<compile_context>
chip_gen: v6e
topology: v6e:2x2x1
jax: 0.10.0
libtpu: 0.0.40
codegen_flags: <defaults>
</compile_context>

<pallas_src>
import jax
import jax.numpy as jnp
from jax.experimental import pallas as pl
from jax.experimental.pallas import tpu as pltpu

NEG_SLOPE = 0.01  # PyTorch nn.LeakyReLU default


def _leaky_relu(x):
    # Equivalent to where(x > 0, x, slope*x) for 0 < slope < 1; one fewer VALU op.
    return jnp.maximum(x, NEG_SLOPE * x)


def _round_up(x, m):
    return ((x + m - 1) // m) * m


def _cdiv(a, b):
    return -(-a // b)


def _vmem_capacity_bytes():
    """Per-TensorCore VMEM capacity (128 MiB v5e/v6e, 64 MiB v7x)."""
    try:
        return int(pltpu.get_tpu_info().vmem_capacity_bytes)
    except Exception:
        return 64 * 2**20  # conservative fallback (v7x per-core VMEM)


# --------------------------------------------------------------------------
# Kernels
# --------------------------------------------------------------------------
def _mlp_resident_kernel(x_ref,
                         w1_ref, b1_ref,
                         w2_ref, b2_ref,
                         w3_ref, b3_ref,
                         w4_ref, b4_ref,
                         o_ref):
    """Grid = (batch_tiles,). All weights VMEM-resident; W1 fetched once."""
    h = jnp.dot(x_ref[...].astype(w1_ref.dtype), w1_ref[...],
                preferred_element_type=jnp.float32) + b1_ref[...]
    h = _leaky_relu(h)
    h = _leaky_relu(jnp.dot(h.astype(w2_ref.dtype), w2_ref[...],
                            preferred_element_type=jnp.float32) + b2_ref[...])
    h = _leaky_relu(jnp.dot(h.astype(w3_ref.dtype), w3_ref[...],
                            preferred_element_type=jnp.float32) + b3_ref[...])
    # Layer 4 (256 -> 1): contract the feature axis of BOTH operands so the
    # result is already a lane-dense (1, batch_tile) row (no masked (bt,1)
    # store, no transpose).
    out_row = jax.lax.dot_general(
        w4_ref[...], h.astype(w4_ref.dtype),          # (1,256) x (bt,256)
        dimension_numbers=(((1,), (1,)), ((), ())),
        preferred_element_type=jnp.float32) + b4_ref[...]
    o_ref[...] = out_row.reshape(o_ref.shape).astype(o_ref.dtype)


def _mlp_ktiled_kernel(x_ref,
                       w1_ref, b1_ref,
                       w2_ref, b2_ref,
                       w3_ref, b3_ref,
                       w4_ref, b4_ref,
                       o_ref,
                       acc_ref):
    """Grid = (batch_tiles, k_tiles); gene_dim reduction (k) innermost."""
    k = pl.program_id(1)
    partial = jnp.dot(x_ref[...].astype(w1_ref.dtype), w1_ref[...],
                      preferred_element_type=jnp.float32)

    @pl.when(k == 0)
    def _first():                       # no zero-init read-modify-write
        acc_ref[...] = partial

    @pl.when(k > 0)
    def _accum():
        acc_ref[...] += partial

    @pl.when(k == pl.num_programs(1) - 1)
    def _finalize():
        h = _leaky_relu(acc_ref[...] + b1_ref[...])
        h = _leaky_relu(jnp.dot(h.astype(w2_ref.dtype), w2_ref[...],
                                preferred_element_type=jnp.float32) + b2_ref[...])
        h = _leaky_relu(jnp.dot(h.astype(w3_ref.dtype), w3_ref[...],
                                preferred_element_type=jnp.float32) + b3_ref[...])
        out_row = jax.lax.dot_general(
            w4_ref[...], h.astype(w4_ref.dtype),
            dimension_numbers=(((1,), (1,)), ((), ())),
            preferred_element_type=jnp.float32) + b4_ref[...]
        o_ref[...] = out_row.reshape(o_ref.shape).astype(o_ref.dtype)


# --------------------------------------------------------------------------
# Wrapper
# --------------------------------------------------------------------------
def discriminator_bulk_forward(x, params, *, batch_tile=256, k_tile=1024,
                               weights_dtype=None, force_ktiled=False):
    """Forward pass of Discriminator_bulk.

    x             : (B, gene_dim) float32.
    params        : [(w, b)] * 4 with w stored (in_features, out_features).
    weights_dtype : None (default) keeps exact f32 semantics of the PyTorch
                    module. jnp.bfloat16 is an explicit opt-in that halves W1
                    HBM traffic and ~3x MXU throughput (~1e-2 relative error).
    force_ktiled  : force the K-tiled (large gene_dim) code path (testing).
    Returns (B, 1) float32.
    """
    (w1, b1), (w2, b2), (w3, b3), (w4, b4) = params
    B, gene_dim = x.shape
    h1, h2, h3 = w1.shape[1], w2.shape[1], w3.shape[1]
    assert w1.shape[0] == gene_dim and w2.shape[0] == h1
    assert w3.shape[0] == h2 and w4.shape == (h3, 1)

    # ---- one-time weight/bias transforms (constant-fold / cache under jit) --
    if weights_dtype is not None:
        x = x.astype(weights_dtype)
        w1, w2, w3, w4 = (w.astype(weights_dtype) for w in (w1, w2, w3, w4))
    b1 = b1.reshape(1, h1).astype(jnp.float32)
    b2 = b2.reshape(1, h2).astype(jnp.float32)
    b3 = b3.reshape(1, h3).astype(jnp.float32)
    b4 = b4.reshape(1, 1).astype(jnp.float32)
    w4_row = w4.reshape(1, h3)           # (1, 256) row for lane-dense layer 4

    x_isz = jnp.dtype(x.dtype).itemsize
    w_isz = jnp.dtype(w1.dtype).itemsize

    # ---- VMEM budget, re-derived per TPU generation -------------------------
    vmem_cap = _vmem_capacity_bytes()
    budget = vmem_cap - (8 << 20)        # headroom for Mosaic internal scratch

    def resident_fp(bt):
        return (2 * bt * gene_dim * x_isz                        # x (double buf)
                + (gene_dim * h1 + h1 * h2 + h2 * h3 + h3) * w_isz  # weights, 1 buf
                + 4 * (h1 + h2 + h3 + 1)                          # f32 biases
                + 4 * bt * (h1 + h2 + h3)                         # f32 intermediates
                + 2 * 4 * bt)                                     # output rows

    def ktiled_fp(bt, kt):
        return (2 * bt * kt * x_isz                               # x tile (double buf)
                + 2 * kt * h1 * w_isz                             # W1 K tile (double buf)
                + (h1 * h2 + h2 * h3 + h3) * w_isz                # resident small weights
                + 4 * (h1 + h2 + h3 + 1)
                + 4 * bt * h1                                     # f32 accumulator
                + 4 * bt * (h1 + h2 + h3)
                + 2 * 4 * bt)

    # ---- batch tiling --------------------------------------------------------
    bt = _round_up(min(batch_tile, _round_up(B, 8)), 8)

    const = lambda a: pl.BlockSpec(a.shape, lambda *_: (0, 0),
                                   pipeline_mode=pl.Buffered(1))

    use_resident = (not force_ktiled) and resident_fp(bt) <= budget

    if use_resident:
        # ------------------- resident-W1 path (no K grid axis) ---------------
        Bp = _round_up(B, bt)
        if Bp != B:
            x = jnp.pad(x, ((0, Bp - B), (0, 0)))   # zero rows, sliced away: exact
        n_btiles = Bp // bt

        footprint = resident_fp(bt)
        vmem_limit = int(max(min(vmem_cap - (8 << 20), footprint + (16 << 20)),
                             24 << 20))
        flops = 2 * Bp * (gene_dim * h1 + h1 * h2 + h2 * h3 + h3)
        bytes_accessed = int(x.size * x_isz
                             + (w1.size + w2.size + w3.size + w4_row.size) * w_isz
                             + 4 * (h1 + h2 + h3 + 1) + Bp * 4)

        out = pl.pallas_call(
            _mlp_resident_kernel,
            out_shape=jax.ShapeDtypeStruct((n_btiles, 1, bt), jnp.float32),
            grid_spec=pltpu.PrefetchScalarGridSpec(
                num_scalar_prefetch=0,
                grid=(n_btiles,),
                in_specs=[
                    pl.BlockSpec((bt, gene_dim), lambda i: (i, 0)),   # x tile
                    const(w1), const(b1),
                    const(w2), const(b2),
                    const(w3), const(b3),
                    const(w4_row), const(b4),
                ],
                out_specs=pl.BlockSpec((1, 1, bt), lambda i: (i, 0, 0)),
            ),
            compiler_params=pltpu.CompilerParams(
                dimension_semantics=("parallel",),
                vmem_limit_bytes=vmem_limit,
            ),
            cost_estimate=pl.CostEstimate(flops=flops, transcendentals=0,
                                          bytes_accessed=bytes_accessed),
        )(x, w1, b1, w2, b2, w3, b3, w4_row, b4)
        return out.reshape(Bp, 1)[:B]

    # ----------------------- K-tiled path (large gene_dim) -------------------
    kt = _round_up(min(k_tile, _round_up(gene_dim, 128)), 128)
    while ktiled_fp(bt, kt) > budget and kt > 128:
        kt = max(128, (kt // 2) // 128 * 128)
    if not force_ktiled:
        # W1 is re-streamed once per batch tile: raise bt toward the VMEM
        # maximum so the re-stream count B/bt shrinks.
        while (bt * 2 <= min(_round_up(B, 8), 1024)
               and _cdiv(B, bt * 2) < _cdiv(B, bt)
               and ktiled_fp(bt * 2, kt) <= budget):
            bt *= 2

    Kp = _round_up(gene_dim, kt)
    Bp = _round_up(B, bt)
    pad_b, pad_k = Bp - B, Kp - gene_dim
    if pad_b or pad_k:
        x = jnp.pad(x, ((0, pad_b), (0, pad_k)))    # zero rows/cols: exact
    if pad_k:
        w1 = jnp.pad(w1, ((0, pad_k), (0, 0)))      # one-time weight transform
    n_btiles, n_ktiles = Bp // bt, Kp // kt

    footprint = ktiled_fp(bt, kt)
    vmem_limit = int(max(min(vmem_cap - (8 << 20), footprint + (16 << 20)),
                         24 << 20))
    flops = 2 * Bp * (Kp * h1 + h1 * h2 + h2 * h3 + h3)
    bytes_accessed = int(x.size * x_isz
                         + n_btiles * w1.size * w_isz            # W1 per batch tile
                         + (w2.size + w3.size + w4_row.size) * w_isz
                         + 4 * (h1 + h2 + h3 + 1) + Bp * 4)

    out = pl.pallas_call(
        _mlp_ktiled_kernel,
        out_shape=jax.ShapeDtypeStruct((n_btiles, 1, bt), jnp.float32),
        grid_spec=pltpu.PrefetchScalarGridSpec(
            num_scalar_prefetch=0,
            grid=(n_btiles, n_ktiles),
            in_specs=[
                pl.BlockSpec((bt, kt), lambda i, k: (i, k)),      # x tile
                pl.BlockSpec((kt, h1), lambda i, k: (k, 0)),      # W1 K tile
                const(b1),
                const(w2), const(b2),
                const(w3), const(b3),
                const(w4_row), const(b4),
            ],
            out_specs=pl.BlockSpec((1, 1, bt), lambda i, k: (i, 0, 0)),
            scratch_shapes=[pltpu.VMEM((bt, h1), jnp.float32)],
        ),
        compiler_params=pltpu.CompilerParams(
            dimension_semantics=("parallel", "arbitrary"),
            vmem_limit_bytes=vmem_limit,
        ),
        cost_estimate=pl.CostEstimate(flops=flops, transcendentals=0,
                                      bytes_accessed=bytes_accessed),
    )(x, w1, b1, w2, b2, w3, b3, w4_row, b4)
    return out.reshape(Bp, 1)[:B]


# --------------------------------------------------------------------------
# Reference + test harness
# --------------------------------------------------------------------------
def init_params(key, gene_dim):
    """Deterministic synthetic init; weights (in, out), biases (1, out)."""
    dims = [(gene_dim, 1024), (1024, 512), (512, 256), (256, 1)]
    params = []
    for fan_in, fan_out in dims:
        key, kw, kb = jax.random.split(key, 3)
        scale = 1.0 / jnp.sqrt(jnp.float32(fan_in))
        w = jax.random.uniform(kw, (fan_in, fan_out), jnp.float32, -scale, scale)
        b = jax.random.uniform(kb, (1, fan_out), jnp.float32, -scale, scale)
        params.append((w, b))
    return params


def reference_forward(x, params, compute_dtype=jnp.float32):
    """Pure-JAX reference mirroring the kernel's (optional) weight cast."""
    h = x.astype(jnp.float32)
    n = len(params)
    for i, (w, b) in enumerate(params):
        h = jnp.dot(h.astype(compute_dtype), w.astype(compute_dtype),
                    preferred_element_type=jnp.float32)
        h = h + b.reshape(1, -1).astype(jnp.float32)
        if i < n - 1:
            h = jnp.where(h > 0, h, NEG_SLOPE * h)
    return h


if __name__ == "__main__":
    key = jax.random.PRNGKey(0)
    k_params, k_x = jax.random.split(key)

    batch, gene_dim = 256, 500          # 500 is deliberately not a multiple of 128
    params = init_params(k_params, gene_dim)
    x = jax.random.normal(k_x, (batch, gene_dim), jnp.float32)

    # f32, resident-W1 path (default): exact PyTorch semantics.
    out = jax.block_until_ready(discriminator_bulk_forward(x, params))
    ref = reference_forward(x, params)
    assert out.shape == (batch, 1), out.shape
    err = float(jnp.max(jnp.abs(out - ref)))
    assert jnp.allclose(out, ref, atol=5e-3, rtol=5e-3), f"f32 max err {err}"

    # bf16 opt-in (v6e/v7x MXU-friendly); reference mirrors the cast.
    out_bf = jax.block_until_ready(
        discriminator_bulk_forward(x, params, weights_dtype=jnp.bfloat16))
    ref_bf = reference_forward(x, params, compute_dtype=jnp.bfloat16)
    err_bf = float(jnp.max(jnp.abs(out_bf - ref_bf)))
    assert jnp.allclose(out_bf, ref_bf, atol=3e-2, rtol=3e-2), f"bf16 max err {err_bf}"

    # Ragged batch (not a multiple of batch_tile) exercises batch padding.
    xr = x[:200]
    out_r = jax.block_until_ready(discriminator_bulk_forward(xr, params))
    ref_r = reference_forward(xr, params)
    assert out_r.shape == (200, 1), out_r.shape
    err_r = float(jnp.max(jnp.abs(out_r - ref_r)))
    assert jnp.allclose(out_r, ref_r, atol=5e-3, rtol=5e-3), f"ragged max err {err_r}"

    # Forced K-tiled path (exercises the large-gene_dim accumulator code at
    # small shapes): grid (2 batch tiles, 2 K tiles), exact zero padding.
    out_k = jax.block_until_ready(
        discriminator_bulk_forward(x, params, batch_tile=128, k_tile=256,
                                   force_ktiled=True))
    err_k = float(jnp.max(jnp.abs(out_k - ref)))
    assert jnp.allclose(out_k, ref, atol=5e-3, rtol=5e-3), f"ktiled max err {err_k}"

    print("KERNEL_OK")
</pallas_src>

<mosaic_0001>
module attributes {stable_mosaic.version = 11 : i64} {
  func.func @_mlp_resident_kernel(%arg0: i32, %arg1: memref<256x500xf32, #tpu.memory_space<vmem>>, %arg2: memref<500x1024xf32, #tpu.memory_space<vmem>>, %arg3: memref<1x1024xf32, #tpu.memory_space<vmem>>, %arg4: memref<1024x512xf32, #tpu.memory_space<vmem>>, %arg5: memref<1x512xf32, #tpu.memory_space<vmem>>, %arg6: memref<512x256xf32, #tpu.memory_space<vmem>>, %arg7: memref<1x256xf32, #tpu.memory_space<vmem>>, %arg8: memref<1x256xf32, #tpu.memory_space<vmem>>, %arg9: memref<1x1xf32, #tpu.memory_space<vmem>>, %arg10: memref<1x1x256xf32, #tpu.memory_space<vmem>>) attributes {dimension_semantics = [#tpu.dimension_semantics<parallel>], iteration_bounds = array<i64: 1>, scalar_prefetch = 0 : i64, scratch_operands = 0 : i64, tpu.core_type = #tpu.core_type<tc>, window_params = [{transform_indices = @transform_0, window_bounds = array<i64: 256, 500>}, {pipeline_mode = #tpu.pipeline_mode<synchronous>, transform_indices = @transform_1, window_bounds = array<i64: 500, 1024>}, {pipeline_mode = #tpu.pipeline_mode<synchronous>, transform_indices = @transform_2, window_bounds = array<i64: 1, 1024>}, {pipeline_mode = #tpu.pipeline_mode<synchronous>, transform_indices = @transform_3, window_bounds = array<i64: 1024, 512>}, {pipeline_mode = #tpu.pipeline_mode<synchronous>, transform_indices = @transform_4, window_bounds = array<i64: 1, 512>}, {pipeline_mode = #tpu.pipeline_mode<synchronous>, transform_indices = @transform_5, window_bounds = array<i64: 512, 256>}, {pipeline_mode = #tpu.pipeline_mode<synchronous>, transform_indices = @transform_6, window_bounds = array<i64: 1, 256>}, {pipeline_mode = #tpu.pipeline_mode<synchronous>, transform_indices = @transform_7, window_bounds = array<i64: 1, 256>}, {pipeline_mode = #tpu.pipeline_mode<synchronous>, transform_indices = @transform_8, window_bounds = array<i64: 1, 1>}, {transform_indices = @transform_9, window_bounds = array<i64: 1, 1, 256>}]} {
    %c0 = arith.constant 0 : index
    %c0_0 = arith.constant 0 : index
    %0 = vector.load %arg1[%c0, %c0_0] : memref<256x500xf32, #tpu.memory_space<vmem>>, vector<256x500xf32>
    %c0_1 = arith.constant 0 : index
    %c0_2 = arith.constant 0 : index
    %1 = vector.load %arg2[%c0_1, %c0_2] : memref<500x1024xf32, #tpu.memory_space<vmem>>, vector<500x1024xf32>
    %cst = arith.constant dense<0.000000e+00> : vector<256x1024xf32>
    %2 = tpu.matmul %0, %1, %cst {dimension_numbers = #tpu.dot_dimension_numbers<[1], [0], [0], [1], [0, 0, 1, 1], [], []>} : vector<256x500xf32>, vector<500x1024xf32>, vector<256x1024xf32> -> vector<256x1024xf32>
    %c0_3 = arith.constant 0 : index
    %c0_4 = arith.constant 0 : index
    %3 = vector.load %arg3[%c0_3, %c0_4] : memref<1x1024xf32, #tpu.memory_space<vmem>>, vector<1x1024xf32>
    %4 = vector.broadcast %3 : vector<1x1024xf32> to vector<256x1024xf32>
    %5 = arith.addf %2, %4 : vector<256x1024xf32>
    %cst_5 = arith.constant 0.00999999977 : f32
    %6 = vector.broadcast %cst_5 : f32 to vector<256x1024xf32>
    %7 = arith.mulf %6, %5 : vector<256x1024xf32>
    %8 = arith.maximumf %5, %7 : vector<256x1024xf32>
    %c0_6 = arith.constant 0 : index
    %c0_7 = arith.constant 0 : index
    %9 = vector.load %arg4[%c0_6, %c0_7] : memref<1024x512xf32, #tpu.memory_space<vmem>>, vector<1024x512xf32>
    %cst_8 = arith.constant dense<0.000000e+00> : vector<256x512xf32>
    %10 = tpu.matmul %8, %9, %cst_8 {dimension_numbers = #tpu.dot_dimension_numbers<[1], [0], [0], [1], [0, 0, 1, 1], [], []>} : vector<256x1024xf32>, vector<1024x512xf32>, vector<256x512xf32> -> vector<256x512xf32>
    %c0_9 = arith.constant 0 : index
    %c0_10 = arith.constant 0 : index
    %11 = vector.load %arg5[%c0_9, %c0_10] : memref<1x512xf32, #tpu.memory_space<vmem>>, vector<1x512xf32>
    %12 = vector.broadcast %11 : vector<1x512xf32> to vector<256x512xf32>
    %13 = arith.addf %10, %12 : vector<256x512xf32>
    %cst_11 = arith.constant 0.00999999977 : f32
    %14 = vector.broadcast %cst_11 : f32 to vector<256x512xf32>
    %15 = arith.mulf %14, %13 : vector<256x512xf32>
    %16 = arith.maximumf %13, %15 : vector<256x512xf32>
    %c0_12 = arith.constant 0 : index
    %c0_13 = arith.constant 0 : index
    %17 = vector.load %arg6[%c0_12, %c0_13] : memref<512x256xf32, #tpu.memory_space<vmem>>, vector<512x256xf32>
    %cst_14 = arith.constant dense<0.000000e+00> : vector<256x256xf32>
    %18 = tpu.matmul %16, %17, %cst_14 {dimension_numbers = #tpu.dot_dimension_numbers<[1], [0], [0], [1], [0, 0, 1, 1], [], []>} : vector<256x512xf32>, vector<512x256xf32>, vector<256x256xf32> -> vector<256x256xf32>
    %c0_15 = arith.constant 0 : index
    %c0_16 = arith.constant 0 : index
    %19 = vector.load %arg7[%c0_15, %c0_16] : memref<1x256xf32, #tpu.memory_space<vmem>>, vector<1x256xf32>
    %20 = vector.broadcast %19 : vector<1x256xf32> to vector<256x256xf32>
    %21 = arith.addf %18, %20 : vector<256x256xf32>
    %cst_17 = arith.constant 0.00999999977 : f32
    %22 = vector.broadcast %cst_17 : f32 to vector<256x256xf32>
    %23 = arith.mulf %22, %21 : vector<256x256xf32>
    %24 = arith.maximumf %21, %23 : vector<256x256xf32>
    %c0_18 = arith.constant 0 : index
    %c0_19 = arith.constant 0 : index
    %25 = vector.load %arg8[%c0_18, %c0_19] : memref<1x256xf32, #tpu.memory_space<vmem>>, vector<1x256xf32>
    %cst_20 = arith.constant dense<0.000000e+00> : vector<1x256xf32>
    %26 = tpu.matmul %25, %24, %cst_20 {dimension_numbers = #tpu.dot_dimension_numbers<[1], [1], [0], [0], [0, 0, 1, 0], [], []>} : vector<1x256xf32>, vector<256x256xf32>, vector<1x256xf32> -> vector<1x256xf32>
    %c0_21 = arith.constant 0 : index
    %c0_22 = arith.constant 0 : index
    %27 = vector.load %arg9[%c0_21, %c0_22] : memref<1x1xf32, #tpu.memory_space<vmem>>, vector<1x1xf32>
    %28 = vector.broadcast %27 : vector<1x1xf32> to vector<1x256xf32>
    %29 = arith.addf %26, %28 : vector<1x256xf32>
    %30 = vector.shape_cast %29 : vector<1x256xf32> to vector<1x1x256xf32>
    %c0_23 = arith.constant 0 : index
    %c0_24 = arith.constant 0 : index
    %c0_25 = arith.constant 0 : index
    %31 = vector.load %arg10[%c0_23, %c0_24, %c0_25] : memref<1x1x256xf32, #tpu.memory_space<vmem>>, vector<1x1x256xf32>
    tpu.vector_store %arg10[%c0_23, %c0_24, %c0_25], %30 {strides = array<i32>} : memref<1x1x256xf32, #tpu.memory_space<vmem>>, vector<1x1x256xf32>,
    return
  }
  func.func @transform_0(%arg0: i32) -> (i32, i32) {
    %c0_i32 = arith.constant 0 : i32
    %c0_i32_0 = arith.constant 0 : i32
    return %arg0, %c0_i32 : i32, i32
  }
  func.func @transform_1(%arg0: i32) -> (i32, i32) {
    %c0_i32 = arith.constant 0 : i32
    %c0_i32_0 = arith.constant 0 : i32
    %c0_i32_1 = arith.constant 0 : i32
    return %c0_i32, %c0_i32_0 : i32, i32
  }
  func.func @transform_2(%arg0: i32) -> (i32, i32) {
    %c0_i32 = arith.constant 0 : i32
    %c0_i32_0 = arith.constant 0 : i32
    %c0_i32_1 = arith.constant 0 : i32
    return %c0_i32, %c0_i32_0 : i32, i32
  }
  func.func @transform_3(%arg0: i32) -> (i32, i32) {
    %c0_i32 = arith.constant 0 : i32
    %c0_i32_0 = arith.constant 0 : i32
    %c0_i32_1 = arith.constant 0 : i32
    return %c0_i32, %c0_i32_0 : i32, i32
  }
  func.func @transform_4(%arg0: i32) -> (i32, i32) {
    %c0_i32 = arith.constant 0 : i32
    %c0_i32_0 = arith.constant 0 : i32
    %c0_i32_1 = arith.constant 0 : i32
    return %c0_i32, %c0_i32_0 : i32, i32
  }
  func.func @transform_5(%arg0: i32) -> (i32, i32) {
    %c0_i32 = arith.constant 0 : i32
    %c0_i32_0 = arith.constant 0 : i32
    %c0_i32_1 = arith.constant 0 : i32
    return %c0_i32, %c0_i32_0 : i32, i32
  }
  func.func @transform_6(%arg0: i32) -> (i32, i32) {
    %c0_i32 = arith.constant 0 : i32
    %c0_i32_0 = arith.constant 0 : i32
    %c0_i32_1 = arith.constant 0 : i32
    return %c0_i32, %c0_i32_0 : i32, i32
  }
  func.func @transform_7(%arg0: i32) -> (i32, i32) {
    %c0_i32 = arith.constant 0 : i32
    %c0_i32_0 = arith.constant 0 : i32
    %c0_i32_1 = arith.constant 0 : i32
    return %c0_i32, %c0_i32_0 : i32, i32
  }
  func.func @transform_8(%arg0: i32) -> (i32, i32) {
    %c0_i32 = arith.constant 0 : i32
    %c0_i32_0 = arith.constant 0 : i32
    %c0_i32_1 = arith.constant 0 : i32
    return %c0_i32, %c0_i32_0 : i32, i32
  }
  func.func @transform_9(%arg0: i32) -> (i32, i32, i32) {
    %c0_i32 = arith.constant 0 : i32
    %c0_i32_0 = arith.constant 0 : i32
    %c0_i32_1 = arith.constant 0 : i32
    return %arg0, %c0_i32, %c0_i32_0 : i32, i32, i32
  }
}

</mosaic_0001>

<llo_original>
// kernel: tpu_custom_call.1
$region0: #{tpu_custom_call.1}
  #allocation0 [shape = 'u32[]', space=smem, size = 0x4, offset = 0x4, fixed_abs, tag = 'smem constant byte address 0x4 - core index']
  #allocation1 [shape = 'u32[144,128]{1,0:T(1,128)}', space=vmem, size = 0x12000, scoped, tag = 'internal scratch']
  #allocation2 [shape = 'f32[1,1]{1,0:T(1,128)S(1)}', space=vmem, size = 0x200, scoped, tag = 'scoped memory for tpu_custom_call.1']
  %s0 = inlined_call_operand.vmem [shape: f32[256,500], index: 0, kind: input, shape index: {}]
  %s1 = inlined_call_operand.hbm [shape: f32[500,1024], index: 1, kind: input, shape index: {}]
  %s2 = inlined_call_operand.hbm [shape: f32[1,1024], index: 2, kind: input, shape index: {}]
  %s3 = inlined_call_operand.hbm [shape: f32[1024,512], index: 3, kind: input, shape index: {}]
  %s4 = inlined_call_operand.hbm [shape: f32[1,512], index: 4, kind: input, shape index: {}]
  %s5 = inlined_call_operand.hbm [shape: f32[512,256], index: 5, kind: input, shape index: {}]
  %s6 = inlined_call_operand.hbm [shape: f32[1,256], index: 6, kind: input, shape index: {}]
  %s7 = inlined_call_operand.hbm [shape: f32[1,256], index: 7, kind: input, shape index: {}]
  %s8 = inlined_call_operand.<no memory space> [shape: f32[1,1], index: 8, kind: input, shape index: {}]
  %s9 = inlined_call_operand.hbm [shape: f32[1,1,256], index: 9, kind: output, shape index: {}]
  %s10 = sld [smem:[#allocation0]]
  $region74: #{tpu_custom_call.1} parent=0
    _
  %s12 = ssub.s32 1, %s10
  %s13 = scalar_select 0, %s12, %s10
  %v14 = vstv %s8
  %15 = vst [vmem:[#allocation2] sm:$0x1] %v14
  $region1: #{tpu_custom_call.1} parent=0
    #allocation3 [shape = 'u8[2064384]{0}', space=vmem, size = 0x1f8000, scoped, tag = 'input window, operand 1, single buffered']
    #allocation4 [shape = 's32[1]{0}', space=sflag, size = 0x4, scoped, tag = 'scoped memory for tpu_custom_call.1']
    #allocation5 [shape = 's32[1]{0}', space=sflag, size = 0x4, scoped, tag = 'scoped memory for tpu_custom_call.1']
    #allocation6 [shape = 'u8[4096]{0}', space=vmem, size = 0x1000, scoped, tag = 'input window, operand 2, single buffered']
    #allocation7 [shape = 's32[1]{0}', space=sflag, size = 0x4, scoped, tag = 'scoped memory for tpu_custom_call.1']
    #allocation8 [shape = 'u8[2097152]{0}', space=vmem, size = 0x200000, scoped, tag = 'input window, operand 3, single buffered']
    #allocation9 [shape = 'u8[2048]{0}', space=vmem, size = 0x800, scoped, tag = 'input window, operand 4, single buffered']
    #allocation10 [shape = 's32[1]{0}', space=sflag, size = 0x4, scoped, tag = 'scoped memory for tpu_custom_call.1']
    #allocation11 [shape = 'u8[524288]{0}', space=vmem, size = 0x80000, scoped, tag = 'input window, operand 5, single buffered']
    #allocation12 [shape = 'u8[1024]{0}', space=vmem, size = 0x400, scoped, tag = 'input window, operand 6, single buffered']
    #allocation13 [shape = 's32[1]{0}', space=sflag, size = 0x4, scoped, tag = 'scoped memory for tpu_custom_call.1']
    #allocation14 [shape = 'u8[1024]{0}', space=vmem, size = 0x400, scoped, tag = 'input window, operand 7, single buffered']
    #allocation15 [shape = 'u8[1024]{0}', space=vmem, size = 0x400, scoped, tag = 'output window, operand 0, single buffered']
    %16 = vsyncpa [#allocation4], 0
    %17 = vsyncpa [#allocation7], 0
    %18 = vsyncpa [#allocation10], 0
    %19 = vsyncpa [#allocation13], 0
    %20 = vsyncpa [#allocation5], 0
    // Predicated region
    $region2: #{tpu_custom_call.1} parent=1 // pred_check
      _
    $region3: #{tpu_custom_call.1} parent=1 // pred_check_branch
      %22 = sbr.rel (0) target = $region5
    $region4: #{tpu_custom_call.1} parent=1 // pred_region
      _
    $region5: #{tpu_custom_call.1} parent=1 // pred_fallthru
      _
    // Predicated region
    $region6: #{tpu_custom_call.1} parent=1 // pred_check
      _
    $region7: #{tpu_custom_call.1} parent=1 // pred_check_branch
      %24 = sbr.rel (0) target = $region9
    $region8: #{tpu_custom_call.1} parent=1 // pred_region
      %s26 = ssub.s32 64512, 64512
      %27 = vsyncadd [#allocation4], %s26
      %s28 = sshll.u32 [#allocation3], 4
      %s29 = int_to_ptr.vmem [resolvable:$true] %s28
      %34 = dma.hbm_to_vmem [thread:$0]  %s1, 64512, %s29, [#allocation4], 1024, 1024, 64
    $region9: #{tpu_custom_call.1} parent=1 // pred_fallthru
      _
    // Predicated region
    $region10: #{tpu_custom_call.1} parent=1 // pred_check
      _
    $region11: #{tpu_custom_call.1} parent=1 // pred_check_branch
      %36 = sbr.rel (0) target = $region13
    $region12: #{tpu_custom_call.1} parent=1 // pred_region
      %s38 = ssub.s32 128, 128
      %39 = vsyncadd [#allocation7], %s38
      %s41 = sshll.u32 [#allocation6], 4
      %s42 = int_to_ptr.vmem [resolvable:$true] %s41
      %44 = dma.hbm_to_vmem [thread:$0]  %s2, 128, %s42, [#allocation7]
    $region13: #{tpu_custom_call.1} parent=1 // pred_fallthru
      _
    // Predicated region
    $region14: #{tpu_custom_call.1} parent=1 // pred_check
      _
    $region15: #{tpu_custom_call.1} parent=1 // pred_check_branch
      %46 = sbr.rel (0) target = $region17
    $region16: #{tpu_custom_call.1} parent=1 // pred_region
      %s48 = ssub.s32 65536, 65536
      %49 = vsyncadd [#allocation7], %s48
      %s50 = sshll.u32 [#allocation8], 4
      %s51 = int_to_ptr.vmem [resolvable:$true] %s50
      %56 = dma.hbm_to_vmem [thread:$0]  %s3, 65536, %s51, [#allocation7], 512, 512, 32
    $region17: #{tpu_custom_call.1} parent=1 // pred_fallthru
      _
    // Predicated region
    $region18: #{tpu_custom_call.1} parent=1 // pred_check
      _
    $region19: #{tpu_custom_call.1} parent=1 // pred_check_branch
      %58 = sbr.rel (0) target = $region21
    $region20: #{tpu_custom_call.1} parent=1 // pred_region
      %s60 = ssub.s32 64, 64
      %61 = vsyncadd [#allocation10], %s60
      %s63 = sshll.u32 [#allocation9], 4
      %s64 = int_to_ptr.vmem [resolvable:$true] %s63
      %66 = dma.hbm_to_vmem [thread:$0]  %s4, 64, %s64, [#allocation10]
    $region21: #{tpu_custom_call.1} parent=1 // pred_fallthru
      _
    // Predicated region
    $region22: #{tpu_custom_call.1} parent=1 // pred_check
      _
    $region23: #{tpu_custom_call.1} parent=1 // pred_check_branch
      %68 = sbr.rel (0) target = $region25
    $region24: #{tpu_custom_call.1} parent=1 // pred_region
      %s70 = ssub.s32 16384, 16384
      %71 = vsyncadd [#allocation10], %s70
      %s72 = sshll.u32 [#allocation11], 4
      %s73 = int_to_ptr.vmem [resolvable:$true] %s72
      %78 = dma.hbm_to_vmem [thread:$0]  %s5, 16384, %s73, [#allocation10], 256, 256, 16
    $region25: #{tpu_custom_call.1} parent=1 // pred_fallthru
      _
    // Predicated region
    $region26: #{tpu_custom_call.1} parent=1 // pred_check
      _
    $region27: #{tpu_custom_call.1} parent=1 // pred_check_branch
      %80 = sbr.rel (0) target = $region29
    $region28: #{tpu_custom_call.1} parent=1 // pred_region
      %s82 = ssub.s32 32, 32
      %83 = vsyncadd [#allocation13], %s82
      %s85 = sshll.u32 [#allocation12], 4
      %s86 = int_to_ptr.vmem [resolvable:$true] %s85
      %88 = dma.hbm_to_vmem [thread:$0]  %s6, 32, %s86, [#allocation13]
    $region29: #{tpu_custom_call.1} parent=1 // pred_fallthru
      _
    // Predicated region
    $region30: #{tpu_custom_call.1} parent=1 // pred_check
      _
    $region31: #{tpu_custom_call.1} parent=1 // pred_check_branch
      %90 = sbr.rel (0) target = $region33
    $region32: #{tpu_custom_call.1} parent=1 // pred_region
      %s92 = ssub.s32 32, 32
      %93 = vsyncadd [#allocation13], %s92
      %s95 = sshll.u32 [#allocation14], 4
      %s96 = int_to_ptr.vmem [resolvable:$true] %s95
      %98 = dma.hbm_to_vmem [thread:$0]  %s7, 32, %s96, [#allocation13]
    $region33: #{tpu_custom_call.1} parent=1 // pred_fallthru
      _
    // Predicated region
    $region34: #{tpu_custom_call.1} parent=1 // pred_check
      _
    $region35: #{tpu_custom_call.1} parent=1 // pred_check_branch
      %100 = sbr.rel (0) target = $region37
    $region36: #{tpu_custom_call.1} parent=1 // pred_region
      _
    $region37: #{tpu_custom_call.1} parent=1 // pred_fallthru
      _
    // Predicated region
    $region38: #{tpu_custom_call.1} parent=1 // pred_check
      _
    $region39: #{tpu_custom_call.1} parent=1 // pred_check_branch
      %102 = sbr.rel (0) target = $region41
    $region40: #{tpu_custom_call.1} parent=1 // pred_region
      %103 = dma.done [#allocation4], 64512
    $region41: #{tpu_custom_call.1} parent=1 // pred_fallthru
      _
    // Predicated region
    $region42: #{tpu_custom_call.1} parent=1 // pred_check
      _
    $region43: #{tpu_custom_call.1} parent=1 // pred_check_branch
      %105 = sbr.rel (0) target = $region45
    $region44: #{tpu_custom_call.1} parent=1 // pred_region
      %106 = dma.done [#allocation7], 128
    $region45: #{tpu_custom_call.1} parent=1 // pred_fallthru
      _
    // Predicated region
    $region46: #{tpu_custom_call.1} parent=1 // pred_check
      _
    $region47: #{tpu_custom_call.1} parent=1 // pred_check_branch
      %108 = sbr.rel (0) target = $region49
    $region48: #{tpu_custom_call.1} parent=1 // pred_region
      %109 = dma.done [#allocation7], 65536
    $region49: #{tpu_custom_call.1} parent=1 // pred_fallthru
      _
    // Predicated region
    $region50: #{tpu_custom_call.1} parent=1 // pred_check
      _
    $region51: #{tpu_custom_call.1} parent=1 // pred_check_branch
      %111 = sbr.rel (0) target = $region53
    $region52: #{tpu_custom_call.1} parent=1 // pred_region
      %112 = dma.done [#allocation10], 64
    $region53: #{tpu_custom_call.1} parent=1 // pred_fallthru
      _
    // Predicated region
    $region54: #{tpu_custom_call.1} parent=1 // pred_check
      _
    $region55: #{tpu_custom_call.1} parent=1 // pred_check_branch
      %114 = sbr.rel (0) target = $region57
    $region56: #{tpu_custom_call.1} parent=1 // pred_region
      %115 = dma.done [#allocation10], 16384
    $region57: #{tpu_custom_call.1} parent=1 // pred_fallthru
      _
    // Predicated region
    $region58: #{tpu_custom_call.1} parent=1 // pred_check
      _
    $region59: #{tpu_custom_call.1} parent=1 // pred_check_branch
      %117 = sbr.rel (0) target = $region61
    $region60: #{tpu_custom_call.1} parent=1 // pred_region
      %118 = dma.done [#allocation13], 32
    $region61: #{tpu_custom_call.1} parent=1 // pred_fallthru
      _
    // Predicated region
    $region62: #{tpu_custom_call.1} parent=1 // pred_check
      _
    $region63: #{tpu_custom_call.1} parent=1 // pred_check_branch
      %120 = sbr.rel (0) target = $region65
    $region64: #{tpu_custom_call.1} parent=1 // pred_region
      %121 = dma.done [#allocation13], 32
    $region65: #{tpu_custom_call.1} parent=1 // pred_fallthru
      _
    %v122 = vld [vmem:[%s0] sm:$0xff]
    %v123 = vld [vmem:[%s0 + $0x8] sm:$0xff]
    %v124 = vld [vmem:[%s0 + $0x10] sm:$0xff]
    %v125 = vld [vmem:[%s0 + $0x18] sm:$0xff]
    %v126 = vld [vmem:[%s0 + $0x20] sm:$0xff]
    %v127 = vld [vmem:[%s0 + $0x28] sm:$0xff]
    %v128 = vld [vmem:[%s0 + $0x30] sm:$0xff]
    %v129 = vld [vmem:[%s0 + $0x38] sm:$0xff]
    %v130 = vld [vmem:[%s0 + $0x40] sm:$0xff]
    %v131 = vld [vmem:[%s0 + $0x48] sm:$0xff]
    %v132 = vld [vmem:[%s0 + $0x50] sm:$0xff]
    %v133 = vld [vmem:[%s0 + $0x58] sm:$0xff]
    %v134 = vld [vmem:[%s0 + $0x60] sm:$0xff]
    %v135 = vld [vmem:[%s0 + $0x68] sm:$0xff]
    %v136 = vld [vmem:[%s0 + $0x70] sm:$0xff]
    %v137 = vld [vmem:[%s0 + $0x78] sm:$0xff]
    %v138 = vld [vmem:[%s0 + $0x80] sm:$0xff]
    %v139 = vld [vmem:[%s0 + $0x88] sm:$0xff]
    %v140 = vld [vmem:[%s0 + $0x90] sm:$0xff]
    %v141 = vld [vmem:[%s0 + $0x98] sm:$0xff]
    %v142 = vld [vmem:[%s0 + $0xa0] sm:$0xff]
    %v143 = vld [vmem:[%s0 + $0xa8] sm:$0xff]
    %v144 = vld [vmem:[%s0 + $0xb0] sm:$0xff]
    %v145 = vld [vmem:[%s0 + $0xb8] sm:$0xff]
    %v146 = vld [vmem:[%s0 + $0xc0] sm:$0xff]
    %v147 = vld [vmem:[%s0 + $0xc8] sm:$0xff]
    %v148 = vld [vmem:[%s0 + $0xd0] sm:$0xff]
    %v149 = vld [vmem:[%s0 + $0xd8] sm:$0xff]
    %v150 = vld [vmem:[%s0 + $0xe0] sm:$0xff]
    %v151 = vld [vmem:[%s0 + $0xe8] sm:$0xff]
    %v152 = vld [vmem:[%s0 + $0xf0] sm:$0xff]
    %v153 = vld [vmem:[%s0 + $0xf8] sm:$0xff]
    %v154 = vld [vmem:[%s0 + $0x100] sm:$0xff]
    %v155 = vld [vmem:[%s0 + $0x108] sm:$0xff]
    %v156 = vld [vmem:[%s0 + $0x110] sm:$0xff]
    %v157 = vld [vmem:[%s0 + $0x118] sm:$0xff]
    %v158 = vld [vmem:[%s0 + $0x120] sm:$0xff]
    %v159 = vld [vmem:[%s0 + $0x128] sm:$0xff]
    %v160 = vld [vmem:[%s0 + $0x130] sm:$0xff]
    %v161 = vld [vmem:[%s0 + $0x138] sm:$0xff]
    %v162 = vld [vmem:[%s0 + $0x140] sm:$0xff]
    %v163 = vld [vmem:[%s0 + $0x148] sm:$0xff]
    %v164 = vld [vmem:[%s0 + $0x150] sm:$0xff]
    %v165 = vld [vmem:[%s0 + $0x158] sm:$0xff]
    %v166 = vld [vmem:[%s0 + $0x160] sm:$0xff]
    %v167 = vld [vmem:[%s0 + $0x168] sm:$0xff]
    %v168 = vld [vmem:[%s0 + $0x170] sm:$0xff]
    %v169 = vld [vmem:[%s0 + $0x178] sm:$0xff]
    %v170 = vld [vmem:[%s0 + $0x180] sm:$0xff]
    %v171 = vld [vmem:[%s0 + $0x188] sm:$0xff]
    %v172 = vld [vmem:[%s0 + $0x190] sm:$0xff]
    %v173 = vld [vmem:[%s0 + $0x198] sm:$0xff]
    %v174 = vld [vmem:[%s0 + $0x1a0] sm:$0xff]
    %v175 = vld [vmem:[%s0 + $0x1a8] sm:$0xff]
    %v176 = vld [vmem:[%s0 + $0x1b0] sm:$0xff]
    %v177 = vld [vmem:[%s0 + $0x1b8] sm:$0xff]
    %v178 = vld [vmem:[%s0 + $0x1c0] sm:$0xff]
    %v179 = vld [vmem:[%s0 + $0x1c8] sm:$0xff]
    %v180 = vld [vmem:[%s0 + $0x1d0] sm:$0xff]
    %v181 = vld [vmem:[%s0 + $0x1d8] sm:$0xff]
    %v182 = vld [vmem:[%s0 + $0x1e0] sm:$0xff]
    %v183 = vld [vmem:[%s0 + $0x1e8] sm:$0xff]
    %v184 = vld [vmem:[%s0 + $0x1f0] sm:$0xff]
    %v185 = vld [vmem:[%s0 + $0x1f8] sm:$0xff]
    %v186 = vld [vmem:[%s0 + $0x200] sm:$0xff]
    %v187 = vld [vmem:[%s0 + $0x208] sm:$0xff]
    %v188 = vld [vmem:[%s0 + $0x210] sm:$0xff]
    %v189 = vld [vmem:[%s0 + $0x218] sm:$0xff]
    %v190 = vld [vmem:[%s0 + $0x220] sm:$0xff]
    %v191 = vld [vmem:[%s0 + $0x228] sm:$0xff]
    %v192 = vld [vmem:[%s0 + $0x230] sm:$0xff]
    %v193 = vld [vmem:[%s0 + $0x238] sm:$0xff]
    %v194 = vld [vmem:[%s0 + $0x240] sm:$0xff]
    %v195 = vld [vmem:[%s0 + $0x248] sm:$0xff]
    %v196 = vld [vmem:[%s0 + $0x250] sm:$0xff]
    %v197 = vld [vmem:[%s0 + $0x258] sm:$0xff]
    %v198 = vld [vmem:[%s0 + $0x260] sm:$0xff]
    %v199 = vld [vmem:[%s0 + $0x268] sm:$0xff]
    %v200 = vld [vmem:[%s0 + $0x270] sm:$0xff]
    %v201 = vld [vmem:[%s0 + $0x278] sm:$0xff]
    %v202 = vld [vmem:[%s0 + $0x280] sm:$0xff]
    %v203 = vld [vmem:[%s0 + $0x288] sm:$0xff]
    %v204 = vld [vmem:[%s0 + $0x290] sm:$0xff]
    %v205 = vld [vmem:[%s0 + $0x298] sm:$0xff]
    %v206 = vld [vmem:[%s0 + $0x2a0] sm:$0xff]
    %v207 = vld [vmem:[%s0 + $0x2a8] sm:$0xff]
    %v208 = vld [vmem:[%s0 + $0x2b0] sm:$0xff]
    %v209 = vld [vmem:[%s0 + $0x2b8] sm:$0xff]
    %v210 = vld [vmem:[%s0 + $0x2c0] sm:$0xff]
    %v211 = vld [vmem:[%s0 + $0x2c8] sm:$0xff]
    %v212 = vld [vmem:[%s0 + $0x2d0] sm:$0xff]
    %v213 = vld [vmem:[%s0 + $0x2d8] sm:$0xff]
    %v214 = vld [vmem:[%s0 + $0x2e0] sm:$0xff]
    %v215 = vld [vmem:[%s0 + $0x2e8] sm:$0xff]
    %v216 = vld [vmem:[%s0 + $0x2f0] sm:$0xff]
    %v217 = vld [vmem:[%s0 + $0x2f8] sm:$0xff]
    %v218 = vld [vmem:[%s0 + $0x300] sm:$0xff]
    %v219 = vld [vmem:[%s0 + $0x308] sm:$0xff]
    %v220 = vld [vmem:[%s0 + $0x310] sm:$0xff]
    %v221 = vld [vmem:[%s0 + $0x318] sm:$0xff]
    %v222 = vld [vmem:[%s0 + $0x320] sm:$0xff]
    %v223 = vld [vmem:[%s0 + $0x328] sm:$0xff]
    %v224 = vld [vmem:[%s0 + $0x330] sm:$0xff]
    %v225 = vld [vmem:[%s0 + $0x338] sm:$0xff]
    %v226 = vld [vmem:[%s0 + $0x340] sm:$0xff]
    %v227 = vld [vmem:[%s0 + $0x348] sm:$0xff]
    %v228 = vld [vmem:[%s0 + $0x350] sm:$0xff]
    %v229 = vld [vmem:[%s0 + $0x358] sm:$0xff]
    %v230 = vld [vmem:[%s0 + $0x360] sm:$0xff]
    %v231 = vld [vmem:[%s0 + $0x368] sm:$0xff]
    %v232 = vld [vmem:[%s0 + $0x370] sm:$0xff]
    %v233 = vld [vmem:[%s0 + $0x378] sm:$0xff]
    %v234 = vld [vmem:[%s0 + $0x380] sm:$0xff]
    %v235 = vld [vmem:[%s0 + $0x388] sm:$0xff]
    %v236 = vld [vmem:[%s0 + $0x390] sm:$0xff]
    %v237 = vld [vmem:[%s0 + $0x398] sm:$0xff]
    %v238 = vld [vmem:[%s0 + $0x3a0] sm:$0xff]
    %v239 = vld [vmem:[%s0 + $0x3a8] sm:$0xff]
    %v240 = vld [vmem:[%s0 + $0x3b0] sm:$0xff]
    %v241 = vld [vmem:[%s0 + $0x3b8] sm:$0xff]
    %v242 = vld [vmem:[%s0 + $0x3c0] sm:$0xff]
    %v243 = vld [vmem:[%s0 + $0x3c8] sm:$0xff]
    %v244 = vld [vmem:[%s0 + $0x3d0] sm:$0xff]
    %v245 = vld [vmem:[%s0 + $0x3d8] sm:$0xff]
    %v246 = vld [vmem:[%s0 + $0x3e0] sm:$0xff]
    %v247 = vld [vmem:[%s0 + $0x3e8] sm:$0xff]
    %v248 = vld [vmem:[%s0 + $0x3f0] sm:$0xff]
    %v249 = vld [vmem:[%s0 + $0x3f8] sm:$0xff]
    %v250 = vld [vmem:[#allocation3] sm:$0xff]
    %v251 = vld [vmem:[#allocation3 + $0x8] sm:$0xff]
    %v252 = vld [vmem:[#allocation3 + $0x10] sm:$0xff]
    %v253 = vld [vmem:[#allocation3 + $0x18] sm:$0xff]
    %v254 = vld [vmem:[#allocation3 + $0x20] sm:$0xff]
    %v255 = vld [vmem:[#allocation3 + $0x28] sm:$0xff]
    %v256 = vld [vmem:[#allocation3 + $0x30] sm:$0xff]
    %v257 = vld [vmem:[#allocation3 + $0x38] sm:$0xff]
    %v258 = vld [vmem:[#allocation3 + $0x40] sm:$0xff]
    %v259 = vld [vmem:[#allocation3 + $0x48] sm:$0xff]
    %v260 = vld [vmem:[#allocation3 + $0x50] sm:$0xff]
    %v261 = vld [vmem:[#allocation3 + $0x58] sm:$0xff]
    %v262 = vld [vmem:[#allocation3 + $0x60] sm:$0xff]
    %v263 = vld [vmem:[#allocation3 + $0x68] sm:$0xff]
    %v264 = vld [vmem:[#allocation3 + $0x70] sm:$0xff]
    %v265 = vld [vmem:[#allocation3 + $0x78] sm:$0xff]
    %v266 = vld [vmem:[#allocation3 + $0x80] sm:$0xff]
    %v267 = vld [vmem:[#allocation3 + $0x88] sm:$0xff]
    %v268 = vld [vmem:[#allocation3 + $0x90] sm:$0xff]
    %v269 = vld [vmem:[#allocation3 + $0x98] sm:$0xff]
    %v270 = vld [vmem:[#allocation3 + $0xa0] sm:$0xff]
    %v271 = vld [vmem:[#allocation3 + $0xa8] sm:$0xff]
    %v272 = vld [vmem:[#allocation3 + $0xb0] sm:$0xff]
    %v273 = vld [vmem:[#allocation3 + $0xb8] sm:$0xff]
    %v274 = vld [vmem:[#allocation3 + $0xc0] sm:$0xff]
    %v275 = vld [vmem:[#allocation3 + $0xc8] sm:$0xff]
    %v276 = vld [vmem:[#allocation3 + $0xd0] sm:$0xff]
    %v277 = vld [vmem:[#allocation3 + $0xd8] sm:$0xff]
    %v278 = vld [vmem:[#allocation3 + $0xe0] sm:$0xff]
    %v279 = vld [vmem:[#allocation3 + $0xe8] sm:$0xff]
    %v280 = vld [vmem:[#allocation3 + $0xf0] sm:$0xff]
    %v281 = vld [vmem:[#allocation3 + $0xf8] sm:$0xff]
    %v282 = vld [vmem:[#allocation3 + $0x100] sm:$0xff]
    %v283 = vld [vmem:[#allocation3 + $0x108] sm:$0xff]
    %v284 = vld [vmem:[#allocation3 + $0x110] sm:$0xff]
    %v285 = vld [vmem:[#allocation3 + $0x118] sm:$0xff]
    %v286 = vld [vmem:[#allocation3 + $0x120] sm:$0xff]
    %v287 = vld [vmem:[#allocation3 + $0x128] sm:$0xff]
    %v288 = vld [vmem:[#allocation3 + $0x130] sm:$0xff]
    %v289 = vld [vmem:[#allocation3 + $0x138] sm:$0xff]
    %v290 = vld [vmem:[#allocation3 + $0x140] sm:$0xff]
    %v291 = vld [vmem:[#allocation3 + $0x148] sm:$0xff]
    %v292 = vld [vmem:[#allocation3 + $0x150] sm:$0xff]
    %v293 = vld [vmem:[#allocation3 + $0x158] sm:$0xff]
    %v294 = vld [vmem:[#allocation3 + $0x160] sm:$0xff]
    %v295 = vld [vmem:[#allocation3 + $0x168] sm:$0xff]
    %v296 = vld [vmem:[#allocation3 + $0x170] sm:$0xff]
    %v297 = vld [vmem:[#allocation3 + $0x178] sm:$0xff]
    %v298 = vld [vmem:[#allocation3 + $0x180] sm:$0xff]
    %v299 = vld [vmem:[#allocation3 + $0x188] sm:$0xff]
    %v300 = vld [vmem:[#allocation3 + $0x190] sm:$0xff]
    %v301 = vld [vmem:[#allocation3 + $0x198] sm:$0xff]
    %v302 = vld [vmem:[#allocation3 + $0x1a0] sm:$0xff]
    %v303 = vld [vmem:[#allocation3 + $0x1a8] sm:$0xff]
    %v304 = vld [vmem:[#allocation3 + $0x1b0] sm:$0xff]
    %v305 = vld [vmem:[#allocation3 + $0x1b8] sm:$0xff]
    %v306 = vld [vmem:[#allocation3 + $0x1c0] sm:$0xff]
    %v307 = vld [vmem:[#allocation3 + $0x1c8] sm:$0xff]
    %v308 = vld [vmem:[#allocation3 + $0x1d0] sm:$0xff]
    %v309 = vld [vmem:[#allocation3 + $0x1d8] sm:$0xff]
    %v310 = vld [vmem:[#allocation3 + $0x1e0] sm:$0xff]
    %v311 = vld [vmem:[#allocation3 + $0x1e8] sm:$0xff]
    %v312 = vld [vmem:[#allocation3 + $0x1f0] sm:$0xff]
    %v313 = vld [vmem:[#allocation3 + $0x1f8] sm:$0xff]
    %v314 = vld [vmem:[#allocation3 + $0x200] sm:$0xff]
    %v315 = vld [vmem:[#allocation3 + $0x208] sm:$0xff]
    %v316 = vld [vmem:[#allocation3 + $0x210] sm:$0xff]
    %v317 = vld [vmem:[#allocation3 + $0x218] sm:$0xff]
    %v318 = vld [vmem:[#allocation3 + $0x220] sm:$0xff]
    %v319 = vld [vmem:[#allocation3 + $0x228] sm:$0xff]
    %v320 = vld [vmem:[#allocation3 + $0x230] sm:$0xff]
    %v321 = vld [vmem:[#allocation3 + $0x238] sm:$0xff]
    %v322 = vld [vmem:[#allocation3 + $0x240] sm:$0xff]
    %v323 = vld [vmem:[#allocation3 + $0x248] sm:$0xff]
    %v324 = vld [vmem:[#allocation3 + $0x250] sm:$0xff]
    %v325 = vld [vmem:[#allocation3 + $0x258] sm:$0xff]
    %v326 = vld [vmem:[#allocation3 + $0x260] sm:$0xff]
    %v327 = vld [vmem:[#allocation3 + $0x268] sm:$0xff]
    %v328 = vld [vmem:[#allocation3 + $0x270] sm:$0xff]
    %v329 = vld [vmem:[#allocation3 + $0x278] sm:$0xff]
    %v330 = vld [vmem:[#allocation3 + $0x280] sm:$0xff]
    %v331 = vld [vmem:[#allocation3 + $0x288] sm:$0xff]
    %v332 = vld [vmem:[#allocation3 + $0x290] sm:$0xff]
    %v333 = vld [vmem:[#allocation3 + $0x298] sm:$0xff]
    %v334 = vld [vmem:[#allocation3 + $0x2a0] sm:$0xff]
    %v335 = vld [vmem:[#allocation3 + $0x2a8] sm:$0xff]
    %v336 = vld [vmem:[#allocation3 + $0x2b0] sm:$0xff]
    %v337 = vld [vmem:[#allocation3 + $0x2b8] sm:$0xff]
    %v338 = vld [vmem:[#allocation3 + $0x2c0] sm:$0xff]
    %v339 = vld [vmem:[#allocation3 + $0x2c8] sm:$0xff]
    %v340 = vld [vmem:[#allocation3 + $0x2d0] sm:$0xff]
    %v341 = vld [vmem:[#allocation3 + $0x2d8] sm:$0xff]
    %v342 = vld [vmem:[#allocation3 + $0x2e0] sm:$0xff]
    %v343 = vld [vmem:[#allocation3 + $0x2e8] sm:$0xff]
    %v344 = vld [vmem:[#allocation3 + $0x2f0] sm:$0xff]
    %v345 = vld [vmem:[#allocation3 + $0x2f8] sm:$0xff]
    %v346 = vld [vmem:[#allocation3 + $0x300] sm:$0xff]
    %v347 = vld [vmem:[#allocation3 + $0x308] sm:$0xff]
    %v348 = vld [vmem:[#allocation3 + $0x310] sm:$0xff]
    %v349 = vld [vmem:[#allocation3 + $0x318] sm:$0xff]
    %v350 = vld [vmem:[#allocation3 + $0x320] sm:$0xff]
    %v351 = vld [vmem:[#allocation3 + $0x328] sm:$0xff]
    %v352 = vld [vmem:[#allocation3 + $0x330] sm:$0xff]
    %v353 = vld [vmem:[#allocation3 + $0x338] sm:$0xff]
    %v354 = vld [vmem:[#allocation3 + $0x340] sm:$0xff]
    %v355 = vld [vmem:[#allocation3 + $0x348] sm:$0xff]
    %v356 = vld [vmem:[#allocation3 + $0x350] sm:$0xff]
    %v357 = vld [vmem:[#allocation3 + $0x358] sm:$0xff]
    %v358 = vld [vmem:[#allocation3 + $0x360] sm:$0xff]
    %v359 = vld [vmem:[#allocation3 + $0x368] sm:$0xff]
    %v360 = vld [vmem:[#allocation3 + $0x370] sm:$0xff]
    %v361 = vld [vmem:[#allocation3 + $0x378] sm:$0xff]
    %v362 = vld [vmem:[#allocation3 + $0x380] sm:$0xff]
    %v363 = vld [vmem:[#allocation3 + $0x388] sm:$0xff]
    %v364 = vld [vmem:[#allocation3 + $0x390] sm:$0xff]
    %v365 = vld [vmem:[#allocation3 + $0x398] sm:$0xff]
    %v366 = vld [vmem:[#allocation3 + $0x3a0] sm:$0xff]
    %v367 = vld [vmem:[#allocation3 + $0x3a8] sm:$0xff]
    %v368 = vld [vmem:[#allocation3 + $0x3b0] sm:$0xff]
    %v369 = vld [vmem:[#allocation3 + $0x3b8] sm:$0xff]
    %v370 = vld [vmem:[#allocation3 + $0x3c0] sm:$0xff]
    %v371 = vld [vmem:[#allocation3 + $0x3c8] sm:$0xff]
    %v372 = vld [vmem:[#allocation3 + $0x3d0] sm:$0xff]
    %v373 = vld [vmem:[#allocation3 + $0x3d8] sm:$0xff]
    %v374 = vld [vmem:[#allocation3 + $0x3e0] sm:$0xff]
    %v375 = vld [vmem:[#allocation3 + $0x3e8] sm:$0xff]
    %v376 = vld [vmem:[#allocation3 + $0x3f0] sm:$0xff]
    %v377 = vld [vmem:[#allocation3 + $0x3f8] sm:$0xff]
    %v378 = vld [vmem:[#allocation3 + $0x400] sm:$0xff]
    %v379 = vld [vmem:[#allocation3 + $0x408] sm:$0xff]
    %v380 = vld [vmem:[#allocation3 + $0x410] sm:$0xff]
    %v381 = vld [vmem:[#allocation3 + $0x418] sm:$0xff]
    %v382 = vld [vmem:[#allocation3 + $0x420] sm:$0xff]
    %v383 = vld [vmem:[#allocation3 + $0x428] sm:$0xff]
    %v384 = vld [vmem:[#allocation3 + $0x430] sm:$0xff]
    %v385 = vld [vmem:[#allocation3 + $0x438] sm:$0xff]
    %v386 = vld [vmem:[#allocation3 + $0x440] sm:$0xff]
    %v387 = vld [vmem:[#allocation3 + $0x448] sm:$0xff]
    %v388 = vld [vmem:[#allocation3 + $0x450] sm:$0xff]
    %v389 = vld [vmem:[#allocation3 + $0x458] sm:$0xff]
    %v390 = vld [vmem:[#allocation3 + $0x460] sm:$0xff]
    %v391 = vld [vmem:[#allocation3 + $0x468] sm:$0xff]
    %v392 = vld [vmem:[#allocation3 + $0x470] sm:$0xff]
    %v393 = vld [vmem:[#allocation3 + $0x478] sm:$0xff]
    %v394 = vld [vmem:[#allocation3 + $0x480] sm:$0xff]
    %v395 = vld [vmem:[#allocation3 + $0x488] sm:$0xff]
    %v396 = vld [vmem:[#allocation3 + $0x490] sm:$0xff]
    %v397 = vld [vmem:[#allocation3 + $0x498] sm:$0xff]
    %v398 = vld [vmem:[#allocation3 + $0x4a0] sm:$0xff]
    %v399 = vld [vmem:[#allocation3 + $0x4a8] sm:$0xff]
    %v400 = vld [vmem:[#allocation3 + $0x4b0] sm:$0xff]
    %v401 = vld [vmem:[#allocation3 + $0x4b8] sm:$0xff]
    %v402 = vld [vmem:[#allocation3 + $0x4c0] sm:$0xff]
    %v403 = vld [vmem:[#allocation3 + $0x4c8] sm:$0xff]
    %v404 = vld [vmem:[#allocation3 + $0x4d0] sm:$0xff]
    %v405 = vld [vmem:[#allocation3 + $0x4d8] sm:$0xff]
    %v406 = vld [vmem:[#allocation3 + $0x4e0] sm:$0xff]
    %v407 = vld [vmem:[#allocation3 + $0x4e8] sm:$0xff]
    %v408 = vld [vmem:[#allocation3 + $0x4f0] sm:$0xff]
    %v409 = vld [vmem:[#allocation3 + $0x4f8] sm:$0xff]
    %v410 = vld [vmem:[#allocation3 + $0x500] sm:$0xff]
    %v411 = vld [vmem:[#allocation3 + $0x508] sm:$0xff]
    %v412 = vld [vmem:[#allocation3 + $0x510] sm:$0xff]
    %v413 = vld [vmem:[#allocation3 + $0x518] sm:$0xff]
    %v414 = vld [vmem:[#allocation3 + $0x520] sm:$0xff]
    %v415 = vld [vmem:[#allocation3 + $0x528] sm:$0xff]
    %v416 = vld [vmem:[#allocation3 + $0x530] sm:$0xff]
    %v417 = vld [vmem:[#allocation3 + $0x538] sm:$0xff]
    %v418 = vld [vmem:[#allocation3 + $0x540] sm:$0xff]
    %v419 = vld [vmem:[#allocation3 + $0x548] sm:$0xff]
    %v420 = vld [vmem:[#allocation3 + $0x550] sm:$0xff]
    %v421 = vld [vmem:[#allocation3 + $0x558] sm:$0xff]
    %v422 = vld [vmem:[#allocation3 + $0x560] sm:$0xff]
    %v423 = vld [vmem:[#allocation3 + $0x568] sm:$0xff]
    %v424 = vld [vmem:[#allocation3 + $0x570] sm:$0xff]
    %v425 = vld [vmem:[#allocation3 + $0x578] sm:$0xff]
    %v426 = vld [vmem:[#allocation3 + $0x580] sm:$0xff]
    %v427 = vld [vmem:[#allocation3 + $0x588] sm:$0xff]
    %v428 = vld [vmem:[#allocation3 + $0x590] sm:$0xff]
    %v429 = vld [vmem:[#allocation3 + $0x598] sm:$0xff]
    %v430 = vld [vmem:[#allocation3 + $0x5a0] sm:$0xff]
    %v431 = vld [vmem:[#allocation3 + $0x5a8] sm:$0xff]
    %v432 = vld [vmem:[#allocation3 + $0x5b0] sm:$0xff]
    %v433 = vld [vmem:[#allocation3 + $0x5b8] sm:$0xff]
    %v434 = vld [vmem:[#allocation3 + $0x5c0] sm:$0xff]
    %v435 = vld [vmem:[#allocation3 + $0x5c8] sm:$0xff]
    %v436 = vld [vmem:[#allocation3 + $0x5d0] sm:$0xff]
    %v437 = vld [vmem:[#allocation3 + $0x5d8] sm:$0xff]
    %v438 = vld [vmem:[#allocation3 + $0x5e0] sm:$0xff]
    %v439 = vld [vmem:[#allocation3 + $0x5e8] sm:$0xff]
    %v440 = vld [vmem:[#allocation3 + $0x5f0] sm:$0xff]
    %v441 = vld [vmem:[#allocation3 + $0x5f8] sm:$0xff]
    %v442 = vld [vmem:[#allocation3 + $0x600] sm:$0xff]
    %v443 = vld [vmem:[#allocation3 + $0x608] sm:$0xff]
    %v444 = vld [vmem:[#allocation3 + $0x610] sm:$0xff]
    %v445 = vld [vmem:[#allocation3 + $0x618] sm:$0xff]
    %v446 = vld [vmem:[#allocation3 + $0x620] sm:$0xff]
    %v447 = vld [vmem:[#allocation3 + $0x628] sm:$0xff]
    %v448 = vld [vmem:[#allocation3 + $0x630] sm:$0xff]
    %v449 = vld [vmem:[#allocation3 + $0x638] sm:$0xff]
    %v450 = vld [vmem:[#allocation3 + $0x640] sm:$0xff]
    %v451 = vld [vmem:[#allocation3 + $0x648] sm:$0xff]
    %v452 = vld [vmem:[#allocation3 + $0x650] sm:$0xff]
    %v453 = vld [vmem:[#allocation3 + $0x658] sm:$0xff]
    %v454 = vld [vmem:[#allocation3 + $0x660] sm:$0xff]
    %v455 = vld [vmem:[#allocation3 + $0x668] sm:$0xff]
    %v456 = vld [vmem:[#allocation3 + $0x670] sm:$0xff]
    %v457 = vld [vmem:[#allocation3 + $0x678] sm:$0xff]
    %v458 = vld [vmem:[#allocation3 + $0x680] sm:$0xff]
    %v459 = vld [vmem:[#allocation3 + $0x688] sm:$0xff]
    %v460 = vld [vmem:[#allocation3 + $0x690] sm:$0xff]
    %v461 = vld [vmem:[#allocation3 + $0x698] sm:$0xff]
    %v462 = vld [vmem:[#allocation3 + $0x6a0] sm:$0xff]
    %v463 = vld [vmem:[#allocation3 + $0x6a8] sm:$0xff]
    %v464 = vld [vmem:[#allocation3 + $0x6b0] sm:$0xff]
    %v465 = vld [vmem:[#allocation3 + $0x6b8] sm:$0xff]
    %v466 = vld [vmem:[#allocation3 + $0x6c0] sm:$0xff]
    %v467 = vld [vmem:[#allocation3 + $0x6c8] sm:$0xff]
    %v468 = vld [vmem:[#allocation3 + $0x6d0] sm:$0xff]
    %v469 = vld [vmem:[#allocation3 + $0x6d8] sm:$0xff]
    %v470 = vld [vmem:[#allocation3 + $0x6e0] sm:$0xff]
    %v471 = vld [vmem:[#allocation3 + $0x6e8] sm:$0xff]
    %v472 = vld [vmem:[#allocation3 + $0x6f0] sm:$0xff]
    %v473 = vld [vmem:[#allocation3 + $0x6f8] sm:$0xff]
    %v474 = vld [vmem:[#allocation3 + $0x700] sm:$0xff]
    %v475 = vld [vmem:[#allocation3 + $0x708] sm:$0xff]
    %v476 = vld [vmem:[#allocation3 + $0x710] sm:$0xff]
    %v477 = vld [vmem:[#allocation3 + $0x718] sm:$0xff]
    %v478 = vld [vmem:[#allocation3 + $0x720] sm:$0xff]
    %v479 = vld [vmem:[#allocation3 + $0x728] sm:$0xff]
    %v480 = vld [vmem:[#allocation3 + $0x730] sm:$0xff]
    %v481 = vld [vmem:[#allocation3 + $0x738] sm:$0xff]
    %v482 = vld [vmem:[#allocation3 + $0x740] sm:$0xff]
    %v483 = vld [vmem:[#allocation3 + $0x748] sm:$0xff]
    %v484 = vld [vmem:[#allocation3 + $0x750] sm:$0xff]
    %v485 = vld [vmem:[#allocation3 + $0x758] sm:$0xff]
    %v486 = vld [vmem:[#allocation3 + $0x760] sm:$0xff]
    %v487 = vld [vmem:[#allocation3 + $0x768] sm:$0xff]
    %v488 = vld [vmem:[#allocation3 + $0x770] sm:$0xff]
    %v489 = vld [vmem:[#allocation3 + $0x778] sm:$0xff]
    %v490 = vld [vmem:[#allocation3 + $0x780] sm:$0xff]
    %v491 = vld [vmem:[#allocation3 + $0x788] sm:$0xff]
    %v492 = vld [vmem:[#allocation3 + $0x790] sm:$0xff]
    %v493 = vld [vmem:[#allocation3 + $0x798] sm:$0xff]
    %v494 = vld [vmem:[#allocation3 + $0x7a0] sm:$0xff]
    %v495 = vld [vmem:[#allocation3 + $0x7a8] sm:$0xff]
    %v496 = vld [vmem:[#allocation3 + $0x7b0] sm:$0xff]
    %v497 = vld [vmem:[#allocation3 + $0x7b8] sm:$0xff]
    %v498 = vld [vmem:[#allocation3 + $0x7c0] sm:$0xff]
    %v499 = vld [vmem:[#allocation3 + $0x7c8] sm:$0xff]
    %v500 = vld [vmem:[#allocation3 + $0x7d0] sm:$0xff]
    %v501 = vld [vmem:[#allocation3 + $0x7d8] sm:$0xff]
    %v502 = vld [vmem:[#allocation3 + $0x7e0] sm:$0xff]
    %v503 = vld [vmem:[#allocation3 + $0x7e8] sm:$0xff]
    %v504 = vld [vmem:[#allocation3 + $0x7f0] sm:$0xff]
    %v505 = vld [vmem:[#allocation3 + $0x7f8] sm:$0xff]
    %v506 = vld [vmem:[#allocation3 + $0x800] sm:$0xff]
    %v507 = vld [vmem:[#allocation3 + $0x808] sm:$0xff]
    %v508 = vld [vmem:[#allocation3 + $0x810] sm:$0xff]
    %v509 = vld [vmem:[#allocation3 + $0x818] sm:$0xff]
    %v510 = vld [vmem:[#allocation3 + $0x820] sm:$0xff]
    %v511 = vld [vmem:[#allocation3 + $0x828] sm:$0xff]
    %v512 = vld [vmem:[#allocation3 + $0x830] sm:$0xff]
    %v513 = vld [vmem:[#allocation3 + $0x838] sm:$0xff]
    %v514 = vld [vmem:[#allocation3 + $0x840] sm:$0xff]
    %v515 = vld [vmem:[#allocation3 + $0x848] sm:$0xff]
    %v516 = vld [vmem:[#allocation3 + $0x850] sm:$0xff]
    %v517 = vld [vmem:[#allocation3 + $0x858] sm:$0xff]
    %v518 = vld [vmem:[#allocation3 + $0x860] sm:$0xff]
    %v519 = vld [vmem:[#allocation3 + $0x868] sm:$0xff]
    %v520 = vld [vmem:[#allocation3 + $0x870] sm:$0xff]
    %v521 = vld [vmem:[#allocation3 + $0x878] sm:$0xff]
    %v522 = vld [vmem:[#allocation3 + $0x880] sm:$0xff]
    %v523 = vld [vmem:[#allocation3 + $0x888] sm:$0xff]
    %v524 = vld [vmem:[#allocation3 + $0x890] sm:$0xff]
    %v525 = vld [vmem:[#allocation3 + $0x898] sm:$0xff]
    %v526 = vld [vmem:[#allocation3 + $0x8a0] sm:$0xff]
    %v527 = vld [vmem:[#allocation3 + $0x8a8] sm:$0xff]
    %v528 = vld [vmem:[#allocation3 + $0x8b0] sm:$0xff]
    %v529 = vld [vmem:[#allocation3 + $0x8b8] sm:$0xff]
    %v530 = vld [vmem:[#allocation3 + $0x8c0] sm:$0xff]
    %v531 = vld [vmem:[#allocation3 + $0x8c8] sm:$0xff]
    %v532 = vld [vmem:[#allocation3 + $0x8d0] sm:$0xff]
    %v533 = vld [vmem:[#allocation3 + $0x8d8] sm:$0xff]
    %v534 = vld [vmem:[#allocation3 + $0x8e0] sm:$0xff]
    %v535 = vld [vmem:[#allocation3 + $0x8e8] sm:$0xff]
    %v536 = vld [vmem:[#allocation3 + $0x8f0] sm:$0xff]
    %v537 = vld [vmem:[#allocation3 + $0x8f8] sm:$0xff]
    %v538 = vld [vmem:[#allocation3 + $0x900] sm:$0xff]
    %v539 = vld [vmem:[#allocation3 + $0x908] sm:$0xff]
    %v540 = vld [vmem:[#allocation3 + $0x910] sm:$0xff]
    %v541 = vld [vmem:[#allocation3 + $0x918] sm:$0xff]
    %v542 = vld [vmem:[#allocation3 + $0x920] sm:$0xff]
    %v543 = vld [vmem:[#allocation3 + $0x928] sm:$0xff]
    %v544 = vld [vmem:[#allocation3 + $0x930] sm:$0xff]
    %v545 = vld [vmem:[#allocation3 + $0x938] sm:$0xff]
    %v546 = vld [vmem:[#allocation3 + $0x940] sm:$0xff]
    %v547 = vld [vmem:[#allocation3 + $0x948] sm:$0xff]
    %v548 = vld [vmem:[#allocation3 + $0x950] sm:$0xff]
    %v549 = vld [vmem:[#allocation3 + $0x958] sm:$0xff]
    %v550 = vld [vmem:[#allocation3 + $0x960] sm:$0xff]
    %v551 = vld [vmem:[#allocation3 + $0x968] sm:$0xff]
    %v552 = vld [vmem:[#allocation3 + $0x970] sm:$0xff]
    %v553 = vld [vmem:[#allocation3 + $0x978] sm:$0xff]
    %v554 = vld [vmem:[#allocation3 + $0x980] sm:$0xff]
    %v555 = vld [vmem:[#allocation3 + $0x988] sm:$0xff]
    %v556 = vld [vmem:[#allocation3 + $0x990] sm:$0xff]
    %v557 = vld [vmem:[#allocation3 + $0x998] sm:$0xff]
    %v558 = vld [vmem:[#allocation3 + $0x9a0] sm:$0xff]
    %v559 = vld [vmem:[#allocation3 + $0x9a8] sm:$0xff]
    %v560 = vld [vmem:[#allocation3 + $0x9b0] sm:$0xff]
    %v561 = vld [vmem:[#allocation3 + $0x9b8] sm:$0xff]
    %v562 = vld [vmem:[#allocation3 + $0x9c0] sm:$0xff]
    %v563 = vld [vmem:[#allocation3 + $0x9c8] sm:$0xff]
    %v564 = vld [vmem:[#allocation3 + $0x9d0] sm:$0xff]
    %v565 = vld [vmem:[#allocation3 + $0x9d8] sm:$0xff]
    %v566 = vld [vmem:[#allocation3 + $0x9e0] sm:$0xff]
    %v567 = vld [vmem:[#allocation3 + $0x9e8] sm:$0xff]
    %v568 = vld [vmem:[#allocation3 + $0x9f0] sm:$0xff]
    %v569 = vld [vmem:[#allocation3 + $0x9f8] sm:$0xff]
    %v570 = vld [vmem:[#allocation3 + $0xa00] sm:$0xff]
    %v571 = vld [vmem:[#allocation3 + $0xa08] sm:$0xff]
    %v572 = vld [vmem:[#allocation3 + $0xa10] sm:$0xff]
    %v573 = vld [vmem:[#allocation3 + $0xa18] sm:$0xff]
    %v574 = vld [vmem:[#allocation3 + $0xa20] sm:$0xff]
    %v575 = vld [vmem:[#allocation3 + $0xa28] sm:$0xff]
    %v576 = vld [vmem:[#allocation3 + $0xa30] sm:$0xff]
    %v577 = vld [vmem:[#allocation3 + $0xa38] sm:$0xff]
    %v578 = vld [vmem:[#allocation3 + $0xa40] sm:$0xff]
    %v579 = vld [vmem:[#allocation3 + $0xa48] sm:$0xff]
    %v580 = vld [vmem:[#allocation3 + $0xa50] sm:$0xff]
    %v581 = vld [vmem:[#allocation3 + $0xa58] sm:$0xff]
    %v582 = vld [vmem:[#allocation3 + $0xa60] sm:$0xff]
    %v583 = vld [vmem:[#allocation3 + $0xa68] sm:$0xff]
    %v584 = vld [vmem:[#allocation3 + $0xa70] sm:$0xff]
    %v585 = vld [vmem:[#allocation3 + $0xa78] sm:$0xff]
    %v586 = vld [vmem:[#allocation3 + $0xa80] sm:$0xff]
    %v587 = vld [vmem:[#allocation3 + $0xa88] sm:$0xff]
    %v588 = vld [vmem:[#allocation3 + $0xa90] sm:$0xff]
    %v589 = vld [vmem:[#allocation3 + $0xa98] sm:$0xff]
    %v590 = vld [vmem:[#allocation3 + $0xaa0] sm:$0xff]
    %v591 = vld [vmem:[#allocation3 + $0xaa8] sm:$0xff]
    %v592 = vld [vmem:[#allocation3 + $0xab0] sm:$0xff]
    %v593 = vld [vmem:[#allocation3 + $0xab8] sm:$0xff]
    %v594 = vld [vmem:[#allocation3 + $0xac0] sm:$0xff]
    %v595 = vld [vmem:[#allocation3 + $0xac8] sm:$0xff]
    %v596 = vld [vmem:[#allocation3 + $0xad0] sm:$0xff]
    %v597 = vld [vmem:[#allocation3 + $0xad8] sm:$0xff]
    %v598 = vld [vmem:[#allocation3 + $0xae0] sm:$0xff]
    %v599 = vld [vmem:[#allocation3 + $0xae8] sm:$0xff]
    %v600 = vld [vmem:[#allocation3 + $0xaf0] sm:$0xff]
    %v601 = vld [vmem:[#allocation3 + $0xaf8] sm:$0xff]
    %v602 = vld [vmem:[#allocation3 + $0xb00] sm:$0xff]
    %v603 = vld [vmem:[#allocation3 + $0xb08] sm:$0xff]
    %v604 = vld [vmem:[#allocation3 + $0xb10] sm:$0xff]
    %v605 = vld [vmem:[#allocation3 + $0xb18] sm:$0xff]
    %v606 = vld [vmem:[#allocation3 + $0xb20] sm:$0xff]
    %v607 = vld [vmem:[#allocation3 + $0xb28] sm:$0xff]
    %v608 = vld [vmem:[#allocation3 + $0xb30] sm:$0xff]
    %v609 = vld [vmem:[#allocation3 + $0xb38] sm:$0xff]
    %v610 = vld [vmem:[#allocation3 + $0xb40] sm:$0xff]
    %v611 = vld [vmem:[#allocation3 + $0xb48] sm:$0xff]
    %v612 = vld [vmem:[#allocation3 + $0xb50] sm:$0xff]
    %v613 = vld [vmem:[#allocation3 + $0xb58] sm:$0xff]
    %v614 = vld [vmem:[#allocation3 + $0xb60] sm:$0xff]
    %v615 = vld [vmem:[#allocation3 + $0xb68] sm:$0xff]
    %v616 = vld [vmem:[#allocation3 + $0xb70] sm:$0xff]
    %v617 = vld [vmem:[#allocation3 + $0xb78] sm:$0xff]
    %v618 = vld [vmem:[#allocation3 + $0xb80] sm:$0xff]
    %v619 = vld [vmem:[#allocation3 + $0xb88] sm:$0xff]
    %v620 = vld [vmem:[#allocation3 + $0xb90] sm:$0xff]
    %v621 = vld [vmem:[#allocation3 + $0xb98] sm:$0xff]
    %v622 = vld [vmem:[#allocation3 + $0xba0] sm:$0xff]
    %v623 = vld [vmem:[#allocation3 + $0xba8] sm:$0xff]
    %v624 = vld [vmem:[#allocation3 + $0xbb0] sm:$0xff]
    %v625 = vld [vmem:[#allocation3 + $0xbb8] sm:$0xff]
    %v626 = vld [vmem:[#allocation3 + $0xbc0] sm:$0xff]
    %v627 = vld [vmem:[#allocation3 + $0xbc8] sm:$0xff]
    %v628 = vld [vmem:[#allocation3 + $0xbd0] sm:$0xff]
    %v629 = vld [vmem:[#allocation3 + $0xbd8] sm:$0xff]
    %v630 = vld [vmem:[#allocation3 + $0xbe0] sm:$0xff]
    %v631 = vld [vmem:[#allocation3 + $0xbe8] sm:$0xff]
    %v632 = vld [vmem:[#allocation3 + $0xbf0] sm:$0xff]
    %v633 = vld [vmem:[#allocation3 + $0xbf8] sm:$0xff]
    %v634 = vld [vmem:[#allocation3 + $0xc00] sm:$0xff]
    %v635 = vld [vmem:[#allocation3 + $0xc08] sm:$0xff]
    %v636 = vld [vmem:[#allocation3 + $0xc10] sm:$0xff]
    %v637 = vld [vmem:[#allocation3 + $0xc18] sm:$0xff]
    %v638 = vld [vmem:[#allocation3 + $0xc20] sm:$0xff]
    %v639 = vld [vmem:[#allocation3 + $0xc28] sm:$0xff]
    %v640 = vld [vmem:[#allocation3 + $0xc30] sm:$0xff]
    %v641 = vld [vmem:[#allocation3 + $0xc38] sm:$0xff]
    %v642 = vld [vmem:[#allocation3 + $0xc40] sm:$0xff]
    %v643 = vld [vmem:[#allocation3 + $0xc48] sm:$0xff]
    %v644 = vld [vmem:[#allocation3 + $0xc50] sm:$0xff]
    %v645 = vld [vmem:[#allocation3 + $0xc58] sm:$0xff]
    %v646 = vld [vmem:[#allocation3 + $0xc60] sm:$0xff]
    %v647 = vld [vmem:[#allocation3 + $0xc68] sm:$0xff]
    %v648 = vld [vmem:[#allocation3 + $0xc70] sm:$0xff]
    %v649 = vld [vmem:[#allocation3 + $0xc78] sm:$0xff]
    %v650 = vld [vmem:[#allocation3 + $0xc80] sm:$0xff]
    %v651 = vld [vmem:[#allocation3 + $0xc88] sm:$0xff]
    %v652 = vld [vmem:[#allocation3 + $0xc90] sm:$0xff]
    %v653 = vld [vmem:[#allocation3 + $0xc98] sm:$0xff]
    %v654 = vld [vmem:[#allocation3 + $0xca0] sm:$0xff]
    %v655 = vld [vmem:[#allocation3 + $0xca8] sm:$0xff]
    %v656 = vld [vmem:[#allocation3 + $0xcb0] sm:$0xff]
    %v657 = vld [vmem:[#allocation3 + $0xcb8] sm:$0xff]
    %v658 = vld [vmem:[#allocation3 + $0xcc0] sm:$0xff]
    %v659 = vld [vmem:[#allocation3 + $0xcc8] sm:$0xff]
    %v660 = vld [vmem:[#allocation3 + $0xcd0] sm:$0xff]
    %v661 = vld [vmem:[#allocation3 + $0xcd8] sm:$0xff]
    %v662 = vld [vmem:[#allocation3 + $0xce0] sm:$0xff]
    %v663 = vld [vmem:[#allocation3 + $0xce8] sm:$0xff]
    %v664 = vld [vmem:[#allocation3 + $0xcf0] sm:$0xff]
    %v665 = vld [vmem:[#allocation3 + $0xcf8] sm:$0xff]
    %v666 = vld [vmem:[#allocation3 + $0xd00] sm:$0xff]
    %v667 = vld [vmem:[#allocation3 + $0xd08] sm:$0xff]
    %v668 = vld [vmem:[#allocation3 + $0xd10] sm:$0xff]
    %v669 = vld [vmem:[#allocation3 + $0xd18] sm:$0xff]
    %v670 = vld [vmem:[#allocation3 + $0xd20] sm:$0xff]
    %v671 = vld [vmem:[#allocation3 + $0xd28] sm:$0xff]
    %v672 = vld [vmem:[#allocation3 + $0xd30] sm:$0xff]
    %v673 = vld [vmem:[#allocation3 + $0xd38] sm:$0xff]
    %v674 = vld [vmem:[#allocation3 + $0xd40] sm:$0xff]
    %v675 = vld [vmem:[#allocation3 + $0xd48] sm:$0xff]
    %v676 = vld [vmem:[#allocation3 + $0xd50] sm:$0xff]
    %v677 = vld [vmem:[#allocation3 + $0xd58] sm:$0xff]
    %v678 = vld [vmem:[#allocation3 + $0xd60] sm:$0xff]
    %v679 = vld [vmem:[#allocation3 + $0xd68] sm:$0xff]
    %v680 = vld [vmem:[#allocation3 + $0xd70] sm:$0xff]
    %v681 = vld [vmem:[#allocation3 + $0xd78] sm:$0xff]
    %v682 = vld [vmem:[#allocation3 + $0xd80] sm:$0xff]
    %v683 = vld [vmem:[#allocation3 + $0xd88] sm:$0xff]
    %v684 = vld [vmem:[#allocation3 + $0xd90] sm:$0xff]
    %v685 = vld [vmem:[#allocation3 + $0xd98] sm:$0xff]
    %v686 = vld [vmem:[#allocation3 + $0xda0] sm:$0xff]
    %v687 = vld [vmem:[#allocation3 + $0xda8] sm:$0xff]
    %v688 = vld [vmem:[#allocation3 + $0xdb0] sm:$0xff]
    %v689 = vld [vmem:[#allocation3 + $0xdb8] sm:$0xff]
    %v690 = vld [vmem:[#allocation3 + $0xdc0] sm:$0xff]
    %v691 = vld [vmem:[#allocation3 + $0xdc8] sm:$0xff]
    %v692 = vld [vmem:[#allocation3 + $0xdd0] sm:$0xff]
    %v693 = vld [vmem:[#allocation3 + $0xdd8] sm:$0xff]
    %v694 = vld [vmem:[#allocation3 + $0xde0] sm:$0xff]
    %v695 = vld [vmem:[#allocation3 + $0xde8] sm:$0xff]
    %v696 = vld [vmem:[#allocation3 + $0xdf0] sm:$0xff]
    %v697 = vld [vmem:[#allocation3 + $0xdf8] sm:$0xff]
    %v698 = vld [vmem:[#allocation3 + $0xe00] sm:$0xff]
    %v699 = vld [vmem:[#allocation3 + $0xe08] sm:$0xff]
    %v700 = vld [vmem:[#allocation3 + $0xe10] sm:$0xff]
    %v701 = vld [vmem:[#allocation3 + $0xe18] sm:$0xff]
    %v702 = vld [vmem:[#allocation3 + $0xe20] sm:$0xff]
    %v703 = vld [vmem:[#allocation3 + $0xe28] sm:$0xff]
    %v704 = vld [vmem:[#allocation3 + $0xe30] sm:$0xff]
    %v705 = vld [vmem:[#allocation3 + $0xe38] sm:$0xff]
    %v706 = vld [vmem:[#allocation3 + $0xe40] sm:$0xff]
    %v707 = vld [vmem:[#allocation3 + $0xe48] sm:$0xff]
    %v708 = vld [vmem:[#allocation3 + $0xe50] sm:$0xff]
    %v709 = vld [vmem:[#allocation3 + $0xe58] sm:$0xff]
    %v710 = vld [vmem:[#allocation3 + $0xe60] sm:$0xff]
    %v711 = vld [vmem:[#allocation3 + $0xe68] sm:$0xff]
    %v712 = vld [vmem:[#allocation3 + $0xe70] sm:$0xff]
    %v713 = vld [vmem:[#allocation3 + $0xe78] sm:$0xff]
    %v714 = vld [vmem:[#allocation3 + $0xe80] sm:$0xff]
    %v715 = vld [vmem:[#allocation3 + $0xe88] sm:$0xff]
    %v716 = vld [vmem:[#allocation3 + $0xe90] sm:$0xff]
    %v717 = vld [vmem:[#allocation3 + $0xe98] sm:$0xff]
    %v718 = vld [vmem:[#allocation3 + $0xea0] sm:$0xff]
    %v719 = vld [vmem:[#allocation3 + $0xea8] sm:$0xff]
    %v720 = vld [vmem:[#allocation3 + $0xeb0] sm:$0xff]
    %v721 = vld [vmem:[#allocation3 + $0xeb8] sm:$0xff]
    %v722 = vld [vmem:[#allocation3 + $0xec0] sm:$0xff]
    %v723 = vld [vmem:[#allocation3 + $0xec8] sm:$0xff]
    %v724 = vld [vmem:[#allocation3 + $0xed0] sm:$0xff]
    %v725 = vld [vmem:[#allocation3 + $0xed8] sm:$0xff]
    %v726 = vld [vmem:[#allocation3 + $0xee0] sm:$0xff]
    %v727 = vld [vmem:[#allocation3 + $0xee8] sm:$0xff]
    %v728 = vld [vmem:[#allocation3 + $0xef0] sm:$0xff]
    %v729 = vld [vmem:[#allocation3 + $0xef8] sm:$0xff]
    %v730 = vld [vmem:[#allocation3 + $0xf00] sm:$0xff]
    %v731 = vld [vmem:[#allocation3 + $0xf08] sm:$0xff]
    %v732 = vld [vmem:[#allocation3 + $0xf10] sm:$0xff]
    %v733 = vld [vmem:[#allocation3 + $0xf18] sm:$0xff]
    %v734 = vld [vmem:[#allocation3 + $0xf20] sm:$0xff]
    %v735 = vld [vmem:[#allocation3 + $0xf28] sm:$0xff]
    %v736 = vld [vmem:[#allocation3 + $0xf30] sm:$0xff]
    %v737 = vld [vmem:[#allocation3 + $0xf38] sm:$0xff]
    %v738 = vld [vmem:[#allocation3 + $0xf40] sm:$0xff]
    %v739 = vld [vmem:[#allocation3 + $0xf48] sm:$0xff]
    %v740 = vld [vmem:[#allocation3 + $0xf50] sm:$0xff]
    %v741 = vld [vmem:[#allocation3 + $0xf58] sm:$0xff]
    %v742 = vld [vmem:[#allocation3 + $0xf60] sm:$0xff]
    %v743 = vld [vmem:[#allocation3 + $0xf68] sm:$0xff]
    %v744 = vld [vmem:[#allocation3 + $0xf70] sm:$0xff]
    %v745 = vld [vmem:[#allocation3 + $0xf78] sm:$0xff]
    %v746 = vld [vmem:[#allocation3 + $0xf80] sm:$0xf]
    %v747 = vld [vmem:[#allocation3 + $0xf88] sm:$0xf]
    %v748 = vld [vmem:[#allocation3 + $0xf90] sm:$0xf]
    %v749 = vld [vmem:[#allocation3 + $0xf98] sm:$0xf]
    %v750 = vld [vmem:[#allocation3 + $0xfa0] sm:$0xf]
    %v751 = vld [vmem:[#allocation3 + $0xfa8] sm:$0xf]
    %v752 = vld [vmem:[#allocation3 + $0xfb0] sm:$0xf]
    %v753 = vld [vmem:[#allocation3 + $0xfb8] sm:$0xf]
    %v754 = vld [vmem:[#allocation6] sm:$0xff]
    %v756 = vlaneseq
    %v757 = vshrl.u32 %v756, 7
    %v758 = vsub.s32 0, %v757
    %v759 = vrot.slane %v754, %v758
    %v760 = vlaneseq
    %v761 = vshrl.u32 %v760, 7
    %v762 = vsub.s32 1, %v761
    %v763 = vrot.slane %v754, %v762
    %v764 = vlaneseq
    %v765 = vshrl.u32 %v764, 7
    %v766 = vsub.s32 2, %v765
    %v767 = vrot.slane %v754, %v766
    %v768 = vlaneseq
    %v769 = vshrl.u32 %v768, 7
    %v770 = vsub.s32 3, %v769
    %v771 = vrot.slane %v754, %v770
    %v772 = vlaneseq
    %v773 = vshrl.u32 %v772, 7
    %v774 = vsub.s32 4, %v773
    %v775 = vrot.slane %v754, %v774
    %v776 = vlaneseq
    %v777 = vshrl.u32 %v776, 7
    %v778 = vsub.s32 5, %v777
    %v779 = vrot.slane %v754, %v778
    %v780 = vlaneseq
    %v781 = vshrl.u32 %v780, 7
    %v782 = vsub.s32 6, %v781
    %v783 = vrot.slane %v754, %v782
    %v784 = vlaneseq
    %v785 = vshrl.u32 %v784, 7
    %v786 = vsub.s32 7, %v785
    %v787 = vrot.slane %v754, %v786
    %vm796 = vcmask 949248
    %v798 = vsel %vm796, %v125, 0
    %v801 = vsel %vm796, %v129, 0
    %v804 = vsel %vm796, %v133, 0
    %v807 = vsel %vm796, %v137, 0
    %v810 = vsel %vm796, %v141, 0
    %v813 = vsel %vm796, %v145, 0
    %v816 = vsel %vm796, %v149, 0
    %v819 = vsel %vm796, %v153, 0
    %v822 = vsel %vm796, %v157, 0
    %v825 = vsel %vm796, %v161, 0
    %v828 = vsel %vm796, %v165, 0
    %v831 = vsel %vm796, %v169, 0
    %v834 = vsel %vm796, %v173, 0
    %v837 = vsel %vm796, %v177, 0
    %v840 = vsel %vm796, %v181, 0
    %v843 = vsel %vm796, %v185, 0
    %v846 = vsel %vm796, %v189, 0
    %v849 = vsel %vm796, %v193, 0
    %v852 = vsel %vm796, %v197, 0
    %v855 = vsel %vm796, %v201, 0
    %v858 = vsel %vm796, %v205, 0
    %v861 = vsel %vm796, %v209, 0
    %v864 = vsel %vm796, %v213, 0
    %v867 = vsel %vm796, %v217, 0
    %v870 = vsel %vm796, %v221, 0
    %v873 = vsel %vm796, %v225, 0
    %v876 = vsel %vm796, %v229, 0
    %v879 = vsel %vm796, %v233, 0
    %v882 = vsel %vm796, %v237, 0
    %v885 = vsel %vm796, %v241, 0
    %v888 = vsel %vm796, %v245, 0
    %v891 = vsel %vm796, %v249, 0
    %vm893 = vcmask 1043456
    %v895 = vsel %vm893, %v746, 0
    %v898 = vsel %vm893, %v747, 0
    %v901 = vsel %vm893, %v748, 0
    %v904 = vsel %vm893, %v749, 0
    %v907 = vsel %vm893, %v750, 0
    %v910 = vsel %vm893, %v751, 0
    %v913 = vsel %vm893, %v752, 0
    %v916 = vsel %vm893, %v753, 0
    %918 = vmatprep.subr.mxu0 %v371
    %919 = vmatpush1.msra.mxu0 %v370
    %920 = vmatprep.subr.mxu0 %v363
    %921 = vmatpush1.msra.mxu0 %v362
    %922 = vmatprep.subr.mxu0 %v355
    %923 = vmatpush1.msra.mxu0 %v354
    %924 = vmatprep.subr.mxu0 %v347
    %925 = vmatpush1.msra.mxu0 %v346
    %926 = vmatprep.subr.mxu0 %v339
    %927 = vmatpush1.msra.mxu0 %v338
    %928 = vmatprep.subr.mxu0 %v331
    %929 = vmatpush1.msra.mxu0 %v330
    %930 = vmatprep.subr.mxu0 %v323
    %931 = vmatpush1.msra.mxu0 %v322
    %932 = vmatprep.subr.mxu0 %v315
    %933 = vmatpush1.msra.mxu0 %v314
    %934 = vmatprep.subr.mxu0 %v307
    %935 = vmatpush1.msra.mxu0 %v306
    %936 = vmatprep.subr.mxu0 %v299
    %937 = vmatpush1.msra.mxu0 %v298
    %938 = vmatprep.subr.mxu0 %v291
    %939 = vmatpush1.msra.mxu0 %v290
    %940 = vmatprep.subr.mxu0 %v283
    %941 = vmatpush1.msra.mxu0 %v282
    %942 = vmatprep.subr.mxu0 %v275
    %943 = vmatpush1.msra.mxu0 %v274
    %944 = vmatprep.subr.mxu0 %v267
    %945 = vmatpush1.msra.mxu0 %v266
    %946 = vmatprep.subr.mxu0 %v259
    %947 = vmatpush1.msra.mxu0 %v258
    %948 = vmatprep.subr.mxu0 %v251
    %949 = vmatpush1.msra.mxu0 %v250
    %950 = vmatprep.subr.mxu0 %v499
    %951 = vmatpush2.msra.mxu0 %v498
    %952 = vmatprep.subr.mxu0 %v491
    %953 = vmatpush2.msra.mxu0 %v490
    %954 = vmatprep.subr.mxu0 %v483
    %955 = vmatpush2.msra.mxu0 %v482
    %956 = vmatprep.subr.mxu0 %v475
    %957 = vmatpush2.msra.mxu0 %v474
    %958 = vmatprep.subr.mxu0 %v467
    %959 = vmatpush2.msra.mxu0 %v466
    %960 = vmatprep.subr.mxu0 %v459
    %961 = vmatpush2.msra.mxu0 %v458
    %962 = vmatprep.subr.mxu0 %v451
    %963 = vmatpush2.msra.mxu0 %v450
    %964 = vmatprep.subr.mxu0 %v443
    %965 = vmatpush2.msra.mxu0 %v442
    %966 = vmatprep.subr.mxu0 %v435
    %967 = vmatpush2.msra.mxu0 %v434
    %968 = vmatprep.subr.mxu0 %v427
    %969 = vmatpush2.msra.mxu0 %v426
    %970 = vmatprep.subr.mxu0 %v419
    %971 = vmatpush2.msra.mxu0 %v418
    %972 = vmatprep.subr.mxu0 %v411
    %973 = vmatpush2.msra.mxu0 %v410
    %974 = vmatprep.subr.mxu0 %v403
    %975 = vmatpush2.msra.mxu0 %v402
    %976 = vmatprep.subr.mxu0 %v395
    %977 = vmatpush2.msra.mxu0 %v394
    %978 = vmatprep.subr.mxu0 %v387
    %979 = vmatpush2.msra.mxu0 %v386
    %980 = vmatprep.subr.mxu0 %v379
    %981 = vmatpush2.msra.mxu0 %v378
    %982 = vmatprep.mubr.f32.mxu0 %v123
    %983 = vmatmul.mubr.f32.gmra.mxu0 %v122
    %v984 = vpop.f32.mrf.mxu0
    %v985 = vadd.f32 %v759, %v984
    %v986 = vpop.f32.mrf.mxu0
    %v987 = vadd.f32 %v763, %v986
    %988 = vmatprep.mubr.f32.mxu0 %v127
    %989 = vmatmul.mubr.f32.gmra.mxu0 %v126
    %v990 = vpop.f32.mrf.mxu0
    %v991 = vadd.f32 %v759, %v990
    %v992 = vpop.f32.mrf.mxu0
    %v993 = vadd.f32 %v763, %v992
    %994 = vmatprep.mubr.f32.mxu0 %v131
    %995 = vmatmul.mubr.f32.gmra.mxu0 %v130
    %v996 = vpop.f32.mrf.mxu0
    %v997 = vadd.f32 %v759, %v996
    %v998 = vpop.f32.mrf.mxu0
    %v999 = vadd.f32 %v763, %v998
    %1000 = vmatprep.mubr.f32.mxu0 %v135
    %1001 = vmatmul.mubr.f32.gmra.mxu0 %v134
    %v1002 = vpop.f32.mrf.mxu0
    %v1003 = vadd.f32 %v759, %v1002
    %v1004 = vpop.f32.mrf.mxu0
    %v1005 = vadd.f32 %v763, %v1004
    %1006 = vmatprep.mubr.f32.mxu0 %v139
    %1007 = vmatmul.mubr.f32.gmra.mxu0 %v138
    %v1008 = vpop.f32.mrf.mxu0
    %v1009 = vadd.f32 %v759, %v1008
    %v1010 = vpop.f32.mrf.mxu0
    %v1011 = vadd.f32 %v763, %v1010
    %1012 = vmatprep.mubr.f32.mxu0 %v143
    %1013 = vmatmul.mubr.f32.gmra.mxu0 %v142
    %v1014 = vpop.f32.mrf.mxu0
    %v1015 = vadd.f32 %v759, %v1014
    %v1016 = vpop.f32.mrf.mxu0
    %v1017 = vadd.f32 %v763, %v1016
    %1018 = vmatprep.mubr.f32.mxu0 %v147
    %1019 = vmatmul.mubr.f32.gmra.mxu0 %v146
    %v1020 = vpop.f32.mrf.mxu0
    %v1021 = vadd.f32 %v759, %v1020
    %v1022 = vpop.f32.mrf.mxu0
    %v1023 = vadd.f32 %v763, %v1022
    %1024 = vmatprep.mubr.f32.mxu0 %v151
    %1025 = vmatmul.mubr.f32.gmra.mxu0 %v150
    %v1026 = vpop.f32.mrf.mxu0
    %v1027 = vadd.f32 %v759, %v1026
    %v1028 = vpop.f32.mrf.mxu0
    %v1029 = vadd.f32 %v763, %v1028
    %1030 = vmatprep.mubr.f32.mxu0 %v155
    %1031 = vmatmul.mubr.f32.gmra.mxu0 %v154
    %v1032 = vpop.f32.mrf.mxu0
    %v1033 = vadd.f32 %v759, %v1032
    %v1034 = vpop.f32.mrf.mxu0
    %v1035 = vadd.f32 %v763, %v1034
    %1036 = vmatprep.mubr.f32.mxu0 %v159
    %1037 = vmatmul.mubr.f32.gmra.mxu0 %v158
    %v1038 = vpop.f32.mrf.mxu0
    %v1039 = vadd.f32 %v759, %v1038
    %v1040 = vpop.f32.mrf.mxu0
    %v1041 = vadd.f32 %v763, %v1040
    %1042 = vmatprep.mubr.f32.mxu0 %v163
    %1043 = vmatmul.mubr.f32.gmra.mxu0 %v162
    %v1044 = vpop.f32.mrf.mxu0
    %v1045 = vadd.f32 %v759, %v1044
    %v1046 = vpop.f32.mrf.mxu0
    %v1047 = vadd.f32 %v763, %v1046
    %1048 = vmatprep.mubr.f32.mxu0 %v167
    %1049 = vmatmul.mubr.f32.gmra.mxu0 %v166
    %v1050 = vpop.f32.mrf.mxu0
    %v1051 = vadd.f32 %v759, %v1050
    %v1052 = vpop.f32.mrf.mxu0
    %v1053 = vadd.f32 %v763, %v1052
    %1054 = vmatprep.mubr.f32.mxu0 %v171
    %1055 = vmatmul.mubr.f32.gmra.mxu0 %v170
    %v1056 = vpop.f32.mrf.mxu0
    %v1057 = vadd.f32 %v759, %v1056
    %v1058 = vpop.f32.mrf.mxu0
    %v1059 = vadd.f32 %v763, %v1058
    %1060 = vmatprep.mubr.f32.mxu0 %v175
    %1061 = vmatmul.mubr.f32.gmra.mxu0 %v174
    %v1062 = vpop.f32.mrf.mxu0
    %v1063 = vadd.f32 %v759, %v1062
    %v1064 = vpop.f32.mrf.mxu0
    %v1065 = vadd.f32 %v763, %v1064
    %1066 = vmatprep.mubr.f32.mxu0 %v179
    %1067 = vmatmul.mubr.f32.gmra.mxu0 %v178
    %v1068 = vpop.f32.mrf.mxu0
    %v1069 = vadd.f32 %v759, %v1068
    %v1070 = vpop.f32.mrf.mxu0
    %v1071 = vadd.f32 %v763, %v1070
    %1072 = vmatprep.mubr.f32.mxu0 %v183
    %1073 = vmatmul.mubr.f32.gmra.mxu0 %v182
    %v1074 = vpop.f32.mrf.mxu0
    %v1075 = vadd.f32 %v759, %v1074
    %v1076 = vpop.f32.mrf.mxu0
    %v1077 = vadd.f32 %v763, %v1076
    %1078 = vmatprep.mubr.f32.mxu0 %v187
    %1079 = vmatmul.mubr.f32.gmra.mxu0 %v186
    %v1080 = vpop.f32.mrf.mxu0
    %v1081 = vadd.f32 %v759, %v1080
    %v1082 = vpop.f32.mrf.mxu0
    %v1083 = vadd.f32 %v763, %v1082
    %1084 = vmatprep.mubr.f32.mxu0 %v191
    %1085 = vmatmul.mubr.f32.gmra.mxu0 %v190
    %v1086 = vpop.f32.mrf.mxu0
    %v1087 = vadd.f32 %v759, %v1086
    %v1088 = vpop.f32.mrf.mxu0
    %v1089 = vadd.f32 %v763, %v1088
    %1090 = vmatprep.mubr.f32.mxu0 %v195
    %1091 = vmatmul.mubr.f32.gmra.mxu0 %v194
    %v1092 = vpop.f32.mrf.mxu0
    %v1093 = vadd.f32 %v759, %v1092
    %v1094 = vpop.f32.mrf.mxu0
    %v1095 = vadd.f32 %v763, %v1094
    %1096 = vmatprep.mubr.f32.mxu0 %v199
    %1097 = vmatmul.mubr.f32.gmra.mxu0 %v198
    %v1098 = vpop.f32.mrf.mxu0
    %v1099 = vadd.f32 %v759, %v1098
    %v1100 = vpop.f32.mrf.mxu0
    %v1101 = vadd.f32 %v763, %v1100
    %1102 = vmatprep.mubr.f32.mxu0 %v203
    %1103 = vmatmul.mubr.f32.gmra.mxu0 %v202
    %v1104 = vpop.f32.mrf.mxu0
    %v1105 = vadd.f32 %v759, %v1104
    %v1106 = vpop.f32.mrf.mxu0
    %v1107 = vadd.f32 %v763, %v1106
    %1108 = vmatprep.mubr.f32.mxu0 %v207
    %1109 = vmatmul.mubr.f32.gmra.mxu0 %v206
    %v1110 = vpop.f32.mrf.mxu0
    %v1111 = vadd.f32 %v759, %v1110
    %v1112 = vpop.f32.mrf.mxu0
    %v1113 = vadd.f32 %v763, %v1112
    %1114 = vmatprep.mubr.f32.mxu0 %v211
    %1115 = vmatmul.mubr.f32.gmra.mxu0 %v210
    %v1116 = vpop.f32.mrf.mxu0
    %v1117 = vadd.f32 %v759, %v1116
    %v1118 = vpop.f32.mrf.mxu0
    %v1119 = vadd.f32 %v763, %v1118
    %1120 = vmatprep.mubr.f32.mxu0 %v215
    %1121 = vmatmul.mubr.f32.gmra.mxu0 %v214
    %v1122 = vpop.f32.mrf.mxu0
    %v1123 = vadd.f32 %v759, %v1122
    %v1124 = vpop.f32.mrf.mxu0
    %v1125 = vadd.f32 %v763, %v1124
    %1126 = vmatprep.mubr.f32.mxu0 %v219
    %1127 = vmatmul.mubr.f32.gmra.mxu0 %v218
    %v1128 = vpop.f32.mrf.mxu0
    %v1129 = vadd.f32 %v759, %v1128
    %v1130 = vpop.f32.mrf.mxu0
    %v1131 = vadd.f32 %v763, %v1130
    %1132 = vmatprep.mubr.f32.mxu0 %v223
    %1133 = vmatmul.mubr.f32.gmra.mxu0 %v222
    %v1134 = vpop.f32.mrf.mxu0
    %v1135 = vadd.f32 %v759, %v1134
    %v1136 = vpop.f32.mrf.mxu0
    %v1137 = vadd.f32 %v763, %v1136
    %1138 = vmatprep.mubr.f32.mxu0 %v227
    %1139 = vmatmul.mubr.f32.gmra.mxu0 %v226
    %v1140 = vpop.f32.mrf.mxu0
    %v1141 = vadd.f32 %v759, %v1140
    %v1142 = vpop.f32.mrf.mxu0
    %v1143 = vadd.f32 %v763, %v1142
    %1144 = vmatprep.mubr.f32.mxu0 %v231
    %1145 = vmatmul.mubr.f32.gmra.mxu0 %v230
    %v1146 = vpop.f32.mrf.mxu0
    %v1147 = vadd.f32 %v759, %v1146
    %v1148 = vpop.f32.mrf.mxu0
    %v1149 = vadd.f32 %v763, %v1148
    %1150 = vmatprep.mubr.f32.mxu0 %v235
    %1151 = vmatmul.mubr.f32.gmra.mxu0 %v234
    %v1152 = vpop.f32.mrf.mxu0
    %v1153 = vadd.f32 %v759, %v1152
    %v1154 = vpop.f32.mrf.mxu0
    %v1155 = vadd.f32 %v763, %v1154
    %1156 = vmatprep.mubr.f32.mxu0 %v239
    %1157 = vmatmul.mubr.f32.gmra.mxu0 %v238
    %v1158 = vpop.f32.mrf.mxu0
    %v1159 = vadd.f32 %v759, %v1158
    %v1160 = vpop.f32.mrf.mxu0
    %v1161 = vadd.f32 %v763, %v1160
    %1162 = vmatprep.mubr.f32.mxu0 %v243
    %1163 = vmatmul.mubr.f32.gmra.mxu0 %v242
    %v1164 = vpop.f32.mrf.mxu0
    %v1165 = vadd.f32 %v759, %v1164
    %v1166 = vpop.f32.mrf.mxu0
    %v1167 = vadd.f32 %v763, %v1166
    %1168 = vmatprep.mubr.f32.mxu0 %v247
    %1169 = vmatmul.mubr.f32.gmra.mxu0 %v246
    %v1170 = vpop.f32.mrf.mxu0
    %v1171 = vadd.f32 %v759, %v1170
    %v1172 = vpop.f32.mrf.mxu0
    %v1173 = vadd.f32 %v763, %v1172
    %1174 = vdwg.mxu0
    %1175 = vmatprep.subr.mxu0 %v627
    %1176 = vmatpush1.msra.mxu0 %v626
    %1177 = vmatprep.subr.mxu0 %v619
    %1178 = vmatpush1.msra.mxu0 %v618
    %1179 = vmatprep.subr.mxu0 %v611
    %1180 = vmatpush1.msra.mxu0 %v610
    %1181 = vmatprep.subr.mxu0 %v603
    %1182 = vmatpush1.msra.mxu0 %v602
    %1183 = vmatprep.subr.mxu0 %v595
    %1184 = vmatpush1.msra.mxu0 %v594
    %1185 = vmatprep.subr.mxu0 %v587
    %1186 = vmatpush1.msra.mxu0 %v586
    %1187 = vmatprep.subr.mxu0 %v579
    %1188 = vmatpush1.msra.mxu0 %v578
    %1189 = vmatprep.subr.mxu0 %v571
    %1190 = vmatpush1.msra.mxu0 %v570
    %1191 = vmatprep.subr.mxu0 %v563
    %1192 = vmatpush1.msra.mxu0 %v562
    %1193 = vmatprep.subr.mxu0 %v555
    %1194 = vmatpush1.msra.mxu0 %v554
    %1195 = vmatprep.subr.mxu0 %v547
    %1196 = vmatpush1.msra.mxu0 %v546
    %1197 = vmatprep.subr.mxu0 %v539
    %1198 = vmatpush1.msra.mxu0 %v538
    %1199 = vmatprep.subr.mxu0 %v531
    %1200 = vmatpush1.msra.mxu0 %v530
    %1201 = vmatprep.subr.mxu0 %v523
    %1202 = vmatpush1.msra.mxu0 %v522
    %1203 = vmatprep.subr.mxu0 %v515
    %1204 = vmatpush1.msra.mxu0 %v514
    %1205 = vmatprep.subr.mxu0 %v507
    %1206 = vmatpush1.msra.mxu0 %v506
    %1207 = vmatprep.subr.mxu0 0.0
    %1208 = vmatpush2.msra.mxu0 0.0
    %1209 = vmatprep.subr.mxu0 %v898
    %1210 = vmatpush2.msra.mxu0 %v895
    %1211 = vmatprep.subr.mxu0 %v739
    %1212 = vmatpush2.msra.mxu0 %v738
    %1213 = vmatprep.subr.mxu0 %v731
    %1214 = vmatpush2.msra.mxu0 %v730
    %1215 = vmatprep.subr.mxu0 %v723
    %1216 = vmatpush2.msra.mxu0 %v722
    %1217 = vmatprep.subr.mxu0 %v715
    %1218 = vmatpush2.msra.mxu0 %v714
    %1219 = vmatprep.subr.mxu0 %v707
    %1220 = vmatpush2.msra.mxu0 %v706
    %1221 = vmatprep.subr.mxu0 %v699
    %1222 = vmatpush2.msra.mxu0 %v698
    %1223 = vmatprep.subr.mxu0 %v691
    %1224 = vmatpush2.msra.mxu0 %v690
    %1225 = vmatprep.subr.mxu0 %v683
    %1226 = vmatpush2.msra.mxu0 %v682
    %1227 = vmatprep.subr.mxu0 %v675
    %1228 = vmatpush2.msra.mxu0 %v674
    %1229 = vmatprep.subr.mxu0 %v667
    %1230 = vmatpush2.msra.mxu0 %v666
    %1231 = vmatprep.subr.mxu0 %v659
    %1232 = vmatpush2.msra.mxu0 %v658
    %1233 = vmatprep.subr.mxu0 %v651
    %1234 = vmatpush2.msra.mxu0 %v650
    %1235 = vmatprep.subr.mxu0 %v643
    %1236 = vmatpush2.msra.mxu0 %v642
    %1237 = vmatprep.subr.mxu0 %v635
    %1238 = vmatpush2.msra.mxu0 %v634
    %1239 = vmatprep.mubr.f32.mxu0 %v798
    %1240 = vmatmul.mubr.f32.gmra.mxu0 %v124
    %v1241 = vpop.f32.mrf.mxu0
    %v1242 = vadd.f32 %v985, %v1241
    %v1243 = vpop.f32.mrf.mxu0
    %v1244 = vadd.f32 %v987, %v1243
    %1245 = vmatprep.mubr.f32.mxu0 %v801
    %1246 = vmatmul.mubr.f32.gmra.mxu0 %v128
    %v1247 = vpop.f32.mrf.mxu0
    %v1248 = vadd.f32 %v991, %v1247
    %v1249 = vpop.f32.mrf.mxu0
    %v1250 = vadd.f32 %v993, %v1249
    %1251 = vmatprep.mubr.f32.mxu0 %v804
    %1252 = vmatmul.mubr.f32.gmra.mxu0 %v132
    %v1253 = vpop.f32.mrf.mxu0
    %v1254 = vadd.f32 %v997, %v1253
    %v1255 = vpop.f32.mrf.mxu0
    %v1256 = vadd.f32 %v999, %v1255
    %1257 = vmatprep.mubr.f32.mxu0 %v807
    %1258 = vmatmul.mubr.f32.gmra.mxu0 %v136
    %v1259 = vpop.f32.mrf.mxu0
    %v1260 = vadd.f32 %v1003, %v1259
    %v1261 = vpop.f32.mrf.mxu0
    %v1262 = vadd.f32 %v1005, %v1261
    %1263 = vmatprep.mubr.f32.mxu0 %v810
    %1264 = vmatmul.mubr.f32.gmra.mxu0 %v140
    %v1265 = vpop.f32.mrf.mxu0
    %v1266 = vadd.f32 %v1009, %v1265
    %v1267 = vpop.f32.mrf.mxu0
    %v1268 = vadd.f32 %v1011, %v1267
    %1269 = vmatprep.mubr.f32.mxu0 %v813
    %1270 = vmatmul.mubr.f32.gmra.mxu0 %v144
    %v1271 = vpop.f32.mrf.mxu0
    %v1272 = vadd.f32 %v1015, %v1271
    %v1273 = vpop.f32.mrf.mxu0
    %v1274 = vadd.f32 %v1017, %v1273
    %1275 = vmatprep.mubr.f32.mxu0 %v816
    %1276 = vmatmul.mubr.f32.gmra.mxu0 %v148
    %v1277 = vpop.f32.mrf.mxu0
    %v1278 = vadd.f32 %v1021, %v1277
    %v1279 = vpop.f32.mrf.mxu0
    %v1280 = vadd.f32 %v1023, %v1279
    %1281 = vmatprep.mubr.f32.mxu0 %v819
    %1282 = vmatmul.mubr.f32.gmra.mxu0 %v152
    %v1283 = vpop.f32.mrf.mxu0
    %v1284 = vadd.f32 %v1027, %v1283
    %v1285 = vpop.f32.mrf.mxu0
    %v1286 = vadd.f32 %v1029, %v1285
    %1287 = vmatprep.mubr.f32.mxu0 %v822
    %1288 = vmatmul.mubr.f32.gmra.mxu0 %v156
    %v1289 = vpop.f32.mrf.mxu0
    %v1290 = vadd.f32 %v1033, %v1289
    %v1291 = vpop.f32.mrf.mxu0
    %v1292 = vadd.f32 %v1035, %v1291
    %1293 = vmatprep.mubr.f32.mxu0 %v825
    %1294 = vmatmul.mubr.f32.gmra.mxu0 %v160
    %v1295 = vpop.f32.mrf.mxu0
    %v1296 = vadd.f32 %v1039, %v1295
    %v1297 = vpop.f32.mrf.mxu0
    %v1298 = vadd.f32 %v1041, %v1297
    %1299 = vmatprep.mubr.f32.mxu0 %v828
    %1300 = vmatmul.mubr.f32.gmra.mxu0 %v164
    %v1301 = vpop.f32.mrf.mxu0
    %v1302 = vadd.f32 %v1045, %v1301
    %v1303 = vpop.f32.mrf.mxu0
    %v1304 = vadd.f32 %v1047, %v1303
    %1305 = vmatprep.mubr.f32.mxu0 %v831
    %1306 = vmatmul.mubr.f32.gmra.mxu0 %v168
    %v1307 = vpop.f32.mrf.mxu0
    %v1308 = vadd.f32 %v1051, %v1307
    %v1309 = vpop.f32.mrf.mxu0
    %v1310 = vadd.f32 %v1053, %v1309
    %1311 = vmatprep.mubr.f32.mxu0 %v834
    %1312 = vmatmul.mubr.f32.gmra.mxu0 %v172
    %v1313 = vpop.f32.mrf.mxu0
    %v1314 = vadd.f32 %v1057, %v1313
    %v1315 = vpop.f32.mrf.mxu0
    %v1316 = vadd.f32 %v1059, %v1315
    %1317 = vmatprep.mubr.f32.mxu0 %v837
    %1318 = vmatmul.mubr.f32.gmra.mxu0 %v176
    %v1319 = vpop.f32.mrf.mxu0
    %v1320 = vadd.f32 %v1063, %v1319
    %v1321 = vpop.f32.mrf.mxu0
    %v1322 = vadd.f32 %v1065, %v1321
    %1323 = vmatprep.mubr.f32.mxu0 %v840
    %1324 = vmatmul.mubr.f32.gmra.mxu0 %v180
    %v1325 = vpop.f32.mrf.mxu0
    %v1326 = vadd.f32 %v1069, %v1325
    %v1327 = vpop.f32.mrf.mxu0
    %v1328 = vadd.f32 %v1071, %v1327
    %1329 = vmatprep.mubr.f32.mxu0 %v843
    %1330 = vmatmul.mubr.f32.gmra.mxu0 %v184
    %v1331 = vpop.f32.mrf.mxu0
    %v1332 = vadd.f32 %v1075, %v1331
    %v1333 = vpop.f32.mrf.mxu0
    %v1334 = vadd.f32 %v1077, %v1333
    %1335 = vmatprep.mubr.f32.mxu0 %v846
    %1336 = vmatmul.mubr.f32.gmra.mxu0 %v188
    %v1337 = vpop.f32.mrf.mxu0
    %v1338 = vadd.f32 %v1081, %v1337
    %v1339 = vpop.f32.mrf.mxu0
    %v1340 = vadd.f32 %v1083, %v1339
    %1341 = vmatprep.mubr.f32.mxu0 %v849
    %1342 = vmatmul.mubr.f32.gmra.mxu0 %v192
    %v1343 = vpop.f32.mrf.mxu0
    %v1344 = vadd.f32 %v1087, %v1343
    %v1345 = vpop.f32.mrf.mxu0
    %v1346 = vadd.f32 %v1089, %v1345
    %1347 = vmatprep.mubr.f32.mxu0 %v852
    %1348 = vmatmul.mubr.f32.gmra.mxu0 %v196
    %v1349 = vpop.f32.mrf.mxu0
    %v1350 = vadd.f32 %v1093, %v1349
    %v1351 = vpop.f32.mrf.mxu0
    %v1352 = vadd.f32 %v1095, %v1351
    %1353 = vmatprep.mubr.f32.mxu0 %v855
    %1354 = vmatmul.mubr.f32.gmra.mxu0 %v200
    %v1355 = vpop.f32.mrf.mxu0
    %v1356 = vadd.f32 %v1099, %v1355
    %v1357 = vpop.f32.mrf.mxu0
    %v1358 = vadd.f32 %v1101, %v1357
    %1359 = vmatprep.mubr.f32.mxu0 %v858
    %1360 = vmatmul.mubr.f32.gmra.mxu0 %v204
    %v1361 = vpop.f32.mrf.mxu0
    %v1362 = vadd.f32 %v1105, %v1361
    %v1363 = vpop.f32.mrf.mxu0
    %v1364 = vadd.f32 %v1107, %v1363
    %1365 = vmatprep.mubr.f32.mxu0 %v861
    %1366 = vmatmul.mubr.f32.gmra.mxu0 %v208
    %v1367 = vpop.f32.mrf.mxu0
    %v1368 = vadd.f32 %v1111, %v1367
    %v1369 = vpop.f32.mrf.mxu0
    %v1370 = vadd.f32 %v1113, %v1369
    %1371 = vmatprep.mubr.f32.mxu0 %v864
    %1372 = vmatmul.mubr.f32.gmra.mxu0 %v212
    %v1373 = vpop.f32.mrf.mxu0
    %v1374 = vadd.f32 %v1117, %v1373
    %v1375 = vpop.f32.mrf.mxu0
    %v1376 = vadd.f32 %v1119, %v1375
    %1377 = vmatprep.mubr.f32.mxu0 %v867
    %1378 = vmatmul.mubr.f32.gmra.mxu0 %v216
    %v1379 = vpop.f32.mrf.mxu0
    %v1380 = vadd.f32 %v1123, %v1379
    %v1381 = vpop.f32.mrf.mxu0
    %v1382 = vadd.f32 %v1125, %v1381
    %1383 = vmatprep.mubr.f32.mxu0 %v870
    %1384 = vmatmul.mubr.f32.gmra.mxu0 %v220
    %v1385 = vpop.f32.mrf.mxu0
    %v1386 = vadd.f32 %v1129, %v1385
    %v1387 = vpop.f32.mrf.mxu0
    %v1388 = vadd.f32 %v1131, %v1387
    %1389 = vmatprep.mubr.f32.mxu0 %v873
    %1390 = vmatmul.mubr.f32.gmra.mxu0 %v224
    %v1391 = vpop.f32.mrf.mxu0
    %v1392 = vadd.f32 %v1135, %v1391
    %v1393 = vpop.f32.mrf.mxu0
    %v1394 = vadd.f32 %v1137, %v1393
    %1395 = vmatprep.mubr.f32.mxu0 %v876
    %1396 = vmatmul.mubr.f32.gmra.mxu0 %v228
    %v1397 = vpop.f32.mrf.mxu0
    %v1398 = vadd.f32 %v1141, %v1397
    %v1399 = vpop.f32.mrf.mxu0
    %v1400 = vadd.f32 %v1143, %v1399
    %1401 = vmatprep.mubr.f32.mxu0 %v879
    %1402 = vmatmul.mubr.f32.gmra.mxu0 %v232
    %v1403 = vpop.f32.mrf.mxu0
    %v1404 = vadd.f32 %v1147, %v1403
    %v1405 = vpop.f32.mrf.mxu0
    %v1406 = vadd.f32 %v1149, %v1405
    %1407 = vmatprep.mubr.f32.mxu0 %v882
    %1408 = vmatmul.mubr.f32.gmra.mxu0 %v236
    %v1409 = vpop.f32.mrf.mxu0
    %v1410 = vadd.f32 %v1153, %v1409
    %v1411 = vpop.f32.mrf.mxu0
    %v1412 = vadd.f32 %v1155, %v1411
    %1413 = vmatprep.mubr.f32.mxu0 %v885
    %1414 = vmatmul.mubr.f32.gmra.mxu0 %v240
    %v1415 = vpop.f32.mrf.mxu0
    %v1416 = vadd.f32 %v1159, %v1415
    %v1417 = vpop.f32.mrf.mxu0
    %v1418 = vadd.f32 %v1161, %v1417
    %1419 = vmatprep.mubr.f32.mxu0 %v888
    %1420 = vmatmul.mubr.f32.gmra.mxu0 %v244
    %v1421 = vpop.f32.mrf.mxu0
    %v1422 = vadd.f32 %v1165, %v1421
    %v1423 = vpop.f32.mrf.mxu0
    %v1424 = vadd.f32 %v1167, %v1423
    %1425 = vmatprep.mubr.f32.mxu0 %v891
    %1426 = vmatmul.mubr.f32.gmra.mxu0 %v248
    %v1427 = vpop.f32.mrf.mxu0
    %v1428 = vadd.f32 %v1171, %v1427
    %v1429 = vpop.f32.mrf.mxu0
    %v1430 = vadd.f32 %v1173, %v1429
    %1431 = vdwg.mxu0
    %1432 = vmatprep.subr.mxu0 %v373
    %1433 = vmatpush1.msra.mxu0 %v372
    %1434 = vmatprep.subr.mxu0 %v365
    %1435 = vmatpush1.msra.mxu0 %v364
    %1436 = vmatprep.subr.mxu0 %v357
    %1437 = vmatpush1.msra.mxu0 %v356
    %1438 = vmatprep.subr.mxu0 %v349
    %1439 = vmatpush1.msra.mxu0 %v348
    %1440 = vmatprep.subr.mxu0 %v341
    %1441 = vmatpush1.msra.mxu0 %v340
    %1442 = vmatprep.subr.mxu0 %v333
    %1443 = vmatpush1.msra.mxu0 %v332
    %1444 = vmatprep.subr.mxu0 %v325
    %1445 = vmatpush1.msra.mxu0 %v324
    %1446 = vmatprep.subr.mxu0 %v317
    %1447 = vmatpush1.msra.mxu0 %v316
    %1448 = vmatprep.subr.mxu0 %v309
    %1449 = vmatpush1.msra.mxu0 %v308
    %1450 = vmatprep.subr.mxu0 %v301
    %1451 = vmatpush1.msra.mxu0 %v300
    %1452 = vmatprep.subr.mxu0 %v293
    %1453 = vmatpush1.msra.mxu0 %v292
    %1454 = vmatprep.subr.mxu0 %v285
    %1455 = vmatpush1.msra.mxu0 %v284
    %1456 = vmatprep.subr.mxu0 %v277
    %1457 = vmatpush1.msra.mxu0 %v276
    %1458 = vmatprep.subr.mxu0 %v269
    %1459 = vmatpush1.msra.mxu0 %v268
    %1460 = vmatprep.subr.mxu0 %v261
    %1461 = vmatpush1.msra.mxu0 %v260
    %1462 = vmatprep.subr.mxu0 %v253
    %1463 = vmatpush1.msra.mxu0 %v252
    %1464 = vmatprep.subr.mxu0 %v501
    %1465 = vmatpush2.msra.mxu0 %v500
    %1466 = vmatprep.subr.mxu0 %v493
    %1467 = vmatpush2.msra.mxu0 %v492
    %1468 = vmatprep.subr.mxu0 %v485
    %1469 = vmatpush2.msra.mxu0 %v484
    %1470 = vmatprep.subr.mxu0 %v477
    %1471 = vmatpush2.msra.mxu0 %v476
    %1472 = vmatprep.subr.mxu0 %v469
    %1473 = vmatpush2.msra.mxu0 %v468
    %1474 = vmatprep.subr.mxu0 %v461
    %1475 = vmatpush2.msra.mxu0 %v460
    %1476 = vmatprep.subr.mxu0 %v453
    %1477 = vmatpush2.msra.mxu0 %v452
    %1478 = vmatprep.subr.mxu0 %v445
    %1479 = vmatpush2.msra.mxu0 %v444
    %1480 = vmatprep.subr.mxu0 %v437
    %1481 = vmatpush2.msra.mxu0 %v436
    %1482 = vmatprep.subr.mxu0 %v429
    %1483 = vmatpush2.msra.mxu0 %v428
    %1484 = vmatprep.subr.mxu0 %v421
    %1485 = vmatpush2.msra.mxu0 %v420
    %1486 = vmatprep.subr.mxu0 %v413
    %1487 = vmatpush2.msra.mxu0 %v412
    %1488 = vmatprep.subr.mxu0 %v405
    %1489 = vmatpush2.msra.mxu0 %v404
    %1490 = vmatprep.subr.mxu0 %v397
    %1491 = vmatpush2.msra.mxu0 %v396
    %1492 = vmatprep.subr.mxu0 %v389
    %1493 = vmatpush2.msra.mxu0 %v388
    %1494 = vmatprep.subr.mxu0 %v381
    %1495 = vmatpush2.msra.mxu0 %v380
    %1496 = vmatprep.mubr.f32.mxu0 %v123
    %1497 = vmatmul.mubr.f32.gmra.mxu0 %v122
    %v1498 = vpop.f32.mrf.mxu0
    %v1499 = vadd.f32 %v767, %v1498
    %v1500 = vpop.f32.mrf.mxu0
    %v1501 = vadd.f32 %v771, %v1500
    %1502 = vmatprep.mubr.f32.mxu0 %v127
    %1503 = vmatmul.mubr.f32.gmra.mxu0 %v126
    %v1504 = vpop.f32.mrf.mxu0
    %v1505 = vadd.f32 %v767, %v1504
    %v1506 = vpop.f32.mrf.mxu0
    %v1507 = vadd.f32 %v771, %v1506
    %1508 = vmatprep.mubr.f32.mxu0 %v131
    %1509 = vmatmul.mubr.f32.gmra.mxu0 %v130
    %v1510 = vpop.f32.mrf.mxu0
    %v1511 = vadd.f32 %v767, %v1510
    %v1512 = vpop.f32.mrf.mxu0
    %v1513 = vadd.f32 %v771, %v1512
    %1514 = vmatprep.mubr.f32.mxu0 %v135
    %1515 = vmatmul.mubr.f32.gmra.mxu0 %v134
    %v1516 = vpop.f32.mrf.mxu0
    %v1517 = vadd.f32 %v767, %v1516
    %v1518 = vpop.f32.mrf.mxu0
    %v1519 = vadd.f32 %v771, %v1518
    %1520 = vmatprep.mubr.f32.mxu0 %v139
    %1521 = vmatmul.mubr.f32.gmra.mxu0 %v138
    %v1522 = vpop.f32.mrf.mxu0
    %v1523 = vadd.f32 %v767, %v1522
    %v1524 = vpop.f32.mrf.mxu0
    %v1525 = vadd.f32 %v771, %v1524
    %1526 = vmatprep.mubr.f32.mxu0 %v143
    %1527 = vmatmul.mubr.f32.gmra.mxu0 %v142
    %v1528 = vpop.f32.mrf.mxu0
    %v1529 = vadd.f32 %v767, %v1528
    %v1530 = vpop.f32.mrf.mxu0
    %v1531 = vadd.f32 %v771, %v1530
    %1532 = vmatprep.mubr.f32.mxu0 %v147
    %1533 = vmatmul.mubr.f32.gmra.mxu0 %v146
    %v1534 = vpop.f32.mrf.mxu0
    %v1535 = vadd.f32 %v767, %v1534
    %v1536 = vpop.f32.mrf.mxu0
    %v1537 = vadd.f32 %v771, %v1536
    %1538 = vmatprep.mubr.f32.mxu0 %v151
    %1539 = vmatmul.mubr.f32.gmra.mxu0 %v150
    %v1540 = vpop.f32.mrf.mxu0
    %v1541 = vadd.f32 %v767, %v1540
    %v1542 = vpop.f32.mrf.mxu0
    %v1543 = vadd.f32 %v771, %v1542
    %1544 = vmatprep.mubr.f32.mxu0 %v155
    %1545 = vmatmul.mubr.f32.gmra.mxu0 %v154
    %v1546 = vpop.f32.mrf.mxu0
    %v1547 = vadd.f32 %v767, %v1546
    %v1548 = vpop.f32.mrf.mxu0
    %v1549 = vadd.f32 %v771, %v1548
    %1550 = vmatprep.mubr.f32.mxu0 %v159
    %1551 = vmatmul.mubr.f32.gmra.mxu0 %v158
    %v1552 = vpop.f32.mrf.mxu0
    %v1553 = vadd.f32 %v767, %v1552
    %v1554 = vpop.f32.mrf.mxu0
    %v1555 = vadd.f32 %v771, %v1554
    %1556 = vmatprep.mubr.f32.mxu0 %v163
    %1557 = vmatmul.mubr.f32.gmra.mxu0 %v162
    %v1558 = vpop.f32.mrf.mxu0
    %v1559 = vadd.f32 %v767, %v1558
    %v1560 = vpop.f32.mrf.mxu0
    %v1561 = vadd.f32 %v771, %v1560
    %1562 = vmatprep.mubr.f32.mxu0 %v167
    %1563 = vmatmul.mubr.f32.gmra.mxu0 %v166
    %v1564 = vpop.f32.mrf.mxu0
    %v1565 = vadd.f32 %v767, %v1564
    %v1566 = vpop.f32.mrf.mxu0
    %v1567 = vadd.f32 %v771, %v1566
    %1568 = vmatprep.mubr.f32.mxu0 %v171
    %1569 = vmatmul.mubr.f32.gmra.mxu0 %v170
    %v1570 = vpop.f32.mrf.mxu0
    %v1571 = vadd.f32 %v767, %v1570
    %v1572 = vpop.f32.mrf.mxu0
    %v1573 = vadd.f32 %v771, %v1572
    %1574 = vmatprep.mubr.f32.mxu0 %v175
    %1575 = vmatmul.mubr.f32.gmra.mxu0 %v174
    %v1576 = vpop.f32.mrf.mxu0
    %v1577 = vadd.f32 %v767, %v1576
    %v1578 = vpop.f32.mrf.mxu0
    %v1579 = vadd.f32 %v771, %v1578
    %1580 = vmatprep.mubr.f32.mxu0 %v179
    %1581 = vmatmul.mubr.f32.gmra.mxu0 %v178
    %v1582 = vpop.f32.mrf.mxu0
    %v1583 = vadd.f32 %v767, %v1582
    %v1584 = vpop.f32.mrf.mxu0
    %v1585 = vadd.f32 %v771, %v1584
    %1586 = vmatprep.mubr.f32.mxu0 %v183
    %1587 = vmatmul.mubr.f32.gmra.mxu0 %v182
    %v1588 = vpop.f32.mrf.mxu0
    %v1589 = vadd.f32 %v767, %v1588
    %v1590 = vpop.f32.mrf.mxu0
    %v1591 = vadd.f32 %v771, %v1590
    %1592 = vmatprep.mubr.f32.mxu0 %v187
    %1593 = vmatmul.mubr.f32.gmra.mxu0 %v186
    %v1594 = vpop.f32.mrf.mxu0
    %v1595 = vadd.f32 %v767, %v1594
    %v1596 = vpop.f32.mrf.mxu0
    %v1597 = vadd.f32 %v771, %v1596
    %1598 = vmatprep.mubr.f32.mxu0 %v191
    %1599 = vmatmul.mubr.f32.gmra.mxu0 %v190
    %v1600 = vpop.f32.mrf.mxu0
    %v1601 = vadd.f32 %v767, %v1600
    %v1602 = vpop.f32.mrf.mxu0
    %v1603 = vadd.f32 %v771, %v1602
    %1604 = vmatprep.mubr.f32.mxu0 %v195
    %1605 = vmatmul.mubr.f32.gmra.mxu0 %v194
    %v1606 = vpop.f32.mrf.mxu0
    %v1607 = vadd.f32 %v767, %v1606
    %v1608 = vpop.f32.mrf.mxu0
    %v1609 = vadd.f32 %v771, %v1608
    %1610 = vmatprep.mubr.f32.mxu0 %v199
    %1611 = vmatmul.mubr.f32.gmra.mxu0 %v198
    %v1612 = vpop.f32.mrf.mxu0
    %v1613 = vadd.f32 %v767, %v1612
    %v1614 = vpop.f32.mrf.mxu0
    %v1615 = vadd.f32 %v771, %v1614
    %1616 = vmatprep.mubr.f32.mxu0 %v203
    %1617 = vmatmul.mubr.f32.gmra.mxu0 %v202
    %v1618 = vpop.f32.mrf.mxu0
    %v1619 = vadd.f32 %v767, %v1618
    %v1620 = vpop.f32.mrf.mxu0
    %v1621 = vadd.f32 %v771, %v1620
    %1622 = vmatprep.mubr.f32.mxu0 %v207
    %1623 = vmatmul.mubr.f32.gmra.mxu0 %v206
    %v1624 = vpop.f32.mrf.mxu0
    %v1625 = vadd.f32 %v767, %v1624
    %v1626 = vpop.f32.mrf.mxu0
    %v1627 = vadd.f32 %v771, %v1626
    %1628 = vmatprep.mubr.f32.mxu0 %v211
    %1629 = vmatmul.mubr.f32.gmra.mxu0 %v210
    %v1630 = vpop.f32.mrf.mxu0
    %v1631 = vadd.f32 %v767, %v1630
    %v1632 = vpop.f32.mrf.mxu0
    %v1633 = vadd.f32 %v771, %v1632
    %1634 = vmatprep.mubr.f32.mxu0 %v215
    %1635 = vmatmul.mubr.f32.gmra.mxu0 %v214
    %v1636 = vpop.f32.mrf.mxu0
    %v1637 = vadd.f32 %v767, %v1636
    %v1638 = vpop.f32.mrf.mxu0
    %v1639 = vadd.f32 %v771, %v1638
    %1640 = vmatprep.mubr.f32.mxu0 %v219
    %1641 = vmatmul.mubr.f32.gmra.mxu0 %v218
    %v1642 = vpop.f32.mrf.mxu0
    %v1643 = vadd.f32 %v767, %v1642
    %v1644 = vpop.f32.mrf.mxu0
    %v1645 = vadd.f32 %v771, %v1644
    %1646 = vmatprep.mubr.f32.mxu0 %v223
    %1647 = vmatmul.mubr.f32.gmra.mxu0 %v222
    %v1648 = vpop.f32.mrf.mxu0
    %v1649 = vadd.f32 %v767, %v1648
    %v1650 = vpop.f32.mrf.mxu0
    %v1651 = vadd.f32 %v771, %v1650
    %1652 = vmatprep.mubr.f32.mxu0 %v227
    %1653 = vmatmul.mubr.f32.gmra.mxu0 %v226
    %v1654 = vpop.f32.mrf.mxu0
    %v1655 = vadd.f32 %v767, %v1654
    %v1656 = vpop.f32.mrf.mxu0
    %v1657 = vadd.f32 %v771, %v1656
    %1658 = vmatprep.mubr.f32.mxu0 %v231
    %1659 = vmatmul.mubr.f32.gmra.mxu0 %v230
    %v1660 = vpop.f32.mrf.mxu0
    %v1661 = vadd.f32 %v767, %v1660
    %v1662 = vpop.f32.mrf.mxu0
    %v1663 = vadd.f32 %v771, %v1662
    %1664 = vmatprep.mubr.f32.mxu0 %v235
    %1665 = vmatmul.mubr.f32.gmra.mxu0 %v234
    %v1666 = vpop.f32.mrf.mxu0
    %v1667 = vadd.f32 %v767, %v1666
    %v1668 = vpop.f32.mrf.mxu0
    %v1669 = vadd.f32 %v771, %v1668
    %1670 = vmatprep.mubr.f32.mxu0 %v239
    %1671 = vmatmul.mubr.f32.gmra.mxu0 %v238
    %v1672 = vpop.f32.mrf.mxu0
    %v1673 = vadd.f32 %v767, %v1672
    %v1674 = vpop.f32.mrf.mxu0
    %v1675 = vadd.f32 %v771, %v1674
    %1676 = vmatprep.mubr.f32.mxu0 %v243
    %1677 = vmatmul.mubr.f32.gmra.mxu0 %v242
    %v1678 = vpop.f32.mrf.mxu0
    %v1679 = vadd.f32 %v767, %v1678
    %v1680 = vpop.f32.mrf.mxu0
    %v1681 = vadd.f32 %v771, %v1680
    %1682 = vmatprep.mubr.f32.mxu0 %v247
    %1683 = vmatmul.mubr.f32.gmra.mxu0 %v246
    %v1684 = vpop.f32.mrf.mxu0
    %v1685 = vadd.f32 %v767, %v1684
    %v1686 = vpop.f32.mrf.mxu0
    %v1687 = vadd.f32 %v771, %v1686
    %1688 = vdwg.mxu0
    %1689 = vmatprep.subr.mxu0 %v629
    %1690 = vmatpush1.msra.mxu0 %v628
    %1691 = vmatprep.subr.mxu0 %v621
    %1692 = vmatpush1.msra.mxu0 %v620
    %1693 = vmatprep.subr.mxu0 %v613
    %1694 = vmatpush1.msra.mxu0 %v612
    %1695 = vmatprep.subr.mxu0 %v605
    %1696 = vmatpush1.msra.mxu0 %v604
    %1697 = vmatprep.subr.mxu0 %v597
    %1698 = vmatpush1.msra.mxu0 %v596
    %1699 = vmatprep.subr.mxu0 %v589
    %1700 = vmatpush1.msra.mxu0 %v588
    %1701 = vmatprep.subr.mxu0 %v581
    %1702 = vmatpush1.msra.mxu0 %v580
    %1703 = vmatprep.subr.mxu0 %v573
    %1704 = vmatpush1.msra.mxu0 %v572
    %1705 = vmatprep.subr.mxu0 %v565
    %1706 = vmatpush1.msra.mxu0 %v564
    %1707 = vmatprep.subr.mxu0 %v557
    %1708 = vmatpush1.msra.mxu0 %v556
    %1709 = vmatprep.subr.mxu0 %v549
    %1710 = vmatpush1.msra.mxu0 %v548
    %1711 = vmatprep.subr.mxu0 %v541
    %1712 = vmatpush1.msra.mxu0 %v540
    %1713 = vmatprep.subr.mxu0 %v533
    %1714 = vmatpush1.msra.mxu0 %v532
    %1715 = vmatprep.subr.mxu0 %v525
    %1716 = vmatpush1.msra.mxu0 %v524
    %1717 = vmatprep.subr.mxu0 %v517
    %1718 = vmatpush1.msra.mxu0 %v516
    %1719 = vmatprep.subr.mxu0 %v509
    %1720 = vmatpush1.msra.mxu0 %v508
    %1721 = vmatprep.subr.mxu0 0.0
    %1722 = vmatpush2.msra.mxu0 0.0
    %1723 = vmatprep.subr.mxu0 %v904
    %1724 = vmatpush2.msra.mxu0 %v901
    %1725 = vmatprep.subr.mxu0 %v741
    %1726 = vmatpush2.msra.mxu0 %v740
    %1727 = vmatprep.subr.mxu0 %v733
    %1728 = vmatpush2.msra.mxu0 %v732
    %1729 = vmatprep.subr.mxu0 %v725
    %1730 = vmatpush2.msra.mxu0 %v724
    %1731 = vmatprep.subr.mxu0 %v717
    %1732 = vmatpush2.msra.mxu0 %v716
    %1733 = vmatprep.subr.mxu0 %v709
    %1734 = vmatpush2.msra.mxu0 %v708
    %1735 = vmatprep.subr.mxu0 %v701
    %1736 = vmatpush2.msra.mxu0 %v700
    %1737 = vmatprep.subr.mxu0 %v693
    %1738 = vmatpush2.msra.mxu0 %v692
    %1739 = vmatprep.subr.mxu0 %v685
    %1740 = vmatpush2.msra.mxu0 %v684
    %1741 = vmatprep.subr.mxu0 %v677
    %1742 = vmatpush2.msra.mxu0 %v676
    %1743 = vmatprep.subr.mxu0 %v669
    %1744 = vmatpush2.msra.mxu0 %v668
    %1745 = vmatprep.subr.mxu0 %v661
    %1746 = vmatpush2.msra.mxu0 %v660
    %1747 = vmatprep.subr.mxu0 %v653
    %1748 = vmatpush2.msra.mxu0 %v652
    %1749 = vmatprep.subr.mxu0 %v645
    %1750 = vmatpush2.msra.mxu0 %v644
    %1751 = vmatprep.subr.mxu0 %v637
    %1752 = vmatpush2.msra.mxu0 %v636
    %1753 = vmatprep.mubr.f32.mxu0 %v798
    %1754 = vmatmul.mubr.f32.gmra.mxu0 %v124
    %v1755 = vpop.f32.mrf.mxu0
    %v1756 = vadd.f32 %v1499, %v1755
    %v1757 = vpop.f32.mrf.mxu0
    %v1758 = vadd.f32 %v1501, %v1757
    %1759 = vmatprep.mubr.f32.mxu0 %v801
    %1760 = vmatmul.mubr.f32.gmra.mxu0 %v128
    %v1761 = vpop.f32.mrf.mxu0
    %v1762 = vadd.f32 %v1505, %v1761
    %v1763 = vpop.f32.mrf.mxu0
    %v1764 = vadd.f32 %v1507, %v1763
    %1765 = vmatprep.mubr.f32.mxu0 %v804
    %1766 = vmatmul.mubr.f32.gmra.mxu0 %v132
    %v1767 = vpop.f32.mrf.mxu0
    %v1768 = vadd.f32 %v1511, %v1767
    %v1769 = vpop.f32.mrf.mxu0
    %v1770 = vadd.f32 %v1513, %v1769
    %1771 = vmatprep.mubr.f32.mxu0 %v807
    %1772 = vmatmul.mubr.f32.gmra.mxu0 %v136
    %v1773 = vpop.f32.mrf.mxu0
    %v1774 = vadd.f32 %v1517, %v1773
    %v1775 = vpop.f32.mrf.mxu0
    %v1776 = vadd.f32 %v1519, %v1775
    %1777 = vmatprep.mubr.f32.mxu0 %v810
    %1778 = vmatmul.mubr.f32.gmra.mxu0 %v140
    %v1779 = vpop.f32.mrf.mxu0
    %v1780 = vadd.f32 %v1523, %v1779
    %v1781 = vpop.f32.mrf.mxu0
    %v1782 = vadd.f32 %v1525, %v1781
    %1783 = vmatprep.mubr.f32.mxu0 %v813
    %1784 = vmatmul.mubr.f32.gmra.mxu0 %v144
    %v1785 = vpop.f32.mrf.mxu0
    %v1786 = vadd.f32 %v1529, %v1785
    %v1787 = vpop.f32.mrf.mxu0
    %v1788 = vadd.f32 %v1531, %v1787
    %1789 = vmatprep.mubr.f32.mxu0 %v816
    %1790 = vmatmul.mubr.f32.gmra.mxu0 %v148
    %v1791 = vpop.f32.mrf.mxu0
    %v1792 = vadd.f32 %v1535, %v1791
    %v1793 = vpop.f32.mrf.mxu0
    %v1794 = vadd.f32 %v1537, %v1793
    %1795 = vmatprep.mubr.f32.mxu0 %v819
    %1796 = vmatmul.mubr.f32.gmra.mxu0 %v152
    %v1797 = vpop.f32.mrf.mxu0
    %v1798 = vadd.f32 %v1541, %v1797
    %v1799 = vpop.f32.mrf.mxu0
    %v1800 = vadd.f32 %v1543, %v1799
    %1801 = vmatprep.mubr.f32.mxu0 %v822
    %1802 = vmatmul.mubr.f32.gmra.mxu0 %v156
    %v1803 = vpop.f32.mrf.mxu0
    %v1804 = vadd.f32 %v1547, %v1803
    %v1805 = vpop.f32.mrf.mxu0
    %v1806 = vadd.f32 %v1549, %v1805
    %1807 = vmatprep.mubr.f32.mxu0 %v825
    %1808 = vmatmul.mubr.f32.gmra.mxu0 %v160
    %v1809 = vpop.f32.mrf.mxu0
    %v1810 = vadd.f32 %v1553, %v1809
    %v1811 = vpop.f32.mrf.mxu0
    %v1812 = vadd.f32 %v1555, %v1811
    %1813 = vmatprep.mubr.f32.mxu0 %v828
    %1814 = vmatmul.mubr.f32.gmra.mxu0 %v164
    %v1815 = vpop.f32.mrf.mxu0
    %v1816 = vadd.f32 %v1559, %v1815
    %v1817 = vpop.f32.mrf.mxu0
    %v1818 = vadd.f32 %v1561, %v1817
    %1819 = vmatprep.mubr.f32.mxu0 %v831
    %1820 = vmatmul.mubr.f32.gmra.mxu0 %v168
    %v1821 = vpop.f32.mrf.mxu0
    %v1822 = vadd.f32 %v1565, %v1821
    %v1823 = vpop.f32.mrf.mxu0
    %v1824 = vadd.f32 %v1567, %v1823
    %1825 = vmatprep.mubr.f32.mxu0 %v834
    %1826 = vmatmul.mubr.f32.gmra.mxu0 %v172
    %v1827 = vpop.f32.mrf.mxu0
    %v1828 = vadd.f32 %v1571, %v1827
    %v1829 = vpop.f32.mrf.mxu0
    %v1830 = vadd.f32 %v1573, %v1829
    %1831 = vmatprep.mubr.f32.mxu0 %v837
    %1832 = vmatmul.mubr.f32.gmra.mxu0 %v176
    %v1833 = vpop.f32.mrf.mxu0
    %v1834 = vadd.f32 %v1577, %v1833
    %v1835 = vpop.f32.mrf.mxu0
    %v1836 = vadd.f32 %v1579, %v1835
    %1837 = vmatprep.mubr.f32.mxu0 %v840
    %1838 = vmatmul.mubr.f32.gmra.mxu0 %v180
    %v1839 = vpop.f32.mrf.mxu0
    %v1840 = vadd.f32 %v1583, %v1839
    %v1841 = vpop.f32.mrf.mxu0
    %v1842 = vadd.f32 %v1585, %v1841
    %1843 = vmatprep.mubr.f32.mxu0 %v843
    %1844 = vmatmul.mubr.f32.gmra.mxu0 %v184
    %v1845 = vpop.f32.mrf.mxu0
    %v1846 = vadd.f32 %v1589, %v1845
    %v1847 = vpop.f32.mrf.mxu0
    %v1848 = vadd.f32 %v1591, %v1847
    %1849 = vmatprep.mubr.f32.mxu0 %v846
    %1850 = vmatmul.mubr.f32.gmra.mxu0 %v188
    %v1851 = vpop.f32.mrf.mxu0
    %v1852 = vadd.f32 %v1595, %v1851
    %v1853 = vpop.f32.mrf.mxu0
    %v1854 = vadd.f32 %v1597, %v1853
    %1855 = vmatprep.mubr.f32.mxu0 %v849
    %1856 = vmatmul.mubr.f32.gmra.mxu0 %v192
    %v1857 = vpop.f32.mrf.mxu0
    %v1858 = vadd.f32 %v1601, %v1857
    %v1859 = vpop.f32.mrf.mxu0
    %v1860 = vadd.f32 %v1603, %v1859
    %1861 = vmatprep.mubr.f32.mxu0 %v852
    %1862 = vmatmul.mubr.f32.gmra.mxu0 %v196
    %v1863 = vpop.f32.mrf.mxu0
    %v1864 = vadd.f32 %v1607, %v1863
    %v1865 = vpop.f32.mrf.mxu0
    %v1866 = vadd.f32 %v1609, %v1865
    %1867 = vmatprep.mubr.f32.mxu0 %v855
    %1868 = vmatmul.mubr.f32.gmra.mxu0 %v200
    %v1869 = vpop.f32.mrf.mxu0
    %v1870 = vadd.f32 %v1613, %v1869
    %v1871 = vpop.f32.mrf.mxu0
    %v1872 = vadd.f32 %v1615, %v1871
    %1873 = vmatprep.mubr.f32.mxu0 %v858
    %1874 = vmatmul.mubr.f32.gmra.mxu0 %v204
    %v1875 = vpop.f32.mrf.mxu0
    %v1876 = vadd.f32 %v1619, %v1875
    %v1877 = vpop.f32.mrf.mxu0
    %v1878 = vadd.f32 %v1621, %v1877
    %1879 = vmatprep.mubr.f32.mxu0 %v861
    %1880 = vmatmul.mubr.f32.gmra.mxu0 %v208
    %v1881 = vpop.f32.mrf.mxu0
    %v1882 = vadd.f32 %v1625, %v1881
    %v1883 = vpop.f32.mrf.mxu0
    %v1884 = vadd.f32 %v1627, %v1883
    %1885 = vmatprep.mubr.f32.mxu0 %v864
    %1886 = vmatmul.mubr.f32.gmra.mxu0 %v212
    %v1887 = vpop.f32.mrf.mxu0
    %v1888 = vadd.f32 %v1631, %v1887
    %v1889 = vpop.f32.mrf.mxu0
    %v1890 = vadd.f32 %v1633, %v1889
    %1891 = vmatprep.mubr.f32.mxu0 %v867
    %1892 = vmatmul.mubr.f32.gmra.mxu0 %v216
    %v1893 = vpop.f32.mrf.mxu0
    %v1894 = vadd.f32 %v1637, %v1893
    %v1895 = vpop.f32.mrf.mxu0
    %v1896 = vadd.f32 %v1639, %v1895
    %1897 = vmatprep.mubr.f32.mxu0 %v870
    %1898 = vmatmul.mubr.f32.gmra.mxu0 %v220
    %v1899 = vpop.f32.mrf.mxu0
    %v1900 = vadd.f32 %v1643, %v1899
    %v1901 = vpop.f32.mrf.mxu0
    %v1902 = vadd.f32 %v1645, %v1901
    %1903 = vmatprep.mubr.f32.mxu0 %v873
    %1904 = vmatmul.mubr.f32.gmra.mxu0 %v224
    %v1905 = vpop.f32.mrf.mxu0
    %v1906 = vadd.f32 %v1649, %v1905
    %v1907 = vpop.f32.mrf.mxu0
    %v1908 = vadd.f32 %v1651, %v1907
    %1909 = vmatprep.mubr.f32.mxu0 %v876
    %1910 = vmatmul.mubr.f32.gmra.mxu0 %v228
    %v1911 = vpop.f32.mrf.mxu0
    %v1912 = vadd.f32 %v1655, %v1911
    %v1913 = vpop.f32.mrf.mxu0
    %v1914 = vadd.f32 %v1657, %v1913
    %1915 = vmatprep.mubr.f32.mxu0 %v879
    %1916 = vmatmul.mubr.f32.gmra.mxu0 %v232
    %v1917 = vpop.f32.mrf.mxu0
    %v1918 = vadd.f32 %v1661, %v1917
    %v1919 = vpop.f32.mrf.mxu0
    %v1920 = vadd.f32 %v1663, %v1919
    %1921 = vmatprep.mubr.f32.mxu0 %v882
    %1922 = vmatmul.mubr.f32.gmra.mxu0 %v236
    %v1923 = vpop.f32.mrf.mxu0
    %v1924 = vadd.f32 %v1667, %v1923
    %v1925 = vpop.f32.mrf.mxu0
    %v1926 = vadd.f32 %v1669, %v1925
    %1927 = vmatprep.mubr.f32.mxu0 %v885
    %1928 = vmatmul.mubr.f32.gmra.mxu0 %v240
    %v1929 = vpop.f32.mrf.mxu0
    %v1930 = vadd.f32 %v1673, %v1929
    %v1931 = vpop.f32.mrf.mxu0
    %v1932 = vadd.f32 %v1675, %v1931
    %1933 = vmatprep.mubr.f32.mxu0 %v888
    %1934 = vmatmul.mubr.f32.gmra.mxu0 %v244
    %v1935 = vpop.f32.mrf.mxu0
    %v1936 = vadd.f32 %v1679, %v1935
    %v1937 = vpop.f32.mrf.mxu0
    %v1938 = vadd.f32 %v1681, %v1937
    %1939 = vmatprep.mubr.f32.mxu0 %v891
    %1940 = vmatmul.mubr.f32.gmra.mxu0 %v248
    %v1941 = vpop.f32.mrf.mxu0
    %v1942 = vadd.f32 %v1685, %v1941
    %v1943 = vpop.f32.mrf.mxu0
    %v1944 = vadd.f32 %v1687, %v1943
    %1945 = vdwg.mxu0
    %1946 = vmatprep.subr.mxu0 %v375
    %1947 = vmatpush1.msra.mxu0 %v374
    %1948 = vmatprep.subr.mxu0 %v367
    %1949 = vmatpush1.msra.mxu0 %v366
    %1950 = vmatprep.subr.mxu0 %v359
    %1951 = vmatpush1.msra.mxu0 %v358
    %1952 = vmatprep.subr.mxu0 %v351
    %1953 = vmatpush1.msra.mxu0 %v350
    %1954 = vmatprep.subr.mxu0 %v343
    %1955 = vmatpush1.msra.mxu0 %v342
    %1956 = vmatprep.subr.mxu0 %v335
    %1957 = vmatpush1.msra.mxu0 %v334
    %1958 = vmatprep.subr.mxu0 %v327
    %1959 = vmatpush1.msra.mxu0 %v326
    %1960 = vmatprep.subr.mxu0 %v319
    %1961 = vmatpush1.msra.mxu0 %v318
    %1962 = vmatprep.subr.mxu0 %v311
    %1963 = vmatpush1.msra.mxu0 %v310
    %1964 = vmatprep.subr.mxu0 %v303
    %1965 = vmatpush1.msra.mxu0 %v302
    %1966 = vmatprep.subr.mxu0 %v295
    %1967 = vmatpush1.msra.mxu0 %v294
    %1968 = vmatprep.subr.mxu0 %v287
    %1969 = vmatpush1.msra.mxu0 %v286
    %1970 = vmatprep.subr.mxu0 %v279
    %1971 = vmatpush1.msra.mxu0 %v278
    %1972 = vmatprep.subr.mxu0 %v271
    %1973 = vmatpush1.msra.mxu0 %v270
    %1974 = vmatprep.subr.mxu0 %v263
    %1975 = vmatpush1.msra.mxu0 %v262
    %1976 = vmatprep.subr.mxu0 %v255
    %1977 = vmatpush1.msra.mxu0 %v254
    %1978 = vmatprep.subr.mxu0 %v503
    %1979 = vmatpush2.msra.mxu0 %v502
    %1980 = vmatprep.subr.mxu0 %v495
    %1981 = vmatpush2.msra.mxu0 %v494
    %1982 = vmatprep.subr.mxu0 %v487
    %1983 = vmatpush2.msra.mxu0 %v486
    %1984 = vmatprep.subr.mxu0 %v479
    %1985 = vmatpush2.msra.mxu0 %v478
    %1986 = vmatprep.subr.mxu0 %v471
    %1987 = vmatpush2.msra.mxu0 %v470
    %1988 = vmatprep.subr.mxu0 %v463
    %1989 = vmatpush2.msra.mxu0 %v462
    %1990 = vmatprep.subr.mxu0 %v455
    %1991 = vmatpush2.msra.mxu0 %v454
    %1992 = vmatprep.subr.mxu0 %v447
    %1993 = vmatpush2.msra.mxu0 %v446
    %1994 = vmatprep.subr.mxu0 %v439
    %1995 = vmatpush2.msra.mxu0 %v438
    %1996 = vmatprep.subr.mxu0 %v431
    %1997 = vmatpush2.msra.mxu0 %v430
    %1998 = vmatprep.subr.mxu0 %v423
    %1999 = vmatpush2.msra.mxu0 %v422
    %2000 = vmatprep.subr.mxu0 %v415
    %2001 = vmatpush2.msra.mxu0 %v414
    %2002 = vmatprep.subr.mxu0 %v407
    %2003 = vmatpush2.msra.mxu0 %v406
    %2004 = vmatprep.subr.mxu0 %v399
    %2005 = vmatpush2.msra.mxu0 %v398
    %2006 = vmatprep.subr.mxu0 %v391
    %2007 = vmatpush2.msra.mxu0 %v390
    %2008 = vmatprep.subr.mxu0 %v383
    %2009 = vmatpush2.msra.mxu0 %v382
    %2010 = vmatprep.mubr.f32.mxu0 %v123
    %2011 = vmatmul.mubr.f32.gmra.mxu0 %v122
    %v2012 = vpop.f32.mrf.mxu0
    %v2013 = vadd.f32 %v775, %v2012
    %v2014 = vpop.f32.mrf.mxu0
    %v2015 = vadd.f32 %v779, %v2014
    %2016 = vmatprep.mubr.f32.mxu0 %v127
    %2017 = vmatmul.mubr.f32.gmra.mxu0 %v126
    %v2018 = vpop.f32.mrf.mxu0
    %v2019 = vadd.f32 %v775, %v2018
    %v2020 = vpop.f32.mrf.mxu0
    %v2021 = vadd.f32 %v779, %v2020
    %2022 = vmatprep.mubr.f32.mxu0 %v131
    %2023 = vmatmul.mubr.f32.gmra.mxu0 %v130
    %v2024 = vpop.f32.mrf.mxu0
    %v2025 = vadd.f32 %v775, %v2024
    %v2026 = vpop.f32.mrf.mxu0
    %v2027 = vadd.f32 %v779, %v2026
    %2028 = vmatprep.mubr.f32.mxu0 %v135
    %2029 = vmatmul.mubr.f32.gmra.mxu0 %v134
    %v2030 = vpop.f32.mrf.mxu0
    %v2031 = vadd.f32 %v775, %v2030
    %v2032 = vpop.f32.mrf.mxu0
    %v2033 = vadd.f32 %v779, %v2032
    %2034 = vmatprep.mubr.f32.mxu0 %v139
    %2035 = vmatmul.mubr.f32.gmra.mxu0 %v138
    %v2036 = vpop.f32.mrf.mxu0
    %v2037 = vadd.f32 %v775, %v2036
    %v2038 = vpop.f32.mrf.mxu0
    %v2039 = vadd.f32 %v779, %v2038
    %2040 = vmatprep.mubr.f32.mxu0 %v143
    %2041 = vmatmul.mubr.f32.gmra.mxu0 %v142
    %v2042 = vpop.f32.mrf.mxu0
    %v2043 = vadd.f32 %v775, %v2042
    %v2044 = vpop.f32.mrf.mxu0
    %v2045 = vadd.f32 %v779, %v2044
    %2046 = vmatprep.mubr.f32.mxu0 %v147
    %2047 = vmatmul.mubr.f32.gmra.mxu0 %v146
    %v2048 = vpop.f32.mrf.mxu0
    %v2049 = vadd.f32 %v775, %v2048
    %v2050 = vpop.f32.mrf.mxu0
    %v2051 = vadd.f32 %v779, %v2050
    %2052 = vmatprep.mubr.f32.mxu0 %v151
    %2053 = vmatmul.mubr.f32.gmra.mxu0 %v150
    %v2054 = vpop.f32.mrf.mxu0
    %v2055 = vadd.f32 %v775, %v2054
    %v2056 = vpop.f32.mrf.mxu0
    %v2057 = vadd.f32 %v779, %v2056
    %2058 = vmatprep.mubr.f32.mxu0 %v155
    %2059 = vmatmul.mubr.f32.gmra.mxu0 %v154
    %v2060 = vpop.f32.mrf.mxu0
    %v2061 = vadd.f32 %v775, %v2060
    %v2062 = vpop.f32.mrf.mxu0
    %v2063 = vadd.f32 %v779, %v2062
    %2064 = vmatprep.mubr.f32.mxu0 %v159
    %2065 = vmatmul.mubr.f32.gmra.mxu0 %v158
    %v2066 = vpop.f32.mrf.mxu0
    %v2067 = vadd.f32 %v775, %v2066
    %v2068 = vpop.f32.mrf.mxu0
    %v2069 = vadd.f32 %v779, %v2068
    %2070 = vmatprep.mubr.f32.mxu0 %v163
    %2071 = vmatmul.mubr.f32.gmra.mxu0 %v162
    %v2072 = vpop.f32.mrf.mxu0
    %v2073 = vadd.f32 %v775, %v2072
    %v2074 = vpop.f32.mrf.mxu0
    %v2075 = vadd.f32 %v779, %v2074
    %2076 = vmatprep.mubr.f32.mxu0 %v167
    %2077 = vmatmul.mubr.f32.gmra.mxu0 %v166
    %v2078 = vpop.f32.mrf.mxu0
    %v2079 = vadd.f32 %v775, %v2078
    %v2080 = vpop.f32.mrf.mxu0
    %v2081 = vadd.f32 %v779, %v2080
    %2082 = vmatprep.mubr.f32.mxu0 %v171
    %2083 = vmatmul.mubr.f32.gmra.mxu0 %v170
    %v2084 = vpop.f32.mrf.mxu0
    %v2085 = vadd.f32 %v775, %v2084
    %v2086 = vpop.f32.mrf.mxu0
    %v2087 = vadd.f32 %v779, %v2086
    %2088 = vmatprep.mubr.f32.mxu0 %v175
    %2089 = vmatmul.mubr.f32.gmra.mxu0 %v174
    %v2090 = vpop.f32.mrf.mxu0
    %v2091 = vadd.f32 %v775, %v2090
    %v2092 = vpop.f32.mrf.mxu0
    %v2093 = vadd.f32 %v779, %v2092
    %2094 = vmatprep.mubr.f32.mxu0 %v179
    %2095 = vmatmul.mubr.f32.gmra.mxu0 %v178
    %v2096 = vpop.f32.mrf.mxu0
    %v2097 = vadd.f32 %v775, %v2096
    %v2098 = vpop.f32.mrf.mxu0
    %v2099 = vadd.f32 %v779, %v2098
    %2100 = vmatprep.mubr.f32.mxu0 %v183
    %2101 = vmatmul.mubr.f32.gmra.mxu0 %v182
    %v2102 = vpop.f32.mrf.mxu0
    %v2103 = vadd.f32 %v775, %v2102
    %v2104 = vpop.f32.mrf.mxu0
    %v2105 = vadd.f32 %v779, %v2104
    %2106 = vmatprep.mubr.f32.mxu0 %v187
    %2107 = vmatmul.mubr.f32.gmra.mxu0 %v186
    %v2108 = vpop.f32.mrf.mxu0
    %v2109 = vadd.f32 %v775, %v2108
    %v2110 = vpop.f32.mrf.mxu0
    %v2111 = vadd.f32 %v779, %v2110
    %2112 = vmatprep.mubr.f32.mxu0 %v191
    %2113 = vmatmul.mubr.f32.gmra.mxu0 %v190
    %v2114 = vpop.f32.mrf.mxu0
    %v2115 = vadd.f32 %v775, %v2114
    %v2116 = vpop.f32.mrf.mxu0
    %v2117 = vadd.f32 %v779, %v2116
    %2118 = vmatprep.mubr.f32.mxu0 %v195
    %2119 = vmatmul.mubr.f32.gmra.mxu0 %v194
    %v2120 = vpop.f32.mrf.mxu0
    %v2121 = vadd.f32 %v775, %v2120
    %v2122 = vpop.f32.mrf.mxu0
    %v2123 = vadd.f32 %v779, %v2122
    %2124 = vmatprep.mubr.f32.mxu0 %v199
    %2125 = vmatmul.mubr.f32.gmra.mxu0 %v198
    %v2126 = vpop.f32.mrf.mxu0
    %v2127 = vadd.f32 %v775, %v2126
    %v2128 = vpop.f32.mrf.mxu0
    %v2129 = vadd.f32 %v779, %v2128
    %2130 = vmatprep.mubr.f32.mxu0 %v203
    %2131 = vmatmul.mubr.f32.gmra.mxu0 %v202
    %v2132 = vpop.f32.mrf.mxu0
    %v2133 = vadd.f32 %v775, %v2132
    %v2134 = vpop.f32.mrf.mxu0
    %v2135 = vadd.f32 %v779, %v2134
    %2136 = vmatprep.mubr.f32.mxu0 %v207
    %2137 = vmatmul.mubr.f32.gmra.mxu0 %v206
    %v2138 = vpop.f32.mrf.mxu0
    %v2139 = vadd.f32 %v775, %v2138
    %v2140 = vpop.f32.mrf.mxu0
    %v2141 = vadd.f32 %v779, %v2140
    %2142 = vmatprep.mubr.f32.mxu0 %v211
    %2143 = vmatmul.mubr.f32.gmra.mxu0 %v210
    %v2144 = vpop.f32.mrf.mxu0
    %v2145 = vadd.f32 %v775, %v2144
    %v2146 = vpop.f32.mrf.mxu0
    %v2147 = vadd.f32 %v779, %v2146
    %2148 = vmatprep.mubr.f32.mxu0 %v215
    %2149 = vmatmul.mubr.f32.gmra.mxu0 %v214
    %v2150 = vpop.f32.mrf.mxu0
    %v2151 = vadd.f32 %v775, %v2150
    %v2152 = vpop.f32.mrf.mxu0
    %v2153 = vadd.f32 %v779, %v2152
    %2154 = vmatprep.mubr.f32.mxu0 %v219
    %2155 = vmatmul.mubr.f32.gmra.mxu0 %v218
    %v2156 = vpop.f32.mrf.mxu0
    %v2157 = vadd.f32 %v775, %v2156
    %v2158 = vpop.f32.mrf.mxu0
    %v2159 = vadd.f32 %v779, %v2158
    %2160 = vmatprep.mubr.f32.mxu0 %v223
    %2161 = vmatmul.mubr.f32.gmra.mxu0 %v222
    %v2162 = vpop.f32.mrf.mxu0
    %v2163 = vadd.f32 %v775, %v2162
    %v2164 = vpop.f32.mrf.mxu0
    %v2165 = vadd.f32 %v779, %v2164
    %2166 = vmatprep.mubr.f32.mxu0 %v227
    %2167 = vmatmul.mubr.f32.gmra.mxu0 %v226
    %v2168 = vpop.f32.mrf.mxu0
    %v2169 = vadd.f32 %v775, %v2168
    %v2170 = vpop.f32.mrf.mxu0
    %v2171 = vadd.f32 %v779, %v2170
    %2172 = vmatprep.mubr.f32.mxu0 %v231
    %2173 = vmatmul.mubr.f32.gmra.mxu0 %v230
    %v2174 = vpop.f32.mrf.mxu0
    %v2175 = vadd.f32 %v775, %v2174
    %v2176 = vpop.f32.mrf.mxu0
    %v2177 = vadd.f32 %v779, %v2176
    %2178 = vmatprep.mubr.f32.mxu0 %v235
    %2179 = vmatmul.mubr.f32.gmra.mxu0 %v234
    %v2180 = vpop.f32.mrf.mxu0
    %v2181 = vadd.f32 %v775, %v2180
    %v2182 = vpop.f32.mrf.mxu0
    %v2183 = vadd.f32 %v779, %v2182
    %2184 = vmatprep.mubr.f32.mxu0 %v239
    %2185 = vmatmul.mubr.f32.gmra.mxu0 %v238
    %v2186 = vpop.f32.mrf.mxu0
    %v2187 = vadd.f32 %v775, %v2186
    %v2188 = vpop.f32.mrf.mxu0
    %v2189 = vadd.f32 %v779, %v2188
    %2190 = vmatprep.mubr.f32.mxu0 %v243
    %2191 = vmatmul.mubr.f32.gmra.mxu0 %v242
    %v2192 = vpop.f32.mrf.mxu0
    %v2193 = vadd.f32 %v775, %v2192
    %v2194 = vpop.f32.mrf.mxu0
    %v2195 = vadd.f32 %v779, %v2194
    %2196 = vmatprep.mubr.f32.mxu0 %v247
    %2197 = vmatmul.mubr.f32.gmra.mxu0 %v246
    %v2198 = vpop.f32.mrf.mxu0
    %v2199 = vadd.f32 %v775, %v2198
    %v2200 = vpop.f32.mrf.mxu0
    %v2201 = vadd.f32 %v779, %v2200
    %2202 = vdwg.mxu0
    %2203 = vmatprep.subr.mxu0 %v631
    %2204 = vmatpush1.msra.mxu0 %v630
    %2205 = vmatprep.subr.mxu0 %v623
    %2206 = vmatpush1.msra.mxu0 %v622
    %2207 = vmatprep.subr.mxu0 %v615
    %2208 = vmatpush1.msra.mxu0 %v614
    %2209 = vmatprep.subr.mxu0 %v607
    %2210 = vmatpush1.msra.mxu0 %v606
    %2211 = vmatprep.subr.mxu0 %v599
    %2212 = vmatpush1.msra.mxu0 %v598
    %2213 = vmatprep.subr.mxu0 %v591
    %2214 = vmatpush1.msra.mxu0 %v590
    %2215 = vmatprep.subr.mxu0 %v583
    %2216 = vmatpush1.msra.mxu0 %v582
    %2217 = vmatprep.subr.mxu0 %v575
    %2218 = vmatpush1.msra.mxu0 %v574
    %2219 = vmatprep.subr.mxu0 %v567
    %2220 = vmatpush1.msra.mxu0 %v566
    %2221 = vmatprep.subr.mxu0 %v559
    %2222 = vmatpush1.msra.mxu0 %v558
    %2223 = vmatprep.subr.mxu0 %v551
    %2224 = vmatpush1.msra.mxu0 %v550
    %2225 = vmatprep.subr.mxu0 %v543
    %2226 = vmatpush1.msra.mxu0 %v542
    %2227 = vmatprep.subr.mxu0 %v535
    %2228 = vmatpush1.msra.mxu0 %v534
    %2229 = vmatprep.subr.mxu0 %v527
    %2230 = vmatpush1.msra.mxu0 %v526
    %2231 = vmatprep.subr.mxu0 %v519
    %2232 = vmatpush1.msra.mxu0 %v518
    %2233 = vmatprep.subr.mxu0 %v511
    %2234 = vmatpush1.msra.mxu0 %v510
    %2235 = vmatprep.subr.mxu0 0.0
    %2236 = vmatpush2.msra.mxu0 0.0
    %2237 = vmatprep.subr.mxu0 %v910
    %2238 = vmatpush2.msra.mxu0 %v907
    %2239 = vmatprep.subr.mxu0 %v743
    %2240 = vmatpush2.msra.mxu0 %v742
    %2241 = vmatprep.subr.mxu0 %v735
    %2242 = vmatpush2.msra.mxu0 %v734
    %2243 = vmatprep.subr.mxu0 %v727
    %2244 = vmatpush2.msra.mxu0 %v726
    %2245 = vmatprep.subr.mxu0 %v719
    %2246 = vmatpush2.msra.mxu0 %v718
    %2247 = vmatprep.subr.mxu0 %v711
    %2248 = vmatpush2.msra.mxu0 %v710
    %2249 = vmatprep.subr.mxu0 %v703
    %2250 = vmatpush2.msra.mxu0 %v702
    %2251 = vmatprep.subr.mxu0 %v695
    %2252 = vmatpush2.msra.mxu0 %v694
    %2253 = vmatprep.subr.mxu0 %v687
    %2254 = vmatpush2.msra.mxu0 %v686
    %2255 = vmatprep.subr.mxu0 %v679
    %2256 = vmatpush2.msra.mxu0 %v678
    %2257 = vmatprep.subr.mxu0 %v671
    %2258 = vmatpush2.msra.mxu0 %v670
    %2259 = vmatprep.subr.mxu0 %v663
    %2260 = vmatpush2.msra.mxu0 %v662
    %2261 = vmatprep.subr.mxu0 %v655
    %2262 = vmatpush2.msra.mxu0 %v654
    %2263 = vmatprep.subr.mxu0 %v647
    %2264 = vmatpush2.msra.mxu0 %v646
    %2265 = vmatprep.subr.mxu0 %v639
    %2266 = vmatpush2.msra.mxu0 %v638
    %2267 = vmatprep.mubr.f32.mxu0 %v798
    %2268 = vmatmul.mubr.f32.gmra.mxu0 %v124
    %v2269 = vpop.f32.mrf.mxu0
    %v2270 = vadd.f32 %v2013, %v2269
    %v2271 = vpop.f32.mrf.mxu0
    %v2272 = vadd.f32 %v2015, %v2271
    %2273 = vmatprep.mubr.f32.mxu0 %v801
    %2274 = vmatmul.mubr.f32.gmra.mxu0 %v128
    %v2275 = vpop.f32.mrf.mxu0
    %v2276 = vadd.f32 %v2019, %v2275
    %v2277 = vpop.f32.mrf.mxu0
    %v2278 = vadd.f32 %v2021, %v2277
    %2279 = vmatprep.mubr.f32.mxu0 %v804
    %2280 = vmatmul.mubr.f32.gmra.mxu0 %v132
    %v2281 = vpop.f32.mrf.mxu0
    %v2282 = vadd.f32 %v2025, %v2281
    %v2283 = vpop.f32.mrf.mxu0
    %v2284 = vadd.f32 %v2027, %v2283
    %2285 = vmatprep.mubr.f32.mxu0 %v807
    %2286 = vmatmul.mubr.f32.gmra.mxu0 %v136
    %v2287 = vpop.f32.mrf.mxu0
    %v2288 = vadd.f32 %v2031, %v2287
    %v2289 = vpop.f32.mrf.mxu0
    %v2290 = vadd.f32 %v2033, %v2289
    %2291 = vmatprep.mubr.f32.mxu0 %v810
    %2292 = vmatmul.mubr.f32.gmra.mxu0 %v140
    %v2293 = vpop.f32.mrf.mxu0
    %v2294 = vadd.f32 %v2037, %v2293
    %v2295 = vpop.f32.mrf.mxu0
    %v2296 = vadd.f32 %v2039, %v2295
    %2297 = vmatprep.mubr.f32.mxu0 %v813
    %2298 = vmatmul.mubr.f32.gmra.mxu0 %v144
    %v2299 = vpop.f32.mrf.mxu0
    %v2300 = vadd.f32 %v2043, %v2299
    %v2301 = vpop.f32.mrf.mxu0
    %v2302 = vadd.f32 %v2045, %v2301
    %2303 = vmatprep.mubr.f32.mxu0 %v816
    %2304 = vmatmul.mubr.f32.gmra.mxu0 %v148
    %v2305 = vpop.f32.mrf.mxu0
    %v2306 = vadd.f32 %v2049, %v2305
    %v2307 = vpop.f32.mrf.mxu0
    %v2308 = vadd.f32 %v2051, %v2307
    %2309 = vmatprep.mubr.f32.mxu0 %v819
    %2310 = vmatmul.mubr.f32.gmra.mxu0 %v152
    %v2311 = vpop.f32.mrf.mxu0
    %v2312 = vadd.f32 %v2055, %v2311
    %v2313 = vpop.f32.mrf.mxu0
    %v2314 = vadd.f32 %v2057, %v2313
    %2315 = vmatprep.mubr.f32.mxu0 %v822
    %2316 = vmatmul.mubr.f32.gmra.mxu0 %v156
    %v2317 = vpop.f32.mrf.mxu0
    %v2318 = vadd.f32 %v2061, %v2317
    %v2319 = vpop.f32.mrf.mxu0
    %v2320 = vadd.f32 %v2063, %v2319
    %2321 = vmatprep.mubr.f32.mxu0 %v825
    %2322 = vmatmul.mubr.f32.gmra.mxu0 %v160
    %v2323 = vpop.f32.mrf.mxu0
    %v2324 = vadd.f32 %v2067, %v2323
    %v2325 = vpop.f32.mrf.mxu0
    %v2326 = vadd.f32 %v2069, %v2325
    %2327 = vmatprep.mubr.f32.mxu0 %v828
    %2328 = vmatmul.mubr.f32.gmra.mxu0 %v164
    %v2329 = vpop.f32.mrf.mxu0
    %v2330 = vadd.f32 %v2073, %v2329
    %v2331 = vpop.f32.mrf.mxu0
    %v2332 = vadd.f32 %v2075, %v2331
    %2333 = vmatprep.mubr.f32.mxu0 %v831
    %2334 = vmatmul.mubr.f32.gmra.mxu0 %v168
    %v2335 = vpop.f32.mrf.mxu0
    %v2336 = vadd.f32 %v2079, %v2335
    %v2337 = vpop.f32.mrf.mxu0
    %v2338 = vadd.f32 %v2081, %v2337
    %2339 = vmatprep.mubr.f32.mxu0 %v834
    %2340 = vmatmul.mubr.f32.gmra.mxu0 %v172
    %v2341 = vpop.f32.mrf.mxu0
    %v2342 = vadd.f32 %v2085, %v2341
    %v2343 = vpop.f32.mrf.mxu0
    %v2344 = vadd.f32 %v2087, %v2343
    %2345 = vmatprep.mubr.f32.mxu0 %v837
    %2346 = vmatmul.mubr.f32.gmra.mxu0 %v176
    %v2347 = vpop.f32.mrf.mxu0
    %v2348 = vadd.f32 %v2091, %v2347
    %v2349 = vpop.f32.mrf.mxu0
    %v2350 = vadd.f32 %v2093, %v2349
    %2351 = vmatprep.mubr.f32.mxu0 %v840
    %2352 = vmatmul.mubr.f32.gmra.mxu0 %v180
    %v2353 = vpop.f32.mrf.mxu0
    %v2354 = vadd.f32 %v2097, %v2353
    %v2355 = vpop.f32.mrf.mxu0
    %v2356 = vadd.f32 %v2099, %v2355
    %2357 = vmatprep.mubr.f32.mxu0 %v843
    %2358 = vmatmul.mubr.f32.gmra.mxu0 %v184
    %v2359 = vpop.f32.mrf.mxu0
    %v2360 = vadd.f32 %v2103, %v2359
    %v2361 = vpop.f32.mrf.mxu0
    %v2362 = vadd.f32 %v2105, %v2361
    %2363 = vmatprep.mubr.f32.mxu0 %v846
    %2364 = vmatmul.mubr.f32.gmra.mxu0 %v188
    %v2365 = vpop.f32.mrf.mxu0
    %v2366 = vadd.f32 %v2109, %v2365
    %v2367 = vpop.f32.mrf.mxu0
    %v2368 = vadd.f32 %v2111, %v2367
    %2369 = vmatprep.mubr.f32.mxu0 %v849
    %2370 = vmatmul.mubr.f32.gmra.mxu0 %v192
    %v2371 = vpop.f32.mrf.mxu0
    %v2372 = vadd.f32 %v2115, %v2371
    %v2373 = vpop.f32.mrf.mxu0
    %v2374 = vadd.f32 %v2117, %v2373
    %2375 = vmatprep.mubr.f32.mxu0 %v852
    %2376 = vmatmul.mubr.f32.gmra.mxu0 %v196
    %v2377 = vpop.f32.mrf.mxu0
    %v2378 = vadd.f32 %v2121, %v2377
    %v2379 = vpop.f32.mrf.mxu0
    %v2380 = vadd.f32 %v2123, %v2379
    %2381 = vmatprep.mubr.f32.mxu0 %v855
    %2382 = vmatmul.mubr.f32.gmra.mxu0 %v200
    %v2383 = vpop.f32.mrf.mxu0
    %v2384 = vadd.f32 %v2127, %v2383
    %v2385 = vpop.f32.mrf.mxu0
    %v2386 = vadd.f32 %v2129, %v2385
    %2387 = vmatprep.mubr.f32.mxu0 %v858
    %2388 = vmatmul.mubr.f32.gmra.mxu0 %v204
    %v2389 = vpop.f32.mrf.mxu0
    %v2390 = vadd.f32 %v2133, %v2389
    %v2391 = vpop.f32.mrf.mxu0
    %v2392 = vadd.f32 %v2135, %v2391
    %2393 = vmatprep.mubr.f32.mxu0 %v861
    %2394 = vmatmul.mubr.f32.gmra.mxu0 %v208
    %v2395 = vpop.f32.mrf.mxu0
    %v2396 = vadd.f32 %v2139, %v2395
    %v2397 = vpop.f32.mrf.mxu0
    %v2398 = vadd.f32 %v2141, %v2397
    %2399 = vmatprep.mubr.f32.mxu0 %v864
    %2400 = vmatmul.mubr.f32.gmra.mxu0 %v212
    %v2401 = vpop.f32.mrf.mxu0
    %v2402 = vadd.f32 %v2145, %v2401
    %v2403 = vpop.f32.mrf.mxu0
    %v2404 = vadd.f32 %v2147, %v2403
    %2405 = vmatprep.mubr.f32.mxu0 %v867
    %2406 = vmatmul.mubr.f32.gmra.mxu0 %v216
    %v2407 = vpop.f32.mrf.mxu0
    %v2408 = vadd.f32 %v2151, %v2407
    %v2409 = vpop.f32.mrf.mxu0
    %v2410 = vadd.f32 %v2153, %v2409
    %2411 = vmatprep.mubr.f32.mxu0 %v870
    %2412 = vmatmul.mubr.f32.gmra.mxu0 %v220
    %v2413 = vpop.f32.mrf.mxu0
    %v2414 = vadd.f32 %v2157, %v2413
    %v2415 = vpop.f32.mrf.mxu0
    %v2416 = vadd.f32 %v2159, %v2415
    %2417 = vmatprep.mubr.f32.mxu0 %v873
    %2418 = vmatmul.mubr.f32.gmra.mxu0 %v224
    %v2419 = vpop.f32.mrf.mxu0
    %v2420 = vadd.f32 %v2163, %v2419
    %v2421 = vpop.f32.mrf.mxu0
    %v2422 = vadd.f32 %v2165, %v2421
    %2423 = vmatprep.mubr.f32.mxu0 %v876
    %2424 = vmatmul.mubr.f32.gmra.mxu0 %v228
    %v2425 = vpop.f32.mrf.mxu0
    %v2426 = vadd.f32 %v2169, %v2425
    %v2427 = vpop.f32.mrf.mxu0
    %v2428 = vadd.f32 %v2171, %v2427
    %2429 = vmatprep.mubr.f32.mxu0 %v879
    %2430 = vmatmul.mubr.f32.gmra.mxu0 %v232
    %v2431 = vpop.f32.mrf.mxu0
    %v2432 = vadd.f32 %v2175, %v2431
    %v2433 = vpop.f32.mrf.mxu0
    %v2434 = vadd.f32 %v2177, %v2433
    %2435 = vmatprep.mubr.f32.mxu0 %v882
    %2436 = vmatmul.mubr.f32.gmra.mxu0 %v236
    %v2437 = vpop.f32.mrf.mxu0
    %v2438 = vadd.f32 %v2181, %v2437
    %v2439 = vpop.f32.mrf.mxu0
    %v2440 = vadd.f32 %v2183, %v2439
    %2441 = vmatprep.mubr.f32.mxu0 %v885
    %2442 = vmatmul.mubr.f32.gmra.mxu0 %v240
    %v2443 = vpop.f32.mrf.mxu0
    %v2444 = vadd.f32 %v2187, %v2443
    %v2445 = vpop.f32.mrf.mxu0
    %v2446 = vadd.f32 %v2189, %v2445
    %2447 = vmatprep.mubr.f32.mxu0 %v888
    %2448 = vmatmul.mubr.f32.gmra.mxu0 %v244
    %v2449 = vpop.f32.mrf.mxu0
    %v2450 = vadd.f32 %v2193, %v2449
    %v2451 = vpop.f32.mrf.mxu0
    %v2452 = vadd.f32 %v2195, %v2451
    %2453 = vmatprep.mubr.f32.mxu0 %v891
    %2454 = vmatmul.mubr.f32.gmra.mxu0 %v248
    %v2455 = vpop.f32.mrf.mxu0
    %v2456 = vadd.f32 %v2199, %v2455
    %v2457 = vpop.f32.mrf.mxu0
    %v2458 = vadd.f32 %v2201, %v2457
    %2459 = vdwg.mxu0
    %2460 = vmatprep.subr.mxu0 %v377
    %2461 = vmatpush1.msra.mxu0 %v376
    %2462 = vmatprep.subr.mxu0 %v369
    %2463 = vmatpush1.msra.mxu0 %v368
    %2464 = vmatprep.subr.mxu0 %v361
    %2465 = vmatpush1.msra.mxu0 %v360
    %2466 = vmatprep.subr.mxu0 %v353
    %2467 = vmatpush1.msra.mxu0 %v352
    %2468 = vmatprep.subr.mxu0 %v345
    %2469 = vmatpush1.msra.mxu0 %v344
    %2470 = vmatprep.subr.mxu0 %v337
    %2471 = vmatpush1.msra.mxu0 %v336
    %2472 = vmatprep.subr.mxu0 %v329
    %2473 = vmatpush1.msra.mxu0 %v328
    %2474 = vmatprep.subr.mxu0 %v321
    %2475 = vmatpush1.msra.mxu0 %v320
    %2476 = vmatprep.subr.mxu0 %v313
    %2477 = vmatpush1.msra.mxu0 %v312
    %2478 = vmatprep.subr.mxu0 %v305
    %2479 = vmatpush1.msra.mxu0 %v304
    %2480 = vmatprep.subr.mxu0 %v297
    %2481 = vmatpush1.msra.mxu0 %v296
    %2482 = vmatprep.subr.mxu0 %v289
    %2483 = vmatpush1.msra.mxu0 %v288
    %2484 = vmatprep.subr.mxu0 %v281
    %2485 = vmatpush1.msra.mxu0 %v280
    %2486 = vmatprep.subr.mxu0 %v273
    %2487 = vmatpush1.msra.mxu0 %v272
    %2488 = vmatprep.subr.mxu0 %v265
    %2489 = vmatpush1.msra.mxu0 %v264
    %2490 = vmatprep.subr.mxu0 %v257
    %2491 = vmatpush1.msra.mxu0 %v256
    %2492 = vmatprep.subr.mxu0 %v505
    %2493 = vmatpush2.msra.mxu0 %v504
    %2494 = vmatprep.subr.mxu0 %v497
    %2495 = vmatpush2.msra.mxu0 %v496
    %2496 = vmatprep.subr.mxu0 %v489
    %2497 = vmatpush2.msra.mxu0 %v488
    %2498 = vmatprep.subr.mxu0 %v481
    %2499 = vmatpush2.msra.mxu0 %v480
    %2500 = vmatprep.subr.mxu0 %v473
    %2501 = vmatpush2.msra.mxu0 %v472
    %2502 = vmatprep.subr.mxu0 %v465
    %2503 = vmatpush2.msra.mxu0 %v464
    %2504 = vmatprep.subr.mxu0 %v457
    %2505 = vmatpush2.msra.mxu0 %v456
    %2506 = vmatprep.subr.mxu0 %v449
    %2507 = vmatpush2.msra.mxu0 %v448
    %2508 = vmatprep.subr.mxu0 %v441
    %2509 = vmatpush2.msra.mxu0 %v440
    %2510 = vmatprep.subr.mxu0 %v433
    %2511 = vmatpush2.msra.mxu0 %v432
    %2512 = vmatprep.subr.mxu0 %v425
    %2513 = vmatpush2.msra.mxu0 %v424
    %2514 = vmatprep.subr.mxu0 %v417
    %2515 = vmatpush2.msra.mxu0 %v416
    %2516 = vmatprep.subr.mxu0 %v409
    %2517 = vmatpush2.msra.mxu0 %v408
    %2518 = vmatprep.subr.mxu0 %v401
    %2519 = vmatpush2.msra.mxu0 %v400
    %2520 = vmatprep.subr.mxu0 %v393
    %2521 = vmatpush2.msra.mxu0 %v392
    %2522 = vmatprep.subr.mxu0 %v385
    %2523 = vmatpush2.msra.mxu0 %v384
    %2524 = vmatprep.mubr.f32.mxu0 %v123
    %2525 = vmatmul.mubr.f32.gmra.mxu0 %v122
    %v2526 = vpop.f32.mrf.mxu0
    %v2527 = vadd.f32 %v783, %v2526
    %v2528 = vpop.f32.mrf.mxu0
    %v2529 = vadd.f32 %v787, %v2528
    %2530 = vmatprep.mubr.f32.mxu0 %v127
    %2531 = vmatmul.mubr.f32.gmra.mxu0 %v126
    %v2532 = vpop.f32.mrf.mxu0
    %v2533 = vadd.f32 %v783, %v2532
    %v2534 = vpop.f32.mrf.mxu0
    %v2535 = vadd.f32 %v787, %v2534
    %2536 = vmatprep.mubr.f32.mxu0 %v131
    %2537 = vmatmul.mubr.f32.gmra.mxu0 %v130
    %v2538 = vpop.f32.mrf.mxu0
    %v2539 = vadd.f32 %v783, %v2538
    %v2540 = vpop.f32.mrf.mxu0
    %v2541 = vadd.f32 %v787, %v2540
    %2542 = vmatprep.mubr.f32.mxu0 %v135
    %2543 = vmatmul.mubr.f32.gmra.mxu0 %v134
    %v2544 = vpop.f32.mrf.mxu0
    %v2545 = vadd.f32 %v783, %v2544
    %v2546 = vpop.f32.mrf.mxu0
    %v2547 = vadd.f32 %v787, %v2546
    %2548 = vmatprep.mubr.f32.mxu0 %v139
    %2549 = vmatmul.mubr.f32.gmra.mxu0 %v138
    %v2550 = vpop.f32.mrf.mxu0
    %v2551 = vadd.f32 %v783, %v2550
    %v2552 = vpop.f32.mrf.mxu0
    %v2553 = vadd.f32 %v787, %v2552
    %2554 = vmatprep.mubr.f32.mxu0 %v143
    %2555 = vmatmul.mubr.f32.gmra.mxu0 %v142
    %v2556 = vpop.f32.mrf.mxu0
    %v2557 = vadd.f32 %v783, %v2556
    %v2558 = vpop.f32.mrf.mxu0
    %v2559 = vadd.f32 %v787, %v2558
    %2560 = vmatprep.mubr.f32.mxu0 %v147
    %2561 = vmatmul.mubr.f32.gmra.mxu0 %v146
    %v2562 = vpop.f32.mrf.mxu0
    %v2563 = vadd.f32 %v783, %v2562
    %v2564 = vpop.f32.mrf.mxu0
    %v2565 = vadd.f32 %v787, %v2564
    %2566 = vmatprep.mubr.f32.mxu0 %v151
    %2567 = vmatmul.mubr.f32.gmra.mxu0 %v150
    %v2568 = vpop.f32.mrf.mxu0
    %v2569 = vadd.f32 %v783, %v2568
    %v2570 = vpop.f32.mrf.mxu0
    %v2571 = vadd.f32 %v787, %v2570
    %2572 = vmatprep.mubr.f32.mxu0 %v155
    %2573 = vmatmul.mubr.f32.gmra.mxu0 %v154
    %v2574 = vpop.f32.mrf.mxu0
    %v2575 = vadd.f32 %v783, %v2574
    %v2576 = vpop.f32.mrf.mxu0
    %v2577 = vadd.f32 %v787, %v2576
    %2578 = vmatprep.mubr.f32.mxu0 %v159
    %2579 = vmatmul.mubr.f32.gmra.mxu0 %v158
    %v2580 = vpop.f32.mrf.mxu0
    %v2581 = vadd.f32 %v783, %v2580
    %v2582 = vpop.f32.mrf.mxu0
    %v2583 = vadd.f32 %v787, %v2582
    %2584 = vmatprep.mubr.f32.mxu0 %v163
    %2585 = vmatmul.mubr.f32.gmra.mxu0 %v162
    %v2586 = vpop.f32.mrf.mxu0
    %v2587 = vadd.f32 %v783, %v2586
    %v2588 = vpop.f32.mrf.mxu0
    %v2589 = vadd.f32 %v787, %v2588
    %2590 = vmatprep.mubr.f32.mxu0 %v167
    %2591 = vmatmul.mubr.f32.gmra.mxu0 %v166
    %v2592 = vpop.f32.mrf.mxu0
    %v2593 = vadd.f32 %v783, %v2592
    %v2594 = vpop.f32.mrf.mxu0
    %v2595 = vadd.f32 %v787, %v2594
    %2596 = vmatprep.mubr.f32.mxu0 %v171
    %2597 = vmatmul.mubr.f32.gmra.mxu0 %v170
    %v2598 = vpop.f32.mrf.mxu0
    %v2599 = vadd.f32 %v783, %v2598
    %v2600 = vpop.f32.mrf.mxu0
    %v2601 = vadd.f32 %v787, %v2600
    %2602 = vmatprep.mubr.f32.mxu0 %v175
    %2603 = vmatmul.mubr.f32.gmra.mxu0 %v174
    %v2604 = vpop.f32.mrf.mxu0
    %v2605 = vadd.f32 %v783, %v2604
    %v2606 = vpop.f32.mrf.mxu0
    %v2607 = vadd.f32 %v787, %v2606
    %2608 = vmatprep.mubr.f32.mxu0 %v179
    %2609 = vmatmul.mubr.f32.gmra.mxu0 %v178
    %v2610 = vpop.f32.mrf.mxu0
    %v2611 = vadd.f32 %v783, %v2610
    %v2612 = vpop.f32.mrf.mxu0
    %v2613 = vadd.f32 %v787, %v2612
    %2614 = vmatprep.mubr.f32.mxu0 %v183
    %2615 = vmatmul.mubr.f32.gmra.mxu0 %v182
    %v2616 = vpop.f32.mrf.mxu0
    %v2617 = vadd.f32 %v783, %v2616
    %v2618 = vpop.f32.mrf.mxu0
    %v2619 = vadd.f32 %v787, %v2618
    %2620 = vmatprep.mubr.f32.mxu0 %v187
    %2621 = vmatmul.mubr.f32.gmra.mxu0 %v186
    %v2622 = vpop.f32.mrf.mxu0
    %v2623 = vadd.f32 %v783, %v2622
    %v2624 = vpop.f32.mrf.mxu0
    %v2625 = vadd.f32 %v787, %v2624
    %2626 = vmatprep.mubr.f32.mxu0 %v191
    %2627 = vmatmul.mubr.f32.gmra.mxu0 %v190
    %v2628 = vpop.f32.mrf.mxu0
    %v2629 = vadd.f32 %v783, %v2628
    %v2630 = vpop.f32.mrf.mxu0
    %v2631 = vadd.f32 %v787, %v2630
    %2632 = vmatprep.mubr.f32.mxu0 %v195
    %2633 = vmatmul.mubr.f32.gmra.mxu0 %v194
    %v2634 = vpop.f32.mrf.mxu0
    %v2635 = vadd.f32 %v783, %v2634
    %v2636 = vpop.f32.mrf.mxu0
    %v2637 = vadd.f32 %v787, %v2636
    %2638 = vmatprep.mubr.f32.mxu0 %v199
    %2639 = vmatmul.mubr.f32.gmra.mxu0 %v198
    %v2640 = vpop.f32.mrf.mxu0
    %v2641 = vadd.f32 %v783, %v2640
    %v2642 = vpop.f32.mrf.mxu0
    %v2643 = vadd.f32 %v787, %v2642
    %2644 = vmatprep.mubr.f32.mxu0 %v203
    %2645 = vmatmul.mubr.f32.gmra.mxu0 %v202
    %v2646 = vpop.f32.mrf.mxu0
    %v2647 = vadd.f32 %v783, %v2646
    %v2648 = vpop.f32.mrf.mxu0
    %v2649 = vadd.f32 %v787, %v2648
    %2650 = vmatprep.mubr.f32.mxu0 %v207
    %2651 = vmatmul.mubr.f32.gmra.mxu0 %v206
    %v2652 = vpop.f32.mrf.mxu0
    %v2653 = vadd.f32 %v783, %v2652
    %v2654 = vpop.f32.mrf.mxu0
    %v2655 = vadd.f32 %v787, %v2654
    %2656 = vmatprep.mubr.f32.mxu0 %v211
    %2657 = vmatmul.mubr.f32.gmra.mxu0 %v210
    %v2658 = vpop.f32.mrf.mxu0
    %v2659 = vadd.f32 %v783, %v2658
    %v2660 = vpop.f32.mrf.mxu0
    %v2661 = vadd.f32 %v787, %v2660
    %2662 = vmatprep.mubr.f32.mxu0 %v215
    %2663 = vmatmul.mubr.f32.gmra.mxu0 %v214
    %v2664 = vpop.f32.mrf.mxu0
    %v2665 = vadd.f32 %v783, %v2664
    %v2666 = vpop.f32.mrf.mxu0
    %v2667 = vadd.f32 %v787, %v2666
    %2668 = vmatprep.mubr.f32.mxu0 %v219
    %2669 = vmatmul.mubr.f32.gmra.mxu0 %v218
    %v2670 = vpop.f32.mrf.mxu0
    %v2671 = vadd.f32 %v783, %v2670
    %v2672 = vpop.f32.mrf.mxu0
    %v2673 = vadd.f32 %v787, %v2672
    %2674 = vmatprep.mubr.f32.mxu0 %v223
    %2675 = vmatmul.mubr.f32.gmra.mxu0 %v222
    %v2676 = vpop.f32.mrf.mxu0
    %v2677 = vadd.f32 %v783, %v2676
    %v2678 = vpop.f32.mrf.mxu0
    %v2679 = vadd.f32 %v787, %v2678
    %2680 = vmatprep.mubr.f32.mxu0 %v227
    %2681 = vmatmul.mubr.f32.gmra.mxu0 %v226
    %v2682 = vpop.f32.mrf.mxu0
    %v2683 = vadd.f32 %v783, %v2682
    %v2684 = vpop.f32.mrf.mxu0
    %v2685 = vadd.f32 %v787, %v2684
    %2686 = vmatprep.mubr.f32.mxu0 %v231
    %2687 = vmatmul.mubr.f32.gmra.mxu0 %v230
    %v2688 = vpop.f32.mrf.mxu0
    %v2689 = vadd.f32 %v783, %v2688
    %v2690 = vpop.f32.mrf.mxu0
    %v2691 = vadd.f32 %v787, %v2690
    %2692 = vmatprep.mubr.f32.mxu0 %v235
    %2693 = vmatmul.mubr.f32.gmra.mxu0 %v234
    %v2694 = vpop.f32.mrf.mxu0
    %v2695 = vadd.f32 %v783, %v2694
    %v2696 = vpop.f32.mrf.mxu0
    %v2697 = vadd.f32 %v787, %v2696
    %2698 = vmatprep.mubr.f32.mxu0 %v239
    %2699 = vmatmul.mubr.f32.gmra.mxu0 %v238
    %v2700 = vpop.f32.mrf.mxu0
    %v2701 = vadd.f32 %v783, %v2700
    %v2702 = vpop.f32.mrf.mxu0
    %v2703 = vadd.f32 %v787, %v2702
    %2704 = vmatprep.mubr.f32.mxu0 %v243
    %2705 = vmatmul.mubr.f32.gmra.mxu0 %v242
    %v2706 = vpop.f32.mrf.mxu0
    %v2707 = vadd.f32 %v783, %v2706
    %v2708 = vpop.f32.mrf.mxu0
    %v2709 = vadd.f32 %v787, %v2708
    %2710 = vmatprep.mubr.f32.mxu0 %v247
    %2711 = vmatmul.mubr.f32.gmra.mxu0 %v246
    %v2712 = vpop.f32.mrf.mxu0
    %v2713 = vadd.f32 %v783, %v2712
    %v2714 = vpop.f32.mrf.mxu0
    %v2715 = vadd.f32 %v787, %v2714
    %2716 = vdwg.mxu0
    %2717 = vmatprep.subr.mxu0 %v633
    %2718 = vmatpush1.msra.mxu0 %v632
    %2719 = vmatprep.subr.mxu0 %v625
    %2720 = vmatpush1.msra.mxu0 %v624
    %2721 = vmatprep.subr.mxu0 %v617
    %2722 = vmatpush1.msra.mxu0 %v616
    %2723 = vmatprep.subr.mxu0 %v609
    %2724 = vmatpush1.msra.mxu0 %v608
    %2725 = vmatprep.subr.mxu0 %v601
    %2726 = vmatpush1.msra.mxu0 %v600
    %2727 = vmatprep.subr.mxu0 %v593
    %2728 = vmatpush1.msra.mxu0 %v592
    %2729 = vmatprep.subr.mxu0 %v585
    %2730 = vmatpush1.msra.mxu0 %v584
    %2731 = vmatprep.subr.mxu0 %v577
    %2732 = vmatpush1.msra.mxu0 %v576
    %2733 = vmatprep.subr.mxu0 %v569
    %2734 = vmatpush1.msra.mxu0 %v568
    %2735 = vmatprep.subr.mxu0 %v561
    %2736 = vmatpush1.msra.mxu0 %v560
    %2737 = vmatprep.subr.mxu0 %v553
    %2738 = vmatpush1.msra.mxu0 %v552
    %2739 = vmatprep.subr.mxu0 %v545
    %2740 = vmatpush1.msra.mxu0 %v544
    %2741 = vmatprep.subr.mxu0 %v537
    %2742 = vmatpush1.msra.mxu0 %v536
    %2743 = vmatprep.subr.mxu0 %v529
    %2744 = vmatpush1.msra.mxu0 %v528
    %2745 = vmatprep.subr.mxu0 %v521
    %2746 = vmatpush1.msra.mxu0 %v520
    %2747 = vmatprep.subr.mxu0 %v513
    %2748 = vmatpush1.msra.mxu0 %v512
    %2749 = vmatprep.subr.mxu0 0.0
    %2750 = vmatpush2.msra.mxu0 0.0
    %2751 = vmatprep.subr.mxu0 %v916
    %2752 = vmatpush2.msra.mxu0 %v913
    %2753 = vmatprep.subr.mxu0 %v745
    %2754 = vmatpush2.msra.mxu0 %v744
    %2755 = vmatprep.subr.mxu0 %v737
    %2756 = vmatpush2.msra.mxu0 %v736
    %2757 = vmatprep.subr.mxu0 %v729
    %2758 = vmatpush2.msra.mxu0 %v728
    %2759 = vmatprep.subr.mxu0 %v721
    %2760 = vmatpush2.msra.mxu0 %v720
    %2761 = vmatprep.subr.mxu0 %v713
    %2762 = vmatpush2.msra.mxu0 %v712
    %2763 = vmatprep.subr.mxu0 %v705
    %2764 = vmatpush2.msra.mxu0 %v704
    %2765 = vmatprep.subr.mxu0 %v697
    %2766 = vmatpush2.msra.mxu0 %v696
    %2767 = vmatprep.subr.mxu0 %v689
    %2768 = vmatpush2.msra.mxu0 %v688
    %2769 = vmatprep.subr.mxu0 %v681
    %2770 = vmatpush2.msra.mxu0 %v680
    %2771 = vmatprep.subr.mxu0 %v673
    %2772 = vmatpush2.msra.mxu0 %v672
    %2773 = vmatprep.subr.mxu0 %v665
    %2774 = vmatpush2.msra.mxu0 %v664
    %2775 = vmatprep.subr.mxu0 %v657
    %2776 = vmatpush2.msra.mxu0 %v656
    %2777 = vmatprep.subr.mxu0 %v649
    %2778 = vmatpush2.msra.mxu0 %v648
    %2779 = vmatprep.subr.mxu0 %v641
    %2780 = vmatpush2.msra.mxu0 %v640
    %2781 = vmatprep.mubr.f32.mxu0 %v798
    %2782 = vmatmul.mubr.f32.gmra.mxu0 %v124
    %v2783 = vpop.f32.mrf.mxu0
    %v2784 = vadd.f32 %v2527, %v2783
    %v2785 = vpop.f32.mrf.mxu0
    %v2786 = vadd.f32 %v2529, %v2785
    %2787 = vmatprep.mubr.f32.mxu0 %v801
    %2788 = vmatmul.mubr.f32.gmra.mxu0 %v128
    %v2789 = vpop.f32.mrf.mxu0
    %v2790 = vadd.f32 %v2533, %v2789
    %v2791 = vpop.f32.mrf.mxu0
    %v2792 = vadd.f32 %v2535, %v2791
    %2793 = vmatprep.mubr.f32.mxu0 %v804
    %2794 = vmatmul.mubr.f32.gmra.mxu0 %v132
    %v2795 = vpop.f32.mrf.mxu0
    %v2796 = vadd.f32 %v2539, %v2795
    %v2797 = vpop.f32.mrf.mxu0
    %v2798 = vadd.f32 %v2541, %v2797
    %2799 = vmatprep.mubr.f32.mxu0 %v807
    %2800 = vmatmul.mubr.f32.gmra.mxu0 %v136
    %v2801 = vpop.f32.mrf.mxu0
    %v2802 = vadd.f32 %v2545, %v2801
    %v2803 = vpop.f32.mrf.mxu0
    %v2804 = vadd.f32 %v2547, %v2803
    %2805 = vmatprep.mubr.f32.mxu0 %v810
    %2806 = vmatmul.mubr.f32.gmra.mxu0 %v140
    %v2807 = vpop.f32.mrf.mxu0
    %v2808 = vadd.f32 %v2551, %v2807
    %v2809 = vpop.f32.mrf.mxu0
    %v2810 = vadd.f32 %v2553, %v2809
    %2811 = vmatprep.mubr.f32.mxu0 %v813
    %2812 = vmatmul.mubr.f32.gmra.mxu0 %v144
    %v2813 = vpop.f32.mrf.mxu0
    %v2814 = vadd.f32 %v2557, %v2813
    %v2815 = vpop.f32.mrf.mxu0
    %v2816 = vadd.f32 %v2559, %v2815
    %2817 = vmatprep.mubr.f32.mxu0 %v816
    %2818 = vmatmul.mubr.f32.gmra.mxu0 %v148
    %v2819 = vpop.f32.mrf.mxu0
    %v2820 = vadd.f32 %v2563, %v2819
    %v2821 = vpop.f32.mrf.mxu0
    %v2822 = vadd.f32 %v2565, %v2821
    %2823 = vmatprep.mubr.f32.mxu0 %v819
    %2824 = vmatmul.mubr.f32.gmra.mxu0 %v152
    %v2825 = vpop.f32.mrf.mxu0
    %v2826 = vadd.f32 %v2569, %v2825
    %v2827 = vpop.f32.mrf.mxu0
    %v2828 = vadd.f32 %v2571, %v2827
    %2829 = vmatprep.mubr.f32.mxu0 %v822
    %2830 = vmatmul.mubr.f32.gmra.mxu0 %v156
    %v2831 = vpop.f32.mrf.mxu0
    %v2832 = vadd.f32 %v2575, %v2831
    %v2833 = vpop.f32.mrf.mxu0
    %v2834 = vadd.f32 %v2577, %v2833
    %2835 = vmatprep.mubr.f32.mxu0 %v825
    %2836 = vmatmul.mubr.f32.gmra.mxu0 %v160
    %v2837 = vpop.f32.mrf.mxu0
    %v2838 = vadd.f32 %v2581, %v2837
    %v2839 = vpop.f32.mrf.mxu0
    %v2840 = vadd.f32 %v2583, %v2839
    %2841 = vmatprep.mubr.f32.mxu0 %v828
    %2842 = vmatmul.mubr.f32.gmra.mxu0 %v164
    %v2843 = vpop.f32.mrf.mxu0
    %v2844 = vadd.f32 %v2587, %v2843
    %v2845 = vpop.f32.mrf.mxu0
    %v2846 = vadd.f32 %v2589, %v2845
    %2847 = vmatprep.mubr.f32.mxu0 %v831
    %2848 = vmatmul.mubr.f32.gmra.mxu0 %v168
    %v2849 = vpop.f32.mrf.mxu0
    %v2850 = vadd.f32 %v2593, %v2849
    %v2851 = vpop.f32.mrf.mxu0
    %v2852 = vadd.f32 %v2595, %v2851
    %2853 = vmatprep.mubr.f32.mxu0 %v834
    %2854 = vmatmul.mubr.f32.gmra.mxu0 %v172
    %v2855 = vpop.f32.mrf.mxu0
    %v2856 = vadd.f32 %v2599, %v2855
    %v2857 = vpop.f32.mrf.mxu0
    %v2858 = vadd.f32 %v2601, %v2857
    %2859 = vmatprep.mubr.f32.mxu0 %v837
    %2860 = vmatmul.mubr.f32.gmra.mxu0 %v176
    %v2861 = vpop.f32.mrf.mxu0
    %v2862 = vadd.f32 %v2605, %v2861
    %v2863 = vpop.f32.mrf.mxu0
    %v2864 = vadd.f32 %v2607, %v2863
    %2865 = vmatprep.mubr.f32.mxu0 %v840
    %2866 = vmatmul.mubr.f32.gmra.mxu0 %v180
    %v2867 = vpop.f32.mrf.mxu0
    %v2868 = vadd.f32 %v2611, %v2867
    %v2869 = vpop.f32.mrf.mxu0
    %v2870 = vadd.f32 %v2613, %v2869
    %2871 = vmatprep.mubr.f32.mxu0 %v843
    %2872 = vmatmul.mubr.f32.gmra.mxu0 %v184
    %v2873 = vpop.f32.mrf.mxu0
    %v2874 = vadd.f32 %v2617, %v2873
    %v2875 = vpop.f32.mrf.mxu0
    %v2876 = vadd.f32 %v2619, %v2875
    %2877 = vmatprep.mubr.f32.mxu0 %v846
    %2878 = vmatmul.mubr.f32.gmra.mxu0 %v188
    %v2879 = vpop.f32.mrf.mxu0
    %v2880 = vadd.f32 %v2623, %v2879
    %v2881 = vpop.f32.mrf.mxu0
    %v2882 = vadd.f32 %v2625, %v2881
    %2883 = vmatprep.mubr.f32.mxu0 %v849
    %2884 = vmatmul.mubr.f32.gmra.mxu0 %v192
    %v2885 = vpop.f32.mrf.mxu0
    %v2886 = vadd.f32 %v2629, %v2885
    %v2887 = vpop.f32.mrf.mxu0
    %v2888 = vadd.f32 %v2631, %v2887
    %2889 = vmatprep.mubr.f32.mxu0 %v852
    %2890 = vmatmul.mubr.f32.gmra.mxu0 %v196
    %v2891 = vpop.f32.mrf.mxu0
    %v2892 = vadd.f32 %v2635, %v2891
    %v2893 = vpop.f32.mrf.mxu0
    %v2894 = vadd.f32 %v2637, %v2893
    %2895 = vmatprep.mubr.f32.mxu0 %v855
    %2896 = vmatmul.mubr.f32.gmra.mxu0 %v200
    %v2897 = vpop.f32.mrf.mxu0
    %v2898 = vadd.f32 %v2641, %v2897
    %v2899 = vpop.f32.mrf.mxu0
    %v2900 = vadd.f32 %v2643, %v2899
    %2901 = vmatprep.mubr.f32.mxu0 %v858
    %2902 = vmatmul.mubr.f32.gmra.mxu0 %v204
    %v2903 = vpop.f32.mrf.mxu0
    %v2904 = vadd.f32 %v2647, %v2903
    %v2905 = vpop.f32.mrf.mxu0
    %v2906 = vadd.f32 %v2649, %v2905
    %2907 = vmatprep.mubr.f32.mxu0 %v861
    %2908 = vmatmul.mubr.f32.gmra.mxu0 %v208
    %v2909 = vpop.f32.mrf.mxu0
    %v2910 = vadd.f32 %v2653, %v2909
    %v2911 = vpop.f32.mrf.mxu0
    %v2912 = vadd.f32 %v2655, %v2911
    %2913 = vmatprep.mubr.f32.mxu0 %v864
    %2914 = vmatmul.mubr.f32.gmra.mxu0 %v212
    %v2915 = vpop.f32.mrf.mxu0
    %v2916 = vadd.f32 %v2659, %v2915
    %v2917 = vpop.f32.mrf.mxu0
    %v2918 = vadd.f32 %v2661, %v2917
    %2919 = vmatprep.mubr.f32.mxu0 %v867
    %2920 = vmatmul.mubr.f32.gmra.mxu0 %v216
    %v2921 = vpop.f32.mrf.mxu0
    %v2922 = vadd.f32 %v2665, %v2921
    %v2923 = vpop.f32.mrf.mxu0
    %v2924 = vadd.f32 %v2667, %v2923
    %2925 = vmatprep.mubr.f32.mxu0 %v870
    %2926 = vmatmul.mubr.f32.gmra.mxu0 %v220
    %v2927 = vpop.f32.mrf.mxu0
    %v2928 = vadd.f32 %v2671, %v2927
    %v2929 = vpop.f32.mrf.mxu0
    %v2930 = vadd.f32 %v2673, %v2929
    %2931 = vmatprep.mubr.f32.mxu0 %v873
    %2932 = vmatmul.mubr.f32.gmra.mxu0 %v224
    %v2933 = vpop.f32.mrf.mxu0
    %v2934 = vadd.f32 %v2677, %v2933
    %v2935 = vpop.f32.mrf.mxu0
    %v2936 = vadd.f32 %v2679, %v2935
    %2937 = vmatprep.mubr.f32.mxu0 %v876
    %2938 = vmatmul.mubr.f32.gmra.mxu0 %v228
    %v2939 = vpop.f32.mrf.mxu0
    %v2940 = vadd.f32 %v2683, %v2939
    %v2941 = vpop.f32.mrf.mxu0
    %v2942 = vadd.f32 %v2685, %v2941
    %2943 = vmatprep.mubr.f32.mxu0 %v879
    %2944 = vmatmul.mubr.f32.gmra.mxu0 %v232
    %v2945 = vpop.f32.mrf.mxu0
    %v2946 = vadd.f32 %v2689, %v2945
    %v2947 = vpop.f32.mrf.mxu0
    %v2948 = vadd.f32 %v2691, %v2947
    %2949 = vmatprep.mubr.f32.mxu0 %v882
    %2950 = vmatmul.mubr.f32.gmra.mxu0 %v236
    %v2951 = vpop.f32.mrf.mxu0
    %v2952 = vadd.f32 %v2695, %v2951
    %v2953 = vpop.f32.mrf.mxu0
    %v2954 = vadd.f32 %v2697, %v2953
    %2955 = vmatprep.mubr.f32.mxu0 %v885
    %2956 = vmatmul.mubr.f32.gmra.mxu0 %v240
    %v2957 = vpop.f32.mrf.mxu0
    %v2958 = vadd.f32 %v2701, %v2957
    %v2959 = vpop.f32.mrf.mxu0
    %v2960 = vadd.f32 %v2703, %v2959
    %2961 = vmatprep.mubr.f32.mxu0 %v888
    %2962 = vmatmul.mubr.f32.gmra.mxu0 %v244
    %v2963 = vpop.f32.mrf.mxu0
    %v2964 = vadd.f32 %v2707, %v2963
    %v2965 = vpop.f32.mrf.mxu0
    %v2966 = vadd.f32 %v2709, %v2965
    %2967 = vmatprep.mubr.f32.mxu0 %v891
    %2968 = vmatmul.mubr.f32.gmra.mxu0 %v248
    %v2969 = vpop.f32.mrf.mxu0
    %v2970 = vadd.f32 %v2713, %v2969
    %v2971 = vpop.f32.mrf.mxu0
    %v2972 = vadd.f32 %v2715, %v2971
    %2973 = vdwg.mxu0
    %v2974 = vmul.f32 %v1242, 0.01
    %v2975 = vmul.f32 %v1244, 0.01
    %v2976 = vmul.f32 %v1756, 0.01
    %v2977 = vmul.f32 %v1758, 0.01
    %v2978 = vmul.f32 %v2270, 0.01
    %v2979 = vmul.f32 %v2272, 0.01
    %v2980 = vmul.f32 %v2784, 0.01
    %v2981 = vmul.f32 %v2786, 0.01
    %v2982 = vmul.f32 %v1248, 0.01
    %v2983 = vmul.f32 %v1250, 0.01
    %v2984 = vmul.f32 %v1762, 0.01
    %v2985 = vmul.f32 %v1764, 0.01
    %v2986 = vmul.f32 %v2276, 0.01
    %v2987 = vmul.f32 %v2278, 0.01
    %v2988 = vmul.f32 %v2790, 0.01
    %v2989 = vmul.f32 %v2792, 0.01
    %v2990 = vmul.f32 %v1254, 0.01
    %v2991 = vmul.f32 %v1256, 0.01
    %v2992 = vmul.f32 %v1768, 0.01
    %v2993 = vmul.f32 %v1770, 0.01
    %v2994 = vmul.f32 %v2282, 0.01
    %v2995 = vmul.f32 %v2284, 0.01
    %v2996 = vmul.f32 %v2796, 0.01
    %v2997 = vmul.f32 %v2798, 0.01
    %v2998 = vmul.f32 %v1260, 0.01
    %v2999 = vmul.f32 %v1262, 0.01
    %v3000 = vmul.f32 %v1774, 0.01
    %v3001 = vmul.f32 %v1776, 0.01
    %v3002 = vmul.f32 %v2288, 0.01
    %v3003 = vmul.f32 %v2290, 0.01
    %v3004 = vmul.f32 %v2802, 0.01
    %v3005 = vmul.f32 %v2804, 0.01
    %v3006 = vmul.f32 %v1266, 0.01
    %v3007 = vmul.f32 %v1268, 0.01
    %v3008 = vmul.f32 %v1780, 0.01
    %v3009 = vmul.f32 %v1782, 0.01
    %v3010 = vmul.f32 %v2294, 0.01
    %v3011 = vmul.f32 %v2296, 0.01
    %v3012 = vmul.f32 %v2808, 0.01
    %v3013 = vmul.f32 %v2810, 0.01
    %v3014 = vmul.f32 %v1272, 0.01
    %v3015 = vmul.f32 %v1274, 0.01
    %v3016 = vmul.f32 %v1786, 0.01
    %v3017 = vmul.f32 %v1788, 0.01
    %v3018 = vmul.f32 %v2300, 0.01
    %v3019 = vmul.f32 %v2302, 0.01
    %v3020 = vmul.f32 %v2814, 0.01
    %v3021 = vmul.f32 %v2816, 0.01
    %v3022 = vmul.f32 %v1278, 0.01
    %v3023 = vmul.f32 %v1280, 0.01
    %v3024 = vmul.f32 %v1792, 0.01
    %v3025 = vmul.f32 %v1794, 0.01
    %v3026 = vmul.f32 %v2306, 0.01
    %v3027 = vmul.f32 %v2308, 0.01
    %v3028 = vmul.f32 %v2820, 0.01
    %v3029 = vmul.f32 %v2822, 0.01
    %v3030 = vmul.f32 %v1284, 0.01
    %v3031 = vmul.f32 %v1286, 0.01
    %v3032 = vmul.f32 %v1798, 0.01
    %v3033 = vmul.f32 %v1800, 0.01
    %v3034 = vmul.f32 %v2312, 0.01
    %v3035 = vmul.f32 %v2314, 0.01
    %v3036 = vmul.f32 %v2826, 0.01
    %v3037 = vmul.f32 %v2828, 0.01
    %v3038 = vmul.f32 %v1290, 0.01
    %v3039 = vmul.f32 %v1292, 0.01
    %v3040 = vmul.f32 %v1804, 0.01
    %v3041 = vmul.f32 %v1806, 0.01
    %v3042 = vmul.f32 %v2318, 0.01
    %v3043 = vmul.f32 %v2320, 0.01
    %v3044 = vmul.f32 %v2832, 0.01
    %v3045 = vmul.f32 %v2834, 0.01
    %v3046 = vmul.f32 %v1296, 0.01
    %v3047 = vmul.f32 %v1298, 0.01
    %v3048 = vmul.f32 %v1810, 0.01
    %v3049 = vmul.f32 %v1812, 0.01
    %v3050 = vmul.f32 %v2324, 0.01
    %v3051 = vmul.f32 %v2326, 0.01
    %v3052 = vmul.f32 %v2838, 0.01
    %v3053 = vmul.f32 %v2840, 0.01
    %v3054 = vmul.f32 %v1302, 0.01
    %v3055 = vmul.f32 %v1304, 0.01
    %v3056 = vmul.f32 %v1816, 0.01
    %v3057 = vmul.f32 %v1818, 0.01
    %v3058 = vmul.f32 %v2330, 0.01
    %v3059 = vmul.f32 %v2332, 0.01
    %v3060 = vmul.f32 %v2844, 0.01
    %v3061 = vmul.f32 %v2846, 0.01
    %v3062 = vmul.f32 %v1308, 0.01
    %v3063 = vmul.f32 %v1310, 0.01
    %v3064 = vmul.f32 %v1822, 0.01
    %v3065 = vmul.f32 %v1824, 0.01
    %v3066 = vmul.f32 %v2336, 0.01
    %v3067 = vmul.f32 %v2338, 0.01
    %v3068 = vmul.f32 %v2850, 0.01
    %v3069 = vmul.f32 %v2852, 0.01
    %v3070 = vmul.f32 %v1314, 0.01
    %v3071 = vmul.f32 %v1316, 0.01
    %v3072 = vmul.f32 %v1828, 0.01
    %v3073 = vmul.f32 %v1830, 0.01
    %v3074 = vmul.f32 %v2342, 0.01
    %v3075 = vmul.f32 %v2344, 0.01
    %v3076 = vmul.f32 %v2856, 0.01
    %v3077 = vmul.f32 %v2858, 0.01
    %v3078 = vmul.f32 %v1320, 0.01
    %v3079 = vmul.f32 %v1322, 0.01
    %v3080 = vmul.f32 %v1834, 0.01
    %v3081 = vmul.f32 %v1836, 0.01
    %v3082 = vmul.f32 %v2348, 0.01
    %v3083 = vmul.f32 %v2350, 0.01
    %v3084 = vmul.f32 %v2862, 0.01
    %v3085 = vmul.f32 %v2864, 0.01
    %v3086 = vmul.f32 %v1326, 0.01
    %v3087 = vmul.f32 %v1328, 0.01
    %v3088 = vmul.f32 %v1840, 0.01
    %v3089 = vmul.f32 %v1842, 0.01
    %v3090 = vmul.f32 %v2354, 0.01
    %v3091 = vmul.f32 %v2356, 0.01
    %v3092 = vmul.f32 %v2868, 0.01
    %v3093 = vmul.f32 %v2870, 0.01
    %v3094 = vmul.f32 %v1332, 0.01
    %v3095 = vmul.f32 %v1334, 0.01
    %v3096 = vmul.f32 %v1846, 0.01
    %v3097 = vmul.f32 %v1848, 0.01
    %v3098 = vmul.f32 %v2360, 0.01
    %v3099 = vmul.f32 %v2362, 0.01
    %v3100 = vmul.f32 %v2874, 0.01
    %v3101 = vmul.f32 %v2876, 0.01
    %v3102 = vmul.f32 %v1338, 0.01
    %v3103 = vmul.f32 %v1340, 0.01
    %v3104 = vmul.f32 %v1852, 0.01
    %v3105 = vmul.f32 %v1854, 0.01
    %v3106 = vmul.f32 %v2366, 0.01
    %v3107 = vmul.f32 %v2368, 0.01
    %v3108 = vmul.f32 %v2880, 0.01
    %v3109 = vmul.f32 %v2882, 0.01
    %v3110 = vmul.f32 %v1344, 0.01
    %v3111 = vmul.f32 %v1346, 0.01
    %v3112 = vmul.f32 %v1858, 0.01
    %v3113 = vmul.f32 %v1860, 0.01
    %v3114 = vmul.f32 %v2372, 0.01
    %v3115 = vmul.f32 %v2374, 0.01
    %v3116 = vmul.f32 %v2886, 0.01
    %v3117 = vmul.f32 %v2888, 0.01
    %v3118 = vmul.f32 %v1350, 0.01
    %v3119 = vmul.f32 %v1352, 0.01
    %v3120 = vmul.f32 %v1864, 0.01
    %v3121 = vmul.f32 %v1866, 0.01
    %v3122 = vmul.f32 %v2378, 0.01
    %v3123 = vmul.f32 %v2380, 0.01
    %v3124 = vmul.f32 %v2892, 0.01
    %v3125 = vmul.f32 %v2894, 0.01
    %v3126 = vmul.f32 %v1356, 0.01
    %v3127 = vmul.f32 %v1358, 0.01
    %v3128 = vmul.f32 %v1870, 0.01
    %v3129 = vmul.f32 %v1872, 0.01
    %v3130 = vmul.f32 %v2384, 0.01
    %v3131 = vmul.f32 %v2386, 0.01
    %v3132 = vmul.f32 %v2898, 0.01
    %v3133 = vmul.f32 %v2900, 0.01
    %v3134 = vmul.f32 %v1362, 0.01
    %v3135 = vmul.f32 %v1364, 0.01
    %v3136 = vmul.f32 %v1876, 0.01
    %v3137 = vmul.f32 %v1878, 0.01
    %v3138 = vmul.f32 %v2390, 0.01
    %v3139 = vmul.f32 %v2392, 0.01
    %v3140 = vmul.f32 %v2904, 0.01
    %v3141 = vmul.f32 %v2906, 0.01
    %v3142 = vmul.f32 %v1368, 0.01
    %v3143 = vmul.f32 %v1370, 0.01
    %v3144 = vmul.f32 %v1882, 0.01
    %v3145 = vmul.f32 %v1884, 0.01
    %v3146 = vmul.f32 %v2396, 0.01
    %v3147 = vmul.f32 %v2398, 0.01
    %v3148 = vmul.f32 %v2910, 0.01
    %v3149 = vmul.f32 %v2912, 0.01
    %v3150 = vmul.f32 %v1374, 0.01
    %v3151 = vmul.f32 %v1376, 0.01
    %v3152 = vmul.f32 %v1888, 0.01
    %v3153 = vmul.f32 %v1890, 0.01
    %v3154 = vmul.f32 %v2402, 0.01
    %v3155 = vmul.f32 %v2404, 0.01
    %v3156 = vmul.f32 %v2916, 0.01
    %v3157 = vmul.f32 %v2918, 0.01
    %v3158 = vmul.f32 %v1380, 0.01
    %v3159 = vmul.f32 %v1382, 0.01
    %v3160 = vmul.f32 %v1894, 0.01
    %v3161 = vmul.f32 %v1896, 0.01
    %v3162 = vmul.f32 %v2408, 0.01
    %v3163 = vmul.f32 %v2410, 0.01
    %v3164 = vmul.f32 %v2922, 0.01
    %v3165 = vmul.f32 %v2924, 0.01
    %v3166 = vmul.f32 %v1386, 0.01
    %v3167 = vmul.f32 %v1388, 0.01
    %v3168 = vmul.f32 %v1900, 0.01
    %v3169 = vmul.f32 %v1902, 0.01
    %v3170 = vmul.f32 %v2414, 0.01
    %v3171 = vmul.f32 %v2416, 0.01
    %v3172 = vmul.f32 %v2928, 0.01
    %v3173 = vmul.f32 %v2930, 0.01
    %v3174 = vmul.f32 %v1392, 0.01
    %v3175 = vmul.f32 %v1394, 0.01
    %v3176 = vmul.f32 %v1906, 0.01
    %v3177 = vmul.f32 %v1908, 0.01
    %v3178 = vmul.f32 %v2420, 0.01
    %v3179 = vmul.f32 %v2422, 0.01
    %v3180 = vmul.f32 %v2934, 0.01
    %v3181 = vmul.f32 %v2936, 0.01
    %v3182 = vmul.f32 %v1398, 0.01
    %v3183 = vmul.f32 %v1400, 0.01
    %v3184 = vmul.f32 %v1912, 0.01
    %v3185 = vmul.f32 %v1914, 0.01
    %v3186 = vmul.f32 %v2426, 0.01
    %v3187 = vmul.f32 %v2428, 0.01
    %v3188 = vmul.f32 %v2940, 0.01
    %v3189 = vmul.f32 %v2942, 0.01
    %v3190 = vmul.f32 %v1404, 0.01
    %v3191 = vmul.f32 %v1406, 0.01
    %v3192 = vmul.f32 %v1918, 0.01
    %v3193 = vmul.f32 %v1920, 0.01
    %v3194 = vmul.f32 %v2432, 0.01
    %v3195 = vmul.f32 %v2434, 0.01
    %v3196 = vmul.f32 %v2946, 0.01
    %v3197 = vmul.f32 %v2948, 0.01
    %v3198 = vmul.f32 %v1410, 0.01
    %v3199 = vmul.f32 %v1412, 0.01
    %v3200 = vmul.f32 %v1924, 0.01
    %v3201 = vmul.f32 %v1926, 0.01
    %v3202 = vmul.f32 %v2438, 0.01
    %v3203 = vmul.f32 %v2440, 0.01
    %v3204 = vmul.f32 %v2952, 0.01
    %v3205 = vmul.f32 %v2954, 0.01
    %v3206 = vmul.f32 %v1416, 0.01
    %v3207 = vmul.f32 %v1418, 0.01
    %v3208 = vmul.f32 %v1930, 0.01
    %v3209 = vmul.f32 %v1932, 0.01
    %v3210 = vmul.f32 %v2444, 0.01
    %v3211 = vmul.f32 %v2446, 0.01
    %v3212 = vmul.f32 %v2958, 0.01
    %v3213 = vmul.f32 %v2960, 0.01
    %v3214 = vmul.f32 %v1422, 0.01
    %v3215 = vmul.f32 %v1424, 0.01
    %v3216 = vmul.f32 %v1936, 0.01
    %v3217 = vmul.f32 %v1938, 0.01
    %v3218 = vmul.f32 %v2450, 0.01
    %v3219 = vmul.f32 %v2452, 0.01
    %v3220 = vmul.f32 %v2964, 0.01
    %v3221 = vmul.f32 %v2966, 0.01
    %v3222 = vmul.f32 %v1428, 0.01
    %v3223 = vmul.f32 %v1430, 0.01
    %v3224 = vmul.f32 %v1942, 0.01
    %v3225 = vmul.f32 %v1944, 0.01
    %v3226 = vmul.f32 %v2456, 0.01
    %v3227 = vmul.f32 %v2458, 0.01
    %v3228 = vmul.f32 %v2970, 0.01
    %v3229 = vmul.f32 %v2972, 0.01
    %v3230 = vmax.f32 %v1242, %v2974
    %v3231 = vmax.f32 %v1244, %v2975
    %v3232 = vmax.f32 %v1756, %v2976
    %v3233 = vmax.f32 %v1758, %v2977
    %v3234 = vmax.f32 %v2270, %v2978
    %v3235 = vmax.f32 %v2272, %v2979
    %v3236 = vmax.f32 %v2784, %v2980
    %v3237 = vmax.f32 %v2786, %v2981
    %v3238 = vmax.f32 %v1248, %v2982
    %v3239 = vmax.f32 %v1250, %v2983
    %v3240 = vmax.f32 %v1762, %v2984
    %v3241 = vmax.f32 %v1764, %v2985
    %v3242 = vmax.f32 %v2276, %v2986
    %v3243 = vmax.f32 %v2278, %v2987
    %v3244 = vmax.f32 %v2790, %v2988
    %v3245 = vmax.f32 %v2792, %v2989
    %v3246 = vmax.f32 %v1254, %v2990
    %v3247 = vmax.f32 %v1256, %v2991
    %v3248 = vmax.f32 %v1768, %v2992
    %v3249 = vmax.f32 %v1770, %v2993
    %v3250 = vmax.f32 %v2282, %v2994
    %v3251 = vmax.f32 %v2284, %v2995
    %v3252 = vmax.f32 %v2796, %v2996
    %v3253 = vmax.f32 %v2798, %v2997
    %v3254 = vmax.f32 %v1260, %v2998
    %v3255 = vmax.f32 %v1262, %v2999
    %v3256 = vmax.f32 %v1774, %v3000
    %v3257 = vmax.f32 %v1776, %v3001
    %v3258 = vmax.f32 %v2288, %v3002
    %v3259 = vmax.f32 %v2290, %v3003
    %v3260 = vmax.f32 %v2802, %v3004
    %v3261 = vmax.f32 %v2804, %v3005
    %v3262 = vmax.f32 %v1266, %v3006
    %v3263 = vmax.f32 %v1268, %v3007
    %v3264 = vmax.f32 %v1780, %v3008
    %v3265 = vmax.f32 %v1782, %v3009
    %v3266 = vmax.f32 %v2294, %v3010
    %v3267 = vmax.f32 %v2296, %v3011
    %v3268 = vmax.f32 %v2808, %v3012
    %v3269 = vmax.f32 %v2810, %v3013
    %v3270 = vmax.f32 %v1272, %v3014
    %v3271 = vmax.f32 %v1274, %v3015
    %v3272 = vmax.f32 %v1786, %v3016
    %v3273 = vmax.f32 %v1788, %v3017
    %v3274 = vmax.f32 %v2300, %v3018
    %v3275 = vmax.f32 %v2302, %v3019
    %v3276 = vmax.f32 %v2814, %v3020
    %v3277 = vmax.f32 %v2816, %v3021
    %v3278 = vmax.f32 %v1278, %v3022
    %v3279 = vmax.f32 %v1280, %v3023
    %v3280 = vmax.f32 %v1792, %v3024
    %v3281 = vmax.f32 %v1794, %v3025
    %v3282 = vmax.f32 %v2306, %v3026
    %v3283 = vmax.f32 %v2308, %v3027
    %v3284 = vmax.f32 %v2820, %v3028
    %v3285 = vmax.f32 %v2822, %v3029
    %v3286 = vmax.f32 %v1284, %v3030
    %v3287 = vmax.f32 %v1286, %v3031
    %v3288 = vmax.f32 %v1798, %v3032
    %v3289 = vmax.f32 %v1800, %v3033
    %v3290 = vmax.f32 %v2312, %v3034
    %v3291 = vmax.f32 %v2314, %v3035
    %v3292 = vmax.f32 %v2826, %v3036
    %v3293 = vmax.f32 %v2828, %v3037
    %v3294 = vmax.f32 %v1290, %v3038
    %v3295 = vmax.f32 %v1292, %v3039
    %v3296 = vmax.f32 %v1804, %v3040
    %v3297 = vmax.f32 %v1806, %v3041
    %v3298 = vmax.f32 %v2318, %v3042
    %v3299 = vmax.f32 %v2320, %v3043
    %v3300 = vmax.f32 %v2832, %v3044
    %v3301 = vmax.f32 %v2834, %v3045
    %v3302 = vmax.f32 %v1296, %v3046
    %v3303 = vmax.f32 %v1298, %v3047
    %v3304 = vmax.f32 %v1810, %v3048
    %v3305 = vmax.f32 %v1812, %v3049
    %v3306 = vmax.f32 %v2324, %v3050
    %v3307 = vmax.f32 %v2326, %v3051
    %v3308 = vmax.f32 %v2838, %v3052
    %v3309 = vmax.f32 %v2840, %v3053
    %v3310 = vmax.f32 %v1302, %v3054
    %v3311 = vmax.f32 %v1304, %v3055
    %v3312 = vmax.f32 %v1816, %v3056
    %v3313 = vmax.f32 %v1818, %v3057
    %v3314 = vmax.f32 %v2330, %v3058
    %v3315 = vmax.f32 %v2332, %v3059
    %v3316 = vmax.f32 %v2844, %v3060
    %v3317 = vmax.f32 %v2846, %v3061
    %v3318 = vmax.f32 %v1308, %v3062
    %v3319 = vmax.f32 %v1310, %v3063
    %v3320 = vmax.f32 %v1822, %v3064
    %v3321 = vmax.f32 %v1824, %v3065
    %v3322 = vmax.f32 %v2336, %v3066
    %v3323 = vmax.f32 %v2338, %v3067
    %v3324 = vmax.f32 %v2850, %v3068
    %v3325 = vmax.f32 %v2852, %v3069
    %v3326 = vmax.f32 %v1314, %v3070
    %v3327 = vmax.f32 %v1316, %v3071
    %v3328 = vmax.f32 %v1828, %v3072
    %v3329 = vmax.f32 %v1830, %v3073
    %v3330 = vmax.f32 %v2342, %v3074
    %v3331 = vmax.f32 %v2344, %v3075
    %v3332 = vmax.f32 %v2856, %v3076
    %v3333 = vmax.f32 %v2858, %v3077
    %v3334 = vmax.f32 %v1320, %v3078
    %v3335 = vmax.f32 %v1322, %v3079
    %v3336 = vmax.f32 %v1834, %v3080
    %v3337 = vmax.f32 %v1836, %v3081
    %v3338 = vmax.f32 %v2348, %v3082
    %v3339 = vmax.f32 %v2350, %v3083
    %v3340 = vmax.f32 %v2862, %v3084
    %v3341 = vmax.f32 %v2864, %v3085
    %v3342 = vmax.f32 %v1326, %v3086
    %v3343 = vmax.f32 %v1328, %v3087
    %v3344 = vmax.f32 %v1840, %v3088
    %v3345 = vmax.f32 %v1842, %v3089
    %v3346 = vmax.f32 %v2354, %v3090
    %v3347 = vmax.f32 %v2356, %v3091
    %v3348 = vmax.f32 %v2868, %v3092
    %v3349 = vmax.f32 %v2870, %v3093
    %v3350 = vmax.f32 %v1332, %v3094
    %v3351 = vmax.f32 %v1334, %v3095
    %v3352 = vmax.f32 %v1846, %v3096
    %v3353 = vmax.f32 %v1848, %v3097
    %v3354 = vmax.f32 %v2360, %v3098
    %v3355 = vmax.f32 %v2362, %v3099
    %v3356 = vmax.f32 %v2874, %v3100
    %v3357 = vmax.f32 %v2876, %v3101
    %v3358 = vmax.f32 %v1338, %v3102
    %v3359 = vmax.f32 %v1340, %v3103
    %v3360 = vmax.f32 %v1852, %v3104
    %v3361 = vmax.f32 %v1854, %v3105
    %v3362 = vmax.f32 %v2366, %v3106
    %v3363 = vmax.f32 %v2368, %v3107
    %v3364 = vmax.f32 %v2880, %v3108
    %v3365 = vmax.f32 %v2882, %v3109
    %v3366 = vmax.f32 %v1344, %v3110
    %v3367 = vmax.f32 %v1346, %v3111
    %v3368 = vmax.f32 %v1858, %v3112
    %v3369 = vmax.f32 %v1860, %v3113
    %v3370 = vmax.f32 %v2372, %v3114
    %v3371 = vmax.f32 %v2374, %v3115
    %v3372 = vmax.f32 %v2886, %v3116
    %v3373 = vmax.f32 %v2888, %v3117
    %v3374 = vmax.f32 %v1350, %v3118
    %v3375 = vmax.f32 %v1352, %v3119
    %v3376 = vmax.f32 %v1864, %v3120
    %v3377 = vmax.f32 %v1866, %v3121
    %v3378 = vmax.f32 %v2378, %v3122
    %v3379 = vmax.f32 %v2380, %v3123
    %v3380 = vmax.f32 %v2892, %v3124
    %v3381 = vmax.f32 %v2894, %v3125
    %v3382 = vmax.f32 %v1356, %v3126
    %v3383 = vmax.f32 %v1358, %v3127
    %v3384 = vmax.f32 %v1870, %v3128
    %v3385 = vmax.f32 %v1872, %v3129
    %v3386 = vmax.f32 %v2384, %v3130
    %v3387 = vmax.f32 %v2386, %v3131
    %v3388 = vmax.f32 %v2898, %v3132
    %v3389 = vmax.f32 %v2900, %v3133
    %v3390 = vmax.f32 %v1362, %v3134
    %v3391 = vmax.f32 %v1364, %v3135
    %v3392 = vmax.f32 %v1876, %v3136
    %v3393 = vmax.f32 %v1878, %v3137
    %v3394 = vmax.f32 %v2390, %v3138
    %v3395 = vmax.f32 %v2392, %v3139
    %v3396 = vmax.f32 %v2904, %v3140
    %v3397 = vmax.f32 %v2906, %v3141
    %v3398 = vmax.f32 %v1368, %v3142
    %v3399 = vmax.f32 %v1370, %v3143
    %v3400 = vmax.f32 %v1882, %v3144
    %v3401 = vmax.f32 %v1884, %v3145
    %v3402 = vmax.f32 %v2396, %v3146
    %v3403 = vmax.f32 %v2398, %v3147
    %v3404 = vmax.f32 %v2910, %v3148
    %v3405 = vmax.f32 %v2912, %v3149
    %v3406 = vmax.f32 %v1374, %v3150
    %v3407 = vmax.f32 %v1376, %v3151
    %v3408 = vmax.f32 %v1888, %v3152
    %v3409 = vmax.f32 %v1890, %v3153
    %v3410 = vmax.f32 %v2402, %v3154
    %v3411 = vmax.f32 %v2404, %v3155
    %v3412 = vmax.f32 %v2916, %v3156
    %v3413 = vmax.f32 %v2918, %v3157
    %v3414 = vmax.f32 %v1380, %v3158
    %v3415 = vmax.f32 %v1382, %v3159
    %v3416 = vmax.f32 %v1894, %v3160
    %v3417 = vmax.f32 %v1896, %v3161
    %v3418 = vmax.f32 %v2408, %v3162
    %v3419 = vmax.f32 %v2410, %v3163
    %v3420 = vmax.f32 %v2922, %v3164
    %v3421 = vmax.f32 %v2924, %v3165
    %v3422 = vmax.f32 %v1386, %v3166
    %v3423 = vmax.f32 %v1388, %v3167
    %v3424 = vmax.f32 %v1900, %v3168
    %v3425 = vmax.f32 %v1902, %v3169
    %v3426 = vmax.f32 %v2414, %v3170
    %v3427 = vmax.f32 %v2416, %v3171
    %v3428 = vmax.f32 %v2928, %v3172
    %v3429 = vmax.f32 %v2930, %v3173
    %v3430 = vmax.f32 %v1392, %v3174
    %v3431 = vmax.f32 %v1394, %v3175
    %v3432 = vmax.f32 %v1906, %v3176
    %v3433 = vmax.f32 %v1908, %v3177
    %v3434 = vmax.f32 %v2420, %v3178
    %v3435 = vmax.f32 %v2422, %v3179
    %v3436 = vmax.f32 %v2934, %v3180
    %v3437 = vmax.f32 %v2936, %v3181
    %v3438 = vmax.f32 %v1398, %v3182
    %v3439 = vmax.f32 %v1400, %v3183
    %v3440 = vmax.f32 %v1912, %v3184
    %v3441 = vmax.f32 %v1914, %v3185
    %v3442 = vmax.f32 %v2426, %v3186
    %v3443 = vmax.f32 %v2428, %v3187
    %v3444 = vmax.f32 %v2940, %v3188
    %v3445 = vmax.f32 %v2942, %v3189
    %v3446 = vmax.f32 %v1404, %v3190
    %v3447 = vmax.f32 %v1406, %v3191
    %v3448 = vmax.f32 %v1918, %v3192
    %v3449 = vmax.f32 %v1920, %v3193
    %v3450 = vmax.f32 %v2432, %v3194
    %v3451 = vmax.f32 %v2434, %v3195
    %v3452 = vmax.f32 %v2946, %v3196
    %v3453 = vmax.f32 %v2948, %v3197
    %v3454 = vmax.f32 %v1410, %v3198
    %v3455 = vmax.f32 %v1412, %v3199
    %v3456 = vmax.f32 %v1924, %v3200
    %v3457 = vmax.f32 %v1926, %v3201
    %v3458 = vmax.f32 %v2438, %v3202
    %v3459 = vmax.f32 %v2440, %v3203
    %v3460 = vmax.f32 %v2952, %v3204
    %v3461 = vmax.f32 %v2954, %v3205
    %v3462 = vmax.f32 %v1416, %v3206
    %v3463 = vmax.f32 %v1418, %v3207
    %v3464 = vmax.f32 %v1930, %v3208
    %v3465 = vmax.f32 %v1932, %v3209
    %v3466 = vmax.f32 %v2444, %v3210
    %v3467 = vmax.f32 %v2446, %v3211
    %v3468 = vmax.f32 %v2958, %v3212
    %v3469 = vmax.f32 %v2960, %v3213
    %v3470 = vmax.f32 %v1422, %v3214
    %v3471 = vmax.f32 %v1424, %v3215
    %v3472 = vmax.f32 %v1936, %v3216
    %v3473 = vmax.f32 %v1938, %v3217
    %v3474 = vmax.f32 %v2450, %v3218
    %v3475 = vmax.f32 %v2452, %v3219
    %v3476 = vmax.f32 %v2964, %v3220
    %v3477 = vmax.f32 %v2966, %v3221
    %v3478 = vmax.f32 %v1428, %v3222
    %v3479 = vmax.f32 %v1430, %v3223
    %v3480 = vmax.f32 %v1942, %v3224
    %v3481 = vmax.f32 %v1944, %v3225
    %v3482 = vmax.f32 %v2456, %v3226
    %v3483 = vmax.f32 %v2458, %v3227
    %v3484 = vmax.f32 %v2970, %v3228
    %v3485 = vmax.f32 %v2972, %v3229
    %v3486 = vld [vmem:[#allocation8] sm:$0xff]
    %v3487 = vld [vmem:[#allocation8 + $0x8] sm:$0xff]
    %v3488 = vld [vmem:[#allocation8 + $0x10] sm:$0xff]
    %v3489 = vld [vmem:[#allocation8 + $0x18] sm:$0xff]
    %v3490 = vld [vmem:[#allocation8 + $0x20] sm:$0xff]
    %v3491 = vld [vmem:[#allocation8 + $0x28] sm:$0xff]
    %v3492 = vld [vmem:[#allocation8 + $0x30] sm:$0xff]
    %v3493 = vld [vmem:[#allocation8 + $0x38] sm:$0xff]
    %v3494 = vld [vmem:[#allocation8 + $0x40] sm:$0xff]
    %v3495 = vld [vmem:[#allocation8 + $0x48] sm:$0xff]
    %v3496 = vld [vmem:[#allocation8 + $0x50] sm:$0xff]
    %v3497 = vld [vmem:[#allocation8 + $0x58] sm:$0xff]
    %v3498 = vld [vmem:[#allocation8 + $0x60] sm:$0xff]
    %v3499 = vld [vmem:[#allocation8 + $0x68] sm:$0xff]
    %v3500 = vld [vmem:[#allocation8 + $0x70] sm:$0xff]
    %v3501 = vld [vmem:[#allocation8 + $0x78] sm:$0xff]
    %v3502 = vld [vmem:[#allocation8 + $0x80] sm:$0xff]
    %v3503 = vld [vmem:[#allocation8 + $0x88] sm:$0xff]
    %v3504 = vld [vmem:[#allocation8 + $0x90] sm:$0xff]
    %v3505 = vld [vmem:[#allocation8 + $0x98] sm:$0xff]
    %v3506 = vld [vmem:[#allocation8 + $0xa0] sm:$0xff]
    %v3507 = vld [vmem:[#allocation8 + $0xa8] sm:$0xff]
    %v3508 = vld [vmem:[#allocation8 + $0xb0] sm:$0xff]
    %v3509 = vld [vmem:[#allocation8 + $0xb8] sm:$0xff]
    %v3510 = vld [vmem:[#allocation8 + $0xc0] sm:$0xff]
    %v3511 = vld [vmem:[#allocation8 + $0xc8] sm:$0xff]
    %v3512 = vld [vmem:[#allocation8 + $0xd0] sm:$0xff]
    %v3513 = vld [vmem:[#allocation8 + $0xd8] sm:$0xff]
    %v3514 = vld [vmem:[#allocation8 + $0xe0] sm:$0xff]
    %v3515 = vld [vmem:[#allocation8 + $0xe8] sm:$0xff]
    %v3516 = vld [vmem:[#allocation8 + $0xf0] sm:$0xff]
    %v3517 = vld [vmem:[#allocation8 + $0xf8] sm:$0xff]
    %v3518 = vld [vmem:[#allocation8 + $0x100] sm:$0xff]
    %v3519 = vld [vmem:[#allocation8 + $0x108] sm:$0xff]
    %v3520 = vld [vmem:[#allocation8 + $0x110] sm:$0xff]
    %v3521 = vld [vmem:[#allocation8 + $0x118] sm:$0xff]
    %v3522 = vld [vmem:[#allocation8 + $0x120] sm:$0xff]
    %v3523 = vld [vmem:[#allocation8 + $0x128] sm:$0xff]
    %v3524 = vld [vmem:[#allocation8 + $0x130] sm:$0xff]
    %v3525 = vld [vmem:[#allocation8 + $0x138] sm:$0xff]
    %v3526 = vld [vmem:[#allocation8 + $0x140] sm:$0xff]
    %v3527 = vld [vmem:[#allocation8 + $0x148] sm:$0xff]
    %v3528 = vld [vmem:[#allocation8 + $0x150] sm:$0xff]
    %v3529 = vld [vmem:[#allocation8 + $0x158] sm:$0xff]
    %v3530 = vld [vmem:[#allocation8 + $0x160] sm:$0xff]
    %v3531 = vld [vmem:[#allocation8 + $0x168] sm:$0xff]
    %v3532 = vld [vmem:[#allocation8 + $0x170] sm:$0xff]
    %v3533 = vld [vmem:[#allocation8 + $0x178] sm:$0xff]
    %v3534 = vld [vmem:[#allocation8 + $0x180] sm:$0xff]
    %v3535 = vld [vmem:[#allocation8 + $0x188] sm:$0xff]
    %v3536 = vld [vmem:[#allocation8 + $0x190] sm:$0xff]
    %v3537 = vld [vmem:[#allocation8 + $0x198] sm:$0xff]
    %v3538 = vld [vmem:[#allocation8 + $0x1a0] sm:$0xff]
    %v3539 = vld [vmem:[#allocation8 + $0x1a8] sm:$0xff]
    %v3540 = vld [vmem:[#allocation8 + $0x1b0] sm:$0xff]
    %v3541 = vld [vmem:[#allocation8 + $0x1b8] sm:$0xff]
    %v3542 = vld [vmem:[#allocation8 + $0x1c0] sm:$0xff]
    %v3543 = vld [vmem:[#allocation8 + $0x1c8] sm:$0xff]
    %v3544 = vld [vmem:[#allocation8 + $0x1d0] sm:$0xff]
    %v3545 = vld [vmem:[#allocation8 + $0x1d8] sm:$0xff]
    %v3546 = vld [vmem:[#allocation8 + $0x1e0] sm:$0xff]
    %v3547 = vld [vmem:[#allocation8 + $0x1e8] sm:$0xff]
    %v3548 = vld [vmem:[#allocation8 + $0x1f0] sm:$0xff]
    %v3549 = vld [vmem:[#allocation8 + $0x1f8] sm:$0xff]
    %v3550 = vld [vmem:[#allocation8 + $0x200] sm:$0xff]
    %v3551 = vld [vmem:[#allocation8 + $0x208] sm:$0xff]
    %v3552 = vld [vmem:[#allocation8 + $0x210] sm:$0xff]
    %v3553 = vld [vmem:[#allocation8 + $0x218] sm:$0xff]
    %v3554 = vld [vmem:[#allocation8 + $0x220] sm:$0xff]
    %v3555 = vld [vmem:[#allocation8 + $0x228] sm:$0xff]
    %v3556 = vld [vmem:[#allocation8 + $0x230] sm:$0xff]
    %v3557 = vld [vmem:[#allocation8 + $0x238] sm:$0xff]
    %v3558 = vld [vmem:[#allocation8 + $0x240] sm:$0xff]
    %v3559 = vld [vmem:[#allocation8 + $0x248] sm:$0xff]
    %v3560 = vld [vmem:[#allocation8 + $0x250] sm:$0xff]
    %v3561 = vld [vmem:[#allocation8 + $0x258] sm:$0xff]
    %v3562 = vld [vmem:[#allocation8 + $0x260] sm:$0xff]
    %v3563 = vld [vmem:[#allocation8 + $0x268] sm:$0xff]
    %v3564 = vld [vmem:[#allocation8 + $0x270] sm:$0xff]
    %v3565 = vld [vmem:[#allocation8 + $0x278] sm:$0xff]
    %v3566 = vld [vmem:[#allocation8 + $0x280] sm:$0xff]
    %v3567 = vld [vmem:[#allocation8 + $0x288] sm:$0xff]
    %v3568 = vld [vmem:[#allocation8 + $0x290] sm:$0xff]
    %v3569 = vld [vmem:[#allocation8 + $0x298] sm:$0xff]
    %v3570 = vld [vmem:[#allocation8 + $0x2a0] sm:$0xff]
    %v3571 = vld [vmem:[#allocation8 + $0x2a8] sm:$0xff]
    %v3572 = vld [vmem:[#allocation8 + $0x2b0] sm:$0xff]
    %v3573 = vld [vmem:[#allocation8 + $0x2b8] sm:$0xff]
    %v3574 = vld [vmem:[#allocation8 + $0x2c0] sm:$0xff]
    %v3575 = vld [vmem:[#allocation8 + $0x2c8] sm:$0xff]
    %v3576 = vld [vmem:[#allocation8 + $0x2d0] sm:$0xff]
    %v3577 = vld [vmem:[#allocation8 + $0x2d8] sm:$0xff]
    %v3578 = vld [vmem:[#allocation8 + $0x2e0] sm:$0xff]
    %v3579 = vld [vmem:[#allocation8 + $0x2e8] sm:$0xff]
    %v3580 = vld [vmem:[#allocation8 + $0x2f0] sm:$0xff]
    %v3581 = vld [vmem:[#allocation8 + $0x2f8] sm:$0xff]
    %v3582 = vld [vmem:[#allocation8 + $0x300] sm:$0xff]
    %v3583 = vld [vmem:[#allocation8 + $0x308] sm:$0xff]
    %v3584 = vld [vmem:[#allocation8 + $0x310] sm:$0xff]
    %v3585 = vld [vmem:[#allocation8 + $0x318] sm:$0xff]
    %v3586 = vld [vmem:[#allocation8 + $0x320] sm:$0xff]
    %v3587 = vld [vmem:[#allocation8 + $0x328] sm:$0xff]
    %v3588 = vld [vmem:[#allocation8 + $0x330] sm:$0xff]
    %v3589 = vld [vmem:[#allocation8 + $0x338] sm:$0xff]
    %v3590 = vld [vmem:[#allocation8 + $0x340] sm:$0xff]
    %v3591 = vld [vmem:[#allocation8 + $0x348] sm:$0xff]
    %v3592 = vld [vmem:[#allocation8 + $0x350] sm:$0xff]
    %v3593 = vld [vmem:[#allocation8 + $0x358] sm:$0xff]
    %v3594 = vld [vmem:[#allocation8 + $0x360] sm:$0xff]
    %v3595 = vld [vmem:[#allocation8 + $0x368] sm:$0xff]
    %v3596 = vld [vmem:[#allocation8 + $0x370] sm:$0xff]
    %v3597 = vld [vmem:[#allocation8 + $0x378] sm:$0xff]
    %v3598 = vld [vmem:[#allocation8 + $0x380] sm:$0xff]
    %v3599 = vld [vmem:[#allocation8 + $0x388] sm:$0xff]
    %v3600 = vld [vmem:[#allocation8 + $0x390] sm:$0xff]
    %v3601 = vld [vmem:[#allocation8 + $0x398] sm:$0xff]
    %v3602 = vld [vmem:[#allocation8 + $0x3a0] sm:$0xff]
    %v3603 = vld [vmem:[#allocation8 + $0x3a8] sm:$0xff]
    %v3604 = vld [vmem:[#allocation8 + $0x3b0] sm:$0xff]
    %v3605 = vld [vmem:[#allocation8 + $0x3b8] sm:$0xff]
    %v3606 = vld [vmem:[#allocation8 + $0x3c0] sm:$0xff]
    %v3607 = vld [vmem:[#allocation8 + $0x3c8] sm:$0xff]
    %v3608 = vld [vmem:[#allocation8 + $0x3d0] sm:$0xff]
    %v3609 = vld [vmem:[#allocation8 + $0x3d8] sm:$0xff]
    %v3610 = vld [vmem:[#allocation8 + $0x3e0] sm:$0xff]
    %v3611 = vld [vmem:[#allocation8 + $0x3e8] sm:$0xff]
    %v3612 = vld [vmem:[#allocation8 + $0x3f0] sm:$0xff]
    %v3613 = vld [vmem:[#allocation8 + $0x3f8] sm:$0xff]
    %v3614 = vld [vmem:[#allocation8 + $0x400] sm:$0xff]
    %v3615 = vld [vmem:[#allocation8 + $0x408] sm:$0xff]
    %v3616 = vld [vmem:[#allocation8 + $0x410] sm:$0xff]
    %v3617 = vld [vmem:[#allocation8 + $0x418] sm:$0xff]
    %v3618 = vld [vmem:[#allocation8 + $0x420] sm:$0xff]
    %v3619 = vld [vmem:[#allocation8 + $0x428] sm:$0xff]
    %v3620 = vld [vmem:[#allocation8 + $0x430] sm:$0xff]
    %v3621 = vld [vmem:[#allocation8 + $0x438] sm:$0xff]
    %v3622 = vld [vmem:[#allocation8 + $0x440] sm:$0xff]
    %v3623 = vld [vmem:[#allocation8 + $0x448] sm:$0xff]
    %v3624 = vld [vmem:[#allocation8 + $0x450] sm:$0xff]
    %v3625 = vld [vmem:[#allocation8 + $0x458] sm:$0xff]
    %v3626 = vld [vmem:[#allocation8 + $0x460] sm:$0xff]
    %v3627 = vld [vmem:[#allocation8 + $0x468] sm:$0xff]
    %v3628 = vld [vmem:[#allocation8 + $0x470] sm:$0xff]
    %v3629 = vld [vmem:[#allocation8 + $0x478] sm:$0xff]
    %v3630 = vld [vmem:[#allocation8 + $0x480] sm:$0xff]
    %v3631 = vld [vmem:[#allocation8 + $0x488] sm:$0xff]
    %v3632 = vld [vmem:[#allocation8 + $0x490] sm:$0xff]
    %v3633 = vld [vmem:[#allocation8 + $0x498] sm:$0xff]
    %v3634 = vld [vmem:[#allocation8 + $0x4a0] sm:$0xff]
    %v3635 = vld [vmem:[#allocation8 + $0x4a8] sm:$0xff]
    %v3636 = vld [vmem:[#allocation8 + $0x4b0] sm:$0xff]
    %v3637 = vld [vmem:[#allocation8 + $0x4b8] sm:$0xff]
    %v3638 = vld [vmem:[#allocation8 + $0x4c0] sm:$0xff]
    %v3639 = vld [vmem:[#allocation8 + $0x4c8] sm:$0xff]
    %v3640 = vld [vmem:[#allocation8 + $0x4d0] sm:$0xff]
    %v3641 = vld [vmem:[#allocation8 + $0x4d8] sm:$0xff]
    %v3642 = vld [vmem:[#allocation8 + $0x4e0] sm:$0xff]
    %v3643 = vld [vmem:[#allocation8 + $0x4e8] sm:$0xff]
    %v3644 = vld [vmem:[#allocation8 + $0x4f0] sm:$0xff]
    %v3645 = vld [vmem:[#allocation8 + $0x4f8] sm:$0xff]
    %v3646 = vld [vmem:[#allocation8 + $0x500] sm:$0xff]
    %v3647 = vld [vmem:[#allocation8 + $0x508] sm:$0xff]
    %v3648 = vld [vmem:[#allocation8 + $0x510] sm:$0xff]
    %v3649 = vld [vmem:[#allocation8 + $0x518] sm:$0xff]
    %v3650 = vld [vmem:[#allocation8 + $0x520] sm:$0xff]
    %v3651 = vld [vmem:[#allocation8 + $0x528] sm:$0xff]
    %v3652 = vld [vmem:[#allocation8 + $0x530] sm:$0xff]
    %v3653 = vld [vmem:[#allocation8 + $0x538] sm:$0xff]
    %v3654 = vld [vmem:[#allocation8 + $0x540] sm:$0xff]
    %v3655 = vld [vmem:[#allocation8 + $0x548] sm:$0xff]
    %v3656 = vld [vmem:[#allocation8 + $0x550] sm:$0xff]
    %v3657 = vld [vmem:[#allocation8 + $0x558] sm:$0xff]
    %v3658 = vld [vmem:[#allocation8 + $0x560] sm:$0xff]
    %v3659 = vld [vmem:[#allocation8 + $0x568] sm:$0xff]
    %v3660 = vld [vmem:[#allocation8 + $0x570] sm:$0xff]
    %v3661 = vld [vmem:[#allocation8 + $0x578] sm:$0xff]
    %v3662 = vld [vmem:[#allocation8 + $0x580] sm:$0xff]
    %v3663 = vld [vmem:[#allocation8 + $0x588] sm:$0xff]
    %v3664 = vld [vmem:[#allocation8 + $0x590] sm:$0xff]
    %v3665 = vld [vmem:[#allocation8 + $0x598] sm:$0xff]
    %v3666 = vld [vmem:[#allocation8 + $0x5a0] sm:$0xff]
    %v3667 = vld [vmem:[#allocation8 + $0x5a8] sm:$0xff]
    %v3668 = vld [vmem:[#allocation8 + $0x5b0] sm:$0xff]
    %v3669 = vld [vmem:[#allocation8 + $0x5b8] sm:$0xff]
    %v3670 = vld [vmem:[#allocation8 + $0x5c0] sm:$0xff]
    %v3671 = vld [vmem:[#allocation8 + $0x5c8] sm:$0xff]
    %v3672 = vld [vmem:[#allocation8 + $0x5d0] sm:$0xff]
    %v3673 = vld [vmem:[#allocation8 + $0x5d8] sm:$0xff]
    %v3674 = vld [vmem:[#allocation8 + $0x5e0] sm:$0xff]
    %v3675 = vld [vmem:[#allocation8 + $0x5e8] sm:$0xff]
    %v3676 = vld [vmem:[#allocation8 + $0x5f0] sm:$0xff]
    %v3677 = vld [vmem:[#allocation8 + $0x5f8] sm:$0xff]
    %v3678 = vld [vmem:[#allocation8 + $0x600] sm:$0xff]
    %v3679 = vld [vmem:[#allocation8 + $0x608] sm:$0xff]
    %v3680 = vld [vmem:[#allocation8 + $0x610] sm:$0xff]
    %v3681 = vld [vmem:[#allocation8 + $0x618] sm:$0xff]
    %v3682 = vld [vmem:[#allocation8 + $0x620] sm:$0xff]
    %v3683 = vld [vmem:[#allocation8 + $0x628] sm:$0xff]
    %v3684 = vld [vmem:[#allocation8 + $0x630] sm:$0xff]
    %v3685 = vld [vmem:[#allocation8 + $0x638] sm:$0xff]
    %v3686 = vld [vmem:[#allocation8 + $0x640] sm:$0xff]
    %v3687 = vld [vmem:[#allocation8 + $0x648] sm:$0xff]
    %v3688 = vld [vmem:[#allocation8 + $0x650] sm:$0xff]
    %v3689 = vld [vmem:[#allocation8 + $0x658] sm:$0xff]
    %v3690 = vld [vmem:[#allocation8 + $0x660] sm:$0xff]
    %v3691 = vld [vmem:[#allocation8 + $0x668] sm:$0xff]
    %v3692 = vld [vmem:[#allocation8 + $0x670] sm:$0xff]
    %v3693 = vld [vmem:[#allocation8 + $0x678] sm:$0xff]
    %v3694 = vld [vmem:[#allocation8 + $0x680] sm:$0xff]
    %v3695 = vld [vmem:[#allocation8 + $0x688] sm:$0xff]
    %v3696 = vld [vmem:[#allocation8 + $0x690] sm:$0xff]
    %v3697 = vld [vmem:[#allocation8 + $0x698] sm:$0xff]
    %v3698 = vld [vmem:[#allocation8 + $0x6a0] sm:$0xff]
    %v3699 = vld [vmem:[#allocation8 + $0x6a8] sm:$0xff]
    %v3700 = vld [vmem:[#allocation8 + $0x6b0] sm:$0xff]
    %v3701 = vld [vmem:[#allocation8 + $0x6b8] sm:$0xff]
    %v3702 = vld [vmem:[#allocation8 + $0x6c0] sm:$0xff]
    %v3703 = vld [vmem:[#allocation8 + $0x6c8] sm:$0xff]
    %v3704 = vld [vmem:[#allocation8 + $0x6d0] sm:$0xff]
    %v3705 = vld [vmem:[#allocation8 + $0x6d8] sm:$0xff]
    %v3706 = vld [vmem:[#allocation8 + $0x6e0] sm:$0xff]
    %v3707 = vld [vmem:[#allocation8 + $0x6e8] sm:$0xff]
    %v3708 = vld [vmem:[#allocation8 + $0x6f0] sm:$0xff]
    %v3709 = vld [vmem:[#allocation8 + $0x6f8] sm:$0xff]
    %v3710 = vld [vmem:[#allocation8 + $0x700] sm:$0xff]
    %v3711 = vld [vmem:[#allocation8 + $0x708] sm:$0xff]
    %v3712 = vld [vmem:[#allocation8 + $0x710] sm:$0xff]
    %v3713 = vld [vmem:[#allocation8 + $0x718] sm:$0xff]
    %v3714 = vld [vmem:[#allocation8 + $0x720] sm:$0xff]
    %v3715 = vld [vmem:[#allocation8 + $0x728] sm:$0xff]
    %v3716 = vld [vmem:[#allocation8 + $0x730] sm:$0xff]
    %v3717 = vld [vmem:[#allocation8 + $0x738] sm:$0xff]
    %v3718 = vld [vmem:[#allocation8 + $0x740] sm:$0xff]
    %v3719 = vld [vmem:[#allocation8 + $0x748] sm:$0xff]
    %v3720 = vld [vmem:[#allocation8 + $0x750] sm:$0xff]
    %v3721 = vld [vmem:[#allocation8 + $0x758] sm:$0xff]
    %v3722 = vld [vmem:[#allocation8 + $0x760] sm:$0xff]
    %v3723 = vld [vmem:[#allocation8 + $0x768] sm:$0xff]
    %v3724 = vld [vmem:[#allocation8 + $0x770] sm:$0xff]
    %v3725 = vld [vmem:[#allocation8 + $0x778] sm:$0xff]
    %v3726 = vld [vmem:[#allocation8 + $0x780] sm:$0xff]
    %v3727 = vld [vmem:[#allocation8 + $0x788] sm:$0xff]
    %v3728 = vld [vmem:[#allocation8 + $0x790] sm:$0xff]
    %v3729 = vld [vmem:[#allocation8 + $0x798] sm:$0xff]
    %v3730 = vld [vmem:[#allocation8 + $0x7a0] sm:$0xff]
    %v3731 = vld [vmem:[#allocation8 + $0x7a8] sm:$0xff]
    %v3732 = vld [vmem:[#allocation8 + $0x7b0] sm:$0xff]
    %v3733 = vld [vmem:[#allocation8 + $0x7b8] sm:$0xff]
    %v3734 = vld [vmem:[#allocation8 + $0x7c0] sm:$0xff]
    %v3735 = vld [vmem:[#allocation8 + $0x7c8] sm:$0xff]
    %v3736 = vld [vmem:[#allocation8 + $0x7d0] sm:$0xff]
    %v3737 = vld [vmem:[#allocation8 + $0x7d8] sm:$0xff]
    %v3738 = vld [vmem:[#allocation8 + $0x7e0] sm:$0xff]
    %v3739 = vld [vmem:[#allocation8 + $0x7e8] sm:$0xff]
    %v3740 = vld [vmem:[#allocation8 + $0x7f0] sm:$0xff]
    %v3741 = vld [vmem:[#allocation8 + $0x7f8] sm:$0xff]
    %v3742 = vld [vmem:[#allocation8 + $0x800] sm:$0xff]
    %v3743 = vld [vmem:[#allocation8 + $0x808] sm:$0xff]
    %v3744 = vld [vmem:[#allocation8 + $0x810] sm:$0xff]
    %v3745 = vld [vmem:[#allocation8 + $0x818] sm:$0xff]
    %v3746 = vld [vmem:[#allocation8 + $0x820] sm:$0xff]
    %v3747 = vld [vmem:[#allocation8 + $0x828] sm:$0xff]
    %v3748 = vld [vmem:[#allocation8 + $0x830] sm:$0xff]
    %v3749 = vld [vmem:[#allocation8 + $0x838] sm:$0xff]
    %v3750 = vld [vmem:[#allocation8 + $0x840] sm:$0xff]
    %v3751 = vld [vmem:[#allocation8 + $0x848] sm:$0xff]
    %v3752 = vld [vmem:[#allocation8 + $0x850] sm:$0xff]
    %v3753 = vld [vmem:[#allocation8 + $0x858] sm:$0xff]
    %v3754 = vld [vmem:[#allocation8 + $0x860] sm:$0xff]
    %v3755 = vld [vmem:[#allocation8 + $0x868] sm:$0xff]
    %v3756 = vld [vmem:[#allocation8 + $0x870] sm:$0xff]
    %v3757 = vld [vmem:[#allocation8 + $0x878] sm:$0xff]
    %v3758 = vld [vmem:[#allocation8 + $0x880] sm:$0xff]
    %v3759 = vld [vmem:[#allocation8 + $0x888] sm:$0xff]
    %v3760 = vld [vmem:[#allocation8 + $0x890] sm:$0xff]
    %v3761 = vld [vmem:[#allocation8 + $0x898] sm:$0xff]
    %v3762 = vld [vmem:[#allocation8 + $0x8a0] sm:$0xff]
    %v3763 = vld [vmem:[#allocation8 + $0x8a8] sm:$0xff]
    %v3764 = vld [vmem:[#allocation8 + $0x8b0] sm:$0xff]
    %v3765 = vld [vmem:[#allocation8 + $0x8b8] sm:$0xff]
    %v3766 = vld [vmem:[#allocation8 + $0x8c0] sm:$0xff]
    %v3767 = vld [vmem:[#allocation8 + $0x8c8] sm:$0xff]
    %v3768 = vld [vmem:[#allocation8 + $0x8d0] sm:$0xff]
    %v3769 = vld [vmem:[#allocation8 + $0x8d8] sm:$0xff]
    %v3770 = vld [vmem:[#allocation8 + $0x8e0] sm:$0xff]
    %v3771 = vld [vmem:[#allocation8 + $0x8e8] sm:$0xff]
    %v3772 = vld [vmem:[#allocation8 + $0x8f0] sm:$0xff]
    %v3773 = vld [vmem:[#allocation8 + $0x8f8] sm:$0xff]
    %v3774 = vld [vmem:[#allocation8 + $0x900] sm:$0xff]
    %v3775 = vld [vmem:[#allocation8 + $0x908] sm:$0xff]
    %v3776 = vld [vmem:[#allocation8 + $0x910] sm:$0xff]
    %v3777 = vld [vmem:[#allocation8 + $0x918] sm:$0xff]
    %v3778 = vld [vmem:[#allocation8 + $0x920] sm:$0xff]
    %v3779 = vld [vmem:[#allocation8 + $0x928] sm:$0xff]
    %v3780 = vld [vmem:[#allocation8 + $0x930] sm:$0xff]
    %v3781 = vld [vmem:[#allocation8 + $0x938] sm:$0xff]
    %v3782 = vld [vmem:[#allocation8 + $0x940] sm:$0xff]
    %v3783 = vld [vmem:[#allocation8 + $0x948] sm:$0xff]
    %v3784 = vld [vmem:[#allocation8 + $0x950] sm:$0xff]
    %v3785 = vld [vmem:[#allocation8 + $0x958] sm:$0xff]
    %v3786 = vld [vmem:[#allocation8 + $0x960] sm:$0xff]
    %v3787 = vld [vmem:[#allocation8 + $0x968] sm:$0xff]
    %v3788 = vld [vmem:[#allocation8 + $0x970] sm:$0xff]
    %v3789 = vld [vmem:[#allocation8 + $0x978] sm:$0xff]
    %v3790 = vld [vmem:[#allocation8 + $0x980] sm:$0xff]
    %v3791 = vld [vmem:[#allocation8 + $0x988] sm:$0xff]
    %v3792 = vld [vmem:[#allocation8 + $0x990] sm:$0xff]
    %v3793 = vld [vmem:[#allocation8 + $0x998] sm:$0xff]
    %v3794 = vld [vmem:[#allocation8 + $0x9a0] sm:$0xff]
    %v3795 = vld [vmem:[#allocation8 + $0x9a8] sm:$0xff]
    %v3796 = vld [vmem:[#allocation8 + $0x9b0] sm:$0xff]
    %v3797 = vld [vmem:[#allocation8 + $0x9b8] sm:$0xff]
    %v3798 = vld [vmem:[#allocation8 + $0x9c0] sm:$0xff]
    %v3799 = vld [vmem:[#allocation8 + $0x9c8] sm:$0xff]
    %v3800 = vld [vmem:[#allocation8 + $0x9d0] sm:$0xff]
    %v3801 = vld [vmem:[#allocation8 + $0x9d8] sm:$0xff]
    %v3802 = vld [vmem:[#allocation8 + $0x9e0] sm:$0xff]
    %v3803 = vld [vmem:[#allocation8 + $0x9e8] sm:$0xff]
    %v3804 = vld [vmem:[#allocation8 + $0x9f0] sm:$0xff]
    %v3805 = vld [vmem:[#allocation8 + $0x9f8] sm:$0xff]
    %v3806 = vld [vmem:[#allocation8 + $0xa00] sm:$0xff]
    %v3807 = vld [vmem:[#allocation8 + $0xa08] sm:$0xff]
    %v3808 = vld [vmem:[#allocation8 + $0xa10] sm:$0xff]
    %v3809 = vld [vmem:[#allocation8 + $0xa18] sm:$0xff]
    %v3810 = vld [vmem:[#allocation8 + $0xa20] sm:$0xff]
    %v3811 = vld [vmem:[#allocation8 + $0xa28] sm:$0xff]
    %v3812 = vld [vmem:[#allocation8 + $0xa30] sm:$0xff]
    %v3813 = vld [vmem:[#allocation8 + $0xa38] sm:$0xff]
    %v3814 = vld [vmem:[#allocation8 + $0xa40] sm:$0xff]
    %v3815 = vld [vmem:[#allocation8 + $0xa48] sm:$0xff]
    %v3816 = vld [vmem:[#allocation8 + $0xa50] sm:$0xff]
    %v3817 = vld [vmem:[#allocation8 + $0xa58] sm:$0xff]
    %v3818 = vld [vmem:[#allocation8 + $0xa60] sm:$0xff]
    %v3819 = vld [vmem:[#allocation8 + $0xa68] sm:$0xff]
    %v3820 = vld [vmem:[#allocation8 + $0xa70] sm:$0xff]
    %v3821 = vld [vmem:[#allocation8 + $0xa78] sm:$0xff]
    %v3822 = vld [vmem:[#allocation8 + $0xa80] sm:$0xff]
    %v3823 = vld [vmem:[#allocation8 + $0xa88] sm:$0xff]
    %v3824 = vld [vmem:[#allocation8 + $0xa90] sm:$0xff]
    %v3825 = vld [vmem:[#allocation8 + $0xa98] sm:$0xff]
    %v3826 = vld [vmem:[#allocation8 + $0xaa0] sm:$0xff]
    %v3827 = vld [vmem:[#allocation8 + $0xaa8] sm:$0xff]
    %v3828 = vld [vmem:[#allocation8 + $0xab0] sm:$0xff]
    %v3829 = vld [vmem:[#allocation8 + $0xab8] sm:$0xff]
    %v3830 = vld [vmem:[#allocation8 + $0xac0] sm:$0xff]
    %v3831 = vld [vmem:[#allocation8 + $0xac8] sm:$0xff]
    %v3832 = vld [vmem:[#allocation8 + $0xad0] sm:$0xff]
    %v3833 = vld [vmem:[#allocation8 + $0xad8] sm:$0xff]
    %v3834 = vld [vmem:[#allocation8 + $0xae0] sm:$0xff]
    %v3835 = vld [vmem:[#allocation8 + $0xae8] sm:$0xff]
    %v3836 = vld [vmem:[#allocation8 + $0xaf0] sm:$0xff]
    %v3837 = vld [vmem:[#allocation8 + $0xaf8] sm:$0xff]
    %v3838 = vld [vmem:[#allocation8 + $0xb00] sm:$0xff]
    %v3839 = vld [vmem:[#allocation8 + $0xb08] sm:$0xff]
    %v3840 = vld [vmem:[#allocation8 + $0xb10] sm:$0xff]
    %v3841 = vld [vmem:[#allocation8 + $0xb18] sm:$0xff]
    %v3842 = vld [vmem:[#allocation8 + $0xb20] sm:$0xff]
    %v3843 = vld [vmem:[#allocation8 + $0xb28] sm:$0xff]
    %v3844 = vld [vmem:[#allocation8 + $0xb30] sm:$0xff]
    %v3845 = vld [vmem:[#allocation8 + $0xb38] sm:$0xff]
    %v3846 = vld [vmem:[#allocation8 + $0xb40] sm:$0xff]
    %v3847 = vld [vmem:[#allocation8 + $0xb48] sm:$0xff]
    %v3848 = vld [vmem:[#allocation8 + $0xb50] sm:$0xff]
    %v3849 = vld [vmem:[#allocation8 + $0xb58] sm:$0xff]
    %v3850 = vld [vmem:[#allocation8 + $0xb60] sm:$0xff]
    %v3851 = vld [vmem:[#allocation8 + $0xb68] sm:$0xff]
    %v3852 = vld [vmem:[#allocation8 + $0xb70] sm:$0xff]
    %v3853 = vld [vmem:[#allocation8 + $0xb78] sm:$0xff]
    %v3854 = vld [vmem:[#allocation8 + $0xb80] sm:$0xff]
    %v3855 = vld [vmem:[#allocation8 + $0xb88] sm:$0xff]
    %v3856 = vld [vmem:[#allocation8 + $0xb90] sm:$0xff]
    %v3857 = vld [vmem:[#allocation8 + $0xb98] sm:$0xff]
    %v3858 = vld [vmem:[#allocation8 + $0xba0] sm:$0xff]
    %v3859 = vld [vmem:[#allocation8 + $0xba8] sm:$0xff]
    %v3860 = vld [vmem:[#allocation8 + $0xbb0] sm:$0xff]
    %v3861 = vld [vmem:[#allocation8 + $0xbb8] sm:$0xff]
    %v3862 = vld [vmem:[#allocation8 + $0xbc0] sm:$0xff]
    %v3863 = vld [vmem:[#allocation8 + $0xbc8] sm:$0xff]
    %v3864 = vld [vmem:[#allocation8 + $0xbd0] sm:$0xff]
    %v3865 = vld [vmem:[#allocation8 + $0xbd8] sm:$0xff]
    %v3866 = vld [vmem:[#allocation8 + $0xbe0] sm:$0xff]
    %v3867 = vld [vmem:[#allocation8 + $0xbe8] sm:$0xff]
    %v3868 = vld [vmem:[#allocation8 + $0xbf0] sm:$0xff]
    %v3869 = vld [vmem:[#allocation8 + $0xbf8] sm:$0xff]
    %v3870 = vld [vmem:[#allocation8 + $0xc00] sm:$0xff]
    %v3871 = vld [vmem:[#allocation8 + $0xc08] sm:$0xff]
    %v3872 = vld [vmem:[#allocation8 + $0xc10] sm:$0xff]
    %v3873 = vld [vmem:[#allocation8 + $0xc18] sm:$0xff]
    %v3874 = vld [vmem:[#allocation8 + $0xc20] sm:$0xff]
    %v3875 = vld [vmem:[#allocation8 + $0xc28] sm:$0xff]
    %v3876 = vld [vmem:[#allocation8 + $0xc30] sm:$0xff]
    %v3877 = vld [vmem:[#allocation8 + $0xc38] sm:$0xff]
    %v3878 = vld [vmem:[#allocation8 + $0xc40] sm:$0xff]
    %v3879 = vld [vmem:[#allocation8 + $0xc48] sm:$0xff]
    %v3880 = vld [vmem:[#allocation8 + $0xc50] sm:$0xff]
    %v3881 = vld [vmem:[#allocation8 + $0xc58] sm:$0xff]
    %v3882 = vld [vmem:[#allocation8 + $0xc60] sm:$0xff]
    %v3883 = vld [vmem:[#allocation8 + $0xc68] sm:$0xff]
    %v3884 = vld [vmem:[#allocation8 + $0xc70] sm:$0xff]
    %v3885 = vld [vmem:[#allocation8 + $0xc78] sm:$0xff]
    %v3886 = vld [vmem:[#allocation8 + $0xc80] sm:$0xff]
    %v3887 = vld [vmem:[#allocation8 + $0xc88] sm:$0xff]
    %v3888 = vld [vmem:[#allocation8 + $0xc90] sm:$0xff]
    %v3889 = vld [vmem:[#allocation8 + $0xc98] sm:$0xff]
    %v3890 = vld [vmem:[#allocation8 + $0xca0] sm:$0xff]
    %v3891 = vld [vmem:[#allocation8 + $0xca8] sm:$0xff]
    %v3892 = vld [vmem:[#allocation8 + $0xcb0] sm:$0xff]
    %v3893 = vld [vmem:[#allocation8 + $0xcb8] sm:$0xff]
    %v3894 = vld [vmem:[#allocation8 + $0xcc0] sm:$0xff]
    %v3895 = vld [vmem:[#allocation8 + $0xcc8] sm:$0xff]
    %v3896 = vld [vmem:[#allocation8 + $0xcd0] sm:$0xff]
    %v3897 = vld [vmem:[#allocation8 + $0xcd8] sm:$0xff]
    %v3898 = vld [vmem:[#allocation8 + $0xce0] sm:$0xff]
    %v3899 = vld [vmem:[#allocation8 + $0xce8] sm:$0xff]
    %v3900 = vld [vmem:[#allocation8 + $0xcf0] sm:$0xff]
    %v3901 = vld [vmem:[#allocation8 + $0xcf8] sm:$0xff]
    %v3902 = vld [vmem:[#allocation8 + $0xd00] sm:$0xff]
    %v3903 = vld [vmem:[#allocation8 + $0xd08] sm:$0xff]
    %v3904 = vld [vmem:[#allocation8 + $0xd10] sm:$0xff]
    %v3905 = vld [vmem:[#allocation8 + $0xd18] sm:$0xff]
    %v3906 = vld [vmem:[#allocation8 + $0xd20] sm:$0xff]
    %v3907 = vld [vmem:[#allocation8 + $0xd28] sm:$0xff]
    %v3908 = vld [vmem:[#allocation8 + $0xd30] sm:$0xff]
    %v3909 = vld [vmem:[#allocation8 + $0xd38] sm:$0xff]
    %v3910 = vld [vmem:[#allocation8 + $0xd40] sm:$0xff]
    %v3911 = vld [vmem:[#allocation8 + $0xd48] sm:$0xff]
    %v3912 = vld [vmem:[#allocation8 + $0xd50] sm:$0xff]
    %v3913 = vld [vmem:[#allocation8 + $0xd58] sm:$0xff]
    %v3914 = vld [vmem:[#allocation8 + $0xd60] sm:$0xff]
    %v3915 = vld [vmem:[#allocation8 + $0xd68] sm:$0xff]
    %v3916 = vld [vmem:[#allocation8 + $0xd70] sm:$0xff]
    %v3917 = vld [vmem:[#allocation8 + $0xd78] sm:$0xff]
    %v3918 = vld [vmem:[#allocation8 + $0xd80] sm:$0xff]
    %v3919 = vld [vmem:[#allocation8 + $0xd88] sm:$0xff]
    %v3920 = vld [vmem:[#allocation8 + $0xd90] sm:$0xff]
    %v3921 = vld [vmem:[#allocation8 + $0xd98] sm:$0xff]
    %v3922 = vld [vmem:[#allocation8 + $0xda0] sm:$0xff]
    %v3923 = vld [vmem:[#allocation8 + $0xda8] sm:$0xff]
    %v3924 = vld [vmem:[#allocation8 + $0xdb0] sm:$0xff]
    %v3925 = vld [vmem:[#allocation8 + $0xdb8] sm:$0xff]
    %v3926 = vld [vmem:[#allocation8 + $0xdc0] sm:$0xff]
    %v3927 = vld [vmem:[#allocation8 + $0xdc8] sm:$0xff]
    %v3928 = vld [vmem:[#allocation8 + $0xdd0] sm:$0xff]
    %v3929 = vld [vmem:[#allocation8 + $0xdd8] sm:$0xff]
    %v3930 = vld [vmem:[#allocation8 + $0xde0] sm:$0xff]
    %v3931 = vld [vmem:[#allocation8 + $0xde8] sm:$0xff]
    %v3932 = vld [vmem:[#allocation8 + $0xdf0] sm:$0xff]
    %v3933 = vld [vmem:[#allocation8 + $0xdf8] sm:$0xff]
    %v3934 = vld [vmem:[#allocation8 + $0xe00] sm:$0xff]
    %v3935 = vld [vmem:[#allocation8 + $0xe08] sm:$0xff]
    %v3936 = vld [vmem:[#allocation8 + $0xe10] sm:$0xff]
    %v3937 = vld [vmem:[#allocation8 + $0xe18] sm:$0xff]
    %v3938 = vld [vmem:[#allocation8 + $0xe20] sm:$0xff]
    %v3939 = vld [vmem:[#allocation8 + $0xe28] sm:$0xff]
    %v3940 = vld [vmem:[#allocation8 + $0xe30] sm:$0xff]
    %v3941 = vld [vmem:[#allocation8 + $0xe38] sm:$0xff]
    %v3942 = vld [vmem:[#allocation8 + $0xe40] sm:$0xff]
    %v3943 = vld [vmem:[#allocation8 + $0xe48] sm:$0xff]
    %v3944 = vld [vmem:[#allocation8 + $0xe50] sm:$0xff]
    %v3945 = vld [vmem:[#allocation8 + $0xe58] sm:$0xff]
    %v3946 = vld [vmem:[#allocation8 + $0xe60] sm:$0xff]
    %v3947 = vld [vmem:[#allocation8 + $0xe68] sm:$0xff]
    %v3948 = vld [vmem:[#allocation8 + $0xe70] sm:$0xff]
    %v3949 = vld [vmem:[#allocation8 + $0xe78] sm:$0xff]
    %v3950 = vld [vmem:[#allocation8 + $0xe80] sm:$0xff]
    %v3951 = vld [vmem:[#allocation8 + $0xe88] sm:$0xff]
    %v3952 = vld [vmem:[#allocation8 + $0xe90] sm:$0xff]
    %v3953 = vld [vmem:[#allocation8 + $0xe98] sm:$0xff]
    %v3954 = vld [vmem:[#allocation8 + $0xea0] sm:$0xff]
    %v3955 = vld [vmem:[#allocation8 + $0xea8] sm:$0xff]
    %v3956 = vld [vmem:[#allocation8 + $0xeb0] sm:$0xff]
    %v3957 = vld [vmem:[#allocation8 + $0xeb8] sm:$0xff]
    %v3958 = vld [vmem:[#allocation8 + $0xec0] sm:$0xff]
    %v3959 = vld [vmem:[#allocation8 + $0xec8] sm:$0xff]
    %v3960 = vld [vmem:[#allocation8 + $0xed0] sm:$0xff]
    %v3961 = vld [vmem:[#allocation8 + $0xed8] sm:$0xff]
    %v3962 = vld [vmem:[#allocation8 + $0xee0] sm:$0xff]
    %v3963 = vld [vmem:[#allocation8 + $0xee8] sm:$0xff]
    %v3964 = vld [vmem:[#allocation8 + $0xef0] sm:$0xff]
    %v3965 = vld [vmem:[#allocation8 + $0xef8] sm:$0xff]
    %v3966 = vld [vmem:[#allocation8 + $0xf00] sm:$0xff]
    %v3967 = vld [vmem:[#allocation8 + $0xf08] sm:$0xff]
    %v3968 = vld [vmem:[#allocation8 + $0xf10] sm:$0xff]
    %v3969 = vld [vmem:[#allocation8 + $0xf18] sm:$0xff]
    %v3970 = vld [vmem:[#allocation8 + $0xf20] sm:$0xff]
    %v3971 = vld [vmem:[#allocation8 + $0xf28] sm:$0xff]
    %v3972 = vld [vmem:[#allocation8 + $0xf30] sm:$0xff]
    %v3973 = vld [vmem:[#allocation8 + $0xf38] sm:$0xff]
    %v3974 = vld [vmem:[#allocation8 + $0xf40] sm:$0xff]
    %v3975 = vld [vmem:[#allocation8 + $0xf48] sm:$0xff]
    %v3976 = vld [vmem:[#allocation8 + $0xf50] sm:$0xff]
    %v3977 = vld [vmem:[#allocation8 + $0xf58] sm:$0xff]
    %v3978 = vld [vmem:[#allocation8 + $0xf60] sm:$0xff]
    %v3979 = vld [vmem:[#allocation8 + $0xf68] sm:$0xff]
    %v3980 = vld [vmem:[#allocation8 + $0xf70] sm:$0xff]
    %v3981 = vld [vmem:[#allocation8 + $0xf78] sm:$0xff]
    %v3982 = vld [vmem:[#allocation8 + $0xf80] sm:$0xff]
    %v3983 = vld [vmem:[#allocation8 + $0xf88] sm:$0xff]
    %v3984 = vld [vmem:[#allocation8 + $0xf90] sm:$0xff]
    %v3985 = vld [vmem:[#allocation8 + $0xf98] sm:$0xff]
    %v3986 = vld [vmem:[#allocation8 + $0xfa0] sm:$0xff]
    %v3987 = vld [vmem:[#allocation8 + $0xfa8] sm:$0xff]
    %v3988 = vld [vmem:[#allocation8 + $0xfb0] sm:$0xff]
    %v3989 = vld [vmem:[#allocation8 + $0xfb8] sm:$0xff]
    %v3990 = vld [vmem:[#allocation8 + $0xfc0] sm:$0xff]
    %v3991 = vld [vmem:[#allocation8 + $0xfc8] sm:$0xff]
    %v3992 = vld [vmem:[#allocation8 + $0xfd0] sm:$0xff]
    %v3993 = vld [vmem:[#allocation8 + $0xfd8] sm:$0xff]
    %v3994 = vld [vmem:[#allocation8 + $0xfe0] sm:$0xff]
    %v3995 = vld [vmem:[#allocation8 + $0xfe8] sm:$0xff]
    %v3996 = vld [vmem:[#allocation8 + $0xff0] sm:$0xff]
    %v3997 = vld [vmem:[#allocation8 + $0xff8] sm:$0xff]
    %v3998 = vld [vmem:[#allocation9] sm:$0xf]
    %v4000 = vlaneseq
    %v4001 = vshrl.u32 %v4000, 7
    %v4002 = vsub.s32 0, %v4001
    %v4003 = vrot.slane %v3998, %v4002
    %v4004 = vlaneseq
    %v4005 = vshrl.u32 %v4004, 7
    %v4006 = vsub.s32 1, %v4005
    %v4007 = vrot.slane %v3998, %v4006
    %v4008 = vlaneseq
    %v4009 = vshrl.u32 %v4008, 7
    %v4010 = vsub.s32 2, %v4009
    %v4011 = vrot.slane %v3998, %v4010
    %v4012 = vlaneseq
    %v4013 = vshrl.u32 %v4012, 7
    %v4014 = vsub.s32 3, %v4013
    %v4015 = vrot.slane %v3998, %v4014
    %4020 = vmatprep.subr.mxu0 %v3547
    %4021 = vmatpush1.msra.mxu0 %v3546
    %4022 = vmatprep.subr.mxu0 %v3543
    %4023 = vmatpush1.msra.mxu0 %v3542
    %4024 = vmatprep.subr.mxu0 %v3539
    %4025 = vmatpush1.msra.mxu0 %v3538
    %4026 = vmatprep.subr.mxu0 %v3535
    %4027 = vmatpush1.msra.mxu0 %v3534
    %4028 = vmatprep.subr.mxu0 %v3531
    %4029 = vmatpush1.msra.mxu0 %v3530
    %4030 = vmatprep.subr.mxu0 %v3527
    %4031 = vmatpush1.msra.mxu0 %v3526
    %4032 = vmatprep.subr.mxu0 %v3523
    %4033 = vmatpush1.msra.mxu0 %v3522
    %4034 = vmatprep.subr.mxu0 %v3519
    %4035 = vmatpush1.msra.mxu0 %v3518
    %4036 = vmatprep.subr.mxu0 %v3515
    %4037 = vmatpush1.msra.mxu0 %v3514
    %4038 = vmatprep.subr.mxu0 %v3511
    %4039 = vmatpush1.msra.mxu0 %v3510
    %4040 = vmatprep.subr.mxu0 %v3507
    %4041 = vmatpush1.msra.mxu0 %v3506
    %4042 = vmatprep.subr.mxu0 %v3503
    %4043 = vmatpush1.msra.mxu0 %v3502
    %4044 = vmatprep.subr.mxu0 %v3499
    %4045 = vmatpush1.msra.mxu0 %v3498
    %4046 = vmatprep.subr.mxu0 %v3495
    %4047 = vmatpush1.msra.mxu0 %v3494
    %4048 = vmatprep.subr.mxu0 %v3491
    %4049 = vmatpush1.msra.mxu0 %v3490
    %4050 = vmatprep.subr.mxu0 %v3487
    %4051 = vmatpush1.msra.mxu0 %v3486
    %4052 = vmatprep.subr.mxu0 %v3611
    %4053 = vmatpush2.msra.mxu0 %v3610
    %4054 = vmatprep.subr.mxu0 %v3607
    %4055 = vmatpush2.msra.mxu0 %v3606
    %4056 = vmatprep.subr.mxu0 %v3603
    %4057 = vmatpush2.msra.mxu0 %v3602
    %4058 = vmatprep.subr.mxu0 %v3599
    %4059 = vmatpush2.msra.mxu0 %v3598
    %4060 = vmatprep.subr.mxu0 %v3595
    %4061 = vmatpush2.msra.mxu0 %v3594
    %4062 = vmatprep.subr.mxu0 %v3591
    %4063 = vmatpush2.msra.mxu0 %v3590
    %4064 = vmatprep.subr.mxu0 %v3587
    %4065 = vmatpush2.msra.mxu0 %v3586
    %4066 = vmatprep.subr.mxu0 %v3583
    %4067 = vmatpush2.msra.mxu0 %v3582
    %4068 = vmatprep.subr.mxu0 %v3579
    %4069 = vmatpush2.msra.mxu0 %v3578
    %4070 = vmatprep.subr.mxu0 %v3575
    %4071 = vmatpush2.msra.mxu0 %v3574
    %4072 = vmatprep.subr.mxu0 %v3571
    %4073 = vmatpush2.msra.mxu0 %v3570
    %4074 = vmatprep.subr.mxu0 %v3567
    %4075 = vmatpush2.msra.mxu0 %v3566
    %4076 = vmatprep.subr.mxu0 %v3563
    %4077 = vmatpush2.msra.mxu0 %v3562
    %4078 = vmatprep.subr.mxu0 %v3559
    %4079 = vmatpush2.msra.mxu0 %v3558
    %4080 = vmatprep.subr.mxu0 %v3555
    %4081 = vmatpush2.msra.mxu0 %v3554
    %4082 = vmatprep.subr.mxu0 %v3551
    %4083 = vmatpush2.msra.mxu0 %v3550
    %4084 = vmatprep.mubr.f32.mxu0 %v3231
    %4085 = vmatmul.mubr.f32.gmra.mxu0 %v3230
    %v4086 = vpop.f32.mrf.mxu0
    %v4087 = vadd.f32 %v4003, %v4086
    %v4088 = vpop.f32.mrf.mxu0
    %v4089 = vadd.f32 %v4007, %v4088
    %4090 = vmatprep.mubr.f32.mxu0 %v3239
    %4091 = vmatmul.mubr.f32.gmra.mxu0 %v3238
    %v4092 = vpop.f32.mrf.mxu0
    %v4093 = vadd.f32 %v4003, %v4092
    %v4094 = vpop.f32.mrf.mxu0
    %v4095 = vadd.f32 %v4007, %v4094
    %4096 = vmatprep.mubr.f32.mxu0 %v3247
    %4097 = vmatmul.mubr.f32.gmra.mxu0 %v3246
    %v4098 = vpop.f32.mrf.mxu0
    %v4099 = vadd.f32 %v4003, %v4098
    %v4100 = vpop.f32.mrf.mxu0
    %v4101 = vadd.f32 %v4007, %v4100
    %4102 = vmatprep.mubr.f32.mxu0 %v3255
    %4103 = vmatmul.mubr.f32.gmra.mxu0 %v3254
    %v4104 = vpop.f32.mrf.mxu0
    %v4105 = vadd.f32 %v4003, %v4104
    %v4106 = vpop.f32.mrf.mxu0
    %v4107 = vadd.f32 %v4007, %v4106
    %4108 = vmatprep.mubr.f32.mxu0 %v3263
    %4109 = vmatmul.mubr.f32.gmra.mxu0 %v3262
    %v4110 = vpop.f32.mrf.mxu0
    %v4111 = vadd.f32 %v4003, %v4110
    %v4112 = vpop.f32.mrf.mxu0
    %v4113 = vadd.f32 %v4007, %v4112
    %4114 = vmatprep.mubr.f32.mxu0 %v3271
    %4115 = vmatmul.mubr.f32.gmra.mxu0 %v3270
    %v4116 = vpop.f32.mrf.mxu0
    %v4117 = vadd.f32 %v4003, %v4116
    %v4118 = vpop.f32.mrf.mxu0
    %v4119 = vadd.f32 %v4007, %v4118
    %4120 = vmatprep.mubr.f32.mxu0 %v3279
    %4121 = vmatmul.mubr.f32.gmra.mxu0 %v3278
    %v4122 = vpop.f32.mrf.mxu0
    %v4123 = vadd.f32 %v4003, %v4122
    %v4124 = vpop.f32.mrf.mxu0
    %v4125 = vadd.f32 %v4007, %v4124
    %4126 = vmatprep.mubr.f32.mxu0 %v3287
    %4127 = vmatmul.mubr.f32.gmra.mxu0 %v3286
    %v4128 = vpop.f32.mrf.mxu0
    %v4129 = vadd.f32 %v4003, %v4128
    %v4130 = vpop.f32.mrf.mxu0
    %v4131 = vadd.f32 %v4007, %v4130
    %4132 = vmatprep.mubr.f32.mxu0 %v3295
    %4133 = vmatmul.mubr.f32.gmra.mxu0 %v3294
    %v4134 = vpop.f32.mrf.mxu0
    %v4135 = vadd.f32 %v4003, %v4134
    %v4136 = vpop.f32.mrf.mxu0
    %v4137 = vadd.f32 %v4007, %v4136
    %4138 = vmatprep.mubr.f32.mxu0 %v3303
    %4139 = vmatmul.mubr.f32.gmra.mxu0 %v3302
    %v4140 = vpop.f32.mrf.mxu0
    %v4141 = vadd.f32 %v4003, %v4140
    %v4142 = vpop.f32.mrf.mxu0
    %v4143 = vadd.f32 %v4007, %v4142
    %4144 = vmatprep.mubr.f32.mxu0 %v3311
    %4145 = vmatmul.mubr.f32.gmra.mxu0 %v3310
    %v4146 = vpop.f32.mrf.mxu0
    %v4147 = vadd.f32 %v4003, %v4146
    %v4148 = vpop.f32.mrf.mxu0
    %v4149 = vadd.f32 %v4007, %v4148
    %4150 = vmatprep.mubr.f32.mxu0 %v3319
    %4151 = vmatmul.mubr.f32.gmra.mxu0 %v3318
    %v4152 = vpop.f32.mrf.mxu0
    %v4153 = vadd.f32 %v4003, %v4152
    %v4154 = vpop.f32.mrf.mxu0
    %v4155 = vadd.f32 %v4007, %v4154
    %4156 = vmatprep.mubr.f32.mxu0 %v3327
    %4157 = vmatmul.mubr.f32.gmra.mxu0 %v3326
    %v4158 = vpop.f32.mrf.mxu0
    %v4159 = vadd.f32 %v4003, %v4158
    %v4160 = vpop.f32.mrf.mxu0
    %v4161 = vadd.f32 %v4007, %v4160
    %4162 = vmatprep.mubr.f32.mxu0 %v3335
    %4163 = vmatmul.mubr.f32.gmra.mxu0 %v3334
    %v4164 = vpop.f32.mrf.mxu0
    %v4165 = vadd.f32 %v4003, %v4164
    %v4166 = vpop.f32.mrf.mxu0
    %v4167 = vadd.f32 %v4007, %v4166
    %4168 = vmatprep.mubr.f32.mxu0 %v3343
    %4169 = vmatmul.mubr.f32.gmra.mxu0 %v3342
    %v4170 = vpop.f32.mrf.mxu0
    %v4171 = vadd.f32 %v4003, %v4170
    %v4172 = vpop.f32.mrf.mxu0
    %v4173 = vadd.f32 %v4007, %v4172
    %4174 = vmatprep.mubr.f32.mxu0 %v3351
    %4175 = vmatmul.mubr.f32.gmra.mxu0 %v3350
    %v4176 = vpop.f32.mrf.mxu0
    %v4177 = vadd.f32 %v4003, %v4176
    %v4178 = vpop.f32.mrf.mxu0
    %v4179 = vadd.f32 %v4007, %v4178
    %4180 = vmatprep.mubr.f32.mxu0 %v3359
    %4181 = vmatmul.mubr.f32.gmra.mxu0 %v3358
    %v4182 = vpop.f32.mrf.mxu0
    %v4183 = vadd.f32 %v4003, %v4182
    %v4184 = vpop.f32.mrf.mxu0
    %v4185 = vadd.f32 %v4007, %v4184
    %4186 = vmatprep.mubr.f32.mxu0 %v3367
    %4187 = vmatmul.mubr.f32.gmra.mxu0 %v3366
    %v4188 = vpop.f32.mrf.mxu0
    %v4189 = vadd.f32 %v4003, %v4188
    %v4190 = vpop.f32.mrf.mxu0
    %v4191 = vadd.f32 %v4007, %v4190
    %4192 = vmatprep.mubr.f32.mxu0 %v3375
    %4193 = vmatmul.mubr.f32.gmra.mxu0 %v3374
    %v4194 = vpop.f32.mrf.mxu0
    %v4195 = vadd.f32 %v4003, %v4194
    %v4196 = vpop.f32.mrf.mxu0
    %v4197 = vadd.f32 %v4007, %v4196
    %4198 = vmatprep.mubr.f32.mxu0 %v3383
    %4199 = vmatmul.mubr.f32.gmra.mxu0 %v3382
    %v4200 = vpop.f32.mrf.mxu0
    %v4201 = vadd.f32 %v4003, %v4200
    %v4202 = vpop.f32.mrf.mxu0
    %v4203 = vadd.f32 %v4007, %v4202
    %4204 = vmatprep.mubr.f32.mxu0 %v3391
    %4205 = vmatmul.mubr.f32.gmra.mxu0 %v3390
    %v4206 = vpop.f32.mrf.mxu0
    %v4207 = vadd.f32 %v4003, %v4206
    %v4208 = vpop.f32.mrf.mxu0
    %v4209 = vadd.f32 %v4007, %v4208
    %4210 = vmatprep.mubr.f32.mxu0 %v3399
    %4211 = vmatmul.mubr.f32.gmra.mxu0 %v3398
    %v4212 = vpop.f32.mrf.mxu0
    %v4213 = vadd.f32 %v4003, %v4212
    %v4214 = vpop.f32.mrf.mxu0
    %v4215 = vadd.f32 %v4007, %v4214
    %4216 = vmatprep.mubr.f32.mxu0 %v3407
    %4217 = vmatmul.mubr.f32.gmra.mxu0 %v3406
    %v4218 = vpop.f32.mrf.mxu0
    %v4219 = vadd.f32 %v4003, %v4218
    %v4220 = vpop.f32.mrf.mxu0
    %v4221 = vadd.f32 %v4007, %v4220
    %4222 = vmatprep.mubr.f32.mxu0 %v3415
    %4223 = vmatmul.mubr.f32.gmra.mxu0 %v3414
    %v4224 = vpop.f32.mrf.mxu0
    %v4225 = vadd.f32 %v4003, %v4224
    %v4226 = vpop.f32.mrf.mxu0
    %v4227 = vadd.f32 %v4007, %v4226
    %4228 = vmatprep.mubr.f32.mxu0 %v3423
    %4229 = vmatmul.mubr.f32.gmra.mxu0 %v3422
    %v4230 = vpop.f32.mrf.mxu0
    %v4231 = vadd.f32 %v4003, %v4230
    %v4232 = vpop.f32.mrf.mxu0
    %v4233 = vadd.f32 %v4007, %v4232
    %4234 = vmatprep.mubr.f32.mxu0 %v3431
    %4235 = vmatmul.mubr.f32.gmra.mxu0 %v3430
    %v4236 = vpop.f32.mrf.mxu0
    %v4237 = vadd.f32 %v4003, %v4236
    %v4238 = vpop.f32.mrf.mxu0
    %v4239 = vadd.f32 %v4007, %v4238
    %4240 = vmatprep.mubr.f32.mxu0 %v3439
    %4241 = vmatmul.mubr.f32.gmra.mxu0 %v3438
    %v4242 = vpop.f32.mrf.mxu0
    %v4243 = vadd.f32 %v4003, %v4242
    %v4244 = vpop.f32.mrf.mxu0
    %v4245 = vadd.f32 %v4007, %v4244
    %4246 = vmatprep.mubr.f32.mxu0 %v3447
    %4247 = vmatmul.mubr.f32.gmra.mxu0 %v3446
    %v4248 = vpop.f32.mrf.mxu0
    %v4249 = vadd.f32 %v4003, %v4248
    %v4250 = vpop.f32.mrf.mxu0
    %v4251 = vadd.f32 %v4007, %v4250
    %4252 = vmatprep.mubr.f32.mxu0 %v3455
    %4253 = vmatmul.mubr.f32.gmra.mxu0 %v3454
    %v4254 = vpop.f32.mrf.mxu0
    %v4255 = vadd.f32 %v4003, %v4254
    %v4256 = vpop.f32.mrf.mxu0
    %v4257 = vadd.f32 %v4007, %v4256
    %4258 = vmatprep.mubr.f32.mxu0 %v3463
    %4259 = vmatmul.mubr.f32.gmra.mxu0 %v3462
    %v4260 = vpop.f32.mrf.mxu0
    %v4261 = vadd.f32 %v4003, %v4260
    %v4262 = vpop.f32.mrf.mxu0
    %v4263 = vadd.f32 %v4007, %v4262
    %4264 = vmatprep.mubr.f32.mxu0 %v3471
    %4265 = vmatmul.mubr.f32.gmra.mxu0 %v3470
    %v4266 = vpop.f32.mrf.mxu0
    %v4267 = vadd.f32 %v4003, %v4266
    %v4268 = vpop.f32.mrf.mxu0
    %v4269 = vadd.f32 %v4007, %v4268
    %4270 = vmatprep.mubr.f32.mxu0 %v3479
    %4271 = vmatmul.mubr.f32.gmra.mxu0 %v3478
    %v4272 = vpop.f32.mrf.mxu0
    %v4273 = vadd.f32 %v4003, %v4272
    %v4274 = vpop.f32.mrf.mxu0
    %v4275 = vadd.f32 %v4007, %v4274
    %4276 = vdwg.mxu0
    %4277 = vmatprep.subr.mxu0 %v3675
    %4278 = vmatpush1.msra.mxu0 %v3674
    %4279 = vmatprep.subr.mxu0 %v3671
    %4280 = vmatpush1.msra.mxu0 %v3670
    %4281 = vmatprep.subr.mxu0 %v3667
    %4282 = vmatpush1.msra.mxu0 %v3666
    %4283 = vmatprep.subr.mxu0 %v3663
    %4284 = vmatpush1.msra.mxu0 %v3662
    %4285 = vmatprep.subr.mxu0 %v3659
    %4286 = vmatpush1.msra.mxu0 %v3658
    %4287 = vmatprep.subr.mxu0 %v3655
    %4288 = vmatpush1.msra.mxu0 %v3654
    %4289 = vmatprep.subr.mxu0 %v3651
    %4290 = vmatpush1.msra.mxu0 %v3650
    %4291 = vmatprep.subr.mxu0 %v3647
    %4292 = vmatpush1.msra.mxu0 %v3646
    %4293 = vmatprep.subr.mxu0 %v3643
    %4294 = vmatpush1.msra.mxu0 %v3642
    %4295 = vmatprep.subr.mxu0 %v3639
    %4296 = vmatpush1.msra.mxu0 %v3638
    %4297 = vmatprep.subr.mxu0 %v3635
    %4298 = vmatpush1.msra.mxu0 %v3634
    %4299 = vmatprep.subr.mxu0 %v3631
    %4300 = vmatpush1.msra.mxu0 %v3630
    %4301 = vmatprep.subr.mxu0 %v3627
    %4302 = vmatpush1.msra.mxu0 %v3626
    %4303 = vmatprep.subr.mxu0 %v3623
    %4304 = vmatpush1.msra.mxu0 %v3622
    %4305 = vmatprep.subr.mxu0 %v3619
    %4306 = vmatpush1.msra.mxu0 %v3618
    %4307 = vmatprep.subr.mxu0 %v3615
    %4308 = vmatpush1.msra.mxu0 %v3614
    %4309 = vmatprep.subr.mxu0 %v3739
    %4310 = vmatpush2.msra.mxu0 %v3738
    %4311 = vmatprep.subr.mxu0 %v3735
    %4312 = vmatpush2.msra.mxu0 %v3734
    %4313 = vmatprep.subr.mxu0 %v3731
    %4314 = vmatpush2.msra.mxu0 %v3730
    %4315 = vmatprep.subr.mxu0 %v3727
    %4316 = vmatpush2.msra.mxu0 %v3726
    %4317 = vmatprep.subr.mxu0 %v3723
    %4318 = vmatpush2.msra.mxu0 %v3722
    %4319 = vmatprep.subr.mxu0 %v3719
    %4320 = vmatpush2.msra.mxu0 %v3718
    %4321 = vmatprep.subr.mxu0 %v3715
    %4322 = vmatpush2.msra.mxu0 %v3714
    %4323 = vmatprep.subr.mxu0 %v3711
    %4324 = vmatpush2.msra.mxu0 %v3710
    %4325 = vmatprep.subr.mxu0 %v3707
    %4326 = vmatpush2.msra.mxu0 %v3706
    %4327 = vmatprep.subr.mxu0 %v3703
    %4328 = vmatpush2.msra.mxu0 %v3702
    %4329 = vmatprep.subr.mxu0 %v3699
    %4330 = vmatpush2.msra.mxu0 %v3698
    %4331 = vmatprep.subr.mxu0 %v3695
    %4332 = vmatpush2.msra.mxu0 %v3694
    %4333 = vmatprep.subr.mxu0 %v3691
    %4334 = vmatpush2.msra.mxu0 %v3690
    %4335 = vmatprep.subr.mxu0 %v3687
    %4336 = vmatpush2.msra.mxu0 %v3686
    %4337 = vmatprep.subr.mxu0 %v3683
    %4338 = vmatpush2.msra.mxu0 %v3682
    %4339 = vmatprep.subr.mxu0 %v3679
    %4340 = vmatpush2.msra.mxu0 %v3678
    %4341 = vmatprep.mubr.f32.mxu0 %v3233
    %4342 = vmatmul.mubr.f32.gmra.mxu0 %v3232
    %v4343 = vpop.f32.mrf.mxu0
    %v4344 = vadd.f32 %v4087, %v4343
    %v4345 = vpop.f32.mrf.mxu0
    %v4346 = vadd.f32 %v4089, %v4345
    %4347 = vmatprep.mubr.f32.mxu0 %v3241
    %4348 = vmatmul.mubr.f32.gmra.mxu0 %v3240
    %v4349 = vpop.f32.mrf.mxu0
    %v4350 = vadd.f32 %v4093, %v4349
    %v4351 = vpop.f32.mrf.mxu0
    %v4352 = vadd.f32 %v4095, %v4351
    %4353 = vmatprep.mubr.f32.mxu0 %v3249
    %4354 = vmatmul.mubr.f32.gmra.mxu0 %v3248
    %v4355 = vpop.f32.mrf.mxu0
    %v4356 = vadd.f32 %v4099, %v4355
    %v4357 = vpop.f32.mrf.mxu0
    %v4358 = vadd.f32 %v4101, %v4357
    %4359 = vmatprep.mubr.f32.mxu0 %v3257
    %4360 = vmatmul.mubr.f32.gmra.mxu0 %v3256
    %v4361 = vpop.f32.mrf.mxu0
    %v4362 = vadd.f32 %v4105, %v4361
    %v4363 = vpop.f32.mrf.mxu0
    %v4364 = vadd.f32 %v4107, %v4363
    %4365 = vmatprep.mubr.f32.mxu0 %v3265
    %4366 = vmatmul.mubr.f32.gmra.mxu0 %v3264
    %v4367 = vpop.f32.mrf.mxu0
    %v4368 = vadd.f32 %v4111, %v4367
    %v4369 = vpop.f32.mrf.mxu0
    %v4370 = vadd.f32 %v4113, %v4369
    %4371 = vmatprep.mubr.f32.mxu0 %v3273
    %4372 = vmatmul.mubr.f32.gmra.mxu0 %v3272
    %v4373 = vpop.f32.mrf.mxu0
    %v4374 = vadd.f32 %v4117, %v4373
    %v4375 = vpop.f32.mrf.mxu0
    %v4376 = vadd.f32 %v4119, %v4375
    %4377 = vmatprep.mubr.f32.mxu0 %v3281
    %4378 = vmatmul.mubr.f32.gmra.mxu0 %v3280
    %v4379 = vpop.f32.mrf.mxu0
    %v4380 = vadd.f32 %v4123, %v4379
    %v4381 = vpop.f32.mrf.mxu0
    %v4382 = vadd.f32 %v4125, %v4381
    %4383 = vmatprep.mubr.f32.mxu0 %v3289
    %4384 = vmatmul.mubr.f32.gmra.mxu0 %v3288
    %v4385 = vpop.f32.mrf.mxu0
    %v4386 = vadd.f32 %v4129, %v4385
    %v4387 = vpop.f32.mrf.mxu0
    %v4388 = vadd.f32 %v4131, %v4387
    %4389 = vmatprep.mubr.f32.mxu0 %v3297
    %4390 = vmatmul.mubr.f32.gmra.mxu0 %v3296
    %v4391 = vpop.f32.mrf.mxu0
    %v4392 = vadd.f32 %v4135, %v4391
    %v4393 = vpop.f32.mrf.mxu0
    %v4394 = vadd.f32 %v4137, %v4393
    %4395 = vmatprep.mubr.f32.mxu0 %v3305
    %4396 = vmatmul.mubr.f32.gmra.mxu0 %v3304
    %v4397 = vpop.f32.mrf.mxu0
    %v4398 = vadd.f32 %v4141, %v4397
    %v4399 = vpop.f32.mrf.mxu0
    %v4400 = vadd.f32 %v4143, %v4399
    %4401 = vmatprep.mubr.f32.mxu0 %v3313
    %4402 = vmatmul.mubr.f32.gmra.mxu0 %v3312
    %v4403 = vpop.f32.mrf.mxu0
    %v4404 = vadd.f32 %v4147, %v4403
    %v4405 = vpop.f32.mrf.mxu0
    %v4406 = vadd.f32 %v4149, %v4405
    %4407 = vmatprep.mubr.f32.mxu0 %v3321
    %4408 = vmatmul.mubr.f32.gmra.mxu0 %v3320
    %v4409 = vpop.f32.mrf.mxu0
    %v4410 = vadd.f32 %v4153, %v4409
    %v4411 = vpop.f32.mrf.mxu0
    %v4412 = vadd.f32 %v4155, %v4411
    %4413 = vmatprep.mubr.f32.mxu0 %v3329
    %4414 = vmatmul.mubr.f32.gmra.mxu0 %v3328
    %v4415 = vpop.f32.mrf.mxu0
    %v4416 = vadd.f32 %v4159, %v4415
    %v4417 = vpop.f32.mrf.mxu0
    %v4418 = vadd.f32 %v4161, %v4417
    %4419 = vmatprep.mubr.f32.mxu0 %v3337
    %4420 = vmatmul.mubr.f32.gmra.mxu0 %v3336
    %v4421 = vpop.f32.mrf.mxu0
    %v4422 = vadd.f32 %v4165, %v4421
    %v4423 = vpop.f32.mrf.mxu0
    %v4424 = vadd.f32 %v4167, %v4423
    %4425 = vmatprep.mubr.f32.mxu0 %v3345
    %4426 = vmatmul.mubr.f32.gmra.mxu0 %v3344
    %v4427 = vpop.f32.mrf.mxu0
    %v4428 = vadd.f32 %v4171, %v4427
    %v4429 = vpop.f32.mrf.mxu0
    %v4430 = vadd.f32 %v4173, %v4429
    %4431 = vmatprep.mubr.f32.mxu0 %v3353
    %4432 = vmatmul.mubr.f32.gmra.mxu0 %v3352
    %v4433 = vpop.f32.mrf.mxu0
    %v4434 = vadd.f32 %v4177, %v4433
    %v4435 = vpop.f32.mrf.mxu0
    %v4436 = vadd.f32 %v4179, %v4435
    %4437 = vmatprep.mubr.f32.mxu0 %v3361
    %4438 = vmatmul.mubr.f32.gmra.mxu0 %v3360
    %v4439 = vpop.f32.mrf.mxu0
    %v4440 = vadd.f32 %v4183, %v4439
    %v4441 = vpop.f32.mrf.mxu0
    %v4442 = vadd.f32 %v4185, %v4441
    %4443 = vmatprep.mubr.f32.mxu0 %v3369
    %4444 = vmatmul.mubr.f32.gmra.mxu0 %v3368
    %v4445 = vpop.f32.mrf.mxu0
    %v4446 = vadd.f32 %v4189, %v4445
    %v4447 = vpop.f32.mrf.mxu0
    %v4448 = vadd.f32 %v4191, %v4447
    %4449 = vmatprep.mubr.f32.mxu0 %v3377
    %4450 = vmatmul.mubr.f32.gmra.mxu0 %v3376
    %v4451 = vpop.f32.mrf.mxu0
    %v4452 = vadd.f32 %v4195, %v4451
    %v4453 = vpop.f32.mrf.mxu0
    %v4454 = vadd.f32 %v4197, %v4453
    %4455 = vmatprep.mubr.f32.mxu0 %v3385
    %4456 = vmatmul.mubr.f32.gmra.mxu0 %v3384
    %v4457 = vpop.f32.mrf.mxu0
    %v4458 = vadd.f32 %v4201, %v4457
    %v4459 = vpop.f32.mrf.mxu0
    %v4460 = vadd.f32 %v4203, %v4459
    %4461 = vmatprep.mubr.f32.mxu0 %v3393
    %4462 = vmatmul.mubr.f32.gmra.mxu0 %v3392
    %v4463 = vpop.f32.mrf.mxu0
    %v4464 = vadd.f32 %v4207, %v4463
    %v4465 = vpop.f32.mrf.mxu0
    %v4466 = vadd.f32 %v4209, %v4465
    %4467 = vmatprep.mubr.f32.mxu0 %v3401
    %4468 = vmatmul.mubr.f32.gmra.mxu0 %v3400
    %v4469 = vpop.f32.mrf.mxu0
    %v4470 = vadd.f32 %v4213, %v4469
    %v4471 = vpop.f32.mrf.mxu0
    %v4472 = vadd.f32 %v4215, %v4471
    %4473 = vmatprep.mubr.f32.mxu0 %v3409
    %4474 = vmatmul.mubr.f32.gmra.mxu0 %v3408
    %v4475 = vpop.f32.mrf.mxu0
    %v4476 = vadd.f32 %v4219, %v4475
    %v4477 = vpop.f32.mrf.mxu0
    %v4478 = vadd.f32 %v4221, %v4477
    %4479 = vmatprep.mubr.f32.mxu0 %v3417
    %4480 = vmatmul.mubr.f32.gmra.mxu0 %v3416
    %v4481 = vpop.f32.mrf.mxu0
    %v4482 = vadd.f32 %v4225, %v4481
    %v4483 = vpop.f32.mrf.mxu0
    %v4484 = vadd.f32 %v4227, %v4483
    %4485 = vmatprep.mubr.f32.mxu0 %v3425
    %4486 = vmatmul.mubr.f32.gmra.mxu0 %v3424
    %v4487 = vpop.f32.mrf.mxu0
    %v4488 = vadd.f32 %v4231, %v4487
    %v4489 = vpop.f32.mrf.mxu0
    %v4490 = vadd.f32 %v4233, %v4489
    %4491 = vmatprep.mubr.f32.mxu0 %v3433
    %4492 = vmatmul.mubr.f32.gmra.mxu0 %v3432
    %v4493 = vpop.f32.mrf.mxu0
    %v4494 = vadd.f32 %v4237, %v4493
    %v4495 = vpop.f32.mrf.mxu0
    %v4496 = vadd.f32 %v4239, %v4495
    %4497 = vmatprep.mubr.f32.mxu0 %v3441
    %4498 = vmatmul.mubr.f32.gmra.mxu0 %v3440
    %v4499 = vpop.f32.mrf.mxu0
    %v4500 = vadd.f32 %v4243, %v4499
    %v4501 = vpop.f32.mrf.mxu0
    %v4502 = vadd.f32 %v4245, %v4501
    %4503 = vmatprep.mubr.f32.mxu0 %v3449
    %4504 = vmatmul.mubr.f32.gmra.mxu0 %v3448
    %v4505 = vpop.f32.mrf.mxu0
    %v4506 = vadd.f32 %v4249, %v4505
    %v4507 = vpop.f32.mrf.mxu0
    %v4508 = vadd.f32 %v4251, %v4507
    %4509 = vmatprep.mubr.f32.mxu0 %v3457
    %4510 = vmatmul.mubr.f32.gmra.mxu0 %v3456
    %v4511 = vpop.f32.mrf.mxu0
    %v4512 = vadd.f32 %v4255, %v4511
    %v4513 = vpop.f32.mrf.mxu0
    %v4514 = vadd.f32 %v4257, %v4513
    %4515 = vmatprep.mubr.f32.mxu0 %v3465
    %4516 = vmatmul.mubr.f32.gmra.mxu0 %v3464
    %v4517 = vpop.f32.mrf.mxu0
    %v4518 = vadd.f32 %v4261, %v4517
    %v4519 = vpop.f32.mrf.mxu0
    %v4520 = vadd.f32 %v4263, %v4519
    %4521 = vmatprep.mubr.f32.mxu0 %v3473
    %4522 = vmatmul.mubr.f32.gmra.mxu0 %v3472
    %v4523 = vpop.f32.mrf.mxu0
    %v4524 = vadd.f32 %v4267, %v4523
    %v4525 = vpop.f32.mrf.mxu0
    %v4526 = vadd.f32 %v4269, %v4525
    %4527 = vmatprep.mubr.f32.mxu0 %v3481
    %4528 = vmatmul.mubr.f32.gmra.mxu0 %v3480
    %v4529 = vpop.f32.mrf.mxu0
    %v4530 = vadd.f32 %v4273, %v4529
    %v4531 = vpop.f32.mrf.mxu0
    %v4532 = vadd.f32 %v4275, %v4531
    %4533 = vdwg.mxu0
    %4534 = vmatprep.subr.mxu0 %v3803
    %4535 = vmatpush1.msra.mxu0 %v3802
    %4536 = vmatprep.subr.mxu0 %v3799
    %4537 = vmatpush1.msra.mxu0 %v3798
    %4538 = vmatprep.subr.mxu0 %v3795
    %4539 = vmatpush1.msra.mxu0 %v3794
    %4540 = vmatprep.subr.mxu0 %v3791
    %4541 = vmatpush1.msra.mxu0 %v3790
    %4542 = vmatprep.subr.mxu0 %v3787
    %4543 = vmatpush1.msra.mxu0 %v3786
    %4544 = vmatprep.subr.mxu0 %v3783
    %4545 = vmatpush1.msra.mxu0 %v3782
    %4546 = vmatprep.subr.mxu0 %v3779
    %4547 = vmatpush1.msra.mxu0 %v3778
    %4548 = vmatprep.subr.mxu0 %v3775
    %4549 = vmatpush1.msra.mxu0 %v3774
    %4550 = vmatprep.subr.mxu0 %v3771
    %4551 = vmatpush1.msra.mxu0 %v3770
    %4552 = vmatprep.subr.mxu0 %v3767
    %4553 = vmatpush1.msra.mxu0 %v3766
    %4554 = vmatprep.subr.mxu0 %v3763
    %4555 = vmatpush1.msra.mxu0 %v3762
    %4556 = vmatprep.subr.mxu0 %v3759
    %4557 = vmatpush1.msra.mxu0 %v3758
    %4558 = vmatprep.subr.mxu0 %v3755
    %4559 = vmatpush1.msra.mxu0 %v3754
    %4560 = vmatprep.subr.mxu0 %v3751
    %4561 = vmatpush1.msra.mxu0 %v3750
    %4562 = vmatprep.subr.mxu0 %v3747
    %4563 = vmatpush1.msra.mxu0 %v3746
    %4564 = vmatprep.subr.mxu0 %v3743
    %4565 = vmatpush1.msra.mxu0 %v3742
    %4566 = vmatprep.subr.mxu0 %v3867
    %4567 = vmatpush2.msra.mxu0 %v3866
    %4568 = vmatprep.subr.mxu0 %v3863
    %4569 = vmatpush2.msra.mxu0 %v3862
    %4570 = vmatprep.subr.mxu0 %v3859
    %4571 = vmatpush2.msra.mxu0 %v3858
    %4572 = vmatprep.subr.mxu0 %v3855
    %4573 = vmatpush2.msra.mxu0 %v3854
    %4574 = vmatprep.subr.mxu0 %v3851
    %4575 = vmatpush2.msra.mxu0 %v3850
    %4576 = vmatprep.subr.mxu0 %v3847
    %4577 = vmatpush2.msra.mxu0 %v3846
    %4578 = vmatprep.subr.mxu0 %v3843
    %4579 = vmatpush2.msra.mxu0 %v3842
    %4580 = vmatprep.subr.mxu0 %v3839
    %4581 = vmatpush2.msra.mxu0 %v3838
    %4582 = vmatprep.subr.mxu0 %v3835
    %4583 = vmatpush2.msra.mxu0 %v3834
    %4584 = vmatprep.subr.mxu0 %v3831
    %4585 = vmatpush2.msra.mxu0 %v3830
    %4586 = vmatprep.subr.mxu0 %v3827
    %4587 = vmatpush2.msra.mxu0 %v3826
    %4588 = vmatprep.subr.mxu0 %v3823
    %4589 = vmatpush2.msra.mxu0 %v3822
    %4590 = vmatprep.subr.mxu0 %v3819
    %4591 = vmatpush2.msra.mxu0 %v3818
    %4592 = vmatprep.subr.mxu0 %v3815
    %4593 = vmatpush2.msra.mxu0 %v3814
    %4594 = vmatprep.subr.mxu0 %v3811
    %4595 = vmatpush2.msra.mxu0 %v3810
    %4596 = vmatprep.subr.mxu0 %v3807
    %4597 = vmatpush2.msra.mxu0 %v3806
    %4598 = vmatprep.mubr.f32.mxu0 %v3235
    %4599 = vmatmul.mubr.f32.gmra.mxu0 %v3234
    %v4600 = vpop.f32.mrf.mxu0
    %v4601 = vadd.f32 %v4344, %v4600
    %v4602 = vpop.f32.mrf.mxu0
    %v4603 = vadd.f32 %v4346, %v4602
    %4604 = vmatprep.mubr.f32.mxu0 %v3243
    %4605 = vmatmul.mubr.f32.gmra.mxu0 %v3242
    %v4606 = vpop.f32.mrf.mxu0
    %v4607 = vadd.f32 %v4350, %v4606
    %v4608 = vpop.f32.mrf.mxu0
    %v4609 = vadd.f32 %v4352, %v4608
    %4610 = vmatprep.mubr.f32.mxu0 %v3251
    %4611 = vmatmul.mubr.f32.gmra.mxu0 %v3250
    %v4612 = vpop.f32.mrf.mxu0
    %v4613 = vadd.f32 %v4356, %v4612
    %v4614 = vpop.f32.mrf.mxu0
    %v4615 = vadd.f32 %v4358, %v4614
    %4616 = vmatprep.mubr.f32.mxu0 %v3259
    %4617 = vmatmul.mubr.f32.gmra.mxu0 %v3258
    %v4618 = vpop.f32.mrf.mxu0
    %v4619 = vadd.f32 %v4362, %v4618
    %v4620 = vpop.f32.mrf.mxu0
    %v4621 = vadd.f32 %v4364, %v4620
    %4622 = vmatprep.mubr.f32.mxu0 %v3267
    %4623 = vmatmul.mubr.f32.gmra.mxu0 %v3266
    %v4624 = vpop.f32.mrf.mxu0
    %v4625 = vadd.f32 %v4368, %v4624
    %v4626 = vpop.f32.mrf.mxu0
    %v4627 = vadd.f32 %v4370, %v4626
    %4628 = vmatprep.mubr.f32.mxu0 %v3275
    %4629 = vmatmul.mubr.f32.gmra.mxu0 %v3274
    %v4630 = vpop.f32.mrf.mxu0
    %v4631 = vadd.f32 %v4374, %v4630
    %v4632 = vpop.f32.mrf.mxu0
    %v4633 = vadd.f32 %v4376, %v4632
    %4634 = vmatprep.mubr.f32.mxu0 %v3283
    %4635 = vmatmul.mubr.f32.gmra.mxu0 %v3282
    %v4636 = vpop.f32.mrf.mxu0
    %v4637 = vadd.f32 %v4380, %v4636
    %v4638 = vpop.f32.mrf.mxu0
    %v4639 = vadd.f32 %v4382, %v4638
    %4640 = vmatprep.mubr.f32.mxu0 %v3291
    %4641 = vmatmul.mubr.f32.gmra.mxu0 %v3290
    %v4642 = vpop.f32.mrf.mxu0
    %v4643 = vadd.f32 %v4386, %v4642
    %v4644 = vpop.f32.mrf.mxu0
    %v4645 = vadd.f32 %v4388, %v4644
    %4646 = vmatprep.mubr.f32.mxu0 %v3299
    %4647 = vmatmul.mubr.f32.gmra.mxu0 %v3298
    %v4648 = vpop.f32.mrf.mxu0
    %v4649 = vadd.f32 %v4392, %v4648
    %v4650 = vpop.f32.mrf.mxu0
    %v4651 = vadd.f32 %v4394, %v4650
    %4652 = vmatprep.mubr.f32.mxu0 %v3307
    %4653 = vmatmul.mubr.f32.gmra.mxu0 %v3306
    %v4654 = vpop.f32.mrf.mxu0
    %v4655 = vadd.f32 %v4398, %v4654
    %v4656 = vpop.f32.mrf.mxu0
    %v4657 = vadd.f32 %v4400, %v4656
    %4658 = vmatprep.mubr.f32.mxu0 %v3315
    %4659 = vmatmul.mubr.f32.gmra.mxu0 %v3314
    %v4660 = vpop.f32.mrf.mxu0
    %v4661 = vadd.f32 %v4404, %v4660
    %v4662 = vpop.f32.mrf.mxu0
    %v4663 = vadd.f32 %v4406, %v4662
    %4664 = vmatprep.mubr.f32.mxu0 %v3323
    %4665 = vmatmul.mubr.f32.gmra.mxu0 %v3322
    %v4666 = vpop.f32.mrf.mxu0
    %v4667 = vadd.f32 %v4410, %v4666
    %v4668 = vpop.f32.mrf.mxu0
    %v4669 = vadd.f32 %v4412, %v4668
    %4670 = vmatprep.mubr.f32.mxu0 %v3331
    %4671 = vmatmul.mubr.f32.gmra.mxu0 %v3330
    %v4672 = vpop.f32.mrf.mxu0
    %v4673 = vadd.f32 %v4416, %v4672
    %v4674 = vpop.f32.mrf.mxu0
    %v4675 = vadd.f32 %v4418, %v4674
    %4676 = vmatprep.mubr.f32.mxu0 %v3339
    %4677 = vmatmul.mubr.f32.gmra.mxu0 %v3338
    %v4678 = vpop.f32.mrf.mxu0
    %v4679 = vadd.f32 %v4422, %v4678
    %v4680 = vpop.f32.mrf.mxu0
    %v4681 = vadd.f32 %v4424, %v4680
    %4682 = vmatprep.mubr.f32.mxu0 %v3347
    %4683 = vmatmul.mubr.f32.gmra.mxu0 %v3346
    %v4684 = vpop.f32.mrf.mxu0
    %v4685 = vadd.f32 %v4428, %v4684
    %v4686 = vpop.f32.mrf.mxu0
    %v4687 = vadd.f32 %v4430, %v4686
    %4688 = vmatprep.mubr.f32.mxu0 %v3355
    %4689 = vmatmul.mubr.f32.gmra.mxu0 %v3354
    %v4690 = vpop.f32.mrf.mxu0
    %v4691 = vadd.f32 %v4434, %v4690
    %v4692 = vpop.f32.mrf.mxu0
    %v4693 = vadd.f32 %v4436, %v4692
    %4694 = vmatprep.mubr.f32.mxu0 %v3363
    %4695 = vmatmul.mubr.f32.gmra.mxu0 %v3362
    %v4696 = vpop.f32.mrf.mxu0
    %v4697 = vadd.f32 %v4440, %v4696
    %v4698 = vpop.f32.mrf.mxu0
    %v4699 = vadd.f32 %v4442, %v4698
    %4700 = vmatprep.mubr.f32.mxu0 %v3371
    %4701 = vmatmul.mubr.f32.gmra.mxu0 %v3370
    %v4702 = vpop.f32.mrf.mxu0
    %v4703 = vadd.f32 %v4446, %v4702
    %v4704 = vpop.f32.mrf.mxu0
    %v4705 = vadd.f32 %v4448, %v4704
    %4706 = vmatprep.mubr.f32.mxu0 %v3379
    %4707 = vmatmul.mubr.f32.gmra.mxu0 %v3378
    %v4708 = vpop.f32.mrf.mxu0
    %v4709 = vadd.f32 %v4452, %v4708
    %v4710 = vpop.f32.mrf.mxu0
    %v4711 = vadd.f32 %v4454, %v4710
    %4712 = vmatprep.mubr.f32.mxu0 %v3387
    %4713 = vmatmul.mubr.f32.gmra.mxu0 %v3386
    %v4714 = vpop.f32.mrf.mxu0
    %v4715 = vadd.f32 %v4458, %v4714
    %v4716 = vpop.f32.mrf.mxu0
    %v4717 = vadd.f32 %v4460, %v4716
    %4718 = vmatprep.mubr.f32.mxu0 %v3395
    %4719 = vmatmul.mubr.f32.gmra.mxu0 %v3394
    %v4720 = vpop.f32.mrf.mxu0
    %v4721 = vadd.f32 %v4464, %v4720
    %v4722 = vpop.f32.mrf.mxu0
    %v4723 = vadd.f32 %v4466, %v4722
    %4724 = vmatprep.mubr.f32.mxu0 %v3403
    %4725 = vmatmul.mubr.f32.gmra.mxu0 %v3402
    %v4726 = vpop.f32.mrf.mxu0
    %v4727 = vadd.f32 %v4470, %v4726
    %v4728 = vpop.f32.mrf.mxu0
    %v4729 = vadd.f32 %v4472, %v4728
    %4730 = vmatprep.mubr.f32.mxu0 %v3411
    %4731 = vmatmul.mubr.f32.gmra.mxu0 %v3410
    %v4732 = vpop.f32.mrf.mxu0
    %v4733 = vadd.f32 %v4476, %v4732
    %v4734 = vpop.f32.mrf.mxu0
    %v4735 = vadd.f32 %v4478, %v4734
    %4736 = vmatprep.mubr.f32.mxu0 %v3419
    %4737 = vmatmul.mubr.f32.gmra.mxu0 %v3418
    %v4738 = vpop.f32.mrf.mxu0
    %v4739 = vadd.f32 %v4482, %v4738
    %v4740 = vpop.f32.mrf.mxu0
    %v4741 = vadd.f32 %v4484, %v4740
    %4742 = vmatprep.mubr.f32.mxu0 %v3427
    %4743 = vmatmul.mubr.f32.gmra.mxu0 %v3426
    %v4744 = vpop.f32.mrf.mxu0
    %v4745 = vadd.f32 %v4488, %v4744
    %v4746 = vpop.f32.mrf.mxu0
    %v4747 = vadd.f32 %v4490, %v4746
    %4748 = vmatprep.mubr.f32.mxu0 %v3435
    %4749 = vmatmul.mubr.f32.gmra.mxu0 %v3434
    %v4750 = vpop.f32.mrf.mxu0
    %v4751 = vadd.f32 %v4494, %v4750
    %v4752 = vpop.f32.mrf.mxu0
    %v4753 = vadd.f32 %v4496, %v4752
    %4754 = vmatprep.mubr.f32.mxu0 %v3443
    %4755 = vmatmul.mubr.f32.gmra.mxu0 %v3442
    %v4756 = vpop.f32.mrf.mxu0
    %v4757 = vadd.f32 %v4500, %v4756
    %v4758 = vpop.f32.mrf.mxu0
    %v4759 = vadd.f32 %v4502, %v4758
    %4760 = vmatprep.mubr.f32.mxu0 %v3451
    %4761 = vmatmul.mubr.f32.gmra.mxu0 %v3450
    %v4762 = vpop.f32.mrf.mxu0
    %v4763 = vadd.f32 %v4506, %v4762
    %v4764 = vpop.f32.mrf.mxu0
    %v4765 = vadd.f32 %v4508, %v4764
    %4766 = vmatprep.mubr.f32.mxu0 %v3459
    %4767 = vmatmul.mubr.f32.gmra.mxu0 %v3458
    %v4768 = vpop.f32.mrf.mxu0
    %v4769 = vadd.f32 %v4512, %v4768
    %v4770 = vpop.f32.mrf.mxu0
    %v4771 = vadd.f32 %v4514, %v4770
    %4772 = vmatprep.mubr.f32.mxu0 %v3467
    %4773 = vmatmul.mubr.f32.gmra.mxu0 %v3466
    %v4774 = vpop.f32.mrf.mxu0
    %v4775 = vadd.f32 %v4518, %v4774
    %v4776 = vpop.f32.mrf.mxu0
    %v4777 = vadd.f32 %v4520, %v4776
    %4778 = vmatprep.mubr.f32.mxu0 %v3475
    %4779 = vmatmul.mubr.f32.gmra.mxu0 %v3474
    %v4780 = vpop.f32.mrf.mxu0
    %v4781 = vadd.f32 %v4524, %v4780
    %v4782 = vpop.f32.mrf.mxu0
    %v4783 = vadd.f32 %v4526, %v4782
    %4784 = vmatprep.mubr.f32.mxu0 %v3483
    %4785 = vmatmul.mubr.f32.gmra.mxu0 %v3482
    %v4786 = vpop.f32.mrf.mxu0
    %v4787 = vadd.f32 %v4530, %v4786
    %v4788 = vpop.f32.mrf.mxu0
    %v4789 = vadd.f32 %v4532, %v4788
    %4790 = vdwg.mxu0
    %4791 = vmatprep.subr.mxu0 %v3931
    %4792 = vmatpush1.msra.mxu0 %v3930
    %4793 = vmatprep.subr.mxu0 %v3927
    %4794 = vmatpush1.msra.mxu0 %v3926
    %4795 = vmatprep.subr.mxu0 %v3923
    %4796 = vmatpush1.msra.mxu0 %v3922
    %4797 = vmatprep.subr.mxu0 %v3919
    %4798 = vmatpush1.msra.mxu0 %v3918
    %4799 = vmatprep.subr.mxu0 %v3915
    %4800 = vmatpush1.msra.mxu0 %v3914
    %4801 = vmatprep.subr.mxu0 %v3911
    %4802 = vmatpush1.msra.mxu0 %v3910
    %4803 = vmatprep.subr.mxu0 %v3907
    %4804 = vmatpush1.msra.mxu0 %v3906
    %4805 = vmatprep.subr.mxu0 %v3903
    %4806 = vmatpush1.msra.mxu0 %v3902
    %4807 = vmatprep.subr.mxu0 %v3899
    %4808 = vmatpush1.msra.mxu0 %v3898
    %4809 = vmatprep.subr.mxu0 %v3895
    %4810 = vmatpush1.msra.mxu0 %v3894
    %4811 = vmatprep.subr.mxu0 %v3891
    %4812 = vmatpush1.msra.mxu0 %v3890
    %4813 = vmatprep.subr.mxu0 %v3887
    %4814 = vmatpush1.msra.mxu0 %v3886
    %4815 = vmatprep.subr.mxu0 %v3883
    %4816 = vmatpush1.msra.mxu0 %v3882
    %4817 = vmatprep.subr.mxu0 %v3879
    %4818 = vmatpush1.msra.mxu0 %v3878
    %4819 = vmatprep.subr.mxu0 %v3875
    %4820 = vmatpush1.msra.mxu0 %v3874
    %4821 = vmatprep.subr.mxu0 %v3871
    %4822 = vmatpush1.msra.mxu0 %v3870
    %4823 = vmatprep.subr.mxu0 %v3995
    %4824 = vmatpush2.msra.mxu0 %v3994
    %4825 = vmatprep.subr.mxu0 %v3991
    %4826 = vmatpush2.msra.mxu0 %v3990
    %4827 = vmatprep.subr.mxu0 %v3987
    %4828 = vmatpush2.msra.mxu0 %v3986
    %4829 = vmatprep.subr.mxu0 %v3983
    %4830 = vmatpush2.msra.mxu0 %v3982
    %4831 = vmatprep.subr.mxu0 %v3979
    %4832 = vmatpush2.msra.mxu0 %v3978
    %4833 = vmatprep.subr.mxu0 %v3975
    %4834 = vmatpush2.msra.mxu0 %v3974
    %4835 = vmatprep.subr.mxu0 %v3971
    %4836 = vmatpush2.msra.mxu0 %v3970
    %4837 = vmatprep.subr.mxu0 %v3967
    %4838 = vmatpush2.msra.mxu0 %v3966
    %4839 = vmatprep.subr.mxu0 %v3963
    %4840 = vmatpush2.msra.mxu0 %v3962
    %4841 = vmatprep.subr.mxu0 %v3959
    %4842 = vmatpush2.msra.mxu0 %v3958
    %4843 = vmatprep.subr.mxu0 %v3955
    %4844 = vmatpush2.msra.mxu0 %v3954
    %4845 = vmatprep.subr.mxu0 %v3951
    %4846 = vmatpush2.msra.mxu0 %v3950
    %4847 = vmatprep.subr.mxu0 %v3947
    %4848 = vmatpush2.msra.mxu0 %v3946
    %4849 = vmatprep.subr.mxu0 %v3943
    %4850 = vmatpush2.msra.mxu0 %v3942
    %4851 = vmatprep.subr.mxu0 %v3939
    %4852 = vmatpush2.msra.mxu0 %v3938
    %4853 = vmatprep.subr.mxu0 %v3935
    %4854 = vmatpush2.msra.mxu0 %v3934
    %4855 = vmatprep.mubr.f32.mxu0 %v3237
    %4856 = vmatmul.mubr.f32.gmra.mxu0 %v3236
    %v4857 = vpop.f32.mrf.mxu0
    %v4858 = vadd.f32 %v4601, %v4857
    %v4859 = vpop.f32.mrf.mxu0
    %v4860 = vadd.f32 %v4603, %v4859
    %4861 = vmatprep.mubr.f32.mxu0 %v3245
    %4862 = vmatmul.mubr.f32.gmra.mxu0 %v3244
    %v4863 = vpop.f32.mrf.mxu0
    %v4864 = vadd.f32 %v4607, %v4863
    %v4865 = vpop.f32.mrf.mxu0
    %v4866 = vadd.f32 %v4609, %v4865
    %4867 = vmatprep.mubr.f32.mxu0 %v3253
    %4868 = vmatmul.mubr.f32.gmra.mxu0 %v3252
    %v4869 = vpop.f32.mrf.mxu0
    %v4870 = vadd.f32 %v4613, %v4869
    %v4871 = vpop.f32.mrf.mxu0
    %v4872 = vadd.f32 %v4615, %v4871
    %4873 = vmatprep.mubr.f32.mxu0 %v3261
    %4874 = vmatmul.mubr.f32.gmra.mxu0 %v3260
    %v4875 = vpop.f32.mrf.mxu0
    %v4876 = vadd.f32 %v4619, %v4875
    %v4877 = vpop.f32.mrf.mxu0
    %v4878 = vadd.f32 %v4621, %v4877
    %4879 = vmatprep.mubr.f32.mxu0 %v3269
    %4880 = vmatmul.mubr.f32.gmra.mxu0 %v3268
    %v4881 = vpop.f32.mrf.mxu0
    %v4882 = vadd.f32 %v4625, %v4881
    %v4883 = vpop.f32.mrf.mxu0
    %v4884 = vadd.f32 %v4627, %v4883
    %4885 = vmatprep.mubr.f32.mxu0 %v3277
    %4886 = vmatmul.mubr.f32.gmra.mxu0 %v3276
    %v4887 = vpop.f32.mrf.mxu0
    %v4888 = vadd.f32 %v4631, %v4887
    %v4889 = vpop.f32.mrf.mxu0
    %v4890 = vadd.f32 %v4633, %v4889
    %4891 = vmatprep.mubr.f32.mxu0 %v3285
    %4892 = vmatmul.mubr.f32.gmra.mxu0 %v3284
    %v4893 = vpop.f32.mrf.mxu0
    %v4894 = vadd.f32 %v4637, %v4893
    %v4895 = vpop.f32.mrf.mxu0
    %v4896 = vadd.f32 %v4639, %v4895
    %4897 = vmatprep.mubr.f32.mxu0 %v3293
    %4898 = vmatmul.mubr.f32.gmra.mxu0 %v3292
    %v4899 = vpop.f32.mrf.mxu0
    %v4900 = vadd.f32 %v4643, %v4899
    %v4901 = vpop.f32.mrf.mxu0
    %v4902 = vadd.f32 %v4645, %v4901
    %4903 = vmatprep.mubr.f32.mxu0 %v3301
    %4904 = vmatmul.mubr.f32.gmra.mxu0 %v3300
    %v4905 = vpop.f32.mrf.mxu0
    %v4906 = vadd.f32 %v4649, %v4905
    %v4907 = vpop.f32.mrf.mxu0
    %v4908 = vadd.f32 %v4651, %v4907
    %4909 = vmatprep.mubr.f32.mxu0 %v3309
    %4910 = vmatmul.mubr.f32.gmra.mxu0 %v3308
    %v4911 = vpop.f32.mrf.mxu0
    %v4912 = vadd.f32 %v4655, %v4911
    %v4913 = vpop.f32.mrf.mxu0
    %v4914 = vadd.f32 %v4657, %v4913
    %4915 = vmatprep.mubr.f32.mxu0 %v3317
    %4916 = vmatmul.mubr.f32.gmra.mxu0 %v3316
    %v4917 = vpop.f32.mrf.mxu0
    %v4918 = vadd.f32 %v4661, %v4917
    %v4919 = vpop.f32.mrf.mxu0
    %v4920 = vadd.f32 %v4663, %v4919
    %4921 = vmatprep.mubr.f32.mxu0 %v3325
    %4922 = vmatmul.mubr.f32.gmra.mxu0 %v3324
    %v4923 = vpop.f32.mrf.mxu0
    %v4924 = vadd.f32 %v4667, %v4923
    %v4925 = vpop.f32.mrf.mxu0
    %v4926 = vadd.f32 %v4669, %v4925
    %4927 = vmatprep.mubr.f32.mxu0 %v3333
    %4928 = vmatmul.mubr.f32.gmra.mxu0 %v3332
    %v4929 = vpop.f32.mrf.mxu0
    %v4930 = vadd.f32 %v4673, %v4929
    %v4931 = vpop.f32.mrf.mxu0
    %v4932 = vadd.f32 %v4675, %v4931
    %4933 = vmatprep.mubr.f32.mxu0 %v3341
    %4934 = vmatmul.mubr.f32.gmra.mxu0 %v3340
    %v4935 = vpop.f32.mrf.mxu0
    %v4936 = vadd.f32 %v4679, %v4935
    %v4937 = vpop.f32.mrf.mxu0
    %v4938 = vadd.f32 %v4681, %v4937
    %4939 = vmatprep.mubr.f32.mxu0 %v3349
    %4940 = vmatmul.mubr.f32.gmra.mxu0 %v3348
    %v4941 = vpop.f32.mrf.mxu0
    %v4942 = vadd.f32 %v4685, %v4941
    %v4943 = vpop.f32.mrf.mxu0
    %v4944 = vadd.f32 %v4687, %v4943
    %4945 = vmatprep.mubr.f32.mxu0 %v3357
    %4946 = vmatmul.mubr.f32.gmra.mxu0 %v3356
    %v4947 = vpop.f32.mrf.mxu0
    %v4948 = vadd.f32 %v4691, %v4947
    %v4949 = vpop.f32.mrf.mxu0
    %v4950 = vadd.f32 %v4693, %v4949
    %4951 = vmatprep.mubr.f32.mxu0 %v3365
    %4952 = vmatmul.mubr.f32.gmra.mxu0 %v3364
    %v4953 = vpop.f32.mrf.mxu0
    %v4954 = vadd.f32 %v4697, %v4953
    %v4955 = vpop.f32.mrf.mxu0
    %v4956 = vadd.f32 %v4699, %v4955
    %4957 = vmatprep.mubr.f32.mxu0 %v3373
    %4958 = vmatmul.mubr.f32.gmra.mxu0 %v3372
    %v4959 = vpop.f32.mrf.mxu0
    %v4960 = vadd.f32 %v4703, %v4959
    %v4961 = vpop.f32.mrf.mxu0
    %v4962 = vadd.f32 %v4705, %v4961
    %4963 = vmatprep.mubr.f32.mxu0 %v3381
    %4964 = vmatmul.mubr.f32.gmra.mxu0 %v3380
    %v4965 = vpop.f32.mrf.mxu0
    %v4966 = vadd.f32 %v4709, %v4965
    %v4967 = vpop.f32.mrf.mxu0
    %v4968 = vadd.f32 %v4711, %v4967
    %4969 = vmatprep.mubr.f32.mxu0 %v3389
    %4970 = vmatmul.mubr.f32.gmra.mxu0 %v3388
    %v4971 = vpop.f32.mrf.mxu0
    %v4972 = vadd.f32 %v4715, %v4971
    %v4973 = vpop.f32.mrf.mxu0
    %v4974 = vadd.f32 %v4717, %v4973
    %4975 = vmatprep.mubr.f32.mxu0 %v3397
    %4976 = vmatmul.mubr.f32.gmra.mxu0 %v3396
    %v4977 = vpop.f32.mrf.mxu0
    %v4978 = vadd.f32 %v4721, %v4977
    %v4979 = vpop.f32.mrf.mxu0
    %v4980 = vadd.f32 %v4723, %v4979
    %4981 = vmatprep.mubr.f32.mxu0 %v3405
    %4982 = vmatmul.mubr.f32.gmra.mxu0 %v3404
    %v4983 = vpop.f32.mrf.mxu0
    %v4984 = vadd.f32 %v4727, %v4983
    %v4985 = vpop.f32.mrf.mxu0
    %v4986 = vadd.f32 %v4729, %v4985
    %4987 = vmatprep.mubr.f32.mxu0 %v3413
    %4988 = vmatmul.mubr.f32.gmra.mxu0 %v3412
    %v4989 = vpop.f32.mrf.mxu0
    %v4990 = vadd.f32 %v4733, %v4989
    %v4991 = vpop.f32.mrf.mxu0
    %v4992 = vadd.f32 %v4735, %v4991
    %4993 = vmatprep.mubr.f32.mxu0 %v3421
    %4994 = vmatmul.mubr.f32.gmra.mxu0 %v3420
    %v4995 = vpop.f32.mrf.mxu0
    %v4996 = vadd.f32 %v4739, %v4995
    %v4997 = vpop.f32.mrf.mxu0
    %v4998 = vadd.f32 %v4741, %v4997
    %4999 = vmatprep.mubr.f32.mxu0 %v3429
    %5000 = vmatmul.mubr.f32.gmra.mxu0 %v3428
    %v5001 = vpop.f32.mrf.mxu0
    %v5002 = vadd.f32 %v4745, %v5001
    %v5003 = vpop.f32.mrf.mxu0
    %v5004 = vadd.f32 %v4747, %v5003
    %5005 = vmatprep.mubr.f32.mxu0 %v3437
    %5006 = vmatmul.mubr.f32.gmra.mxu0 %v3436
    %v5007 = vpop.f32.mrf.mxu0
    %v5008 = vadd.f32 %v4751, %v5007
    %v5009 = vpop.f32.mrf.mxu0
    %v5010 = vadd.f32 %v4753, %v5009
    %5011 = vmatprep.mubr.f32.mxu0 %v3445
    %5012 = vmatmul.mubr.f32.gmra.mxu0 %v3444
    %v5013 = vpop.f32.mrf.mxu0
    %v5014 = vadd.f32 %v4757, %v5013
    %v5015 = vpop.f32.mrf.mxu0
    %v5016 = vadd.f32 %v4759, %v5015
    %5017 = vmatprep.mubr.f32.mxu0 %v3453
    %5018 = vmatmul.mubr.f32.gmra.mxu0 %v3452
    %v5019 = vpop.f32.mrf.mxu0
    %v5020 = vadd.f32 %v4763, %v5019
    %v5021 = vpop.f32.mrf.mxu0
    %v5022 = vadd.f32 %v4765, %v5021
    %5023 = vmatprep.mubr.f32.mxu0 %v3461
    %5024 = vmatmul.mubr.f32.gmra.mxu0 %v3460
    %v5025 = vpop.f32.mrf.mxu0
    %v5026 = vadd.f32 %v4769, %v5025
    %v5027 = vpop.f32.mrf.mxu0
    %v5028 = vadd.f32 %v4771, %v5027
    %5029 = vmatprep.mubr.f32.mxu0 %v3469
    %5030 = vmatmul.mubr.f32.gmra.mxu0 %v3468
    %v5031 = vpop.f32.mrf.mxu0
    %v5032 = vadd.f32 %v4775, %v5031
    %v5033 = vpop.f32.mrf.mxu0
    %v5034 = vadd.f32 %v4777, %v5033
    %5035 = vmatprep.mubr.f32.mxu0 %v3477
    %5036 = vmatmul.mubr.f32.gmra.mxu0 %v3476
    %v5037 = vpop.f32.mrf.mxu0
    %v5038 = vadd.f32 %v4781, %v5037
    %v5039 = vpop.f32.mrf.mxu0
    %v5040 = vadd.f32 %v4783, %v5039
    %5041 = vmatprep.mubr.f32.mxu0 %v3485
    %5042 = vmatmul.mubr.f32.gmra.mxu0 %v3484
    %v5043 = vpop.f32.mrf.mxu0
    %v5044 = vadd.f32 %v4787, %v5043
    %v5045 = vpop.f32.mrf.mxu0
    %v5046 = vadd.f32 %v4789, %v5045
    %5047 = vdwg.mxu0
    %5048 = vmatprep.subr.mxu0 %v3549
    %5049 = vmatpush1.msra.mxu0 %v3548
    %5050 = vmatprep.subr.mxu0 %v3545
    %5051 = vmatpush1.msra.mxu0 %v3544
    %5052 = vmatprep.subr.mxu0 %v3541
    %5053 = vmatpush1.msra.mxu0 %v3540
    %5054 = vmatprep.subr.mxu0 %v3537
    %5055 = vmatpush1.msra.mxu0 %v3536
    %5056 = vmatprep.subr.mxu0 %v3533
    %5057 = vmatpush1.msra.mxu0 %v3532
    %5058 = vmatprep.subr.mxu0 %v3529
    %5059 = vmatpush1.msra.mxu0 %v3528
    %5060 = vmatprep.subr.mxu0 %v3525
    %5061 = vmatpush1.msra.mxu0 %v3524
    %5062 = vmatprep.subr.mxu0 %v3521
    %5063 = vmatpush1.msra.mxu0 %v3520
    %5064 = vmatprep.subr.mxu0 %v3517
    %5065 = vmatpush1.msra.mxu0 %v3516
    %5066 = vmatprep.subr.mxu0 %v3513
    %5067 = vmatpush1.msra.mxu0 %v3512
    %5068 = vmatprep.subr.mxu0 %v3509
    %5069 = vmatpush1.msra.mxu0 %v3508
    %5070 = vmatprep.subr.mxu0 %v3505
    %5071 = vmatpush1.msra.mxu0 %v3504
    %5072 = vmatprep.subr.mxu0 %v3501
    %5073 = vmatpush1.msra.mxu0 %v3500
    %5074 = vmatprep.subr.mxu0 %v3497
    %5075 = vmatpush1.msra.mxu0 %v3496
    %5076 = vmatprep.subr.mxu0 %v3493
    %5077 = vmatpush1.msra.mxu0 %v3492
    %5078 = vmatprep.subr.mxu0 %v3489
    %5079 = vmatpush1.msra.mxu0 %v3488
    %5080 = vmatprep.subr.mxu0 %v3613
    %5081 = vmatpush2.msra.mxu0 %v3612
    %5082 = vmatprep.subr.mxu0 %v3609
    %5083 = vmatpush2.msra.mxu0 %v3608
    %5084 = vmatprep.subr.mxu0 %v3605
    %5085 = vmatpush2.msra.mxu0 %v3604
    %5086 = vmatprep.subr.mxu0 %v3601
    %5087 = vmatpush2.msra.mxu0 %v3600
    %5088 = vmatprep.subr.mxu0 %v3597
    %5089 = vmatpush2.msra.mxu0 %v3596
    %5090 = vmatprep.subr.mxu0 %v3593
    %5091 = vmatpush2.msra.mxu0 %v3592
    %5092 = vmatprep.subr.mxu0 %v3589
    %5093 = vmatpush2.msra.mxu0 %v3588
    %5094 = vmatprep.subr.mxu0 %v3585
    %5095 = vmatpush2.msra.mxu0 %v3584
    %5096 = vmatprep.subr.mxu0 %v3581
    %5097 = vmatpush2.msra.mxu0 %v3580
    %5098 = vmatprep.subr.mxu0 %v3577
    %5099 = vmatpush2.msra.mxu0 %v3576
    %5100 = vmatprep.subr.mxu0 %v3573
    %5101 = vmatpush2.msra.mxu0 %v3572
    %5102 = vmatprep.subr.mxu0 %v3569
    %5103 = vmatpush2.msra.mxu0 %v3568
    %5104 = vmatprep.subr.mxu0 %v3565
    %5105 = vmatpush2.msra.mxu0 %v3564
    %5106 = vmatprep.subr.mxu0 %v3561
    %5107 = vmatpush2.msra.mxu0 %v3560
    %5108 = vmatprep.subr.mxu0 %v3557
    %5109 = vmatpush2.msra.mxu0 %v3556
    %5110 = vmatprep.subr.mxu0 %v3553
    %5111 = vmatpush2.msra.mxu0 %v3552
    %5112 = vmatprep.mubr.f32.mxu0 %v3231
    %5113 = vmatmul.mubr.f32.gmra.mxu0 %v3230
    %v5114 = vpop.f32.mrf.mxu0
    %v5115 = vadd.f32 %v4011, %v5114
    %v5116 = vpop.f32.mrf.mxu0
    %v5117 = vadd.f32 %v4015, %v5116
    %5118 = vmatprep.mubr.f32.mxu0 %v3239
    %5119 = vmatmul.mubr.f32.gmra.mxu0 %v3238
    %v5120 = vpop.f32.mrf.mxu0
    %v5121 = vadd.f32 %v4011, %v5120
    %v5122 = vpop.f32.mrf.mxu0
    %v5123 = vadd.f32 %v4015, %v5122
    %5124 = vmatprep.mubr.f32.mxu0 %v3247
    %5125 = vmatmul.mubr.f32.gmra.mxu0 %v3246
    %v5126 = vpop.f32.mrf.mxu0
    %v5127 = vadd.f32 %v4011, %v5126
    %v5128 = vpop.f32.mrf.mxu0
    %v5129 = vadd.f32 %v4015, %v5128
    %5130 = vmatprep.mubr.f32.mxu0 %v3255
    %5131 = vmatmul.mubr.f32.gmra.mxu0 %v3254
    %v5132 = vpop.f32.mrf.mxu0
    %v5133 = vadd.f32 %v4011, %v5132
    %v5134 = vpop.f32.mrf.mxu0
    %v5135 = vadd.f32 %v4015, %v5134
    %5136 = vmatprep.mubr.f32.mxu0 %v3263
    %5137 = vmatmul.mubr.f32.gmra.mxu0 %v3262
    %v5138 = vpop.f32.mrf.mxu0
    %v5139 = vadd.f32 %v4011, %v5138
    %v5140 = vpop.f32.mrf.mxu0
    %v5141 = vadd.f32 %v4015, %v5140
    %5142 = vmatprep.mubr.f32.mxu0 %v3271
    %5143 = vmatmul.mubr.f32.gmra.mxu0 %v3270
    %v5144 = vpop.f32.mrf.mxu0
    %v5145 = vadd.f32 %v4011, %v5144
    %v5146 = vpop.f32.mrf.mxu0
    %v5147 = vadd.f32 %v4015, %v5146
    %5148 = vmatprep.mubr.f32.mxu0 %v3279
    %5149 = vmatmul.mubr.f32.gmra.mxu0 %v3278
    %v5150 = vpop.f32.mrf.mxu0
    %v5151 = vadd.f32 %v4011, %v5150
    %v5152 = vpop.f32.mrf.mxu0
    %v5153 = vadd.f32 %v4015, %v5152
    %5154 = vmatprep.mubr.f32.mxu0 %v3287
    %5155 = vmatmul.mubr.f32.gmra.mxu0 %v3286
    %v5156 = vpop.f32.mrf.mxu0
    %v5157 = vadd.f32 %v4011, %v5156
    %v5158 = vpop.f32.mrf.mxu0
    %v5159 = vadd.f32 %v4015, %v5158
    %5160 = vmatprep.mubr.f32.mxu0 %v3295
    %5161 = vmatmul.mubr.f32.gmra.mxu0 %v3294
    %v5162 = vpop.f32.mrf.mxu0
    %v5163 = vadd.f32 %v4011, %v5162
    %v5164 = vpop.f32.mrf.mxu0
    %v5165 = vadd.f32 %v4015, %v5164
    %5166 = vmatprep.mubr.f32.mxu0 %v3303
    %5167 = vmatmul.mubr.f32.gmra.mxu0 %v3302
    %v5168 = vpop.f32.mrf.mxu0
    %v5169 = vadd.f32 %v4011, %v5168
    %v5170 = vpop.f32.mrf.mxu0
    %v5171 = vadd.f32 %v4015, %v5170
    %5172 = vmatprep.mubr.f32.mxu0 %v3311
    %5173 = vmatmul.mubr.f32.gmra.mxu0 %v3310
    %v5174 = vpop.f32.mrf.mxu0
    %v5175 = vadd.f32 %v4011, %v5174
    %v5176 = vpop.f32.mrf.mxu0
    %v5177 = vadd.f32 %v4015, %v5176
    %5178 = vmatprep.mubr.f32.mxu0 %v3319
    %5179 = vmatmul.mubr.f32.gmra.mxu0 %v3318
    %v5180 = vpop.f32.mrf.mxu0
    %v5181 = vadd.f32 %v4011, %v5180
    %v5182 = vpop.f32.mrf.mxu0
    %v5183 = vadd.f32 %v4015, %v5182
    %5184 = vmatprep.mubr.f32.mxu0 %v3327
    %5185 = vmatmul.mubr.f32.gmra.mxu0 %v3326
    %v5186 = vpop.f32.mrf.mxu0
    %v5187 = vadd.f32 %v4011, %v5186
    %v5188 = vpop.f32.mrf.mxu0
    %v5189 = vadd.f32 %v4015, %v5188
    %5190 = vmatprep.mubr.f32.mxu0 %v3335
    %5191 = vmatmul.mubr.f32.gmra.mxu0 %v3334
    %v5192 = vpop.f32.mrf.mxu0
    %v5193 = vadd.f32 %v4011, %v5192
    %v5194 = vpop.f32.mrf.mxu0
    %v5195 = vadd.f32 %v4015, %v5194
    %5196 = vmatprep.mubr.f32.mxu0 %v3343
    %5197 = vmatmul.mubr.f32.gmra.mxu0 %v3342
    %v5198 = vpop.f32.mrf.mxu0
    %v5199 = vadd.f32 %v4011, %v5198
    %v5200 = vpop.f32.mrf.mxu0
    %v5201 = vadd.f32 %v4015, %v5200
    %5202 = vmatprep.mubr.f32.mxu0 %v3351
    %5203 = vmatmul.mubr.f32.gmra.mxu0 %v3350
    %v5204 = vpop.f32.mrf.mxu0
    %v5205 = vadd.f32 %v4011, %v5204
    %v5206 = vpop.f32.mrf.mxu0
    %v5207 = vadd.f32 %v4015, %v5206
    %5208 = vmatprep.mubr.f32.mxu0 %v3359
    %5209 = vmatmul.mubr.f32.gmra.mxu0 %v3358
    %v5210 = vpop.f32.mrf.mxu0
    %v5211 = vadd.f32 %v4011, %v5210
    %v5212 = vpop.f32.mrf.mxu0
    %v5213 = vadd.f32 %v4015, %v5212
    %5214 = vmatprep.mubr.f32.mxu0 %v3367
    %5215 = vmatmul.mubr.f32.gmra.mxu0 %v3366
    %v5216 = vpop.f32.mrf.mxu0
    %v5217 = vadd.f32 %v4011, %v5216
    %v5218 = vpop.f32.mrf.mxu0
    %v5219 = vadd.f32 %v4015, %v5218
    %5220 = vmatprep.mubr.f32.mxu0 %v3375
    %5221 = vmatmul.mubr.f32.gmra.mxu0 %v3374
    %v5222 = vpop.f32.mrf.mxu0
    %v5223 = vadd.f32 %v4011, %v5222
    %v5224 = vpop.f32.mrf.mxu0
    %v5225 = vadd.f32 %v4015, %v5224
    %5226 = vmatprep.mubr.f32.mxu0 %v3383
    %5227 = vmatmul.mubr.f32.gmra.mxu0 %v3382
    %v5228 = vpop.f32.mrf.mxu0
    %v5229 = vadd.f32 %v4011, %v5228
    %v5230 = vpop.f32.mrf.mxu0
    %v5231 = vadd.f32 %v4015, %v5230
    %5232 = vmatprep.mubr.f32.mxu0 %v3391
    %5233 = vmatmul.mubr.f32.gmra.mxu0 %v3390
    %v5234 = vpop.f32.mrf.mxu0
    %v5235 = vadd.f32 %v4011, %v5234
    %v5236 = vpop.f32.mrf.mxu0
    %v5237 = vadd.f32 %v4015, %v5236
    %5238 = vmatprep.mubr.f32.mxu0 %v3399
    %5239 = vmatmul.mubr.f32.gmra.mxu0 %v3398
    %v5240 = vpop.f32.mrf.mxu0
    %v5241 = vadd.f32 %v4011, %v5240
    %v5242 = vpop.f32.mrf.mxu0
    %v5243 = vadd.f32 %v4015, %v5242
    %5244 = vmatprep.mubr.f32.mxu0 %v3407
    %5245 = vmatmul.mubr.f32.gmra.mxu0 %v3406
    %v5246 = vpop.f32.mrf.mxu0
    %v5247 = vadd.f32 %v4011, %v5246
    %v5248 = vpop.f32.mrf.mxu0
    %v5249 = vadd.f32 %v4015, %v5248
    %5250 = vmatprep.mubr.f32.mxu0 %v3415
    %5251 = vmatmul.mubr.f32.gmra.mxu0 %v3414
    %v5252 = vpop.f32.mrf.mxu0
    %v5253 = vadd.f32 %v4011, %v5252
    %v5254 = vpop.f32.mrf.mxu0
    %v5255 = vadd.f32 %v4015, %v5254
    %5256 = vmatprep.mubr.f32.mxu0 %v3423
    %5257 = vmatmul.mubr.f32.gmra.mxu0 %v3422
    %v5258 = vpop.f32.mrf.mxu0
    %v5259 = vadd.f32 %v4011, %v5258
    %v5260 = vpop.f32.mrf.mxu0
    %v5261 = vadd.f32 %v4015, %v5260
    %5262 = vmatprep.mubr.f32.mxu0 %v3431
    %5263 = vmatmul.mubr.f32.gmra.mxu0 %v3430
    %v5264 = vpop.f32.mrf.mxu0
    %v5265 = vadd.f32 %v4011, %v5264
    %v5266 = vpop.f32.mrf.mxu0
    %v5267 = vadd.f32 %v4015, %v5266
    %5268 = vmatprep.mubr.f32.mxu0 %v3439
    %5269 = vmatmul.mubr.f32.gmra.mxu0 %v3438
    %v5270 = vpop.f32.mrf.mxu0
    %v5271 = vadd.f32 %v4011, %v5270
    %v5272 = vpop.f32.mrf.mxu0
    %v5273 = vadd.f32 %v4015, %v5272
    %5274 = vmatprep.mubr.f32.mxu0 %v3447
    %5275 = vmatmul.mubr.f32.gmra.mxu0 %v3446
    %v5276 = vpop.f32.mrf.mxu0
    %v5277 = vadd.f32 %v4011, %v5276
    %v5278 = vpop.f32.mrf.mxu0
    %v5279 = vadd.f32 %v4015, %v5278
    %5280 = vmatprep.mubr.f32.mxu0 %v3455
    %5281 = vmatmul.mubr.f32.gmra.mxu0 %v3454
    %v5282 = vpop.f32.mrf.mxu0
    %v5283 = vadd.f32 %v4011, %v5282
    %v5284 = vpop.f32.mrf.mxu0
    %v5285 = vadd.f32 %v4015, %v5284
    %5286 = vmatprep.mubr.f32.mxu0 %v3463
    %5287 = vmatmul.mubr.f32.gmra.mxu0 %v3462
    %v5288 = vpop.f32.mrf.mxu0
    %v5289 = vadd.f32 %v4011, %v5288
    %v5290 = vpop.f32.mrf.mxu0
    %v5291 = vadd.f32 %v4015, %v5290
    %5292 = vmatprep.mubr.f32.mxu0 %v3471
    %5293 = vmatmul.mubr.f32.gmra.mxu0 %v3470
    %v5294 = vpop.f32.mrf.mxu0
    %v5295 = vadd.f32 %v4011, %v5294
    %v5296 = vpop.f32.mrf.mxu0
    %v5297 = vadd.f32 %v4015, %v5296
    %5298 = vmatprep.mubr.f32.mxu0 %v3479
    %5299 = vmatmul.mubr.f32.gmra.mxu0 %v3478
    %v5300 = vpop.f32.mrf.mxu0
    %v5301 = vadd.f32 %v4011, %v5300
    %v5302 = vpop.f32.mrf.mxu0
    %v5303 = vadd.f32 %v4015, %v5302
    %5304 = vdwg.mxu0
    %5305 = vmatprep.subr.mxu0 %v3677
    %5306 = vmatpush1.msra.mxu0 %v3676
    %5307 = vmatprep.subr.mxu0 %v3673
    %5308 = vmatpush1.msra.mxu0 %v3672
    %5309 = vmatprep.subr.mxu0 %v3669
    %5310 = vmatpush1.msra.mxu0 %v3668
    %5311 = vmatprep.subr.mxu0 %v3665
    %5312 = vmatpush1.msra.mxu0 %v3664
    %5313 = vmatprep.subr.mxu0 %v3661
    %5314 = vmatpush1.msra.mxu0 %v3660
    %5315 = vmatprep.subr.mxu0 %v3657
    %5316 = vmatpush1.msra.mxu0 %v3656
    %5317 = vmatprep.subr.mxu0 %v3653
    %5318 = vmatpush1.msra.mxu0 %v3652
    %5319 = vmatprep.subr.mxu0 %v3649
    %5320 = vmatpush1.msra.mxu0 %v3648
    %5321 = vmatprep.subr.mxu0 %v3645
    %5322 = vmatpush1.msra.mxu0 %v3644
    %5323 = vmatprep.subr.mxu0 %v3641
    %5324 = vmatpush1.msra.mxu0 %v3640
    %5325 = vmatprep.subr.mxu0 %v3637
    %5326 = vmatpush1.msra.mxu0 %v3636
    %5327 = vmatprep.subr.mxu0 %v3633
    %5328 = vmatpush1.msra.mxu0 %v3632
    %5329 = vmatprep.subr.mxu0 %v3629
    %5330 = vmatpush1.msra.mxu0 %v3628
    %5331 = vmatprep.subr.mxu0 %v3625
    %5332 = vmatpush1.msra.mxu0 %v3624
    %5333 = vmatprep.subr.mxu0 %v3621
    %5334 = vmatpush1.msra.mxu0 %v3620
    %5335 = vmatprep.subr.mxu0 %v3617
    %5336 = vmatpush1.msra.mxu0 %v3616
    %5337 = vmatprep.subr.mxu0 %v3741
    %5338 = vmatpush2.msra.mxu0 %v3740
    %5339 = vmatprep.subr.mxu0 %v3737
    %5340 = vmatpush2.msra.mxu0 %v3736
    %5341 = vmatprep.subr.mxu0 %v3733
    %5342 = vmatpush2.msra.mxu0 %v3732
    %5343 = vmatprep.subr.mxu0 %v3729
    %5344 = vmatpush2.msra.mxu0 %v3728
    %5345 = vmatprep.subr.mxu0 %v3725
    %5346 = vmatpush2.msra.mxu0 %v3724
    %5347 = vmatprep.subr.mxu0 %v3721
    %5348 = vmatpush2.msra.mxu0 %v3720
    %5349 = vmatprep.subr.mxu0 %v3717
    %5350 = vmatpush2.msra.mxu0 %v3716
    %5351 = vmatprep.subr.mxu0 %v3713
    %5352 = vmatpush2.msra.mxu0 %v3712
    %5353 = vmatprep.subr.mxu0 %v3709
    %5354 = vmatpush2.msra.mxu0 %v3708
    %5355 = vmatprep.subr.mxu0 %v3705
    %5356 = vmatpush2.msra.mxu0 %v3704
    %5357 = vmatprep.subr.mxu0 %v3701
    %5358 = vmatpush2.msra.mxu0 %v3700
    %5359 = vmatprep.subr.mxu0 %v3697
    %5360 = vmatpush2.msra.mxu0 %v3696
    %5361 = vmatprep.subr.mxu0 %v3693
    %5362 = vmatpush2.msra.mxu0 %v3692
    %5363 = vmatprep.subr.mxu0 %v3689
    %5364 = vmatpush2.msra.mxu0 %v3688
    %5365 = vmatprep.subr.mxu0 %v3685
    %5366 = vmatpush2.msra.mxu0 %v3684
    %5367 = vmatprep.subr.mxu0 %v3681
    %5368 = vmatpush2.msra.mxu0 %v3680
    %5369 = vmatprep.mubr.f32.mxu0 %v3233
    %5370 = vmatmul.mubr.f32.gmra.mxu0 %v3232
    %v5371 = vpop.f32.mrf.mxu0
    %v5372 = vadd.f32 %v5115, %v5371
    %v5373 = vpop.f32.mrf.mxu0
    %v5374 = vadd.f32 %v5117, %v5373
    %5375 = vmatprep.mubr.f32.mxu0 %v3241
    %5376 = vmatmul.mubr.f32.gmra.mxu0 %v3240
    %v5377 = vpop.f32.mrf.mxu0
    %v5378 = vadd.f32 %v5121, %v5377
    %v5379 = vpop.f32.mrf.mxu0
    %v5380 = vadd.f32 %v5123, %v5379
    %5381 = vmatprep.mubr.f32.mxu0 %v3249
    %5382 = vmatmul.mubr.f32.gmra.mxu0 %v3248
    %v5383 = vpop.f32.mrf.mxu0
    %v5384 = vadd.f32 %v5127, %v5383
    %v5385 = vpop.f32.mrf.mxu0
    %v5386 = vadd.f32 %v5129, %v5385
    %5387 = vmatprep.mubr.f32.mxu0 %v3257
    %5388 = vmatmul.mubr.f32.gmra.mxu0 %v3256
    %v5389 = vpop.f32.mrf.mxu0
    %v5390 = vadd.f32 %v5133, %v5389
    %v5391 = vpop.f32.mrf.mxu0
    %v5392 = vadd.f32 %v5135, %v5391
    %5393 = vmatprep.mubr.f32.mxu0 %v3265
    %5394 = vmatmul.mubr.f32.gmra.mxu0 %v3264
    %v5395 = vpop.f32.mrf.mxu0
    %v5396 = vadd.f32 %v5139, %v5395
    %v5397 = vpop.f32.mrf.mxu0
    %v5398 = vadd.f32 %v5141, %v5397
    %5399 = vmatprep.mubr.f32.mxu0 %v3273
    %5400 = vmatmul.mubr.f32.gmra.mxu0 %v3272
    %v5401 = vpop.f32.mrf.mxu0
    %v5402 = vadd.f32 %v5145, %v5401
    %v5403 = vpop.f32.mrf.mxu0
    %v5404 = vadd.f32 %v5147, %v5403
    %5405 = vmatprep.mubr.f32.mxu0 %v3281
    %5406 = vmatmul.mubr.f32.gmra.mxu0 %v3280
    %v5407 = vpop.f32.mrf.mxu0
    %v5408 = vadd.f32 %v5151, %v5407
    %v5409 = vpop.f32.mrf.mxu0
    %v5410 = vadd.f32 %v5153, %v5409
    %5411 = vmatprep.mubr.f32.mxu0 %v3289
    %5412 = vmatmul.mubr.f32.gmra.mxu0 %v3288
    %v5413 = vpop.f32.mrf.mxu0
    %v5414 = vadd.f32 %v5157, %v5413
    %v5415 = vpop.f32.mrf.mxu0
    %v5416 = vadd.f32 %v5159, %v5415
    %5417 = vmatprep.mubr.f32.mxu0 %v3297
    %5418 = vmatmul.mubr.f32.gmra.mxu0 %v3296
    %v5419 = vpop.f32.mrf.mxu0
    %v5420 = vadd.f32 %v5163, %v5419
    %v5421 = vpop.f32.mrf.mxu0
    %v5422 = vadd.f32 %v5165, %v5421
    %5423 = vmatprep.mubr.f32.mxu0 %v3305
    %5424 = vmatmul.mubr.f32.gmra.mxu0 %v3304
    %v5425 = vpop.f32.mrf.mxu0
    %v5426 = vadd.f32 %v5169, %v5425
    %v5427 = vpop.f32.mrf.mxu0
    %v5428 = vadd.f32 %v5171, %v5427
    %5429 = vmatprep.mubr.f32.mxu0 %v3313
    %5430 = vmatmul.mubr.f32.gmra.mxu0 %v3312
    %v5431 = vpop.f32.mrf.mxu0
    %v5432 = vadd.f32 %v5175, %v5431
    %v5433 = vpop.f32.mrf.mxu0
    %v5434 = vadd.f32 %v5177, %v5433
    %5435 = vmatprep.mubr.f32.mxu0 %v3321
    %5436 = vmatmul.mubr.f32.gmra.mxu0 %v3320
    %v5437 = vpop.f32.mrf.mxu0
    %v5438 = vadd.f32 %v5181, %v5437
    %v5439 = vpop.f32.mrf.mxu0
    %v5440 = vadd.f32 %v5183, %v5439
    %5441 = vmatprep.mubr.f32.mxu0 %v3329
    %5442 = vmatmul.mubr.f32.gmra.mxu0 %v3328
    %v5443 = vpop.f32.mrf.mxu0
    %v5444 = vadd.f32 %v5187, %v5443
    %v5445 = vpop.f32.mrf.mxu0
    %v5446 = vadd.f32 %v5189, %v5445
    %5447 = vmatprep.mubr.f32.mxu0 %v3337
    %5448 = vmatmul.mubr.f32.gmra.mxu0 %v3336
    %v5449 = vpop.f32.mrf.mxu0
    %v5450 = vadd.f32 %v5193, %v5449
    %v5451 = vpop.f32.mrf.mxu0
    %v5452 = vadd.f32 %v5195, %v5451
    %5453 = vmatprep.mubr.f32.mxu0 %v3345
    %5454 = vmatmul.mubr.f32.gmra.mxu0 %v3344
    %v5455 = vpop.f32.mrf.mxu0
    %v5456 = vadd.f32 %v5199, %v5455
    %v5457 = vpop.f32.mrf.mxu0
    %v5458 = vadd.f32 %v5201, %v5457
    %5459 = vmatprep.mubr.f32.mxu0 %v3353
    %5460 = vmatmul.mubr.f32.gmra.mxu0 %v3352
    %v5461 = vpop.f32.mrf.mxu0
    %v5462 = vadd.f32 %v5205, %v5461
    %v5463 = vpop.f32.mrf.mxu0
    %v5464 = vadd.f32 %v5207, %v5463
    %5465 = vmatprep.mubr.f32.mxu0 %v3361
    %5466 = vmatmul.mubr.f32.gmra.mxu0 %v3360
    %v5467 = vpop.f32.mrf.mxu0
    %v5468 = vadd.f32 %v5211, %v5467
    %v5469 = vpop.f32.mrf.mxu0
    %v5470 = vadd.f32 %v5213, %v5469
    %5471 = vmatprep.mubr.f32.mxu0 %v3369
    %5472 = vmatmul.mubr.f32.gmra.mxu0 %v3368
    %v5473 = vpop.f32.mrf.mxu0
    %v5474 = vadd.f32 %v5217, %v5473
    %v5475 = vpop.f32.mrf.mxu0
    %v5476 = vadd.f32 %v5219, %v5475
    %5477 = vmatprep.mubr.f32.mxu0 %v3377
    %5478 = vmatmul.mubr.f32.gmra.mxu0 %v3376
    %v5479 = vpop.f32.mrf.mxu0
    %v5480 = vadd.f32 %v5223, %v5479
    %v5481 = vpop.f32.mrf.mxu0
    %v5482 = vadd.f32 %v5225, %v5481
    %5483 = vmatprep.mubr.f32.mxu0 %v3385
    %5484 = vmatmul.mubr.f32.gmra.mxu0 %v3384
    %v5485 = vpop.f32.mrf.mxu0
    %v5486 = vadd.f32 %v5229, %v5485
    %v5487 = vpop.f32.mrf.mxu0
    %v5488 = vadd.f32 %v5231, %v5487
    %5489 = vmatprep.mubr.f32.mxu0 %v3393
    %5490 = vmatmul.mubr.f32.gmra.mxu0 %v3392
    %v5491 = vpop.f32.mrf.mxu0
    %v5492 = vadd.f32 %v5235, %v5491
    %v5493 = vpop.f32.mrf.mxu0
    %v5494 = vadd.f32 %v5237, %v5493
    %5495 = vmatprep.mubr.f32.mxu0 %v3401
    %5496 = vmatmul.mubr.f32.gmra.mxu0 %v3400
    %v5497 = vpop.f32.mrf.mxu0
    %v5498 = vadd.f32 %v5241, %v5497
    %v5499 = vpop.f32.mrf.mxu0
    %v5500 = vadd.f32 %v5243, %v5499
    %5501 = vmatprep.mubr.f32.mxu0 %v3409
    %5502 = vmatmul.mubr.f32.gmra.mxu0 %v3408
    %v5503 = vpop.f32.mrf.mxu0
    %v5504 = vadd.f32 %v5247, %v5503
    %v5505 = vpop.f32.mrf.mxu0
    %v5506 = vadd.f32 %v5249, %v5505
    %5507 = vmatprep.mubr.f32.mxu0 %v3417
    %5508 = vmatmul.mubr.f32.gmra.mxu0 %v3416
    %v5509 = vpop.f32.mrf.mxu0
    %v5510 = vadd.f32 %v5253, %v5509
    %v5511 = vpop.f32.mrf.mxu0
    %v5512 = vadd.f32 %v5255, %v5511
    %5513 = vmatprep.mubr.f32.mxu0 %v3425
    %5514 = vmatmul.mubr.f32.gmra.mxu0 %v3424
    %v5515 = vpop.f32.mrf.mxu0
    %v5516 = vadd.f32 %v5259, %v5515
    %v5517 = vpop.f32.mrf.mxu0
    %v5518 = vadd.f32 %v5261, %v5517
    %5519 = vmatprep.mubr.f32.mxu0 %v3433
    %5520 = vmatmul.mubr.f32.gmra.mxu0 %v3432
    %v5521 = vpop.f32.mrf.mxu0
    %v5522 = vadd.f32 %v5265, %v5521
    %v5523 = vpop.f32.mrf.mxu0
    %v5524 = vadd.f32 %v5267, %v5523
    %5525 = vmatprep.mubr.f32.mxu0 %v3441
    %5526 = vmatmul.mubr.f32.gmra.mxu0 %v3440
    %v5527 = vpop.f32.mrf.mxu0
    %v5528 = vadd.f32 %v5271, %v5527
    %v5529 = vpop.f32.mrf.mxu0
    %v5530 = vadd.f32 %v5273, %v5529
    %5531 = vmatprep.mubr.f32.mxu0 %v3449
    %5532 = vmatmul.mubr.f32.gmra.mxu0 %v3448
    %v5533 = vpop.f32.mrf.mxu0
    %v5534 = vadd.f32 %v5277, %v5533
    %v5535 = vpop.f32.mrf.mxu0
    %v5536 = vadd.f32 %v5279, %v5535
    %5537 = vmatprep.mubr.f32.mxu0 %v3457
    %5538 = vmatmul.mubr.f32.gmra.mxu0 %v3456
    %v5539 = vpop.f32.mrf.mxu0
    %v5540 = vadd.f32 %v5283, %v5539
    %v5541 = vpop.f32.mrf.mxu0
    %v5542 = vadd.f32 %v5285, %v5541
    %5543 = vmatprep.mubr.f32.mxu0 %v3465
    %5544 = vmatmul.mubr.f32.gmra.mxu0 %v3464
    %v5545 = vpop.f32.mrf.mxu0
    %v5546 = vadd.f32 %v5289, %v5545
    %v5547 = vpop.f32.mrf.mxu0
    %v5548 = vadd.f32 %v5291, %v5547
    %5549 = vmatprep.mubr.f32.mxu0 %v3473
    %5550 = vmatmul.mubr.f32.gmra.mxu0 %v3472
    %v5551 = vpop.f32.mrf.mxu0
    %v5552 = vadd.f32 %v5295, %v5551
    %v5553 = vpop.f32.mrf.mxu0
    %v5554 = vadd.f32 %v5297, %v5553
    %5555 = vmatprep.mubr.f32.mxu0 %v3481
    %5556 = vmatmul.mubr.f32.gmra.mxu0 %v3480
    %v5557 = vpop.f32.mrf.mxu0
    %v5558 = vadd.f32 %v5301, %v5557
    %v5559 = vpop.f32.mrf.mxu0
    %v5560 = vadd.f32 %v5303, %v5559
    %5561 = vdwg.mxu0
    %5562 = vmatprep.subr.mxu0 %v3805
    %5563 = vmatpush1.msra.mxu0 %v3804
    %5564 = vmatprep.subr.mxu0 %v3801
    %5565 = vmatpush1.msra.mxu0 %v3800
    %5566 = vmatprep.subr.mxu0 %v3797
    %5567 = vmatpush1.msra.mxu0 %v3796
    %5568 = vmatprep.subr.mxu0 %v3793
    %5569 = vmatpush1.msra.mxu0 %v3792
    %5570 = vmatprep.subr.mxu0 %v3789
    %5571 = vmatpush1.msra.mxu0 %v3788
    %5572 = vmatprep.subr.mxu0 %v3785
    %5573 = vmatpush1.msra.mxu0 %v3784
    %5574 = vmatprep.subr.mxu0 %v3781
    %5575 = vmatpush1.msra.mxu0 %v3780
    %5576 = vmatprep.subr.mxu0 %v3777
    %5577 = vmatpush1.msra.mxu0 %v3776
    %5578 = vmatprep.subr.mxu0 %v3773
    %5579 = vmatpush1.msra.mxu0 %v3772
    %5580 = vmatprep.subr.mxu0 %v3769
    %5581 = vmatpush1.msra.mxu0 %v3768
    %5582 = vmatprep.subr.mxu0 %v3765
    %5583 = vmatpush1.msra.mxu0 %v3764
    %5584 = vmatprep.subr.mxu0 %v3761
    %5585 = vmatpush1.msra.mxu0 %v3760
    %5586 = vmatprep.subr.mxu0 %v3757
    %5587 = vmatpush1.msra.mxu0 %v3756
    %5588 = vmatprep.subr.mxu0 %v3753
    %5589 = vmatpush1.msra.mxu0 %v3752
    %5590 = vmatprep.subr.mxu0 %v3749
    %5591 = vmatpush1.msra.mxu0 %v3748
    %5592 = vmatprep.subr.mxu0 %v3745
    %5593 = vmatpush1.msra.mxu0 %v3744
    %5594 = vmatprep.subr.mxu0 %v3869
    %5595 = vmatpush2.msra.mxu0 %v3868
    %5596 = vmatprep.subr.mxu0 %v3865
    %5597 = vmatpush2.msra.mxu0 %v3864
    %5598 = vmatprep.subr.mxu0 %v3861
    %5599 = vmatpush2.msra.mxu0 %v3860
    %5600 = vmatprep.subr.mxu0 %v3857
    %5601 = vmatpush2.msra.mxu0 %v3856
    %5602 = vmatprep.subr.mxu0 %v3853
    %5603 = vmatpush2.msra.mxu0 %v3852
    %5604 = vmatprep.subr.mxu0 %v3849
    %5605 = vmatpush2.msra.mxu0 %v3848
    %5606 = vmatprep.subr.mxu0 %v3845
    %5607 = vmatpush2.msra.mxu0 %v3844
    %5608 = vmatprep.subr.mxu0 %v3841
    %5609 = vmatpush2.msra.mxu0 %v3840
    %5610 = vmatprep.subr.mxu0 %v3837
    %5611 = vmatpush2.msra.mxu0 %v3836
    %5612 = vmatprep.subr.mxu0 %v3833
    %5613 = vmatpush2.msra.mxu0 %v3832
    %5614 = vmatprep.subr.mxu0 %v3829
    %5615 = vmatpush2.msra.mxu0 %v3828
    %5616 = vmatprep.subr.mxu0 %v3825
    %5617 = vmatpush2.msra.mxu0 %v3824
    %5618 = vmatprep.subr.mxu0 %v3821
    %5619 = vmatpush2.msra.mxu0 %v3820
    %5620 = vmatprep.subr.mxu0 %v3817
    %5621 = vmatpush2.msra.mxu0 %v3816
    %5622 = vmatprep.subr.mxu0 %v3813
    %5623 = vmatpush2.msra.mxu0 %v3812
    %5624 = vmatprep.subr.mxu0 %v3809
    %5625 = vmatpush2.msra.mxu0 %v3808
    %5626 = vmatprep.mubr.f32.mxu0 %v3235
    %5627 = vmatmul.mubr.f32.gmra.mxu0 %v3234
    %v5628 = vpop.f32.mrf.mxu0
    %v5629 = vadd.f32 %v5372, %v5628
    %v5630 = vpop.f32.mrf.mxu0
    %v5631 = vadd.f32 %v5374, %v5630
    %5632 = vmatprep.mubr.f32.mxu0 %v3243
    %5633 = vmatmul.mubr.f32.gmra.mxu0 %v3242
    %v5634 = vpop.f32.mrf.mxu0
    %v5635 = vadd.f32 %v5378, %v5634
    %v5636 = vpop.f32.mrf.mxu0
    %v5637 = vadd.f32 %v5380, %v5636
    %5638 = vmatprep.mubr.f32.mxu0 %v3251
    %5639 = vmatmul.mubr.f32.gmra.mxu0 %v3250
    %v5640 = vpop.f32.mrf.mxu0
    %v5641 = vadd.f32 %v5384, %v5640
    %v5642 = vpop.f32.mrf.mxu0
    %v5643 = vadd.f32 %v5386, %v5642
    %5644 = vmatprep.mubr.f32.mxu0 %v3259
    %5645 = vmatmul.mubr.f32.gmra.mxu0 %v3258
    %v5646 = vpop.f32.mrf.mxu0
    %v5647 = vadd.f32 %v5390, %v5646
    %v5648 = vpop.f32.mrf.mxu0
    %v5649 = vadd.f32 %v5392, %v5648
    %5650 = vmatprep.mubr.f32.mxu0 %v3267
    %5651 = vmatmul.mubr.f32.gmra.mxu0 %v3266
    %v5652 = vpop.f32.mrf.mxu0
    %v5653 = vadd.f32 %v5396, %v5652
    %v5654 = vpop.f32.mrf.mxu0
    %v5655 = vadd.f32 %v5398, %v5654
    %5656 = vmatprep.mubr.f32.mxu0 %v3275
    %5657 = vmatmul.mubr.f32.gmra.mxu0 %v3274
    %v5658 = vpop.f32.mrf.mxu0
    %v5659 = vadd.f32 %v5402, %v5658
    %v5660 = vpop.f32.mrf.mxu0
    %v5661 = vadd.f32 %v5404, %v5660
    %5662 = vmatprep.mubr.f32.mxu0 %v3283
    %5663 = vmatmul.mubr.f32.gmra.mxu0 %v3282
    %v5664 = vpop.f32.mrf.mxu0
    %v5665 = vadd.f32 %v5408, %v5664
    %v5666 = vpop.f32.mrf.mxu0
    %v5667 = vadd.f32 %v5410, %v5666
    %5668 = vmatprep.mubr.f32.mxu0 %v3291
    %5669 = vmatmul.mubr.f32.gmra.mxu0 %v3290
    %v5670 = vpop.f32.mrf.mxu0
    %v5671 = vadd.f32 %v5414, %v5670
    %v5672 = vpop.f32.mrf.mxu0
    %v5673 = vadd.f32 %v5416, %v5672
    %5674 = vmatprep.mubr.f32.mxu0 %v3299
    %5675 = vmatmul.mubr.f32.gmra.mxu0 %v3298
    %v5676 = vpop.f32.mrf.mxu0
    %v5677 = vadd.f32 %v5420, %v5676
    %v5678 = vpop.f32.mrf.mxu0
    %v5679 = vadd.f32 %v5422, %v5678
    %5680 = vmatprep.mubr.f32.mxu0 %v3307
    %5681 = vmatmul.mubr.f32.gmra.mxu0 %v3306
    %v5682 = vpop.f32.mrf.mxu0
    %v5683 = vadd.f32 %v5426, %v5682
    %v5684 = vpop.f32.mrf.mxu0
    %v5685 = vadd.f32 %v5428, %v5684
    %5686 = vmatprep.mubr.f32.mxu0 %v3315
    %5687 = vmatmul.mubr.f32.gmra.mxu0 %v3314
    %v5688 = vpop.f32.mrf.mxu0
    %v5689 = vadd.f32 %v5432, %v5688
    %v5690 = vpop.f32.mrf.mxu0
    %v5691 = vadd.f32 %v5434, %v5690
    %5692 = vmatprep.mubr.f32.mxu0 %v3323
    %5693 = vmatmul.mubr.f32.gmra.mxu0 %v3322
    %v5694 = vpop.f32.mrf.mxu0
    %v5695 = vadd.f32 %v5438, %v5694
    %v5696 = vpop.f32.mrf.mxu0
    %v5697 = vadd.f32 %v5440, %v5696
    %5698 = vmatprep.mubr.f32.mxu0 %v3331
    %5699 = vmatmul.mubr.f32.gmra.mxu0 %v3330
    %v5700 = vpop.f32.mrf.mxu0
    %v5701 = vadd.f32 %v5444, %v5700
    %v5702 = vpop.f32.mrf.mxu0
    %v5703 = vadd.f32 %v5446, %v5702
    %5704 = vmatprep.mubr.f32.mxu0 %v3339
    %5705 = vmatmul.mubr.f32.gmra.mxu0 %v3338
    %v5706 = vpop.f32.mrf.mxu0
    %v5707 = vadd.f32 %v5450, %v5706
    %v5708 = vpop.f32.mrf.mxu0
    %v5709 = vadd.f32 %v5452, %v5708
    %5710 = vmatprep.mubr.f32.mxu0 %v3347
    %5711 = vmatmul.mubr.f32.gmra.mxu0 %v3346
    %v5712 = vpop.f32.mrf.mxu0
    %v5713 = vadd.f32 %v5456, %v5712
    %v5714 = vpop.f32.mrf.mxu0
    %v5715 = vadd.f32 %v5458, %v5714
    %5716 = vmatprep.mubr.f32.mxu0 %v3355
    %5717 = vmatmul.mubr.f32.gmra.mxu0 %v3354
    %v5718 = vpop.f32.mrf.mxu0
    %v5719 = vadd.f32 %v5462, %v5718
    %v5720 = vpop.f32.mrf.mxu0
    %v5721 = vadd.f32 %v5464, %v5720
    %5722 = vmatprep.mubr.f32.mxu0 %v3363
    %5723 = vmatmul.mubr.f32.gmra.mxu0 %v3362
    %v5724 = vpop.f32.mrf.mxu0
    %v5725 = vadd.f32 %v5468, %v5724
    %v5726 = vpop.f32.mrf.mxu0
    %v5727 = vadd.f32 %v5470, %v5726
    %5728 = vmatprep.mubr.f32.mxu0 %v3371
    %5729 = vmatmul.mubr.f32.gmra.mxu0 %v3370
    %v5730 = vpop.f32.mrf.mxu0
    %v5731 = vadd.f32 %v5474, %v5730
    %v5732 = vpop.f32.mrf.mxu0
    %v5733 = vadd.f32 %v5476, %v5732
    %5734 = vmatprep.mubr.f32.mxu0 %v3379
    %5735 = vmatmul.mubr.f32.gmra.mxu0 %v3378
    %v5736 = vpop.f32.mrf.mxu0
    %v5737 = vadd.f32 %v5480, %v5736
    %v5738 = vpop.f32.mrf.mxu0
    %v5739 = vadd.f32 %v5482, %v5738
    %5740 = vmatprep.mubr.f32.mxu0 %v3387
    %5741 = vmatmul.mubr.f32.gmra.mxu0 %v3386
    %v5742 = vpop.f32.mrf.mxu0
    %v5743 = vadd.f32 %v5486, %v5742
    %v5744 = vpop.f32.mrf.mxu0
    %v5745 = vadd.f32 %v5488, %v5744
    %5746 = vmatprep.mubr.f32.mxu0 %v3395
    %5747 = vmatmul.mubr.f32.gmra.mxu0 %v3394
    %v5748 = vpop.f32.mrf.mxu0
    %v5749 = vadd.f32 %v5492, %v5748
    %v5750 = vpop.f32.mrf.mxu0
    %v5751 = vadd.f32 %v5494, %v5750
    %5752 = vmatprep.mubr.f32.mxu0 %v3403
    %5753 = vmatmul.mubr.f32.gmra.mxu0 %v3402
    %v5754 = vpop.f32.mrf.mxu0
    %v5755 = vadd.f32 %v5498, %v5754
    %v5756 = vpop.f32.mrf.mxu0
    %v5757 = vadd.f32 %v5500, %v5756
    %5758 = vmatprep.mubr.f32.mxu0 %v3411
    %5759 = vmatmul.mubr.f32.gmra.mxu0 %v3410
    %v5760 = vpop.f32.mrf.mxu0
    %v5761 = vadd.f32 %v5504, %v5760
    %v5762 = vpop.f32.mrf.mxu0
    %v5763 = vadd.f32 %v5506, %v5762
    %5764 = vmatprep.mubr.f32.mxu0 %v3419
    %5765 = vmatmul.mubr.f32.gmra.mxu0 %v3418
    %v5766 = vpop.f32.mrf.mxu0
    %v5767 = vadd.f32 %v5510, %v5766
    %v5768 = vpop.f32.mrf.mxu0
    %v5769 = vadd.f32 %v5512, %v5768
    %5770 = vmatprep.mubr.f32.mxu0 %v3427
    %5771 = vmatmul.mubr.f32.gmra.mxu0 %v3426
    %v5772 = vpop.f32.mrf.mxu0
    %v5773 = vadd.f32 %v5516, %v5772
    %v5774 = vpop.f32.mrf.mxu0
    %v5775 = vadd.f32 %v5518, %v5774
    %5776 = vmatprep.mubr.f32.mxu0 %v3435
    %5777 = vmatmul.mubr.f32.gmra.mxu0 %v3434
    %v5778 = vpop.f32.mrf.mxu0
    %v5779 = vadd.f32 %v5522, %v5778
    %v5780 = vpop.f32.mrf.mxu0
    %v5781 = vadd.f32 %v5524, %v5780
    %5782 = vmatprep.mubr.f32.mxu0 %v3443
    %5783 = vmatmul.mubr.f32.gmra.mxu0 %v3442
    %v5784 = vpop.f32.mrf.mxu0
    %v5785 = vadd.f32 %v5528, %v5784
    %v5786 = vpop.f32.mrf.mxu0
    %v5787 = vadd.f32 %v5530, %v5786
    %5788 = vmatprep.mubr.f32.mxu0 %v3451
    %5789 = vmatmul.mubr.f32.gmra.mxu0 %v3450
    %v5790 = vpop.f32.mrf.mxu0
    %v5791 = vadd.f32 %v5534, %v5790
    %v5792 = vpop.f32.mrf.mxu0
    %v5793 = vadd.f32 %v5536, %v5792
    %5794 = vmatprep.mubr.f32.mxu0 %v3459
    %5795 = vmatmul.mubr.f32.gmra.mxu0 %v3458
    %v5796 = vpop.f32.mrf.mxu0
    %v5797 = vadd.f32 %v5540, %v5796
    %v5798 = vpop.f32.mrf.mxu0
    %v5799 = vadd.f32 %v5542, %v5798
    %5800 = vmatprep.mubr.f32.mxu0 %v3467
    %5801 = vmatmul.mubr.f32.gmra.mxu0 %v3466
    %v5802 = vpop.f32.mrf.mxu0
    %v5803 = vadd.f32 %v5546, %v5802
    %v5804 = vpop.f32.mrf.mxu0
    %v5805 = vadd.f32 %v5548, %v5804
    %5806 = vmatprep.mubr.f32.mxu0 %v3475
    %5807 = vmatmul.mubr.f32.gmra.mxu0 %v3474
    %v5808 = vpop.f32.mrf.mxu0
    %v5809 = vadd.f32 %v5552, %v5808
    %v5810 = vpop.f32.mrf.mxu0
    %v5811 = vadd.f32 %v5554, %v5810
    %5812 = vmatprep.mubr.f32.mxu0 %v3483
    %5813 = vmatmul.mubr.f32.gmra.mxu0 %v3482
    %v5814 = vpop.f32.mrf.mxu0
    %v5815 = vadd.f32 %v5558, %v5814
    %v5816 = vpop.f32.mrf.mxu0
    %v5817 = vadd.f32 %v5560, %v5816
    %5818 = vdwg.mxu0
    %5819 = vmatprep.subr.mxu0 %v3933
    %5820 = vmatpush1.msra.mxu0 %v3932
    %5821 = vmatprep.subr.mxu0 %v3929
    %5822 = vmatpush1.msra.mxu0 %v3928
    %5823 = vmatprep.subr.mxu0 %v3925
    %5824 = vmatpush1.msra.mxu0 %v3924
    %5825 = vmatprep.subr.mxu0 %v3921
    %5826 = vmatpush1.msra.mxu0 %v3920
    %5827 = vmatprep.subr.mxu0 %v3917
    %5828 = vmatpush1.msra.mxu0 %v3916
    %5829 = vmatprep.subr.mxu0 %v3913
    %5830 = vmatpush1.msra.mxu0 %v3912
    %5831 = vmatprep.subr.mxu0 %v3909
    %5832 = vmatpush1.msra.mxu0 %v3908
    %5833 = vmatprep.subr.mxu0 %v3905
    %5834 = vmatpush1.msra.mxu0 %v3904
    %5835 = vmatprep.subr.mxu0 %v3901
    %5836 = vmatpush1.msra.mxu0 %v3900
    %5837 = vmatprep.subr.mxu0 %v3897
    %5838 = vmatpush1.msra.mxu0 %v3896
    %5839 = vmatprep.subr.mxu0 %v3893
    %5840 = vmatpush1.msra.mxu0 %v3892
    %5841 = vmatprep.subr.mxu0 %v3889
    %5842 = vmatpush1.msra.mxu0 %v3888
    %5843 = vmatprep.subr.mxu0 %v3885
    %5844 = vmatpush1.msra.mxu0 %v3884
    %5845 = vmatprep.subr.mxu0 %v3881
    %5846 = vmatpush1.msra.mxu0 %v3880
    %5847 = vmatprep.subr.mxu0 %v3877
    %5848 = vmatpush1.msra.mxu0 %v3876
    %5849 = vmatprep.subr.mxu0 %v3873
    %5850 = vmatpush1.msra.mxu0 %v3872
    %5851 = vmatprep.subr.mxu0 %v3997
    %5852 = vmatpush2.msra.mxu0 %v3996
    %5853 = vmatprep.subr.mxu0 %v3993
    %5854 = vmatpush2.msra.mxu0 %v3992
    %5855 = vmatprep.subr.mxu0 %v3989
    %5856 = vmatpush2.msra.mxu0 %v3988
    %5857 = vmatprep.subr.mxu0 %v3985
    %5858 = vmatpush2.msra.mxu0 %v3984
    %5859 = vmatprep.subr.mxu0 %v3981
    %5860 = vmatpush2.msra.mxu0 %v3980
    %5861 = vmatprep.subr.mxu0 %v3977
    %5862 = vmatpush2.msra.mxu0 %v3976
    %5863 = vmatprep.subr.mxu0 %v3973
    %5864 = vmatpush2.msra.mxu0 %v3972
    %5865 = vmatprep.subr.mxu0 %v3969
    %5866 = vmatpush2.msra.mxu0 %v3968
    %5867 = vmatprep.subr.mxu0 %v3965
    %5868 = vmatpush2.msra.mxu0 %v3964
    %5869 = vmatprep.subr.mxu0 %v3961
    %5870 = vmatpush2.msra.mxu0 %v3960
    %5871 = vmatprep.subr.mxu0 %v3957
    %5872 = vmatpush2.msra.mxu0 %v3956
    %5873 = vmatprep.subr.mxu0 %v3953
    %5874 = vmatpush2.msra.mxu0 %v3952
    %5875 = vmatprep.subr.mxu0 %v3949
    %5876 = vmatpush2.msra.mxu0 %v3948
    %5877 = vmatprep.subr.mxu0 %v3945
    %5878 = vmatpush2.msra.mxu0 %v3944
    %5879 = vmatprep.subr.mxu0 %v3941
    %5880 = vmatpush2.msra.mxu0 %v3940
    %5881 = vmatprep.subr.mxu0 %v3937
    %5882 = vmatpush2.msra.mxu0 %v3936
    %5883 = vmatprep.mubr.f32.mxu0 %v3237
    %5884 = vmatmul.mubr.f32.gmra.mxu0 %v3236
    %v5885 = vpop.f32.mrf.mxu0
    %v5886 = vadd.f32 %v5629, %v5885
    %v5887 = vpop.f32.mrf.mxu0
    %v5888 = vadd.f32 %v5631, %v5887
    %5889 = vmatprep.mubr.f32.mxu0 %v3245
    %5890 = vmatmul.mubr.f32.gmra.mxu0 %v3244
    %v5891 = vpop.f32.mrf.mxu0
    %v5892 = vadd.f32 %v5635, %v5891
    %v5893 = vpop.f32.mrf.mxu0
    %v5894 = vadd.f32 %v5637, %v5893
    %5895 = vmatprep.mubr.f32.mxu0 %v3253
    %5896 = vmatmul.mubr.f32.gmra.mxu0 %v3252
    %v5897 = vpop.f32.mrf.mxu0
    %v5898 = vadd.f32 %v5641, %v5897
    %v5899 = vpop.f32.mrf.mxu0
    %v5900 = vadd.f32 %v5643, %v5899
    %5901 = vmatprep.mubr.f32.mxu0 %v3261
    %5902 = vmatmul.mubr.f32.gmra.mxu0 %v3260
    %v5903 = vpop.f32.mrf.mxu0
    %v5904 = vadd.f32 %v5647, %v5903
    %v5905 = vpop.f32.mrf.mxu0
    %v5906 = vadd.f32 %v5649, %v5905
    %5907 = vmatprep.mubr.f32.mxu0 %v3269
    %5908 = vmatmul.mubr.f32.gmra.mxu0 %v3268
    %v5909 = vpop.f32.mrf.mxu0
    %v5910 = vadd.f32 %v5653, %v5909
    %v5911 = vpop.f32.mrf.mxu0
    %v5912 = vadd.f32 %v5655, %v5911
    %5913 = vmatprep.mubr.f32.mxu0 %v3277
    %5914 = vmatmul.mubr.f32.gmra.mxu0 %v3276
    %v5915 = vpop.f32.mrf.mxu0
    %v5916 = vadd.f32 %v5659, %v5915
    %v5917 = vpop.f32.mrf.mxu0
    %v5918 = vadd.f32 %v5661, %v5917
    %5919 = vmatprep.mubr.f32.mxu0 %v3285
    %5920 = vmatmul.mubr.f32.gmra.mxu0 %v3284
    %v5921 = vpop.f32.mrf.mxu0
    %v5922 = vadd.f32 %v5665, %v5921
    %v5923 = vpop.f32.mrf.mxu0
    %v5924 = vadd.f32 %v5667, %v5923
    %5925 = vmatprep.mubr.f32.mxu0 %v3293
    %5926 = vmatmul.mubr.f32.gmra.mxu0 %v3292
    %v5927 = vpop.f32.mrf.mxu0
    %v5928 = vadd.f32 %v5671, %v5927
    %v5929 = vpop.f32.mrf.mxu0
    %v5930 = vadd.f32 %v5673, %v5929
    %5931 = vmatprep.mubr.f32.mxu0 %v3301
    %5932 = vmatmul.mubr.f32.gmra.mxu0 %v3300
    %v5933 = vpop.f32.mrf.mxu0
    %v5934 = vadd.f32 %v5677, %v5933
    %v5935 = vpop.f32.mrf.mxu0
    %v5936 = vadd.f32 %v5679, %v5935
    %5937 = vmatprep.mubr.f32.mxu0 %v3309
    %5938 = vmatmul.mubr.f32.gmra.mxu0 %v3308
    %v5939 = vpop.f32.mrf.mxu0
    %v5940 = vadd.f32 %v5683, %v5939
    %v5941 = vpop.f32.mrf.mxu0
    %v5942 = vadd.f32 %v5685, %v5941
    %5943 = vmatprep.mubr.f32.mxu0 %v3317
    %5944 = vmatmul.mubr.f32.gmra.mxu0 %v3316
    %v5945 = vpop.f32.mrf.mxu0
    %v5946 = vadd.f32 %v5689, %v5945
    %v5947 = vpop.f32.mrf.mxu0
    %v5948 = vadd.f32 %v5691, %v5947
    %5949 = vmatprep.mubr.f32.mxu0 %v3325
    %5950 = vmatmul.mubr.f32.gmra.mxu0 %v3324
    %v5951 = vpop.f32.mrf.mxu0
    %v5952 = vadd.f32 %v5695, %v5951
    %v5953 = vpop.f32.mrf.mxu0
    %v5954 = vadd.f32 %v5697, %v5953
    %5955 = vmatprep.mubr.f32.mxu0 %v3333
    %5956 = vmatmul.mubr.f32.gmra.mxu0 %v3332
    %v5957 = vpop.f32.mrf.mxu0
    %v5958 = vadd.f32 %v5701, %v5957
    %v5959 = vpop.f32.mrf.mxu0
    %v5960 = vadd.f32 %v5703, %v5959
    %5961 = vmatprep.mubr.f32.mxu0 %v3341
    %5962 = vmatmul.mubr.f32.gmra.mxu0 %v3340
    %v5963 = vpop.f32.mrf.mxu0
    %v5964 = vadd.f32 %v5707, %v5963
    %v5965 = vpop.f32.mrf.mxu0
    %v5966 = vadd.f32 %v5709, %v5965
    %5967 = vmatprep.mubr.f32.mxu0 %v3349
    %5968 = vmatmul.mubr.f32.gmra.mxu0 %v3348
    %v5969 = vpop.f32.mrf.mxu0
    %v5970 = vadd.f32 %v5713, %v5969
    %v5971 = vpop.f32.mrf.mxu0
    %v5972 = vadd.f32 %v5715, %v5971
    %5973 = vmatprep.mubr.f32.mxu0 %v3357
    %5974 = vmatmul.mubr.f32.gmra.mxu0 %v3356
    %v5975 = vpop.f32.mrf.mxu0
    %v5976 = vadd.f32 %v5719, %v5975
    %v5977 = vpop.f32.mrf.mxu0
    %v5978 = vadd.f32 %v5721, %v5977
    %5979 = vmatprep.mubr.f32.mxu0 %v3365
    %5980 = vmatmul.mubr.f32.gmra.mxu0 %v3364
    %v5981 = vpop.f32.mrf.mxu0
    %v5982 = vadd.f32 %v5725, %v5981
    %v5983 = vpop.f32.mrf.mxu0
    %v5984 = vadd.f32 %v5727, %v5983
    %5985 = vmatprep.mubr.f32.mxu0 %v3373
    %5986 = vmatmul.mubr.f32.gmra.mxu0 %v3372
    %v5987 = vpop.f32.mrf.mxu0
    %v5988 = vadd.f32 %v5731, %v5987
    %v5989 = vpop.f32.mrf.mxu0
    %v5990 = vadd.f32 %v5733, %v5989
    %5991 = vmatprep.mubr.f32.mxu0 %v3381
    %5992 = vmatmul.mubr.f32.gmra.mxu0 %v3380
    %v5993 = vpop.f32.mrf.mxu0
    %v5994 = vadd.f32 %v5737, %v5993
    %v5995 = vpop.f32.mrf.mxu0
    %v5996 = vadd.f32 %v5739, %v5995
    %5997 = vmatprep.mubr.f32.mxu0 %v3389
    %5998 = vmatmul.mubr.f32.gmra.mxu0 %v3388
    %v5999 = vpop.f32.mrf.mxu0
    %v6000 = vadd.f32 %v5743, %v5999
    %v6001 = vpop.f32.mrf.mxu0
    %v6002 = vadd.f32 %v5745, %v6001
    %6003 = vmatprep.mubr.f32.mxu0 %v3397
    %6004 = vmatmul.mubr.f32.gmra.mxu0 %v3396
    %v6005 = vpop.f32.mrf.mxu0
    %v6006 = vadd.f32 %v5749, %v6005
    %v6007 = vpop.f32.mrf.mxu0
    %v6008 = vadd.f32 %v5751, %v6007
    %6009 = vmatprep.mubr.f32.mxu0 %v3405
    %6010 = vmatmul.mubr.f32.gmra.mxu0 %v3404
    %v6011 = vpop.f32.mrf.mxu0
    %v6012 = vadd.f32 %v5755, %v6011
    %v6013 = vpop.f32.mrf.mxu0
    %v6014 = vadd.f32 %v5757, %v6013
    %6015 = vmatprep.mubr.f32.mxu0 %v3413
    %6016 = vmatmul.mubr.f32.gmra.mxu0 %v3412
    %v6017 = vpop.f32.mrf.mxu0
    %v6018 = vadd.f32 %v5761, %v6017
    %v6019 = vpop.f32.mrf.mxu0
    %v6020 = vadd.f32 %v5763, %v6019
    %6021 = vmatprep.mubr.f32.mxu0 %v3421
    %6022 = vmatmul.mubr.f32.gmra.mxu0 %v3420
    %v6023 = vpop.f32.mrf.mxu0
    %v6024 = vadd.f32 %v5767, %v6023
    %v6025 = vpop.f32.mrf.mxu0
    %v6026 = vadd.f32 %v5769, %v6025
    %6027 = vmatprep.mubr.f32.mxu0 %v3429
    %6028 = vmatmul.mubr.f32.gmra.mxu0 %v3428
    %v6029 = vpop.f32.mrf.mxu0
    %v6030 = vadd.f32 %v5773, %v6029
    %v6031 = vpop.f32.mrf.mxu0
    %v6032 = vadd.f32 %v5775, %v6031
    %6033 = vmatprep.mubr.f32.mxu0 %v3437
    %6034 = vmatmul.mubr.f32.gmra.mxu0 %v3436
    %v6035 = vpop.f32.mrf.mxu0
    %v6036 = vadd.f32 %v5779, %v6035
    %v6037 = vpop.f32.mrf.mxu0
    %v6038 = vadd.f32 %v5781, %v6037
    %6039 = vmatprep.mubr.f32.mxu0 %v3445
    %6040 = vmatmul.mubr.f32.gmra.mxu0 %v3444
    %v6041 = vpop.f32.mrf.mxu0
    %v6042 = vadd.f32 %v5785, %v6041
    %v6043 = vpop.f32.mrf.mxu0
    %v6044 = vadd.f32 %v5787, %v6043
    %6045 = vmatprep.mubr.f32.mxu0 %v3453
    %6046 = vmatmul.mubr.f32.gmra.mxu0 %v3452
    %v6047 = vpop.f32.mrf.mxu0
    %v6048 = vadd.f32 %v5791, %v6047
    %v6049 = vpop.f32.mrf.mxu0
    %v6050 = vadd.f32 %v5793, %v6049
    %6051 = vmatprep.mubr.f32.mxu0 %v3461
    %6052 = vmatmul.mubr.f32.gmra.mxu0 %v3460
    %v6053 = vpop.f32.mrf.mxu0
    %v6054 = vadd.f32 %v5797, %v6053
    %v6055 = vpop.f32.mrf.mxu0
    %v6056 = vadd.f32 %v5799, %v6055
    %6057 = vmatprep.mubr.f32.mxu0 %v3469
    %6058 = vmatmul.mubr.f32.gmra.mxu0 %v3468
    %v6059 = vpop.f32.mrf.mxu0
    %v6060 = vadd.f32 %v5803, %v6059
    %v6061 = vpop.f32.mrf.mxu0
    %v6062 = vadd.f32 %v5805, %v6061
    %6063 = vmatprep.mubr.f32.mxu0 %v3477
    %6064 = vmatmul.mubr.f32.gmra.mxu0 %v3476
    %v6065 = vpop.f32.mrf.mxu0
    %v6066 = vadd.f32 %v5809, %v6065
    %v6067 = vpop.f32.mrf.mxu0
    %v6068 = vadd.f32 %v5811, %v6067
    %6069 = vmatprep.mubr.f32.mxu0 %v3485
    %6070 = vmatmul.mubr.f32.gmra.mxu0 %v3484
    %v6071 = vpop.f32.mrf.mxu0
    %v6072 = vadd.f32 %v5815, %v6071
    %v6073 = vpop.f32.mrf.mxu0
    %v6074 = vadd.f32 %v5817, %v6073
    %6075 = vdwg.mxu0
    %v6076 = vmul.f32 %v4858, 0.01
    %v6077 = vmul.f32 %v4860, 0.01
    %v6078 = vmul.f32 %v5886, 0.01
    %v6079 = vmul.f32 %v5888, 0.01
    %v6080 = vmul.f32 %v4864, 0.01
    %v6081 = vmul.f32 %v4866, 0.01
    %v6082 = vmul.f32 %v5892, 0.01
    %v6083 = vmul.f32 %v5894, 0.01
    %v6084 = vmul.f32 %v4870, 0.01
    %v6085 = vmul.f32 %v4872, 0.01
    %v6086 = vmul.f32 %v5898, 0.01
    %v6087 = vmul.f32 %v5900, 0.01
    %v6088 = vmul.f32 %v4876, 0.01
    %v6089 = vmul.f32 %v4878, 0.01
    %v6090 = vmul.f32 %v5904, 0.01
    %v6091 = vmul.f32 %v5906, 0.01
    %v6092 = vmul.f32 %v4882, 0.01
    %v6093 = vmul.f32 %v4884, 0.01
    %v6094 = vmul.f32 %v5910, 0.01
    %v6095 = vmul.f32 %v5912, 0.01
    %v6096 = vmul.f32 %v4888, 0.01
    %v6097 = vmul.f32 %v4890, 0.01
    %v6098 = vmul.f32 %v5916, 0.01
    %v6099 = vmul.f32 %v5918, 0.01
    %v6100 = vmul.f32 %v4894, 0.01
    %v6101 = vmul.f32 %v4896, 0.01
    %v6102 = vmul.f32 %v5922, 0.01
    %v6103 = vmul.f32 %v5924, 0.01
    %v6104 = vmul.f32 %v4900, 0.01
    %v6105 = vmul.f32 %v4902, 0.01
    %v6106 = vmul.f32 %v5928, 0.01
    %v6107 = vmul.f32 %v5930, 0.01
    %v6108 = vmul.f32 %v4906, 0.01
    %v6109 = vmul.f32 %v4908, 0.01
    %v6110 = vmul.f32 %v5934, 0.01
    %v6111 = vmul.f32 %v5936, 0.01
    %v6112 = vmul.f32 %v4912, 0.01
    %v6113 = vmul.f32 %v4914, 0.01
    %v6114 = vmul.f32 %v5940, 0.01
    %v6115 = vmul.f32 %v5942, 0.01
    %v6116 = vmul.f32 %v4918, 0.01
    %v6117 = vmul.f32 %v4920, 0.01
    %v6118 = vmul.f32 %v5946, 0.01
    %v6119 = vmul.f32 %v5948, 0.01
    %v6120 = vmul.f32 %v4924, 0.01
    %v6121 = vmul.f32 %v4926, 0.01
    %v6122 = vmul.f32 %v5952, 0.01
    %v6123 = vmul.f32 %v5954, 0.01
    %v6124 = vmul.f32 %v4930, 0.01
    %v6125 = vmul.f32 %v4932, 0.01
    %v6126 = vmul.f32 %v5958, 0.01
    %v6127 = vmul.f32 %v5960, 0.01
    %v6128 = vmul.f32 %v4936, 0.01
    %v6129 = vmul.f32 %v4938, 0.01
    %v6130 = vmul.f32 %v5964, 0.01
    %v6131 = vmul.f32 %v5966, 0.01
    %v6132 = vmul.f32 %v4942, 0.01
    %v6133 = vmul.f32 %v4944, 0.01
    %v6134 = vmul.f32 %v5970, 0.01
    %v6135 = vmul.f32 %v5972, 0.01
    %v6136 = vmul.f32 %v4948, 0.01
    %v6137 = vmul.f32 %v4950, 0.01
    %v6138 = vmul.f32 %v5976, 0.01
    %v6139 = vmul.f32 %v5978, 0.01
    %v6140 = vmul.f32 %v4954, 0.01
    %v6141 = vmul.f32 %v4956, 0.01
    %v6142 = vmul.f32 %v5982, 0.01
    %v6143 = vmul.f32 %v5984, 0.01
    %v6144 = vmul.f32 %v4960, 0.01
    %v6145 = vmul.f32 %v4962, 0.01
    %v6146 = vmul.f32 %v5988, 0.01
    %v6147 = vmul.f32 %v5990, 0.01
    %v6148 = vmul.f32 %v4966, 0.01
    %v6149 = vmul.f32 %v4968, 0.01
    %v6150 = vmul.f32 %v5994, 0.01
    %v6151 = vmul.f32 %v5996, 0.01
    %v6152 = vmul.f32 %v4972, 0.01
    %v6153 = vmul.f32 %v4974, 0.01
    %v6154 = vmul.f32 %v6000, 0.01
    %v6155 = vmul.f32 %v6002, 0.01
    %v6156 = vmul.f32 %v4978, 0.01
    %v6157 = vmul.f32 %v4980, 0.01
    %v6158 = vmul.f32 %v6006, 0.01
    %v6159 = vmul.f32 %v6008, 0.01
    %v6160 = vmul.f32 %v4984, 0.01
    %v6161 = vmul.f32 %v4986, 0.01
    %v6162 = vmul.f32 %v6012, 0.01
    %v6163 = vmul.f32 %v6014, 0.01
    %v6164 = vmul.f32 %v4990, 0.01
    %v6165 = vmul.f32 %v4992, 0.01
    %v6166 = vmul.f32 %v6018, 0.01
    %v6167 = vmul.f32 %v6020, 0.01
    %v6168 = vmul.f32 %v4996, 0.01
    %v6169 = vmul.f32 %v4998, 0.01
    %v6170 = vmul.f32 %v6024, 0.01
    %v6171 = vmul.f32 %v6026, 0.01
    %v6172 = vmul.f32 %v5002, 0.01
    %v6173 = vmul.f32 %v5004, 0.01
    %v6174 = vmul.f32 %v6030, 0.01
    %v6175 = vmul.f32 %v6032, 0.01
    %v6176 = vmul.f32 %v5008, 0.01
    %v6177 = vmul.f32 %v5010, 0.01
    %v6178 = vmul.f32 %v6036, 0.01
    %v6179 = vmul.f32 %v6038, 0.01
    %v6180 = vmul.f32 %v5014, 0.01
    %v6181 = vmul.f32 %v5016, 0.01
    %v6182 = vmul.f32 %v6042, 0.01
    %v6183 = vmul.f32 %v6044, 0.01
    %v6184 = vmul.f32 %v5020, 0.01
    %v6185 = vmul.f32 %v5022, 0.01
    %v6186 = vmul.f32 %v6048, 0.01
    %v6187 = vmul.f32 %v6050, 0.01
    %v6188 = vmul.f32 %v5026, 0.01
    %v6189 = vmul.f32 %v5028, 0.01
    %v6190 = vmul.f32 %v6054, 0.01
    %v6191 = vmul.f32 %v6056, 0.01
    %v6192 = vmul.f32 %v5032, 0.01
    %v6193 = vmul.f32 %v5034, 0.01
    %v6194 = vmul.f32 %v6060, 0.01
    %v6195 = vmul.f32 %v6062, 0.01
    %v6196 = vmul.f32 %v5038, 0.01
    %v6197 = vmul.f32 %v5040, 0.01
    %v6198 = vmul.f32 %v6066, 0.01
    %v6199 = vmul.f32 %v6068, 0.01
    %v6200 = vmul.f32 %v5044, 0.01
    %v6201 = vmul.f32 %v5046, 0.01
    %v6202 = vmul.f32 %v6072, 0.01
    %v6203 = vmul.f32 %v6074, 0.01
    %v6204 = vmax.f32 %v4858, %v6076
    %v6205 = vmax.f32 %v4860, %v6077
    %v6206 = vmax.f32 %v5886, %v6078
    %v6207 = vmax.f32 %v5888, %v6079
    %v6208 = vmax.f32 %v4864, %v6080
    %v6209 = vmax.f32 %v4866, %v6081
    %v6210 = vmax.f32 %v5892, %v6082
    %v6211 = vmax.f32 %v5894, %v6083
    %v6212 = vmax.f32 %v4870, %v6084
    %v6213 = vmax.f32 %v4872, %v6085
    %v6214 = vmax.f32 %v5898, %v6086
    %v6215 = vmax.f32 %v5900, %v6087
    %v6216 = vmax.f32 %v4876, %v6088
    %v6217 = vmax.f32 %v4878, %v6089
    %v6218 = vmax.f32 %v5904, %v6090
    %v6219 = vmax.f32 %v5906, %v6091
    %v6220 = vmax.f32 %v4882, %v6092
    %v6221 = vmax.f32 %v4884, %v6093
    %v6222 = vmax.f32 %v5910, %v6094
    %v6223 = vmax.f32 %v5912, %v6095
    %v6224 = vmax.f32 %v4888, %v6096
    %v6225 = vmax.f32 %v4890, %v6097
    %v6226 = vmax.f32 %v5916, %v6098
    %v6227 = vmax.f32 %v5918, %v6099
    %v6228 = vmax.f32 %v4894, %v6100
    %v6229 = vmax.f32 %v4896, %v6101
    %v6230 = vmax.f32 %v5922, %v6102
    %v6231 = vmax.f32 %v5924, %v6103
    %v6232 = vmax.f32 %v4900, %v6104
    %v6233 = vmax.f32 %v4902, %v6105
    %v6234 = vmax.f32 %v5928, %v6106
    %v6235 = vmax.f32 %v5930, %v6107
    %v6236 = vmax.f32 %v4906, %v6108
    %v6237 = vmax.f32 %v4908, %v6109
    %v6238 = vmax.f32 %v5934, %v6110
    %v6239 = vmax.f32 %v5936, %v6111
    %v6240 = vmax.f32 %v4912, %v6112
    %v6241 = vmax.f32 %v4914, %v6113
    %v6242 = vmax.f32 %v5940, %v6114
    %v6243 = vmax.f32 %v5942, %v6115
    %v6244 = vmax.f32 %v4918, %v6116
    %v6245 = vmax.f32 %v4920, %v6117
    %v6246 = vmax.f32 %v5946, %v6118
    %v6247 = vmax.f32 %v5948, %v6119
    %v6248 = vmax.f32 %v4924, %v6120
    %v6249 = vmax.f32 %v4926, %v6121
    %v6250 = vmax.f32 %v5952, %v6122
    %v6251 = vmax.f32 %v5954, %v6123
    %v6252 = vmax.f32 %v4930, %v6124
    %v6253 = vmax.f32 %v4932, %v6125
    %v6254 = vmax.f32 %v5958, %v6126
    %v6255 = vmax.f32 %v5960, %v6127
    %v6256 = vmax.f32 %v4936, %v6128
    %v6257 = vmax.f32 %v4938, %v6129
    %v6258 = vmax.f32 %v5964, %v6130
    %v6259 = vmax.f32 %v5966, %v6131
    %v6260 = vmax.f32 %v4942, %v6132
    %v6261 = vmax.f32 %v4944, %v6133
    %v6262 = vmax.f32 %v5970, %v6134
    %v6263 = vmax.f32 %v5972, %v6135
    %v6264 = vmax.f32 %v4948, %v6136
    %v6265 = vmax.f32 %v4950, %v6137
    %v6266 = vmax.f32 %v5976, %v6138
    %v6267 = vmax.f32 %v5978, %v6139
    %v6268 = vmax.f32 %v4954, %v6140
    %v6269 = vmax.f32 %v4956, %v6141
    %v6270 = vmax.f32 %v5982, %v6142
    %v6271 = vmax.f32 %v5984, %v6143
    %v6272 = vmax.f32 %v4960, %v6144
    %v6273 = vmax.f32 %v4962, %v6145
    %v6274 = vmax.f32 %v5988, %v6146
    %v6275 = vmax.f32 %v5990, %v6147
    %v6276 = vmax.f32 %v4966, %v6148
    %v6277 = vmax.f32 %v4968, %v6149
    %v6278 = vmax.f32 %v5994, %v6150
    %v6279 = vmax.f32 %v5996, %v6151
    %v6280 = vmax.f32 %v4972, %v6152
    %v6281 = vmax.f32 %v4974, %v6153
    %v6282 = vmax.f32 %v6000, %v6154
    %v6283 = vmax.f32 %v6002, %v6155
    %v6284 = vmax.f32 %v4978, %v6156
    %v6285 = vmax.f32 %v4980, %v6157
    %v6286 = vmax.f32 %v6006, %v6158
    %v6287 = vmax.f32 %v6008, %v6159
    %v6288 = vmax.f32 %v4984, %v6160
    %v6289 = vmax.f32 %v4986, %v6161
    %v6290 = vmax.f32 %v6012, %v6162
    %v6291 = vmax.f32 %v6014, %v6163
    %v6292 = vmax.f32 %v4990, %v6164
    %v6293 = vmax.f32 %v4992, %v6165
    %v6294 = vmax.f32 %v6018, %v6166
    %v6295 = vmax.f32 %v6020, %v6167
    %v6296 = vmax.f32 %v4996, %v6168
    %v6297 = vmax.f32 %v4998, %v6169
    %v6298 = vmax.f32 %v6024, %v6170
    %v6299 = vmax.f32 %v6026, %v6171
    %v6300 = vmax.f32 %v5002, %v6172
    %v6301 = vmax.f32 %v5004, %v6173
    %v6302 = vmax.f32 %v6030, %v6174
    %v6303 = vmax.f32 %v6032, %v6175
    %v6304 = vmax.f32 %v5008, %v6176
    %v6305 = vmax.f32 %v5010, %v6177
    %v6306 = vmax.f32 %v6036, %v6178
    %v6307 = vmax.f32 %v6038, %v6179
    %v6308 = vmax.f32 %v5014, %v6180
    %v6309 = vmax.f32 %v5016, %v6181
    %v6310 = vmax.f32 %v6042, %v6182
    %v6311 = vmax.f32 %v6044, %v6183
    %v6312 = vmax.f32 %v5020, %v6184
    %v6313 = vmax.f32 %v5022, %v6185
    %v6314 = vmax.f32 %v6048, %v6186
    %v6315 = vmax.f32 %v6050, %v6187
    %v6316 = vmax.f32 %v5026, %v6188
    %v6317 = vmax.f32 %v5028, %v6189
    %v6318 = vmax.f32 %v6054, %v6190
    %v6319 = vmax.f32 %v6056, %v6191
    %v6320 = vmax.f32 %v5032, %v6192
    %v6321 = vmax.f32 %v5034, %v6193
    %v6322 = vmax.f32 %v6060, %v6194
    %v6323 = vmax.f32 %v6062, %v6195
    %v6324 = vmax.f32 %v5038, %v6196
    %v6325 = vmax.f32 %v5040, %v6197
    %v6326 = vmax.f32 %v6066, %v6198
    %v6327 = vmax.f32 %v6068, %v6199
    %v6328 = vmax.f32 %v5044, %v6200
    %v6329 = vmax.f32 %v5046, %v6201
    %v6330 = vmax.f32 %v6072, %v6202
    %v6331 = vmax.f32 %v6074, %v6203
    %v6332 = vld [vmem:[#allocation11] sm:$0xff]
    %v6333 = vld [vmem:[#allocation11 + $0x8] sm:$0xff]
    %v6334 = vld [vmem:[#allocation11 + $0x10] sm:$0xff]
    %v6335 = vld [vmem:[#allocation11 + $0x18] sm:$0xff]
    %v6336 = vld [vmem:[#allocation11 + $0x20] sm:$0xff]
    %v6337 = vld [vmem:[#allocation11 + $0x28] sm:$0xff]
    %v6338 = vld [vmem:[#allocation11 + $0x30] sm:$0xff]
    %v6339 = vld [vmem:[#allocation11 + $0x38] sm:$0xff]
    %v6340 = vld [vmem:[#allocation11 + $0x40] sm:$0xff]
    %v6341 = vld [vmem:[#allocation11 + $0x48] sm:$0xff]
    %v6342 = vld [vmem:[#allocation11 + $0x50] sm:$0xff]
    %v6343 = vld [vmem:[#allocation11 + $0x58] sm:$0xff]
    %v6344 = vld [vmem:[#allocation11 + $0x60] sm:$0xff]
    %v6345 = vld [vmem:[#allocation11 + $0x68] sm:$0xff]
    %v6346 = vld [vmem:[#allocation11 + $0x70] sm:$0xff]
    %v6347 = vld [vmem:[#allocation11 + $0x78] sm:$0xff]
    %v6348 = vld [vmem:[#allocation11 + $0x80] sm:$0xff]
    %v6349 = vld [vmem:[#allocation11 + $0x88] sm:$0xff]
    %v6350 = vld [vmem:[#allocation11 + $0x90] sm:$0xff]
    %v6351 = vld [vmem:[#allocation11 + $0x98] sm:$0xff]
    %v6352 = vld [vmem:[#allocation11 + $0xa0] sm:$0xff]
    %v6353 = vld [vmem:[#allocation11 + $0xa8] sm:$0xff]
    %v6354 = vld [vmem:[#allocation11 + $0xb0] sm:$0xff]
    %v6355 = vld [vmem:[#allocation11 + $0xb8] sm:$0xff]
    %v6356 = vld [vmem:[#allocation11 + $0xc0] sm:$0xff]
    %v6357 = vld [vmem:[#allocation11 + $0xc8] sm:$0xff]
    %v6358 = vld [vmem:[#allocation11 + $0xd0] sm:$0xff]
    %v6359 = vld [vmem:[#allocation11 + $0xd8] sm:$0xff]
    %v6360 = vld [vmem:[#allocation11 + $0xe0] sm:$0xff]
    %v6361 = vld [vmem:[#allocation11 + $0xe8] sm:$0xff]
    %v6362 = vld [vmem:[#allocation11 + $0xf0] sm:$0xff]
    %v6363 = vld [vmem:[#allocation11 + $0xf8] sm:$0xff]
    %v6364 = vld [vmem:[#allocation11 + $0x100] sm:$0xff]
    %v6365 = vld [vmem:[#allocation11 + $0x108] sm:$0xff]
    %v6366 = vld [vmem:[#allocation11 + $0x110] sm:$0xff]
    %v6367 = vld [vmem:[#allocation11 + $0x118] sm:$0xff]
    %v6368 = vld [vmem:[#allocation11 + $0x120] sm:$0xff]
    %v6369 = vld [vmem:[#allocation11 + $0x128] sm:$0xff]
    %v6370 = vld [vmem:[#allocation11 + $0x130] sm:$0xff]
    %v6371 = vld [vmem:[#allocation11 + $0x138] sm:$0xff]
    %v6372 = vld [vmem:[#allocation11 + $0x140] sm:$0xff]
    %v6373 = vld [vmem:[#allocation11 + $0x148] sm:$0xff]
    %v6374 = vld [vmem:[#allocation11 + $0x150] sm:$0xff]
    %v6375 = vld [vmem:[#allocation11 + $0x158] sm:$0xff]
    %v6376 = vld [vmem:[#allocation11 + $0x160] sm:$0xff]
    %v6377 = vld [vmem:[#allocation11 + $0x168] sm:$0xff]
    %v6378 = vld [vmem:[#allocation11 + $0x170] sm:$0xff]
    %v6379 = vld [vmem:[#allocation11 + $0x178] sm:$0xff]
    %v6380 = vld [vmem:[#allocation11 + $0x180] sm:$0xff]
    %v6381 = vld [vmem:[#allocation11 + $0x188] sm:$0xff]
    %v6382 = vld [vmem:[#allocation11 + $0x190] sm:$0xff]
    %v6383 = vld [vmem:[#allocation11 + $0x198] sm:$0xff]
    %v6384 = vld [vmem:[#allocation11 + $0x1a0] sm:$0xff]
    %v6385 = vld [vmem:[#allocation11 + $0x1a8] sm:$0xff]
    %v6386 = vld [vmem:[#allocation11 + $0x1b0] sm:$0xff]
    %v6387 = vld [vmem:[#allocation11 + $0x1b8] sm:$0xff]
    %v6388 = vld [vmem:[#allocation11 + $0x1c0] sm:$0xff]
    %v6389 = vld [vmem:[#allocation11 + $0x1c8] sm:$0xff]
    %v6390 = vld [vmem:[#allocation11 + $0x1d0] sm:$0xff]
    %v6391 = vld [vmem:[#allocation11 + $0x1d8] sm:$0xff]
    %v6392 = vld [vmem:[#allocation11 + $0x1e0] sm:$0xff]
    %v6393 = vld [vmem:[#allocation11 + $0x1e8] sm:$0xff]
    %v6394 = vld [vmem:[#allocation11 + $0x1f0] sm:$0xff]
    %v6395 = vld [vmem:[#allocation11 + $0x1f8] sm:$0xff]
    %v6396 = vld [vmem:[#allocation11 + $0x200] sm:$0xff]
    %v6397 = vld [vmem:[#allocation11 + $0x208] sm:$0xff]
    %v6398 = vld [vmem:[#allocation11 + $0x210] sm:$0xff]
    %v6399 = vld [vmem:[#allocation11 + $0x218] sm:$0xff]
    %v6400 = vld [vmem:[#allocation11 + $0x220] sm:$0xff]
    %v6401 = vld [vmem:[#allocation11 + $0x228] sm:$0xff]
    %v6402 = vld [vmem:[#allocation11 + $0x230] sm:$0xff]
    %v6403 = vld [vmem:[#allocation11 + $0x238] sm:$0xff]
    %v6404 = vld [vmem:[#allocation11 + $0x240] sm:$0xff]
    %v6405 = vld [vmem:[#allocation11 + $0x248] sm:$0xff]
    %v6406 = vld [vmem:[#allocation11 + $0x250] sm:$0xff]
    %v6407 = vld [vmem:[#allocation11 + $0x258] sm:$0xff]
    %v6408 = vld [vmem:[#allocation11 + $0x260] sm:$0xff]
    %v6409 = vld [vmem:[#allocation11 + $0x268] sm:$0xff]
    %v6410 = vld [vmem:[#allocation11 + $0x270] sm:$0xff]
    %v6411 = vld [vmem:[#allocation11 + $0x278] sm:$0xff]
    %v6412 = vld [vmem:[#allocation11 + $0x280] sm:$0xff]
    %v6413 = vld [vmem:[#allocation11 + $0x288] sm:$0xff]
    %v6414 = vld [vmem:[#allocation11 + $0x290] sm:$0xff]
    %v6415 = vld [vmem:[#allocation11 + $0x298] sm:$0xff]
    %v6416 = vld [vmem:[#allocation11 + $0x2a0] sm:$0xff]
    %v6417 = vld [vmem:[#allocation11 + $0x2a8] sm:$0xff]
    %v6418 = vld [vmem:[#allocation11 + $0x2b0] sm:$0xff]
    %v6419 = vld [vmem:[#allocation11 + $0x2b8] sm:$0xff]
    %v6420 = vld [vmem:[#allocation11 + $0x2c0] sm:$0xff]
    %v6421 = vld [vmem:[#allocation11 + $0x2c8] sm:$0xff]
    %v6422 = vld [vmem:[#allocation11 + $0x2d0] sm:$0xff]
    %v6423 = vld [vmem:[#allocation11 + $0x2d8] sm:$0xff]
    %v6424 = vld [vmem:[#allocation11 + $0x2e0] sm:$0xff]
    %v6425 = vld [vmem:[#allocation11 + $0x2e8] sm:$0xff]
    %v6426 = vld [vmem:[#allocation11 + $0x2f0] sm:$0xff]
    %v6427 = vld [vmem:[#allocation11 + $0x2f8] sm:$0xff]
    %v6428 = vld [vmem:[#allocation11 + $0x300] sm:$0xff]
    %v6429 = vld [vmem:[#allocation11 + $0x308] sm:$0xff]
    %v6430 = vld [vmem:[#allocation11 + $0x310] sm:$0xff]
    %v6431 = vld [vmem:[#allocation11 + $0x318] sm:$0xff]
    %v6432 = vld [vmem:[#allocation11 + $0x320] sm:$0xff]
    %v6433 = vld [vmem:[#allocation11 + $0x328] sm:$0xff]
    %v6434 = vld [vmem:[#allocation11 + $0x330] sm:$0xff]
    %v6435 = vld [vmem:[#allocation11 + $0x338] sm:$0xff]
    %v6436 = vld [vmem:[#allocation11 + $0x340] sm:$0xff]
    %v6437 = vld [vmem:[#allocation11 + $0x348] sm:$0xff]
    %v6438 = vld [vmem:[#allocation11 + $0x350] sm:$0xff]
    %v6439 = vld [vmem:[#allocation11 + $0x358] sm:$0xff]
    %v6440 = vld [vmem:[#allocation11 + $0x360] sm:$0xff]
    %v6441 = vld [vmem:[#allocation11 + $0x368] sm:$0xff]
    %v6442 = vld [vmem:[#allocation11 + $0x370] sm:$0xff]
    %v6443 = vld [vmem:[#allocation11 + $0x378] sm:$0xff]
    %v6444 = vld [vmem:[#allocation11 + $0x380] sm:$0xff]
    %v6445 = vld [vmem:[#allocation11 + $0x388] sm:$0xff]
    %v6446 = vld [vmem:[#allocation11 + $0x390] sm:$0xff]
    %v6447 = vld [vmem:[#allocation11 + $0x398] sm:$0xff]
    %v6448 = vld [vmem:[#allocation11 + $0x3a0] sm:$0xff]
    %v6449 = vld [vmem:[#allocation11 + $0x3a8] sm:$0xff]
    %v6450 = vld [vmem:[#allocation11 + $0x3b0] sm:$0xff]
    %v6451 = vld [vmem:[#allocation11 + $0x3b8] sm:$0xff]
    %v6452 = vld [vmem:[#allocation11 + $0x3c0] sm:$0xff]
    %v6453 = vld [vmem:[#allocation11 + $0x3c8] sm:$0xff]
    %v6454 = vld [vmem:[#allocation11 + $0x3d0] sm:$0xff]
    %v6455 = vld [vmem:[#allocation11 + $0x3d8] sm:$0xff]
    %v6456 = vld [vmem:[#allocation11 + $0x3e0] sm:$0xff]
    %v6457 = vld [vmem:[#allocation11 + $0x3e8] sm:$0xff]
    %v6458 = vld [vmem:[#allocation11 + $0x3f0] sm:$0xff]
    %v6459 = vld [vmem:[#allocation11 + $0x3f8] sm:$0xff]
    %v6460 = vld [vmem:[#allocation12] sm:$0x3]
    %v6462 = vlaneseq
    %v6463 = vshrl.u32 %v6462, 7
    %v6464 = vsub.s32 0, %v6463
    %v6465 = vrot.slane %v6460, %v6464
    %v6466 = vlaneseq
    %v6467 = vshrl.u32 %v6466, 7
    %v6468 = vsub.s32 1, %v6467
    %v6469 = vrot.slane %v6460, %v6468
    %6472 = vmatprep.subr.mxu0 %v6363
    %6473 = vmatpush1.msra.mxu0 %v6362
    %6474 = vmatprep.subr.mxu0 %v6361
    %6475 = vmatpush1.msra.mxu0 %v6360
    %6476 = vmatprep.subr.mxu0 %v6359
    %6477 = vmatpush1.msra.mxu0 %v6358
    %6478 = vmatprep.subr.mxu0 %v6357
    %6479 = vmatpush1.msra.mxu0 %v6356
    %6480 = vmatprep.subr.mxu0 %v6355
    %6481 = vmatpush1.msra.mxu0 %v6354
    %6482 = vmatprep.subr.mxu0 %v6353
    %6483 = vmatpush1.msra.mxu0 %v6352
    %6484 = vmatprep.subr.mxu0 %v6351
    %6485 = vmatpush1.msra.mxu0 %v6350
    %6486 = vmatprep.subr.mxu0 %v6349
    %6487 = vmatpush1.msra.mxu0 %v6348
    %6488 = vmatprep.subr.mxu0 %v6347
    %6489 = vmatpush1.msra.mxu0 %v6346
    %6490 = vmatprep.subr.mxu0 %v6345
    %6491 = vmatpush1.msra.mxu0 %v6344
    %6492 = vmatprep.subr.mxu0 %v6343
    %6493 = vmatpush1.msra.mxu0 %v6342
    %6494 = vmatprep.subr.mxu0 %v6341
    %6495 = vmatpush1.msra.mxu0 %v6340
    %6496 = vmatprep.subr.mxu0 %v6339
    %6497 = vmatpush1.msra.mxu0 %v6338
    %6498 = vmatprep.subr.mxu0 %v6337
    %6499 = vmatpush1.msra.mxu0 %v6336
    %6500 = vmatprep.subr.mxu0 %v6335
    %6501 = vmatpush1.msra.mxu0 %v6334
    %6502 = vmatprep.subr.mxu0 %v6333
    %6503 = vmatpush1.msra.mxu0 %v6332
    %6504 = vmatprep.subr.mxu0 %v6395
    %6505 = vmatpush2.msra.mxu0 %v6394
    %6506 = vmatprep.subr.mxu0 %v6393
    %6507 = vmatpush2.msra.mxu0 %v6392
    %6508 = vmatprep.subr.mxu0 %v6391
    %6509 = vmatpush2.msra.mxu0 %v6390
    %6510 = vmatprep.subr.mxu0 %v6389
    %6511 = vmatpush2.msra.mxu0 %v6388
    %6512 = vmatprep.subr.mxu0 %v6387
    %6513 = vmatpush2.msra.mxu0 %v6386
    %6514 = vmatprep.subr.mxu0 %v6385
    %6515 = vmatpush2.msra.mxu0 %v6384
    %6516 = vmatprep.subr.mxu0 %v6383
    %6517 = vmatpush2.msra.mxu0 %v6382
    %6518 = vmatprep.subr.mxu0 %v6381
    %6519 = vmatpush2.msra.mxu0 %v6380
    %6520 = vmatprep.subr.mxu0 %v6379
    %6521 = vmatpush2.msra.mxu0 %v6378
    %6522 = vmatprep.subr.mxu0 %v6377
    %6523 = vmatpush2.msra.mxu0 %v6376
    %6524 = vmatprep.subr.mxu0 %v6375
    %6525 = vmatpush2.msra.mxu0 %v6374
    %6526 = vmatprep.subr.mxu0 %v6373
    %6527 = vmatpush2.msra.mxu0 %v6372
    %6528 = vmatprep.subr.mxu0 %v6371
    %6529 = vmatpush2.msra.mxu0 %v6370
    %6530 = vmatprep.subr.mxu0 %v6369
    %6531 = vmatpush2.msra.mxu0 %v6368
    %6532 = vmatprep.subr.mxu0 %v6367
    %6533 = vmatpush2.msra.mxu0 %v6366
    %6534 = vmatprep.subr.mxu0 %v6365
    %6535 = vmatpush2.msra.mxu0 %v6364
    %6536 = vmatprep.mubr.f32.mxu0 %v6205
    %6537 = vmatmul.mubr.f32.gmra.mxu0 %v6204
    %v6538 = vpop.f32.mrf.mxu0
    %v6539 = vadd.f32 %v6465, %v6538
    %v6540 = vpop.f32.mrf.mxu0
    %v6541 = vadd.f32 %v6469, %v6540
    %6542 = vmatprep.mubr.f32.mxu0 %v6209
    %6543 = vmatmul.mubr.f32.gmra.mxu0 %v6208
    %v6544 = vpop.f32.mrf.mxu0
    %v6545 = vadd.f32 %v6465, %v6544
    %v6546 = vpop.f32.mrf.mxu0
    %v6547 = vadd.f32 %v6469, %v6546
    %6548 = vmatprep.mubr.f32.mxu0 %v6213
    %6549 = vmatmul.mubr.f32.gmra.mxu0 %v6212
    %v6550 = vpop.f32.mrf.mxu0
    %v6551 = vadd.f32 %v6465, %v6550
    %v6552 = vpop.f32.mrf.mxu0
    %v6553 = vadd.f32 %v6469, %v6552
    %6554 = vmatprep.mubr.f32.mxu0 %v6217
    %6555 = vmatmul.mubr.f32.gmra.mxu0 %v6216
    %v6556 = vpop.f32.mrf.mxu0
    %v6557 = vadd.f32 %v6465, %v6556
    %v6558 = vpop.f32.mrf.mxu0
    %v6559 = vadd.f32 %v6469, %v6558
    %6560 = vmatprep.mubr.f32.mxu0 %v6221
    %6561 = vmatmul.mubr.f32.gmra.mxu0 %v6220
    %v6562 = vpop.f32.mrf.mxu0
    %v6563 = vadd.f32 %v6465, %v6562
    %v6564 = vpop.f32.mrf.mxu0
    %v6565 = vadd.f32 %v6469, %v6564
    %6566 = vmatprep.mubr.f32.mxu0 %v6225
    %6567 = vmatmul.mubr.f32.gmra.mxu0 %v6224
    %v6568 = vpop.f32.mrf.mxu0
    %v6569 = vadd.f32 %v6465, %v6568
    %v6570 = vpop.f32.mrf.mxu0
    %v6571 = vadd.f32 %v6469, %v6570
    %6572 = vmatprep.mubr.f32.mxu0 %v6229
    %6573 = vmatmul.mubr.f32.gmra.mxu0 %v6228
    %v6574 = vpop.f32.mrf.mxu0
    %v6575 = vadd.f32 %v6465, %v6574
    %v6576 = vpop.f32.mrf.mxu0
    %v6577 = vadd.f32 %v6469, %v6576
    %6578 = vmatprep.mubr.f32.mxu0 %v6233
    %6579 = vmatmul.mubr.f32.gmra.mxu0 %v6232
    %v6580 = vpop.f32.mrf.mxu0
    %v6581 = vadd.f32 %v6465, %v6580
    %v6582 = vpop.f32.mrf.mxu0
    %v6583 = vadd.f32 %v6469, %v6582
    %6584 = vmatprep.mubr.f32.mxu0 %v6237
    %6585 = vmatmul.mubr.f32.gmra.mxu0 %v6236
    %v6586 = vpop.f32.mrf.mxu0
    %v6587 = vadd.f32 %v6465, %v6586
    %v6588 = vpop.f32.mrf.mxu0
    %v6589 = vadd.f32 %v6469, %v6588
    %6590 = vmatprep.mubr.f32.mxu0 %v6241
    %6591 = vmatmul.mubr.f32.gmra.mxu0 %v6240
    %v6592 = vpop.f32.mrf.mxu0
    %v6593 = vadd.f32 %v6465, %v6592
    %v6594 = vpop.f32.mrf.mxu0
    %v6595 = vadd.f32 %v6469, %v6594
    %6596 = vmatprep.mubr.f32.mxu0 %v6245
    %6597 = vmatmul.mubr.f32.gmra.mxu0 %v6244
    %v6598 = vpop.f32.mrf.mxu0
    %v6599 = vadd.f32 %v6465, %v6598
    %v6600 = vpop.f32.mrf.mxu0
    %v6601 = vadd.f32 %v6469, %v6600
    %6602 = vmatprep.mubr.f32.mxu0 %v6249
    %6603 = vmatmul.mubr.f32.gmra.mxu0 %v6248
    %v6604 = vpop.f32.mrf.mxu0
    %v6605 = vadd.f32 %v6465, %v6604
    %v6606 = vpop.f32.mrf.mxu0
    %v6607 = vadd.f32 %v6469, %v6606
    %6608 = vmatprep.mubr.f32.mxu0 %v6253
    %6609 = vmatmul.mubr.f32.gmra.mxu0 %v6252
    %v6610 = vpop.f32.mrf.mxu0
    %v6611 = vadd.f32 %v6465, %v6610
    %v6612 = vpop.f32.mrf.mxu0
    %v6613 = vadd.f32 %v6469, %v6612
    %6614 = vmatprep.mubr.f32.mxu0 %v6257
    %6615 = vmatmul.mubr.f32.gmra.mxu0 %v6256
    %v6616 = vpop.f32.mrf.mxu0
    %v6617 = vadd.f32 %v6465, %v6616
    %v6618 = vpop.f32.mrf.mxu0
    %v6619 = vadd.f32 %v6469, %v6618
    %6620 = vmatprep.mubr.f32.mxu0 %v6261
    %6621 = vmatmul.mubr.f32.gmra.mxu0 %v6260
    %v6622 = vpop.f32.mrf.mxu0
    %v6623 = vadd.f32 %v6465, %v6622
    %v6624 = vpop.f32.mrf.mxu0
    %v6625 = vadd.f32 %v6469, %v6624
    %6626 = vmatprep.mubr.f32.mxu0 %v6265
    %6627 = vmatmul.mubr.f32.gmra.mxu0 %v6264
    %v6628 = vpop.f32.mrf.mxu0
    %v6629 = vadd.f32 %v6465, %v6628
    %v6630 = vpop.f32.mrf.mxu0
    %v6631 = vadd.f32 %v6469, %v6630
    %6632 = vmatprep.mubr.f32.mxu0 %v6269
    %6633 = vmatmul.mubr.f32.gmra.mxu0 %v6268
    %v6634 = vpop.f32.mrf.mxu0
    %v6635 = vadd.f32 %v6465, %v6634
    %v6636 = vpop.f32.mrf.mxu0
    %v6637 = vadd.f32 %v6469, %v6636
    %6638 = vmatprep.mubr.f32.mxu0 %v6273
    %6639 = vmatmul.mubr.f32.gmra.mxu0 %v6272
    %v6640 = vpop.f32.mrf.mxu0
    %v6641 = vadd.f32 %v6465, %v6640
    %v6642 = vpop.f32.mrf.mxu0
    %v6643 = vadd.f32 %v6469, %v6642
    %6644 = vmatprep.mubr.f32.mxu0 %v6277
    %6645 = vmatmul.mubr.f32.gmra.mxu0 %v6276
    %v6646 = vpop.f32.mrf.mxu0
    %v6647 = vadd.f32 %v6465, %v6646
    %v6648 = vpop.f32.mrf.mxu0
    %v6649 = vadd.f32 %v6469, %v6648
    %6650 = vmatprep.mubr.f32.mxu0 %v6281
    %6651 = vmatmul.mubr.f32.gmra.mxu0 %v6280
    %v6652 = vpop.f32.mrf.mxu0
    %v6653 = vadd.f32 %v6465, %v6652
    %v6654 = vpop.f32.mrf.mxu0
    %v6655 = vadd.f32 %v6469, %v6654
    %6656 = vmatprep.mubr.f32.mxu0 %v6285
    %6657 = vmatmul.mubr.f32.gmra.mxu0 %v6284
    %v6658 = vpop.f32.mrf.mxu0
    %v6659 = vadd.f32 %v6465, %v6658
    %v6660 = vpop.f32.mrf.mxu0
    %v6661 = vadd.f32 %v6469, %v6660
    %6662 = vmatprep.mubr.f32.mxu0 %v6289
    %6663 = vmatmul.mubr.f32.gmra.mxu0 %v6288
    %v6664 = vpop.f32.mrf.mxu0
    %v6665 = vadd.f32 %v6465, %v6664
    %v6666 = vpop.f32.mrf.mxu0
    %v6667 = vadd.f32 %v6469, %v6666
    %6668 = vmatprep.mubr.f32.mxu0 %v6293
    %6669 = vmatmul.mubr.f32.gmra.mxu0 %v6292
    %v6670 = vpop.f32.mrf.mxu0
    %v6671 = vadd.f32 %v6465, %v6670
    %v6672 = vpop.f32.mrf.mxu0
    %v6673 = vadd.f32 %v6469, %v6672
    %6674 = vmatprep.mubr.f32.mxu0 %v6297
    %6675 = vmatmul.mubr.f32.gmra.mxu0 %v6296
    %v6676 = vpop.f32.mrf.mxu0
    %v6677 = vadd.f32 %v6465, %v6676
    %v6678 = vpop.f32.mrf.mxu0
    %v6679 = vadd.f32 %v6469, %v6678
    %6680 = vmatprep.mubr.f32.mxu0 %v6301
    %6681 = vmatmul.mubr.f32.gmra.mxu0 %v6300
    %v6682 = vpop.f32.mrf.mxu0
    %v6683 = vadd.f32 %v6465, %v6682
    %v6684 = vpop.f32.mrf.mxu0
    %v6685 = vadd.f32 %v6469, %v6684
    %6686 = vmatprep.mubr.f32.mxu0 %v6305
    %6687 = vmatmul.mubr.f32.gmra.mxu0 %v6304
    %v6688 = vpop.f32.mrf.mxu0
    %v6689 = vadd.f32 %v6465, %v6688
    %v6690 = vpop.f32.mrf.mxu0
    %v6691 = vadd.f32 %v6469, %v6690
    %6692 = vmatprep.mubr.f32.mxu0 %v6309
    %6693 = vmatmul.mubr.f32.gmra.mxu0 %v6308
    %v6694 = vpop.f32.mrf.mxu0
    %v6695 = vadd.f32 %v6465, %v6694
    %v6696 = vpop.f32.mrf.mxu0
    %v6697 = vadd.f32 %v6469, %v6696
    %6698 = vmatprep.mubr.f32.mxu0 %v6313
    %6699 = vmatmul.mubr.f32.gmra.mxu0 %v6312
    %v6700 = vpop.f32.mrf.mxu0
    %v6701 = vadd.f32 %v6465, %v6700
    %v6702 = vpop.f32.mrf.mxu0
    %v6703 = vadd.f32 %v6469, %v6702
    %6704 = vmatprep.mubr.f32.mxu0 %v6317
    %6705 = vmatmul.mubr.f32.gmra.mxu0 %v6316
    %v6706 = vpop.f32.mrf.mxu0
    %v6707 = vadd.f32 %v6465, %v6706
    %v6708 = vpop.f32.mrf.mxu0
    %v6709 = vadd.f32 %v6469, %v6708
    %6710 = vmatprep.mubr.f32.mxu0 %v6321
    %6711 = vmatmul.mubr.f32.gmra.mxu0 %v6320
    %v6712 = vpop.f32.mrf.mxu0
    %v6713 = vadd.f32 %v6465, %v6712
    %v6714 = vpop.f32.mrf.mxu0
    %v6715 = vadd.f32 %v6469, %v6714
    %6716 = vmatprep.mubr.f32.mxu0 %v6325
    %6717 = vmatmul.mubr.f32.gmra.mxu0 %v6324
    %v6718 = vpop.f32.mrf.mxu0
    %v6719 = vadd.f32 %v6465, %v6718
    %v6720 = vpop.f32.mrf.mxu0
    %v6721 = vadd.f32 %v6469, %v6720
    %6722 = vmatprep.mubr.f32.mxu0 %v6329
    %6723 = vmatmul.mubr.f32.gmra.mxu0 %v6328
    %v6724 = vpop.f32.mrf.mxu0
    %v6725 = vadd.f32 %v6465, %v6724
    %v6726 = vpop.f32.mrf.mxu0
    %v6727 = vadd.f32 %v6469, %v6726
    %6728 = vdwg.mxu0
    %6729 = vmatprep.subr.mxu0 %v6427
    %6730 = vmatpush1.msra.mxu0 %v6426
    %6731 = vmatprep.subr.mxu0 %v6425
    %6732 = vmatpush1.msra.mxu0 %v6424
    %6733 = vmatprep.subr.mxu0 %v6423
    %6734 = vmatpush1.msra.mxu0 %v6422
    %6735 = vmatprep.subr.mxu0 %v6421
    %6736 = vmatpush1.msra.mxu0 %v6420
    %6737 = vmatprep.subr.mxu0 %v6419
    %6738 = vmatpush1.msra.mxu0 %v6418
    %6739 = vmatprep.subr.mxu0 %v6417
    %6740 = vmatpush1.msra.mxu0 %v6416
    %6741 = vmatprep.subr.mxu0 %v6415
    %6742 = vmatpush1.msra.mxu0 %v6414
    %6743 = vmatprep.subr.mxu0 %v6413
    %6744 = vmatpush1.msra.mxu0 %v6412
    %6745 = vmatprep.subr.mxu0 %v6411
    %6746 = vmatpush1.msra.mxu0 %v6410
    %6747 = vmatprep.subr.mxu0 %v6409
    %6748 = vmatpush1.msra.mxu0 %v6408
    %6749 = vmatprep.subr.mxu0 %v6407
    %6750 = vmatpush1.msra.mxu0 %v6406
    %6751 = vmatprep.subr.mxu0 %v6405
    %6752 = vmatpush1.msra.mxu0 %v6404
    %6753 = vmatprep.subr.mxu0 %v6403
    %6754 = vmatpush1.msra.mxu0 %v6402
    %6755 = vmatprep.subr.mxu0 %v6401
    %6756 = vmatpush1.msra.mxu0 %v6400
    %6757 = vmatprep.subr.mxu0 %v6399
    %6758 = vmatpush1.msra.mxu0 %v6398
    %6759 = vmatprep.subr.mxu0 %v6397
    %6760 = vmatpush1.msra.mxu0 %v6396
    %6761 = vmatprep.subr.mxu0 %v6459
    %6762 = vmatpush2.msra.mxu0 %v6458
    %6763 = vmatprep.subr.mxu0 %v6457
    %6764 = vmatpush2.msra.mxu0 %v6456
    %6765 = vmatprep.subr.mxu0 %v6455
    %6766 = vmatpush2.msra.mxu0 %v6454
    %6767 = vmatprep.subr.mxu0 %v6453
    %6768 = vmatpush2.msra.mxu0 %v6452
    %6769 = vmatprep.subr.mxu0 %v6451
    %6770 = vmatpush2.msra.mxu0 %v6450
    %6771 = vmatprep.subr.mxu0 %v6449
    %6772 = vmatpush2.msra.mxu0 %v6448
    %6773 = vmatprep.subr.mxu0 %v6447
    %6774 = vmatpush2.msra.mxu0 %v6446
    %6775 = vmatprep.subr.mxu0 %v6445
    %6776 = vmatpush2.msra.mxu0 %v6444
    %6777 = vmatprep.subr.mxu0 %v6443
    %6778 = vmatpush2.msra.mxu0 %v6442
    %6779 = vmatprep.subr.mxu0 %v6441
    %6780 = vmatpush2.msra.mxu0 %v6440
    %6781 = vmatprep.subr.mxu0 %v6439
    %6782 = vmatpush2.msra.mxu0 %v6438
    %6783 = vmatprep.subr.mxu0 %v6437
    %6784 = vmatpush2.msra.mxu0 %v6436
    %6785 = vmatprep.subr.mxu0 %v6435
    %6786 = vmatpush2.msra.mxu0 %v6434
    %6787 = vmatprep.subr.mxu0 %v6433
    %6788 = vmatpush2.msra.mxu0 %v6432
    %6789 = vmatprep.subr.mxu0 %v6431
    %6790 = vmatpush2.msra.mxu0 %v6430
    %6791 = vmatprep.subr.mxu0 %v6429
    %6792 = vmatpush2.msra.mxu0 %v6428
    %6793 = vmatprep.mubr.f32.mxu0 %v6207
    %6794 = vmatmul.mubr.f32.gmra.mxu0 %v6206
    %v6795 = vpop.f32.mrf.mxu0
    %v6796 = vadd.f32 %v6539, %v6795
    %v6797 = vpop.f32.mrf.mxu0
    %v6798 = vadd.f32 %v6541, %v6797
    %6799 = vmatprep.mubr.f32.mxu0 %v6211
    %6800 = vmatmul.mubr.f32.gmra.mxu0 %v6210
    %v6801 = vpop.f32.mrf.mxu0
    %v6802 = vadd.f32 %v6545, %v6801
    %v6803 = vpop.f32.mrf.mxu0
    %v6804 = vadd.f32 %v6547, %v6803
    %6805 = vmatprep.mubr.f32.mxu0 %v6215
    %6806 = vmatmul.mubr.f32.gmra.mxu0 %v6214
    %v6807 = vpop.f32.mrf.mxu0
    %v6808 = vadd.f32 %v6551, %v6807
    %v6809 = vpop.f32.mrf.mxu0
    %v6810 = vadd.f32 %v6553, %v6809
    %6811 = vmatprep.mubr.f32.mxu0 %v6219
    %6812 = vmatmul.mubr.f32.gmra.mxu0 %v6218
    %v6813 = vpop.f32.mrf.mxu0
    %v6814 = vadd.f32 %v6557, %v6813
    %v6815 = vpop.f32.mrf.mxu0
    %v6816 = vadd.f32 %v6559, %v6815
    %6817 = vmatprep.mubr.f32.mxu0 %v6223
    %6818 = vmatmul.mubr.f32.gmra.mxu0 %v6222
    %v6819 = vpop.f32.mrf.mxu0
    %v6820 = vadd.f32 %v6563, %v6819
    %v6821 = vpop.f32.mrf.mxu0
    %v6822 = vadd.f32 %v6565, %v6821
    %6823 = vmatprep.mubr.f32.mxu0 %v6227
    %6824 = vmatmul.mubr.f32.gmra.mxu0 %v6226
    %v6825 = vpop.f32.mrf.mxu0
    %v6826 = vadd.f32 %v6569, %v6825
    %v6827 = vpop.f32.mrf.mxu0
    %v6828 = vadd.f32 %v6571, %v6827
    %6829 = vmatprep.mubr.f32.mxu0 %v6231
    %6830 = vmatmul.mubr.f32.gmra.mxu0 %v6230
    %v6831 = vpop.f32.mrf.mxu0
    %v6832 = vadd.f32 %v6575, %v6831
    %v6833 = vpop.f32.mrf.mxu0
    %v6834 = vadd.f32 %v6577, %v6833
    %6835 = vmatprep.mubr.f32.mxu0 %v6235
    %6836 = vmatmul.mubr.f32.gmra.mxu0 %v6234
    %v6837 = vpop.f32.mrf.mxu0
    %v6838 = vadd.f32 %v6581, %v6837
    %v6839 = vpop.f32.mrf.mxu0
    %v6840 = vadd.f32 %v6583, %v6839
    %6841 = vmatprep.mubr.f32.mxu0 %v6239
    %6842 = vmatmul.mubr.f32.gmra.mxu0 %v6238
    %v6843 = vpop.f32.mrf.mxu0
    %v6844 = vadd.f32 %v6587, %v6843
    %v6845 = vpop.f32.mrf.mxu0
    %v6846 = vadd.f32 %v6589, %v6845
    %6847 = vmatprep.mubr.f32.mxu0 %v6243
    %6848 = vmatmul.mubr.f32.gmra.mxu0 %v6242
    %v6849 = vpop.f32.mrf.mxu0
    %v6850 = vadd.f32 %v6593, %v6849
    %v6851 = vpop.f32.mrf.mxu0
    %v6852 = vadd.f32 %v6595, %v6851
    %6853 = vmatprep.mubr.f32.mxu0 %v6247
    %6854 = vmatmul.mubr.f32.gmra.mxu0 %v6246
    %v6855 = vpop.f32.mrf.mxu0
    %v6856 = vadd.f32 %v6599, %v6855
    %v6857 = vpop.f32.mrf.mxu0
    %v6858 = vadd.f32 %v6601, %v6857
    %6859 = vmatprep.mubr.f32.mxu0 %v6251
    %6860 = vmatmul.mubr.f32.gmra.mxu0 %v6250
    %v6861 = vpop.f32.mrf.mxu0
    %v6862 = vadd.f32 %v6605, %v6861
    %v6863 = vpop.f32.mrf.mxu0
    %v6864 = vadd.f32 %v6607, %v6863
    %6865 = vmatprep.mubr.f32.mxu0 %v6255
    %6866 = vmatmul.mubr.f32.gmra.mxu0 %v6254
    %v6867 = vpop.f32.mrf.mxu0
    %v6868 = vadd.f32 %v6611, %v6867
    %v6869 = vpop.f32.mrf.mxu0
    %v6870 = vadd.f32 %v6613, %v6869
    %6871 = vmatprep.mubr.f32.mxu0 %v6259
    %6872 = vmatmul.mubr.f32.gmra.mxu0 %v6258
    %v6873 = vpop.f32.mrf.mxu0
    %v6874 = vadd.f32 %v6617, %v6873
    %v6875 = vpop.f32.mrf.mxu0
    %v6876 = vadd.f32 %v6619, %v6875
    %6877 = vmatprep.mubr.f32.mxu0 %v6263
    %6878 = vmatmul.mubr.f32.gmra.mxu0 %v6262
    %v6879 = vpop.f32.mrf.mxu0
    %v6880 = vadd.f32 %v6623, %v6879
    %v6881 = vpop.f32.mrf.mxu0
    %v6882 = vadd.f32 %v6625, %v6881
    %6883 = vmatprep.mubr.f32.mxu0 %v6267
    %6884 = vmatmul.mubr.f32.gmra.mxu0 %v6266
    %v6885 = vpop.f32.mrf.mxu0
    %v6886 = vadd.f32 %v6629, %v6885
    %v6887 = vpop.f32.mrf.mxu0
    %v6888 = vadd.f32 %v6631, %v6887
    %6889 = vmatprep.mubr.f32.mxu0 %v6271
    %6890 = vmatmul.mubr.f32.gmra.mxu0 %v6270
    %v6891 = vpop.f32.mrf.mxu0
    %v6892 = vadd.f32 %v6635, %v6891
    %v6893 = vpop.f32.mrf.mxu0
    %v6894 = vadd.f32 %v6637, %v6893
    %6895 = vmatprep.mubr.f32.mxu0 %v6275
    %6896 = vmatmul.mubr.f32.gmra.mxu0 %v6274
    %v6897 = vpop.f32.mrf.mxu0
    %v6898 = vadd.f32 %v6641, %v6897
    %v6899 = vpop.f32.mrf.mxu0
    %v6900 = vadd.f32 %v6643, %v6899
    %6901 = vmatprep.mubr.f32.mxu0 %v6279
    %6902 = vmatmul.mubr.f32.gmra.mxu0 %v6278
    %v6903 = vpop.f32.mrf.mxu0
    %v6904 = vadd.f32 %v6647, %v6903
    %v6905 = vpop.f32.mrf.mxu0
    %v6906 = vadd.f32 %v6649, %v6905
    %6907 = vmatprep.mubr.f32.mxu0 %v6283
    %6908 = vmatmul.mubr.f32.gmra.mxu0 %v6282
    %v6909 = vpop.f32.mrf.mxu0
    %v6910 = vadd.f32 %v6653, %v6909
    %v6911 = vpop.f32.mrf.mxu0
    %v6912 = vadd.f32 %v6655, %v6911
    %6913 = vmatprep.mubr.f32.mxu0 %v6287
    %6914 = vmatmul.mubr.f32.gmra.mxu0 %v6286
    %v6915 = vpop.f32.mrf.mxu0
    %v6916 = vadd.f32 %v6659, %v6915
    %v6917 = vpop.f32.mrf.mxu0
    %v6918 = vadd.f32 %v6661, %v6917
    %6919 = vmatprep.mubr.f32.mxu0 %v6291
    %6920 = vmatmul.mubr.f32.gmra.mxu0 %v6290
    %v6921 = vpop.f32.mrf.mxu0
    %v6922 = vadd.f32 %v6665, %v6921
    %v6923 = vpop.f32.mrf.mxu0
    %v6924 = vadd.f32 %v6667, %v6923
    %6925 = vmatprep.mubr.f32.mxu0 %v6295
    %6926 = vmatmul.mubr.f32.gmra.mxu0 %v6294
    %v6927 = vpop.f32.mrf.mxu0
    %v6928 = vadd.f32 %v6671, %v6927
    %v6929 = vpop.f32.mrf.mxu0
    %v6930 = vadd.f32 %v6673, %v6929
    %6931 = vmatprep.mubr.f32.mxu0 %v6299
    %6932 = vmatmul.mubr.f32.gmra.mxu0 %v6298
    %v6933 = vpop.f32.mrf.mxu0
    %v6934 = vadd.f32 %v6677, %v6933
    %v6935 = vpop.f32.mrf.mxu0
    %v6936 = vadd.f32 %v6679, %v6935
    %6937 = vmatprep.mubr.f32.mxu0 %v6303
    %6938 = vmatmul.mubr.f32.gmra.mxu0 %v6302
    %v6939 = vpop.f32.mrf.mxu0
    %v6940 = vadd.f32 %v6683, %v6939
    %v6941 = vpop.f32.mrf.mxu0
    %v6942 = vadd.f32 %v6685, %v6941
    %6943 = vmatprep.mubr.f32.mxu0 %v6307
    %6944 = vmatmul.mubr.f32.gmra.mxu0 %v6306
    %v6945 = vpop.f32.mrf.mxu0
    %v6946 = vadd.f32 %v6689, %v6945
    %v6947 = vpop.f32.mrf.mxu0
    %v6948 = vadd.f32 %v6691, %v6947
    %6949 = vmatprep.mubr.f32.mxu0 %v6311
    %6950 = vmatmul.mubr.f32.gmra.mxu0 %v6310
    %v6951 = vpop.f32.mrf.mxu0
    %v6952 = vadd.f32 %v6695, %v6951
    %v6953 = vpop.f32.mrf.mxu0
    %v6954 = vadd.f32 %v6697, %v6953
    %6955 = vmatprep.mubr.f32.mxu0 %v6315
    %6956 = vmatmul.mubr.f32.gmra.mxu0 %v6314
    %v6957 = vpop.f32.mrf.mxu0
    %v6958 = vadd.f32 %v6701, %v6957
    %v6959 = vpop.f32.mrf.mxu0
    %v6960 = vadd.f32 %v6703, %v6959
    %6961 = vmatprep.mubr.f32.mxu0 %v6319
    %6962 = vmatmul.mubr.f32.gmra.mxu0 %v6318
    %v6963 = vpop.f32.mrf.mxu0
    %v6964 = vadd.f32 %v6707, %v6963
    %v6965 = vpop.f32.mrf.mxu0
    %v6966 = vadd.f32 %v6709, %v6965
    %6967 = vmatprep.mubr.f32.mxu0 %v6323
    %6968 = vmatmul.mubr.f32.gmra.mxu0 %v6322
    %v6969 = vpop.f32.mrf.mxu0
    %v6970 = vadd.f32 %v6713, %v6969
    %v6971 = vpop.f32.mrf.mxu0
    %v6972 = vadd.f32 %v6715, %v6971
    %6973 = vmatprep.mubr.f32.mxu0 %v6327
    %6974 = vmatmul.mubr.f32.gmra.mxu0 %v6326
    %v6975 = vpop.f32.mrf.mxu0
    %v6976 = vadd.f32 %v6719, %v6975
    %v6977 = vpop.f32.mrf.mxu0
    %v6978 = vadd.f32 %v6721, %v6977
    %6979 = vmatprep.mubr.f32.mxu0 %v6331
    %6980 = vmatmul.mubr.f32.gmra.mxu0 %v6330
    %v6981 = vpop.f32.mrf.mxu0
    %v6982 = vadd.f32 %v6725, %v6981
    %v6983 = vpop.f32.mrf.mxu0
    %v6984 = vadd.f32 %v6727, %v6983
    %6985 = vdwg.mxu0
    %v6986 = vmul.f32 %v6796, 0.01
    %v6987 = vmul.f32 %v6798, 0.01
    %v6988 = vmul.f32 %v6802, 0.01
    %v6989 = vmul.f32 %v6804, 0.01
    %v6990 = vmul.f32 %v6808, 0.01
    %v6991 = vmul.f32 %v6810, 0.01
    %v6992 = vmul.f32 %v6814, 0.01
    %v6993 = vmul.f32 %v6816, 0.01
    %v6994 = vmul.f32 %v6820, 0.01
    %v6995 = vmul.f32 %v6822, 0.01
    %v6996 = vmul.f32 %v6826, 0.01
    %v6997 = vmul.f32 %v6828, 0.01
    %v6998 = vmul.f32 %v6832, 0.01
    %v6999 = vmul.f32 %v6834, 0.01
    %v7000 = vmul.f32 %v6838, 0.01
    %v7001 = vmul.f32 %v6840, 0.01
    %v7002 = vmul.f32 %v6844, 0.01
    %v7003 = vmul.f32 %v6846, 0.01
    %v7004 = vmul.f32 %v6850, 0.01
    %v7005 = vmul.f32 %v6852, 0.01
    %v7006 = vmul.f32 %v6856, 0.01
    %v7007 = vmul.f32 %v6858, 0.01
    %v7008 = vmul.f32 %v6862, 0.01
    %v7009 = vmul.f32 %v6864, 0.01
    %v7010 = vmul.f32 %v6868, 0.01
    %v7011 = vmul.f32 %v6870, 0.01
    %v7012 = vmul.f32 %v6874, 0.01
    %v7013 = vmul.f32 %v6876, 0.01
    %v7014 = vmul.f32 %v6880, 0.01
    %v7015 = vmul.f32 %v6882, 0.01
    %v7016 = vmul.f32 %v6886, 0.01
    %v7017 = vmul.f32 %v6888, 0.01
    %v7018 = vmul.f32 %v6892, 0.01
    %v7019 = vmul.f32 %v6894, 0.01
    %v7020 = vmul.f32 %v6898, 0.01
    %v7021 = vmul.f32 %v6900, 0.01
    %v7022 = vmul.f32 %v6904, 0.01
    %v7023 = vmul.f32 %v6906, 0.01
    %v7024 = vmul.f32 %v6910, 0.01
    %v7025 = vmul.f32 %v6912, 0.01
    %v7026 = vmul.f32 %v6916, 0.01
    %v7027 = vmul.f32 %v6918, 0.01
    %v7028 = vmul.f32 %v6922, 0.01
    %v7029 = vmul.f32 %v6924, 0.01
    %v7030 = vmul.f32 %v6928, 0.01
    %v7031 = vmul.f32 %v6930, 0.01
    %v7032 = vmul.f32 %v6934, 0.01
    %v7033 = vmul.f32 %v6936, 0.01
    %v7034 = vmul.f32 %v6940, 0.01
    %v7035 = vmul.f32 %v6942, 0.01
    %v7036 = vmul.f32 %v6946, 0.01
    %v7037 = vmul.f32 %v6948, 0.01
    %v7038 = vmul.f32 %v6952, 0.01
    %v7039 = vmul.f32 %v6954, 0.01
    %v7040 = vmul.f32 %v6958, 0.01
    %v7041 = vmul.f32 %v6960, 0.01
    %v7042 = vmul.f32 %v6964, 0.01
    %v7043 = vmul.f32 %v6966, 0.01
    %v7044 = vmul.f32 %v6970, 0.01
    %v7045 = vmul.f32 %v6972, 0.01
    %v7046 = vmul.f32 %v6976, 0.01
    %v7047 = vmul.f32 %v6978, 0.01
    %v7048 = vmul.f32 %v6982, 0.01
    %v7049 = vmul.f32 %v6984, 0.01
    %v7050 = vmax.f32 %v6796, %v6986
    %v7051 = vmax.f32 %v6798, %v6987
    %v7052 = vmax.f32 %v6802, %v6988
    %v7053 = vmax.f32 %v6804, %v6989
    %v7054 = vmax.f32 %v6808, %v6990
    %v7055 = vmax.f32 %v6810, %v6991
    %v7056 = vmax.f32 %v6814, %v6992
    %v7057 = vmax.f32 %v6816, %v6993
    %v7058 = vmax.f32 %v6820, %v6994
    %v7059 = vmax.f32 %v6822, %v6995
    %v7060 = vmax.f32 %v6826, %v6996
    %v7061 = vmax.f32 %v6828, %v6997
    %v7062 = vmax.f32 %v6832, %v6998
    %v7063 = vmax.f32 %v6834, %v6999
    %v7064 = vmax.f32 %v6838, %v7000
    %v7065 = vmax.f32 %v6840, %v7001
    %v7066 = vmax.f32 %v6844, %v7002
    %v7067 = vmax.f32 %v6846, %v7003
    %v7068 = vmax.f32 %v6850, %v7004
    %v7069 = vmax.f32 %v6852, %v7005
    %v7070 = vmax.f32 %v6856, %v7006
    %v7071 = vmax.f32 %v6858, %v7007
    %v7072 = vmax.f32 %v6862, %v7008
    %v7073 = vmax.f32 %v6864, %v7009
    %v7074 = vmax.f32 %v6868, %v7010
    %v7075 = vmax.f32 %v6870, %v7011
    %v7076 = vmax.f32 %v6874, %v7012
    %v7077 = vmax.f32 %v6876, %v7013
    %v7078 = vmax.f32 %v6880, %v7014
    %v7079 = vmax.f32 %v6882, %v7015
    %v7080 = vmax.f32 %v6886, %v7016
    %v7081 = vmax.f32 %v6888, %v7017
    %v7082 = vmax.f32 %v6892, %v7018
    %v7083 = vmax.f32 %v6894, %v7019
    %v7084 = vmax.f32 %v6898, %v7020
    %v7085 = vmax.f32 %v6900, %v7021
    %v7086 = vmax.f32 %v6904, %v7022
    %v7087 = vmax.f32 %v6906, %v7023
    %v7088 = vmax.f32 %v6910, %v7024
    %v7089 = vmax.f32 %v6912, %v7025
    %v7090 = vmax.f32 %v6916, %v7026
    %v7091 = vmax.f32 %v6918, %v7027
    %v7092 = vmax.f32 %v6922, %v7028
    %v7093 = vmax.f32 %v6924, %v7029
    %v7094 = vmax.f32 %v6928, %v7030
    %v7095 = vmax.f32 %v6930, %v7031
    %v7096 = vmax.f32 %v6934, %v7032
    %v7097 = vmax.f32 %v6936, %v7033
    %v7098 = vmax.f32 %v6940, %v7034
    %v7099 = vmax.f32 %v6942, %v7035
    %v7100 = vmax.f32 %v6946, %v7036
    %v7101 = vmax.f32 %v6948, %v7037
    %v7102 = vmax.f32 %v6952, %v7038
    %v7103 = vmax.f32 %v6954, %v7039
    %v7104 = vmax.f32 %v6958, %v7040
    %v7105 = vmax.f32 %v6960, %v7041
    %v7106 = vmax.f32 %v6964, %v7042
    %v7107 = vmax.f32 %v6966, %v7043
    %v7108 = vmax.f32 %v6970, %v7044
    %v7109 = vmax.f32 %v6972, %v7045
    %v7110 = vmax.f32 %v6976, %v7046
    %v7111 = vmax.f32 %v6978, %v7047
    %v7112 = vmax.f32 %v6982, %v7048
    %v7113 = vmax.f32 %v6984, %v7049
    %v7114 = vld [vmem:[#allocation14] sm:$0x3]
    %v7115 = vld [vmem:[#allocation2] sm:$0x1]
    %7117 = vset.pattern.permute.xlu0 0
    %7118 = vperm.xlu0 %7117, %v7115
    %v7119 = vpop.permute.xlu0 %7118
    %v7121 = vlaneseq
    %v7122 = vshrl.u32 %v7121, 7
    %v7123 = vsub.s32 0, %v7122
    %v7124 = vrot.slane %v7119, %v7123
    %v7126 = vlaneseq
    %v7127 = vshrl.u32 %v7126, 7
    %v7128 = vsub.s32 0, %v7127
    %v7129 = vrot.slane %v7114, %v7128
    %v7130 = vlaneseq
    %v7131 = vshrl.u32 %v7130, 7
    %v7132 = vsub.s32 1, %v7131
    %v7133 = vrot.slane %v7114, %v7132
    %7136 = vmatprep.subr.mxu0 %v7081
    %7137 = vmatpush1.xpose.msra.mxu0 %v7080
    %7138 = vmatprep.subr.mxu0 %v7079
    %7139 = vmatpush1.xpose.msra.mxu0 %v7078
    %7140 = vmatprep.subr.mxu0 %v7077
    %7141 = vmatpush1.xpose.msra.mxu0 %v7076
    %7142 = vmatprep.subr.mxu0 %v7075
    %7143 = vmatpush1.xpose.msra.mxu0 %v7074
    %7144 = vmatprep.subr.mxu0 %v7073
    %7145 = vmatpush1.xpose.msra.mxu0 %v7072
    %7146 = vmatprep.subr.mxu0 %v7071
    %7147 = vmatpush1.xpose.msra.mxu0 %v7070
    %7148 = vmatprep.subr.mxu0 %v7069
    %7149 = vmatpush1.xpose.msra.mxu0 %v7068
    %7150 = vmatprep.subr.mxu0 %v7067
    %7151 = vmatpush1.xpose.msra.mxu0 %v7066
    %7152 = vmatprep.subr.mxu0 %v7065
    %7153 = vmatpush1.xpose.msra.mxu0 %v7064
    %7154 = vmatprep.subr.mxu0 %v7063
    %7155 = vmatpush1.xpose.msra.mxu0 %v7062
    %7156 = vmatprep.subr.mxu0 %v7061
    %7157 = vmatpush1.xpose.msra.mxu0 %v7060
    %7158 = vmatprep.subr.mxu0 %v7059
    %7159 = vmatpush1.xpose.msra.mxu0 %v7058
    %7160 = vmatprep.subr.mxu0 %v7057
    %7161 = vmatpush1.xpose.msra.mxu0 %v7056
    %7162 = vmatprep.subr.mxu0 %v7055
    %7163 = vmatpush1.xpose.msra.mxu0 %v7054
    %7164 = vmatprep.subr.mxu0 %v7053
    %7165 = vmatpush1.xpose.msra.mxu0 %v7052
    %7166 = vmatprep.subr.mxu0 %v7051
    %7167 = vmatpush1.xpose.msra.mxu0 %v7050
    %7168 = vmatprep.subr.mxu0 %v7113
    %7169 = vmatpush2.xpose.msra.mxu0 %v7112
    %7170 = vmatprep.subr.mxu0 %v7111
    %7171 = vmatpush2.xpose.msra.mxu0 %v7110
    %7172 = vmatprep.subr.mxu0 %v7109
    %7173 = vmatpush2.xpose.msra.mxu0 %v7108
    %7174 = vmatprep.subr.mxu0 %v7107
    %7175 = vmatpush2.xpose.msra.mxu0 %v7106
    %7176 = vmatprep.subr.mxu0 %v7105
    %7177 = vmatpush2.xpose.msra.mxu0 %v7104
    %7178 = vmatprep.subr.mxu0 %v7103
    %7179 = vmatpush2.xpose.msra.mxu0 %v7102
    %7180 = vmatprep.subr.mxu0 %v7101
    %7181 = vmatpush2.xpose.msra.mxu0 %v7100
    %7182 = vmatprep.subr.mxu0 %v7099
    %7183 = vmatpush2.xpose.msra.mxu0 %v7098
    %7184 = vmatprep.subr.mxu0 %v7097
    %7185 = vmatpush2.xpose.msra.mxu0 %v7096
    %7186 = vmatprep.subr.mxu0 %v7095
    %7187 = vmatpush2.xpose.msra.mxu0 %v7094
    %7188 = vmatprep.subr.mxu0 %v7093
    %7189 = vmatpush2.xpose.msra.mxu0 %v7092
    %7190 = vmatprep.subr.mxu0 %v7091
    %7191 = vmatpush2.xpose.msra.mxu0 %v7090
    %7192 = vmatprep.subr.mxu0 %v7089
    %7193 = vmatpush2.xpose.msra.mxu0 %v7088
    %7194 = vmatprep.subr.mxu0 %v7087
    %7195 = vmatpush2.xpose.msra.mxu0 %v7086
    %7196 = vmatprep.subr.mxu0 %v7085
    %7197 = vmatpush2.xpose.msra.mxu0 %v7084
    %7198 = vmatprep.subr.mxu0 %v7083
    %7199 = vmatpush2.xpose.msra.mxu0 %v7082
    %7200 = vmatprep.mubr.f32.mxu0 %v7133
    %7201 = vmatmul.mubr.f32.gmra.mxu0 %v7129
    %v7202 = vpop.f32.mrf.mxu0
    %v7203 = vadd.f32 %v7124, %v7202
    %v7204 = vpop.f32.mrf.mxu0
    %v7205 = vadd.f32 %v7124, %v7204
    %7206 = vdwg.mxu0
    %v7209 = vcombine.low %v7203, %v7205
    %v7211 = vunpack.c.l.s4 1966171168
    %v7212 = vunpack.c.0.s8 %v7211
    %v7213 = vlaneseq
    %v7214 = vshrl.u32 %v7213, 7
    %v7215 = vsub.s32 %v7212, %v7214
    %v7216 = vrot.slane %v7209, %v7215
    %v7218 = vunpack.c.l.s4 1966171168
    %v7219 = vunpack.c.0.s8 %v7218
    %v7220 = vlaneseq
    %v7221 = vshrl.u32 %v7220, 7
    %v7222 = vsub.s32 %v7219, %v7221
    %v7223 = vrot.slane %v7216, %v7222
    %v7225 = vlaneseq
    %vm7226 = vcmp.ge.s32.totalorder %v7225, 0
    %vm7227 = vcmp.lt.s32.totalorder %v7225, 256
    %vm7228 = vmand %vm7226, %vm7227
    %7229 = vst.msk [vmem:[#allocation15] sm:$0x3] %vm7228, %v7223
    // Predicated region
    $region66: #{tpu_custom_call.1} parent=1 // pred_check
      _
    $region67: #{tpu_custom_call.1} parent=1 // pred_check_branch
      %7231 = sbr.rel (0) target = $region69
    $region68: #{tpu_custom_call.1} parent=1 // pred_region
      %s7233 = ssub.s32 32, 32
      %7234 = vsyncadd [#allocation5], %s7233
      %s7236 = sshll.u32 [#allocation15], 4
      %s7237 = int_to_ptr.vmem [resolvable:$true] %s7236
      %7239 = dma.vmem_to_hbm [thread:$0]  %s7237, 32, %s9, [#allocation5]
    $region69: #{tpu_custom_call.1} parent=1 // pred_fallthru
      _
    // Predicated region
    $region70: #{tpu_custom_call.1} parent=1 // pred_check
      _
    $region71: #{tpu_custom_call.1} parent=1 // pred_check_branch
      %7241 = sbr.rel (0) target = $region73
    $region72: #{tpu_custom_call.1} parent=1 // pred_region
      %7242 = dma.done [#allocation5], 32
    $region73: #{tpu_custom_call.1} parent=1 // pred_fallthru
      _
    %7243 = vsyncpa [#allocation4], 1
    %7244 = vsyncpa [#allocation7], 1
    %7245 = vsyncpa [#allocation10], 1
    %7246 = vsyncpa [#allocation13], 1
    %7247 = vsyncpa [#allocation5], 1

</llo_original>
